<compile_context>
chip_gen: v7x
topology: tpu7x:2x2x1
jax: 0.10.0
libtpu: 0.0.40
codegen_flags: <defaults>
</compile_context>

<pallas_src>
import jax
import jax.numpy as jnp
from jax import lax
from jax.experimental import pallas as pl
from jax.experimental.pallas import tpu as pltpu

EPS = 1e-5

# Canonical layer order: weight list order == bias/shift column order.
_ORDER = ("e1a", "e1b", "e2a", "e2b", "e3a", "e3b", "e4a", "e4b",
          "ba", "bb",
          "u4", "d4a", "d4b", "u3", "d3a", "d3b",
          "u2", "d2a", "d2b", "u1", "d1a", "d1b", "fin")
_BIAS_COL = {n: i for i, n in enumerate(_ORDER)}


def _round_up(n, m):
    return ((n + m - 1) // m) * m


# --------------------------------------------------------------------------- #
# Fused UNet1d kernel (one grid step = one batch element)
# --------------------------------------------------------------------------- #
def _build_kernel(cin_pad, out_ch, feat, seq_len):
    f = feat
    L = seq_len
    f32 = jnp.float32
    n_w = len(_ORDER)

    def kernel(x_ref, *rest):
        w_refs = rest[:n_w]
        sb_ref = rest[n_w]          # (16f, n_layers) packed per-channel shifts/biases
        o_ref = rest[n_w + 1]       # (1, out_ch, L)
        col_ref = rest[n_w + 2]     # (3*16f, L) im2col scratch (VMEM)
        wr = dict(zip(_ORDER, w_refs))

        def bias(name, cout):
            j = _BIAS_COL[name]
            return sb_ref[0:cout, j:j + 1]                       # (cout, 1)

        def fill_taps(parts, l):
            # parts: list of (value (c, l), c).  Writes im2col rows [0:3*cin, 0:l]:
            #   rows [0:cin]       -> x[l-1] (prev tap, zero at l=0)
            #   rows [cin:2cin]    -> x[l]   (center tap)
            #   rows [2cin:3cin]   -> x[l+1] (next tap, zero at l=L-1)
            # The skip concat is handled here for free via the channel offset.
            cin = sum(c for _, c in parts)
            off = 0
            for val, c in parts:
                zero = jnp.zeros((c, 1), f32)
                r0, r1, r2 = off, cin + off, 2 * cin + off
                if l > 1:
                    col_ref[r0:r0 + c, 0:1] = zero
                    col_ref[r0:r0 + c, 1:l] = val[:, 0:l - 1]
                    col_ref[r1:r1 + c, 0:l] = val
                    col_ref[r2:r2 + c, 0:l - 1] = val[:, 1:l]
                    col_ref[r2:r2 + c, l - 1:l] = zero
                else:
                    col_ref[r0:r0 + c, 0:1] = zero
                    col_ref[r1:r1 + c, 0:1] = val
                    col_ref[r2:r2 + c, 0:1] = zero
                off += c
            return cin

        def conv3(parts, name, cout, l):
            # Conv1d(k=3, pad=1, no bias) + folded BN + tanh: ONE MXU matmul.
            cin = fill_taps(parts, l)
            y = jnp.dot(wr[name][...], col_ref[0:3 * cin, 0:l],
                        preferred_element_type=f32)
            return jnp.tanh(y + bias(name, cout))

        def block(parts, na, nb, cout, l):
            y = conv3(parts, na, cout, l)
            return conv3([(y, cout)], nb, cout, l)

        def pool2(y, l):
            # MaxPool1d(2): even/odd selection matmuls + elementwise max.
            lh = l // 2
            if l == 2:
                return jnp.maximum(y[:, 0:1], y[:, 1:2])
            i = lax.broadcasted_iota(jnp.int32, (l, lh), 0)
            p = lax.broadcasted_iota(jnp.int32, (l, lh), 1)
            sel_e = (i == 2 * p).astype(f32)
            sel_o = (i == 2 * p + 1).astype(f32)
            return jnp.maximum(
                jnp.dot(y, sel_e, preferred_element_type=f32),
                jnp.dot(y, sel_o, preferred_element_type=f32))

        def upconv(x, name, cout, l):
            # ConvTranspose1d(k=2, s=2): both taps in one stacked matmul, then
            # even/odd interleave via 0/1 expansion matmuls (no lane shuffles).
            yt = jnp.dot(wr[name][...], x, preferred_element_type=f32)   # (2*cout, l)
            ye = yt[0:cout, :]
            yo = yt[cout:2 * cout, :]
            b = bias(name, cout)
            if l == 1:
                q = lax.broadcasted_iota(jnp.int32, (cout, 2), 1)
                return jnp.where(q == 0, ye, yo) + b
            r = lax.broadcasted_iota(jnp.int32, (l, 2 * l), 0)
            q = lax.broadcasted_iota(jnp.int32, (l, 2 * l), 1)
            exp_e = (q == 2 * r).astype(f32)
            exp_o = (q == 2 * r + 1).astype(f32)
            return (jnp.dot(ye, exp_e, preferred_element_type=f32)
                    + jnp.dot(yo, exp_o, preferred_element_type=f32) + b)

        x = x_ref[0]                                             # (cin_pad, L)

        # ---- encoder ----
        enc1 = block([(x, cin_pad)], "e1a", "e1b", f, L)
        enc2 = block([(pool2(enc1, L), f)], "e2a", "e2b", 2 * f, L // 2)
        enc3 = block([(pool2(enc2, L // 2), 2 * f)], "e3a", "e3b", 4 * f, L // 4)
        enc4 = block([(pool2(enc3, L // 4), 4 * f)], "e4a", "e4b", 8 * f, L // 8)
        bott = block([(pool2(enc4, L // 8), 8 * f)], "ba", "bb", 16 * f, L // 16)

        # ---- decoder (skip concat handled inside the im2col assembly) ----
        u4 = upconv(bott, "u4", 8 * f, L // 16)
        d4 = block([(u4, 8 * f), (enc4, 8 * f)], "d4a", "d4b", 8 * f, L // 8)
        u3 = upconv(d4, "u3", 4 * f, L // 8)
        d3 = block([(u3, 4 * f), (enc3, 4 * f)], "d3a", "d3b", 4 * f, L // 4)
        u2 = upconv(d3, "u2", 2 * f, L // 4)
        d2 = block([(u2, 2 * f), (enc2, 2 * f)], "d2a", "d2b", 2 * f, L // 2)
        u1 = upconv(d2, "u1", f, L // 2)
        d1 = block([(u1, f), (enc1, f)], "d1a", "d1b", f, L)

        # ---- final Conv1d(k=1) with bias ----
        y = jnp.dot(wr["fin"][...], d1, preferred_element_type=f32) + bias("fin", out_ch)
        o_ref[0] = y.astype(o_ref.dtype)

    return kernel


# --------------------------------------------------------------------------- #
# One-time parameter fold / repack into kernel layout
# --------------------------------------------------------------------------- #
def prepare_kernel_params(params):
    in_ch = params["enc1"]["w1"].shape[2]
    feat = params["enc1"]["w1"].shape[1]
    cin_pad = max(8, _round_up(in_ch, 8))     # pad input channels for aligned tiles

    def fold_conv3(blk, which, pad_to=None):
        w = blk[f"w{which}"]                  # (3, cout, cin) tap-major
        s = blk[f"s{which}"]                  # (cout, 1) folded BN scale
        b = blk[f"b{which}"]                  # (cout, 1) folded BN shift
        cin = w.shape[2]
        if pad_to is not None and pad_to > cin:
            w = jnp.pad(w, ((0, 0), (0, 0), (0, pad_to - cin)))
            cin = pad_to
        wf = w * s[None, :, :]                # fold BN scale into the weight
        cout = wf.shape[1]
        w_flat = jnp.transpose(wf, (1, 0, 2)).reshape(cout, 3 * cin)
        return w_flat, b[:, 0]

    def fold_up(blk):
        w = blk["w"]                          # (2, cout, cin): tap0->even, tap1->odd
        cout, cin = w.shape[1], w.shape[2]
        return w.reshape(2 * cout, cin), blk["b"][:, 0]

    weights, biases = {}, {}
    weights["e1a"], biases["e1a"] = fold_conv3(params["enc1"], 1, pad_to=cin_pad)
    weights["e1b"], biases["e1b"] = fold_conv3(params["enc1"], 2)
    for pre, blk in (("e2", "enc2"), ("e3", "enc3"), ("e4", "enc4"), ("b", "bott"),
                     ("d4", "dec4"), ("d3", "dec3"), ("d2", "dec2"), ("d1", "dec1")):
        weights[pre + "a"], biases[pre + "a"] = fold_conv3(params[blk], 1)
        weights[pre + "b"], biases[pre + "b"] = fold_conv3(params[blk], 2)
    for name, blk in (("u4", "up4"), ("u3", "up3"), ("u2", "up2"), ("u1", "up1")):
        weights[name], biases[name] = fold_up(params[blk])
    weights["fin"] = params["conv"]["w"]
    biases["fin"] = params["conv"]["b"][:, 0]

    max_c = 16 * feat
    sb = jnp.stack(
        [jnp.pad(biases[n], (0, max_c - biases[n].shape[0])) for n in _ORDER], axis=1)
    return dict(w_list=[weights[n] for n in _ORDER], sb=sb)


# --------------------------------------------------------------------------- #
# Forward (single fused pallas_call)
# --------------------------------------------------------------------------- #
def unet1d_wrap_forward(kparams, x):
    w_list, sb = kparams["w_list"], kparams["sb"]
    B, cin, L = x.shape
    feat = w_list[_ORDER.index("e1b")].shape[0]
    out_ch = w_list[_ORDER.index("fin")].shape[0]
    cin_pad = w_list[_ORDER.index("e1a")].shape[1] // 3
    assert L % 16 == 0 and feat % 8 == 0 and cin_pad % 8 == 0

    xp = x if cin == cin_pad else jnp.pad(x, ((0, 0), (0, cin_pad - cin), (0, 0)))

    kernel = _build_kernel(cin_pad, out_ch, feat, L)

    def full_spec(a):
        return pl.BlockSpec(a.shape, lambda b: (0,) * a.ndim)

    in_specs = ([pl.BlockSpec((1, cin_pad, L), lambda b: (b, 0, 0))]
                + [full_spec(w) for w in w_list]
                + [full_spec(sb)])

    out = pl.pallas_call(
        kernel,
        out_shape=jax.ShapeDtypeStruct((B, out_ch, L), jnp.float32),
        grid=(B,),
        in_specs=in_specs,
        out_specs=pl.BlockSpec((1, out_ch, L), lambda b: (b, 0, 0)),
        scratch_shapes=[pltpu.VMEM((3 * 16 * feat, L), jnp.float32)],
        compiler_params=pltpu.CompilerParams(dimension_semantics=("parallel",)),
    )(xp, *w_list, sb)

    # TODO(synk): the wrapper's final .permute([0,2,1]) is left as one tiny XLA
    # transpose of the (B, out_ch, L) result; the kernel writes the lane-dense layout.
    return jnp.transpose(out, (0, 2, 1))


# --------------------------------------------------------------------------- #
# Parameters (deterministic, synthetic) — same structure as before
# --------------------------------------------------------------------------- #
def _winit(key, shape, fan_in):
    return (jax.random.normal(key, shape, jnp.float32) / jnp.sqrt(float(fan_in))).astype(
        jnp.float32
    )


def _make_block(key, cin, cout):
    k1, k2 = jax.random.split(key)
    # BatchNorm defaults: gamma=1, beta=0, running_mean=0, running_var=1 (folded)
    scale = jnp.full((cout, 1), 1.0 / jnp.sqrt(1.0 + EPS), jnp.float32)
    shift = jnp.zeros((cout, 1), jnp.float32)
    return dict(
        w1=_winit(k1, (3, cout, cin), 3 * cin),
        s1=scale, b1=shift,
        w2=_winit(k2, (3, cout, cout), 3 * cout),
        s2=scale, b2=shift,
    )


def _make_upconv(key, cin, cout):
    kw, kb = jax.random.split(key)
    return dict(
        w=_winit(kw, (2, cout, cin), 2 * cin),
        b=_winit(kb, (cout, 1), 2 * cin),
    )


def init_params(key, in_channels, out_channels, features):
    ks = jax.random.split(key, 15)
    f = features
    return dict(
        enc1=_make_block(ks[0], in_channels, f),
        enc2=_make_block(ks[1], f, f * 2),
        enc3=_make_block(ks[2], f * 2, f * 4),
        enc4=_make_block(ks[3], f * 4, f * 8),
        bott=_make_block(ks[4], f * 8, f * 16),
        up4=_make_upconv(ks[5], f * 16, f * 8),
        dec4=_make_block(ks[6], f * 16, f * 8),
        up3=_make_upconv(ks[7], f * 8, f * 4),
        dec3=_make_block(ks[8], f * 8, f * 4),
        up2=_make_upconv(ks[9], f * 4, f * 2),
        dec2=_make_block(ks[10], f * 4, f * 2),
        up1=_make_upconv(ks[11], f * 2, f),
        dec1=_make_block(ks[12], f * 2, f),
        conv=dict(
            w=_winit(ks[13], (out_channels, f), f),
            b=_winit(ks[14], (out_channels, 1), f),
        ),
    )


# --------------------------------------------------------------------------- #
# Pure-JAX reference
# --------------------------------------------------------------------------- #
def _ref_conv3(x, w, scale, shift, act=True):
    B, Cin, L = x.shape
    xp = jnp.pad(x, ((0, 0), (0, 0), (1, 1)))
    y = (
        jnp.einsum("oi,bil->bol", w[0], xp[:, :, 0:L])
        + jnp.einsum("oi,bil->bol", w[1], xp[:, :, 1:L + 1])
        + jnp.einsum("oi,bil->bol", w[2], xp[:, :, 2:L + 2])
    )
    y = y * scale[None] + shift[None]
    return jnp.tanh(y) if act else y


def _ref_block(p, x):
    x = _ref_conv3(x, p["w1"], p["s1"], p["b1"])
    x = _ref_conv3(x, p["w2"], p["s2"], p["b2"])
    return x


def _ref_pool(x):
    B, C, L = x.shape
    return jnp.max(x.reshape(B, C, L // 2, 2), axis=-1)


def _ref_up(x, w, b):
    B, Cin, L = x.shape
    ye = jnp.einsum("oi,bil->bol", w[0], x) + b[None]
    yo = jnp.einsum("oi,bil->bol", w[1], x) + b[None]
    return jnp.stack([ye, yo], axis=-1).reshape(B, w.shape[1], 2 * L)


def ref_forward(params, x):
    enc1 = _ref_block(params["enc1"], x)
    enc2 = _ref_block(params["enc2"], _ref_pool(enc1))
    enc3 = _ref_block(params["enc3"], _ref_pool(enc2))
    enc4 = _ref_block(params["enc4"], _ref_pool(enc3))
    bott = _ref_block(params["bott"], _ref_pool(enc4))
    d4 = _ref_block(params["dec4"],
                    jnp.concatenate([_ref_up(bott, params["up4"]["w"], params["up4"]["b"]), enc4], axis=1))
    d3 = _ref_block(params["dec3"],
                    jnp.concatenate([_ref_up(d4, params["up3"]["w"], params["up3"]["b"]), enc3], axis=1))
    d2 = _ref_block(params["dec2"],
                    jnp.concatenate([_ref_up(d3, params["up2"]["w"], params["up2"]["b"]), enc2], axis=1))
    d1 = _ref_block(params["dec1"],
                    jnp.concatenate([_ref_up(d2, params["up1"]["w"], params["up1"]["b"]), enc1], axis=1))
    out = jnp.einsum("oi,bil->bol", params["conv"]["w"], d1) + params["conv"]["b"][None]
    return jnp.transpose(out, (0, 2, 1))


# --------------------------------------------------------------------------- #
if __name__ == "__main__":
    B, IN_CH, OUT_CH, L, FEATURES = 2, 4, 3, 16, 8

    key = jax.random.PRNGKey(0)
    kx, kp = jax.random.split(key)
    x = jax.random.normal(kx, (B, IN_CH, L), jnp.float32)  # NCL input, like Conv1d
    params = init_params(kp, IN_CH, OUT_CH, FEATURES)

    kparams = prepare_kernel_params(params)        # one-time BN fold / repack
    fwd = jax.jit(unet1d_wrap_forward)

    y = jax.block_until_ready(fwd(kparams, x))
    y_ref = jax.block_until_ready(ref_forward(params, x))

    assert y.shape == (B, L, OUT_CH), y.shape
    assert y.dtype == jnp.float32
    assert bool(jnp.all(jnp.isfinite(y)))
    assert bool(jnp.allclose(y, y_ref, rtol=1e-2, atol=1e-2)), float(jnp.max(jnp.abs(y - y_ref)))

    print("KERNEL_OK")
</pallas_src>

<mosaic_0001>
module attributes {stable_mosaic.version = 11 : i64} {
  func.func @kernel(%arg0: i32, %arg1: memref<1x8x16xf32, #tpu.memory_space<vmem>>, %arg2: memref<8x24xf32, #tpu.memory_space<vmem>>, %arg3: memref<8x24xf32, #tpu.memory_space<vmem>>, %arg4: memref<16x24xf32, #tpu.memory_space<vmem>>, %arg5: memref<16x48xf32, #tpu.memory_space<vmem>>, %arg6: memref<32x48xf32, #tpu.memory_space<vmem>>, %arg7: memref<32x96xf32, #tpu.memory_space<vmem>>, %arg8: memref<64x96xf32, #tpu.memory_space<vmem>>, %arg9: memref<64x192xf32, #tpu.memory_space<vmem>>, %arg10: memref<128x192xf32, #tpu.memory_space<vmem>>, %arg11: memref<128x384xf32, #tpu.memory_space<vmem>>, %arg12: memref<128x128xf32, #tpu.memory_space<vmem>>, %arg13: memref<64x384xf32, #tpu.memory_space<vmem>>, %arg14: memref<64x192xf32, #tpu.memory_space<vmem>>, %arg15: memref<64x64xf32, #tpu.memory_space<vmem>>, %arg16: memref<32x192xf32, #tpu.memory_space<vmem>>, %arg17: memref<32x96xf32, #tpu.memory_space<vmem>>, %arg18: memref<32x32xf32, #tpu.memory_space<vmem>>, %arg19: memref<16x96xf32, #tpu.memory_space<vmem>>, %arg20: memref<16x48xf32, #tpu.memory_space<vmem>>, %arg21: memref<16x16xf32, #tpu.memory_space<vmem>>, %arg22: memref<8x48xf32, #tpu.memory_space<vmem>>, %arg23: memref<8x24xf32, #tpu.memory_space<vmem>>, %arg24: memref<3x8xf32, #tpu.memory_space<vmem>>, %arg25: memref<128x23xf32, #tpu.memory_space<vmem>>, %arg26: memref<1x3x16xf32, #tpu.memory_space<vmem>>, %arg27: memref<384x16xf32, #tpu.memory_space<vmem>>) attributes {dimension_semantics = [#tpu.dimension_semantics<parallel>], iteration_bounds = array<i64: 2>, scalar_prefetch = 0 : i64, scratch_operands = 1 : i64, tpu.core_type = #tpu.core_type<tc>, window_params = [{transform_indices = @transform_0, window_bounds = array<i64: 1, 8, 16>}, {pipeline_mode = #tpu.pipeline_mode<synchronous>, transform_indices = @transform_1, window_bounds = array<i64: 8, 24>}, {pipeline_mode = #tpu.pipeline_mode<synchronous>, transform_indices = @transform_2, window_bounds = array<i64: 8, 24>}, {pipeline_mode = #tpu.pipeline_mode<synchronous>, transform_indices = @transform_3, window_bounds = array<i64: 16, 24>}, {pipeline_mode = #tpu.pipeline_mode<synchronous>, transform_indices = @transform_4, window_bounds = array<i64: 16, 48>}, {pipeline_mode = #tpu.pipeline_mode<synchronous>, transform_indices = @transform_5, window_bounds = array<i64: 32, 48>}, {pipeline_mode = #tpu.pipeline_mode<synchronous>, transform_indices = @transform_6, window_bounds = array<i64: 32, 96>}, {pipeline_mode = #tpu.pipeline_mode<synchronous>, transform_indices = @transform_7, window_bounds = array<i64: 64, 96>}, {pipeline_mode = #tpu.pipeline_mode<synchronous>, transform_indices = @transform_8, window_bounds = array<i64: 64, 192>}, {pipeline_mode = #tpu.pipeline_mode<synchronous>, transform_indices = @transform_9, window_bounds = array<i64: 128, 192>}, {pipeline_mode = #tpu.pipeline_mode<synchronous>, transform_indices = @transform_10, window_bounds = array<i64: 128, 384>}, {pipeline_mode = #tpu.pipeline_mode<synchronous>, transform_indices = @transform_11, window_bounds = array<i64: 128, 128>}, {pipeline_mode = #tpu.pipeline_mode<synchronous>, transform_indices = @transform_12, window_bounds = array<i64: 64, 384>}, {pipeline_mode = #tpu.pipeline_mode<synchronous>, transform_indices = @transform_13, window_bounds = array<i64: 64, 192>}, {pipeline_mode = #tpu.pipeline_mode<synchronous>, transform_indices = @transform_14, window_bounds = array<i64: 64, 64>}, {pipeline_mode = #tpu.pipeline_mode<synchronous>, transform_indices = @transform_15, window_bounds = array<i64: 32, 192>}, {pipeline_mode = #tpu.pipeline_mode<synchronous>, transform_indices = @transform_16, window_bounds = array<i64: 32, 96>}, {pipeline_mode = #tpu.pipeline_mode<synchronous>, transform_indices = @transform_17, window_bounds = array<i64: 32, 32>}, {pipeline_mode = #tpu.pipeline_mode<synchronous>, transform_indices = @transform_18, window_bounds = array<i64: 16, 96>}, {pipeline_mode = #tpu.pipeline_mode<synchronous>, transform_indices = @transform_19, window_bounds = array<i64: 16, 48>}, {pipeline_mode = #tpu.pipeline_mode<synchronous>, transform_indices = @transform_20, window_bounds = array<i64: 16, 16>}, {pipeline_mode = #tpu.pipeline_mode<synchronous>, transform_indices = @transform_21, window_bounds = array<i64: 8, 48>}, {pipeline_mode = #tpu.pipeline_mode<synchronous>, transform_indices = @transform_22, window_bounds = array<i64: 8, 24>}, {pipeline_mode = #tpu.pipeline_mode<synchronous>, transform_indices = @transform_23, window_bounds = array<i64: 3, 8>}, {pipeline_mode = #tpu.pipeline_mode<synchronous>, transform_indices = @transform_24, window_bounds = array<i64: 128, 23>}, {transform_indices = @transform_25, window_bounds = array<i64: 1, 3, 16>}]} {
    %c0 = arith.constant 0 : index
    %c0_0 = arith.constant 0 : index
    %c0_1 = arith.constant 0 : index
    %0 = vector.load %arg1[%c0, %c0_0, %c0_1] : memref<1x8x16xf32, #tpu.memory_space<vmem>>, vector<1x8x16xf32>
    %1 = vector.shape_cast %0 : vector<1x8x16xf32> to vector<8x16xf32>
    %cst = arith.constant 0.000000e+00 : f32
    %2 = vector.broadcast %cst : f32 to vector<8x1xf32>
    %c0_2 = arith.constant 0 : index
    %c0_3 = arith.constant 0 : index
    %3 = vector.load %arg27[%c0_2, %c0_3] : memref<384x16xf32, #tpu.memory_space<vmem>>, vector<8x1xf32>
    tpu.vector_store %arg27[%c0_2, %c0_3], %2 {strides = array<i32>} : memref<384x16xf32, #tpu.memory_space<vmem>>, vector<8x1xf32>,
    %4 = vector.extract_strided_slice %1 {offsets = [0, 0], sizes = [8, 15], strides = [1, 1]} : vector<8x16xf32> to vector<8x15xf32>
    %c0_4 = arith.constant 0 : index
    %c1 = arith.constant 1 : index
    %5 = vector.load %arg27[%c0_4, %c1] : memref<384x16xf32, #tpu.memory_space<vmem>>, vector<8x15xf32>
    tpu.vector_store %arg27[%c0_4, %c1], %4 {strides = array<i32>} : memref<384x16xf32, #tpu.memory_space<vmem>>, vector<8x15xf32>,
    %c8 = arith.constant 8 : index
    %c0_5 = arith.constant 0 : index
    %6 = vector.load %arg27[%c8, %c0_5] : memref<384x16xf32, #tpu.memory_space<vmem>>, vector<8x16xf32>
    tpu.vector_store %arg27[%c8, %c0_5], %1 {strides = array<i32>} : memref<384x16xf32, #tpu.memory_space<vmem>>, vector<8x16xf32>,
    %7 = vector.extract_strided_slice %1 {offsets = [0, 1], sizes = [8, 15], strides = [1, 1]} : vector<8x16xf32> to vector<8x15xf32>
    %c16 = arith.constant 16 : index
    %c0_6 = arith.constant 0 : index
    %8 = vector.load %arg27[%c16, %c0_6] : memref<384x16xf32, #tpu.memory_space<vmem>>, vector<8x15xf32>
    tpu.vector_store %arg27[%c16, %c0_6], %7 {strides = array<i32>} : memref<384x16xf32, #tpu.memory_space<vmem>>, vector<8x15xf32>,
    %c16_7 = arith.constant 16 : index
    %c15 = arith.constant 15 : index
    %9 = vector.load %arg27[%c16_7, %c15] : memref<384x16xf32, #tpu.memory_space<vmem>>, vector<8x1xf32>
    tpu.vector_store %arg27[%c16_7, %c15], %2 {strides = array<i32>} : memref<384x16xf32, #tpu.memory_space<vmem>>, vector<8x1xf32>,
    %c0_8 = arith.constant 0 : index
    %c0_9 = arith.constant 0 : index
    %10 = vector.load %arg2[%c0_8, %c0_9] : memref<8x24xf32, #tpu.memory_space<vmem>>, vector<8x24xf32>
    %c0_10 = arith.constant 0 : index
    %c0_11 = arith.constant 0 : index
    %11 = vector.load %arg27[%c0_10, %c0_11] : memref<384x16xf32, #tpu.memory_space<vmem>>, vector<24x16xf32>
    %cst_12 = arith.constant dense<0.000000e+00> : vector<8x16xf32>
    %12 = tpu.matmul %10, %11, %cst_12 {dimension_numbers = #tpu.dot_dimension_numbers<[1], [0], [0], [1], [0, 0, 1, 1], [], []>} : vector<8x24xf32>, vector<24x16xf32>, vector<8x16xf32> -> vector<8x16xf32>
    %c0_13 = arith.constant 0 : index
    %c0_14 = arith.constant 0 : index
    %13 = vector.load %arg25[%c0_13, %c0_14] : memref<128x23xf32, #tpu.memory_space<vmem>>, vector<8x1xf32>
    %14 = vector.broadcast %13 : vector<8x1xf32> to vector<8x16xf32>
    %15 = arith.addf %12, %14 : vector<8x16xf32>
    %16 = math.tanh %15 : vector<8x16xf32>
    %cst_15 = arith.constant 0.000000e+00 : f32
    %17 = vector.broadcast %cst_15 : f32 to vector<8x1xf32>
    %c0_16 = arith.constant 0 : index
    %c0_17 = arith.constant 0 : index
    %18 = vector.load %arg27[%c0_16, %c0_17] : memref<384x16xf32, #tpu.memory_space<vmem>>, vector<8x1xf32>
    tpu.vector_store %arg27[%c0_16, %c0_17], %17 {strides = array<i32>} : memref<384x16xf32, #tpu.memory_space<vmem>>, vector<8x1xf32>,
    %19 = vector.extract_strided_slice %16 {offsets = [0, 0], sizes = [8, 15], strides = [1, 1]} : vector<8x16xf32> to vector<8x15xf32>
    %c0_18 = arith.constant 0 : index
    %c1_19 = arith.constant 1 : index
    %20 = vector.load %arg27[%c0_18, %c1_19] : memref<384x16xf32, #tpu.memory_space<vmem>>, vector<8x15xf32>
    tpu.vector_store %arg27[%c0_18, %c1_19], %19 {strides = array<i32>} : memref<384x16xf32, #tpu.memory_space<vmem>>, vector<8x15xf32>,
    %c8_20 = arith.constant 8 : index
    %c0_21 = arith.constant 0 : index
    %21 = vector.load %arg27[%c8_20, %c0_21] : memref<384x16xf32, #tpu.memory_space<vmem>>, vector<8x16xf32>
    tpu.vector_store %arg27[%c8_20, %c0_21], %16 {strides = array<i32>} : memref<384x16xf32, #tpu.memory_space<vmem>>, vector<8x16xf32>,
    %22 = vector.extract_strided_slice %16 {offsets = [0, 1], sizes = [8, 15], strides = [1, 1]} : vector<8x16xf32> to vector<8x15xf32>
    %c16_22 = arith.constant 16 : index
    %c0_23 = arith.constant 0 : index
    %23 = vector.load %arg27[%c16_22, %c0_23] : memref<384x16xf32, #tpu.memory_space<vmem>>, vector<8x15xf32>
    tpu.vector_store %arg27[%c16_22, %c0_23], %22 {strides = array<i32>} : memref<384x16xf32, #tpu.memory_space<vmem>>, vector<8x15xf32>,
    %c16_24 = arith.constant 16 : index
    %c15_25 = arith.constant 15 : index
    %24 = vector.load %arg27[%c16_24, %c15_25] : memref<384x16xf32, #tpu.memory_space<vmem>>, vector<8x1xf32>
    tpu.vector_store %arg27[%c16_24, %c15_25], %17 {strides = array<i32>} : memref<384x16xf32, #tpu.memory_space<vmem>>, vector<8x1xf32>,
    %c0_26 = arith.constant 0 : index
    %c0_27 = arith.constant 0 : index
    %25 = vector.load %arg3[%c0_26, %c0_27] : memref<8x24xf32, #tpu.memory_space<vmem>>, vector<8x24xf32>
    %c0_28 = arith.constant 0 : index
    %c0_29 = arith.constant 0 : index
    %26 = vector.load %arg27[%c0_28, %c0_29] : memref<384x16xf32, #tpu.memory_space<vmem>>, vector<24x16xf32>
    %cst_30 = arith.constant dense<0.000000e+00> : vector<8x16xf32>
    %27 = tpu.matmul %25, %26, %cst_30 {dimension_numbers = #tpu.dot_dimension_numbers<[1], [0], [0], [1], [0, 0, 1, 1], [], []>} : vector<8x24xf32>, vector<24x16xf32>, vector<8x16xf32> -> vector<8x16xf32>
    %c0_31 = arith.constant 0 : index
    %c1_32 = arith.constant 1 : index
    %28 = vector.load %arg25[%c0_31, %c1_32] : memref<128x23xf32, #tpu.memory_space<vmem>>, vector<8x1xf32>
    %29 = vector.broadcast %28 : vector<8x1xf32> to vector<8x16xf32>
    %30 = arith.addf %27, %29 : vector<8x16xf32>
    %31 = math.tanh %30 : vector<8x16xf32>
    %32 = tpu.iota {dimensions = array<i32: 0>} : vector<16x8xi32>
    %33 = tpu.iota {dimensions = array<i32: 1>} : vector<16x8xi32>
    %c2_i32 = arith.constant 2 : i32
    %34 = vector.broadcast %c2_i32 : i32 to vector<16x8xi32>
    %35 = arith.muli %34, %33 : vector<16x8xi32>
    %36 = arith.cmpi eq, %32, %35 : vector<16x8xi32>
    %37 = arith.extui %36 : vector<16x8xi1> to vector<16x8xi32>
    %38 = arith.sitofp %37 : vector<16x8xi32> to vector<16x8xf32>
    %c2_i32_33 = arith.constant 2 : i32
    %39 = vector.broadcast %c2_i32_33 : i32 to vector<16x8xi32>
    %40 = arith.muli %39, %33 : vector<16x8xi32>
    %c1_i32 = arith.constant 1 : i32
    %41 = vector.broadcast %c1_i32 : i32 to vector<16x8xi32>
    %42 = arith.addi %40, %41 : vector<16x8xi32>
    %43 = arith.cmpi eq, %32, %42 : vector<16x8xi32>
    %44 = arith.extui %43 : vector<16x8xi1> to vector<16x8xi32>
    %45 = arith.sitofp %44 : vector<16x8xi32> to vector<16x8xf32>
    %cst_34 = arith.constant dense<0.000000e+00> : vector<8x8xf32>
    %46 = tpu.matmul %31, %38, %cst_34 {dimension_numbers = #tpu.dot_dimension_numbers<[1], [0], [0], [1], [0, 0, 1, 1], [], []>} : vector<8x16xf32>, vector<16x8xf32>, vector<8x8xf32> -> vector<8x8xf32>
    %cst_35 = arith.constant dense<0.000000e+00> : vector<8x8xf32>
    %47 = tpu.matmul %31, %45, %cst_35 {dimension_numbers = #tpu.dot_dimension_numbers<[1], [0], [0], [1], [0, 0, 1, 1], [], []>} : vector<8x16xf32>, vector<16x8xf32>, vector<8x8xf32> -> vector<8x8xf32>
    %48 = arith.maximumf %46, %47 : vector<8x8xf32>
    %cst_36 = arith.constant 0.000000e+00 : f32
    %49 = vector.broadcast %cst_36 : f32 to vector<8x1xf32>
    %c0_37 = arith.constant 0 : index
    %c0_38 = arith.constant 0 : index
    %50 = vector.load %arg27[%c0_37, %c0_38] : memref<384x16xf32, #tpu.memory_space<vmem>>, vector<8x1xf32>
    tpu.vector_store %arg27[%c0_37, %c0_38], %49 {strides = array<i32>} : memref<384x16xf32, #tpu.memory_space<vmem>>, vector<8x1xf32>,
    %51 = vector.extract_strided_slice %48 {offsets = [0, 0], sizes = [8, 7], strides = [1, 1]} : vector<8x8xf32> to vector<8x7xf32>
    %c0_39 = arith.constant 0 : index
    %c1_40 = arith.constant 1 : index
    %52 = vector.load %arg27[%c0_39, %c1_40] : memref<384x16xf32, #tpu.memory_space<vmem>>, vector<8x7xf32>
    tpu.vector_store %arg27[%c0_39, %c1_40], %51 {strides = array<i32>} : memref<384x16xf32, #tpu.memory_space<vmem>>, vector<8x7xf32>,
    %c8_41 = arith.constant 8 : index
    %c0_42 = arith.constant 0 : index
    %53 = vector.load %arg27[%c8_41, %c0_42] : memref<384x16xf32, #tpu.memory_space<vmem>>, vector<8x8xf32>
    tpu.vector_store %arg27[%c8_41, %c0_42], %48 {strides = array<i32>} : memref<384x16xf32, #tpu.memory_space<vmem>>, vector<8x8xf32>,
    %54 = vector.extract_strided_slice %48 {offsets = [0, 1], sizes = [8, 7], strides = [1, 1]} : vector<8x8xf32> to vector<8x7xf32>
    %c16_43 = arith.constant 16 : index
    %c0_44 = arith.constant 0 : index
    %55 = vector.load %arg27[%c16_43, %c0_44] : memref<384x16xf32, #tpu.memory_space<vmem>>, vector<8x7xf32>
    tpu.vector_store %arg27[%c16_43, %c0_44], %54 {strides = array<i32>} : memref<384x16xf32, #tpu.memory_space<vmem>>, vector<8x7xf32>,
    %c16_45 = arith.constant 16 : index
    %c7 = arith.constant 7 : index
    %56 = vector.load %arg27[%c16_45, %c7] : memref<384x16xf32, #tpu.memory_space<vmem>>, vector<8x1xf32>
    tpu.vector_store %arg27[%c16_45, %c7], %49 {strides = array<i32>} : memref<384x16xf32, #tpu.memory_space<vmem>>, vector<8x1xf32>,
    %c0_46 = arith.constant 0 : index
    %c0_47 = arith.constant 0 : index
    %57 = vector.load %arg4[%c0_46, %c0_47] : memref<16x24xf32, #tpu.memory_space<vmem>>, vector<16x24xf32>
    %c0_48 = arith.constant 0 : index
    %c0_49 = arith.constant 0 : index
    %58 = vector.load %arg27[%c0_48, %c0_49] : memref<384x16xf32, #tpu.memory_space<vmem>>, vector<24x8xf32>
    %cst_50 = arith.constant dense<0.000000e+00> : vector<16x8xf32>
    %59 = tpu.matmul %57, %58, %cst_50 {dimension_numbers = #tpu.dot_dimension_numbers<[1], [0], [0], [1], [0, 0, 1, 1], [], []>} : vector<16x24xf32>, vector<24x8xf32>, vector<16x8xf32> -> vector<16x8xf32>
    %c0_51 = arith.constant 0 : index
    %c2 = arith.constant 2 : index
    %60 = vector.load %arg25[%c0_51, %c2] : memref<128x23xf32, #tpu.memory_space<vmem>>, vector<16x1xf32>
    %61 = vector.broadcast %60 : vector<16x1xf32> to vector<16x8xf32>
    %62 = arith.addf %59, %61 : vector<16x8xf32>
    %63 = math.tanh %62 : vector<16x8xf32>
    %cst_52 = arith.constant 0.000000e+00 : f32
    %64 = vector.broadcast %cst_52 : f32 to vector<16x1xf32>
    %c0_53 = arith.constant 0 : index
    %c0_54 = arith.constant 0 : index
    %65 = vector.load %arg27[%c0_53, %c0_54] : memref<384x16xf32, #tpu.memory_space<vmem>>, vector<16x1xf32>
    tpu.vector_store %arg27[%c0_53, %c0_54], %64 {strides = array<i32>} : memref<384x16xf32, #tpu.memory_space<vmem>>, vector<16x1xf32>,
    %66 = vector.extract_strided_slice %63 {offsets = [0, 0], sizes = [16, 7], strides = [1, 1]} : vector<16x8xf32> to vector<16x7xf32>
    %c0_55 = arith.constant 0 : index
    %c1_56 = arith.constant 1 : index
    %67 = vector.load %arg27[%c0_55, %c1_56] : memref<384x16xf32, #tpu.memory_space<vmem>>, vector<16x7xf32>
    tpu.vector_store %arg27[%c0_55, %c1_56], %66 {strides = array<i32>} : memref<384x16xf32, #tpu.memory_space<vmem>>, vector<16x7xf32>,
    %c16_57 = arith.constant 16 : index
    %c0_58 = arith.constant 0 : index
    %68 = vector.load %arg27[%c16_57, %c0_58] : memref<384x16xf32, #tpu.memory_space<vmem>>, vector<16x8xf32>
    tpu.vector_store %arg27[%c16_57, %c0_58], %63 {strides = array<i32>} : memref<384x16xf32, #tpu.memory_space<vmem>>, vector<16x8xf32>,
    %69 = vector.extract_strided_slice %63 {offsets = [0, 1], sizes = [16, 7], strides = [1, 1]} : vector<16x8xf32> to vector<16x7xf32>
    %c32 = arith.constant 32 : index
    %c0_59 = arith.constant 0 : index
    %70 = vector.load %arg27[%c32, %c0_59] : memref<384x16xf32, #tpu.memory_space<vmem>>, vector<16x7xf32>
    tpu.vector_store %arg27[%c32, %c0_59], %69 {strides = array<i32>} : memref<384x16xf32, #tpu.memory_space<vmem>>, vector<16x7xf32>,
    %c32_60 = arith.constant 32 : index
    %c7_61 = arith.constant 7 : index
    %71 = vector.load %arg27[%c32_60, %c7_61] : memref<384x16xf32, #tpu.memory_space<vmem>>, vector<16x1xf32>
    tpu.vector_store %arg27[%c32_60, %c7_61], %64 {strides = array<i32>} : memref<384x16xf32, #tpu.memory_space<vmem>>, vector<16x1xf32>,
    %c0_62 = arith.constant 0 : index
    %c0_63 = arith.constant 0 : index
    %72 = vector.load %arg5[%c0_62, %c0_63] : memref<16x48xf32, #tpu.memory_space<vmem>>, vector<16x48xf32>
    %c0_64 = arith.constant 0 : index
    %c0_65 = arith.constant 0 : index
    %73 = vector.load %arg27[%c0_64, %c0_65] : memref<384x16xf32, #tpu.memory_space<vmem>>, vector<48x8xf32>
    %cst_66 = arith.constant dense<0.000000e+00> : vector<16x8xf32>
    %74 = tpu.matmul %72, %73, %cst_66 {dimension_numbers = #tpu.dot_dimension_numbers<[1], [0], [0], [1], [0, 0, 1, 1], [], []>} : vector<16x48xf32>, vector<48x8xf32>, vector<16x8xf32> -> vector<16x8xf32>
    %c0_67 = arith.constant 0 : index
    %c3 = arith.constant 3 : index
    %75 = vector.load %arg25[%c0_67, %c3] : memref<128x23xf32, #tpu.memory_space<vmem>>, vector<16x1xf32>
    %76 = vector.broadcast %75 : vector<16x1xf32> to vector<16x8xf32>
    %77 = arith.addf %74, %76 : vector<16x8xf32>
    %78 = math.tanh %77 : vector<16x8xf32>
    %79 = tpu.iota {dimensions = array<i32: 0>} : vector<8x4xi32>
    %80 = tpu.iota {dimensions = array<i32: 1>} : vector<8x4xi32>
    %c2_i32_68 = arith.constant 2 : i32
    %81 = vector.broadcast %c2_i32_68 : i32 to vector<8x4xi32>
    %82 = arith.muli %81, %80 : vector<8x4xi32>
    %83 = arith.cmpi eq, %79, %82 : vector<8x4xi32>
    %84 = arith.extui %83 : vector<8x4xi1> to vector<8x4xi32>
    %85 = arith.sitofp %84 : vector<8x4xi32> to vector<8x4xf32>
    %c2_i32_69 = arith.constant 2 : i32
    %86 = vector.broadcast %c2_i32_69 : i32 to vector<8x4xi32>
    %87 = arith.muli %86, %80 : vector<8x4xi32>
    %c1_i32_70 = arith.constant 1 : i32
    %88 = vector.broadcast %c1_i32_70 : i32 to vector<8x4xi32>
    %89 = arith.addi %87, %88 : vector<8x4xi32>
    %90 = arith.cmpi eq, %79, %89 : vector<8x4xi32>
    %91 = arith.extui %90 : vector<8x4xi1> to vector<8x4xi32>
    %92 = arith.sitofp %91 : vector<8x4xi32> to vector<8x4xf32>
    %cst_71 = arith.constant dense<0.000000e+00> : vector<16x4xf32>
    %93 = tpu.matmul %78, %85, %cst_71 {dimension_numbers = #tpu.dot_dimension_numbers<[1], [0], [0], [1], [0, 0, 1, 1], [], []>} : vector<16x8xf32>, vector<8x4xf32>, vector<16x4xf32> -> vector<16x4xf32>
    %cst_72 = arith.constant dense<0.000000e+00> : vector<16x4xf32>
    %94 = tpu.matmul %78, %92, %cst_72 {dimension_numbers = #tpu.dot_dimension_numbers<[1], [0], [0], [1], [0, 0, 1, 1], [], []>} : vector<16x8xf32>, vector<8x4xf32>, vector<16x4xf32> -> vector<16x4xf32>
    %95 = arith.maximumf %93, %94 : vector<16x4xf32>
    %cst_73 = arith.constant 0.000000e+00 : f32
    %96 = vector.broadcast %cst_73 : f32 to vector<16x1xf32>
    %c0_74 = arith.constant 0 : index
    %c0_75 = arith.constant 0 : index
    %97 = vector.load %arg27[%c0_74, %c0_75] : memref<384x16xf32, #tpu.memory_space<vmem>>, vector<16x1xf32>
    tpu.vector_store %arg27[%c0_74, %c0_75], %96 {strides = array<i32>} : memref<384x16xf32, #tpu.memory_space<vmem>>, vector<16x1xf32>,
    %98 = vector.extract_strided_slice %95 {offsets = [0, 0], sizes = [16, 3], strides = [1, 1]} : vector<16x4xf32> to vector<16x3xf32>
    %c0_76 = arith.constant 0 : index
    %c1_77 = arith.constant 1 : index
    %99 = vector.load %arg27[%c0_76, %c1_77] : memref<384x16xf32, #tpu.memory_space<vmem>>, vector<16x3xf32>
    tpu.vector_store %arg27[%c0_76, %c1_77], %98 {strides = array<i32>} : memref<384x16xf32, #tpu.memory_space<vmem>>, vector<16x3xf32>,
    %c16_78 = arith.constant 16 : index
    %c0_79 = arith.constant 0 : index
    %100 = vector.load %arg27[%c16_78, %c0_79] : memref<384x16xf32, #tpu.memory_space<vmem>>, vector<16x4xf32>
    tpu.vector_store %arg27[%c16_78, %c0_79], %95 {strides = array<i32>} : memref<384x16xf32, #tpu.memory_space<vmem>>, vector<16x4xf32>,
    %101 = vector.extract_strided_slice %95 {offsets = [0, 1], sizes = [16, 3], strides = [1, 1]} : vector<16x4xf32> to vector<16x3xf32>
    %c32_80 = arith.constant 32 : index
    %c0_81 = arith.constant 0 : index
    %102 = vector.load %arg27[%c32_80, %c0_81] : memref<384x16xf32, #tpu.memory_space<vmem>>, vector<16x3xf32>
    tpu.vector_store %arg27[%c32_80, %c0_81], %101 {strides = array<i32>} : memref<384x16xf32, #tpu.memory_space<vmem>>, vector<16x3xf32>,
    %c32_82 = arith.constant 32 : index
    %c3_83 = arith.constant 3 : index
    %103 = vector.load %arg27[%c32_82, %c3_83] : memref<384x16xf32, #tpu.memory_space<vmem>>, vector<16x1xf32>
    tpu.vector_store %arg27[%c32_82, %c3_83], %96 {strides = array<i32>} : memref<384x16xf32, #tpu.memory_space<vmem>>, vector<16x1xf32>,
    %c0_84 = arith.constant 0 : index
    %c0_85 = arith.constant 0 : index
    %104 = vector.load %arg6[%c0_84, %c0_85] : memref<32x48xf32, #tpu.memory_space<vmem>>, vector<32x48xf32>
    %c0_86 = arith.constant 0 : index
    %c0_87 = arith.constant 0 : index
    %105 = vector.load %arg27[%c0_86, %c0_87] : memref<384x16xf32, #tpu.memory_space<vmem>>, vector<48x4xf32>
    %cst_88 = arith.constant dense<0.000000e+00> : vector<32x4xf32>
    %106 = tpu.matmul %104, %105, %cst_88 {dimension_numbers = #tpu.dot_dimension_numbers<[1], [0], [0], [1], [0, 0, 1, 1], [], []>} : vector<32x48xf32>, vector<48x4xf32>, vector<32x4xf32> -> vector<32x4xf32>
    %c0_89 = arith.constant 0 : index
    %c4 = arith.constant 4 : index
    %107 = vector.load %arg25[%c0_89, %c4] : memref<128x23xf32, #tpu.memory_space<vmem>>, vector<32x1xf32>
    %108 = vector.broadcast %107 : vector<32x1xf32> to vector<32x4xf32>
    %109 = arith.addf %106, %108 : vector<32x4xf32>
    %110 = math.tanh %109 : vector<32x4xf32>
    %cst_90 = arith.constant 0.000000e+00 : f32
    %111 = vector.broadcast %cst_90 : f32 to vector<32x1xf32>
    %c0_91 = arith.constant 0 : index
    %c0_92 = arith.constant 0 : index
    %112 = vector.load %arg27[%c0_91, %c0_92] : memref<384x16xf32, #tpu.memory_space<vmem>>, vector<32x1xf32>
    tpu.vector_store %arg27[%c0_91, %c0_92], %111 {strides = array<i32>} : memref<384x16xf32, #tpu.memory_space<vmem>>, vector<32x1xf32>,
    %113 = vector.extract_strided_slice %110 {offsets = [0, 0], sizes = [32, 3], strides = [1, 1]} : vector<32x4xf32> to vector<32x3xf32>
    %c0_93 = arith.constant 0 : index
    %c1_94 = arith.constant 1 : index
    %114 = vector.load %arg27[%c0_93, %c1_94] : memref<384x16xf32, #tpu.memory_space<vmem>>, vector<32x3xf32>
    tpu.vector_store %arg27[%c0_93, %c1_94], %113 {strides = array<i32>} : memref<384x16xf32, #tpu.memory_space<vmem>>, vector<32x3xf32>,
    %c32_95 = arith.constant 32 : index
    %c0_96 = arith.constant 0 : index
    %115 = vector.load %arg27[%c32_95, %c0_96] : memref<384x16xf32, #tpu.memory_space<vmem>>, vector<32x4xf32>
    tpu.vector_store %arg27[%c32_95, %c0_96], %110 {strides = array<i32>} : memref<384x16xf32, #tpu.memory_space<vmem>>, vector<32x4xf32>,
    %116 = vector.extract_strided_slice %110 {offsets = [0, 1], sizes = [32, 3], strides = [1, 1]} : vector<32x4xf32> to vector<32x3xf32>
    %c64 = arith.constant 64 : index
    %c0_97 = arith.constant 0 : index
    %117 = vector.load %arg27[%c64, %c0_97] : memref<384x16xf32, #tpu.memory_space<vmem>>, vector<32x3xf32>
    tpu.vector_store %arg27[%c64, %c0_97], %116 {strides = array<i32>} : memref<384x16xf32, #tpu.memory_space<vmem>>, vector<32x3xf32>,
    %c64_98 = arith.constant 64 : index
    %c3_99 = arith.constant 3 : index
    %118 = vector.load %arg27[%c64_98, %c3_99] : memref<384x16xf32, #tpu.memory_space<vmem>>, vector<32x1xf32>
    tpu.vector_store %arg27[%c64_98, %c3_99], %111 {strides = array<i32>} : memref<384x16xf32, #tpu.memory_space<vmem>>, vector<32x1xf32>,
    %c0_100 = arith.constant 0 : index
    %c0_101 = arith.constant 0 : index
    %119 = vector.load %arg7[%c0_100, %c0_101] : memref<32x96xf32, #tpu.memory_space<vmem>>, vector<32x96xf32>
    %c0_102 = arith.constant 0 : index
    %c0_103 = arith.constant 0 : index
    %120 = vector.load %arg27[%c0_102, %c0_103] : memref<384x16xf32, #tpu.memory_space<vmem>>, vector<96x4xf32>
    %cst_104 = arith.constant dense<0.000000e+00> : vector<32x4xf32>
    %121 = tpu.matmul %119, %120, %cst_104 {dimension_numbers = #tpu.dot_dimension_numbers<[1], [0], [0], [1], [0, 0, 1, 1], [], []>} : vector<32x96xf32>, vector<96x4xf32>, vector<32x4xf32> -> vector<32x4xf32>
    %c0_105 = arith.constant 0 : index
    %c5 = arith.constant 5 : index
    %122 = vector.load %arg25[%c0_105, %c5] : memref<128x23xf32, #tpu.memory_space<vmem>>, vector<32x1xf32>
    %123 = vector.broadcast %122 : vector<32x1xf32> to vector<32x4xf32>
    %124 = arith.addf %121, %123 : vector<32x4xf32>
    %125 = math.tanh %124 : vector<32x4xf32>
    %126 = tpu.iota {dimensions = array<i32: 0>} : vector<4x2xi32>
    %127 = tpu.iota {dimensions = array<i32: 1>} : vector<4x2xi32>
    %c2_i32_106 = arith.constant 2 : i32
    %128 = vector.broadcast %c2_i32_106 : i32 to vector<4x2xi32>
    %129 = arith.muli %128, %127 : vector<4x2xi32>
    %130 = arith.cmpi eq, %126, %129 : vector<4x2xi32>
    %131 = arith.extui %130 : vector<4x2xi1> to vector<4x2xi32>
    %132 = arith.sitofp %131 : vector<4x2xi32> to vector<4x2xf32>
    %c2_i32_107 = arith.constant 2 : i32
    %133 = vector.broadcast %c2_i32_107 : i32 to vector<4x2xi32>
    %134 = arith.muli %133, %127 : vector<4x2xi32>
    %c1_i32_108 = arith.constant 1 : i32
    %135 = vector.broadcast %c1_i32_108 : i32 to vector<4x2xi32>
    %136 = arith.addi %134, %135 : vector<4x2xi32>
    %137 = arith.cmpi eq, %126, %136 : vector<4x2xi32>
    %138 = arith.extui %137 : vector<4x2xi1> to vector<4x2xi32>
    %139 = arith.sitofp %138 : vector<4x2xi32> to vector<4x2xf32>
    %cst_109 = arith.constant dense<0.000000e+00> : vector<32x2xf32>
    %140 = tpu.matmul %125, %132, %cst_109 {dimension_numbers = #tpu.dot_dimension_numbers<[1], [0], [0], [1], [0, 0, 1, 1], [], []>} : vector<32x4xf32>, vector<4x2xf32>, vector<32x2xf32> -> vector<32x2xf32>
    %cst_110 = arith.constant dense<0.000000e+00> : vector<32x2xf32>
    %141 = tpu.matmul %125, %139, %cst_110 {dimension_numbers = #tpu.dot_dimension_numbers<[1], [0], [0], [1], [0, 0, 1, 1], [], []>} : vector<32x4xf32>, vector<4x2xf32>, vector<32x2xf32> -> vector<32x2xf32>
    %142 = arith.maximumf %140, %141 : vector<32x2xf32>
    %cst_111 = arith.constant 0.000000e+00 : f32
    %143 = vector.broadcast %cst_111 : f32 to vector<32x1xf32>
    %c0_112 = arith.constant 0 : index
    %c0_113 = arith.constant 0 : index
    %144 = vector.load %arg27[%c0_112, %c0_113] : memref<384x16xf32, #tpu.memory_space<vmem>>, vector<32x1xf32>
    tpu.vector_store %arg27[%c0_112, %c0_113], %143 {strides = array<i32>} : memref<384x16xf32, #tpu.memory_space<vmem>>, vector<32x1xf32>,
    %145 = vector.extract_strided_slice %142 {offsets = [0, 0], sizes = [32, 1], strides = [1, 1]} : vector<32x2xf32> to vector<32x1xf32>
    %c0_114 = arith.constant 0 : index
    %c1_115 = arith.constant 1 : index
    %146 = vector.load %arg27[%c0_114, %c1_115] : memref<384x16xf32, #tpu.memory_space<vmem>>, vector<32x1xf32>
    tpu.vector_store %arg27[%c0_114, %c1_115], %145 {strides = array<i32>} : memref<384x16xf32, #tpu.memory_space<vmem>>, vector<32x1xf32>,
    %c32_116 = arith.constant 32 : index
    %c0_117 = arith.constant 0 : index
    %147 = vector.load %arg27[%c32_116, %c0_117] : memref<384x16xf32, #tpu.memory_space<vmem>>, vector<32x2xf32>
    tpu.vector_store %arg27[%c32_116, %c0_117], %142 {strides = array<i32>} : memref<384x16xf32, #tpu.memory_space<vmem>>, vector<32x2xf32>,
    %148 = vector.extract_strided_slice %142 {offsets = [0, 1], sizes = [32, 1], strides = [1, 1]} : vector<32x2xf32> to vector<32x1xf32>
    %c64_118 = arith.constant 64 : index
    %c0_119 = arith.constant 0 : index
    %149 = vector.load %arg27[%c64_118, %c0_119] : memref<384x16xf32, #tpu.memory_space<vmem>>, vector<32x1xf32>
    tpu.vector_store %arg27[%c64_118, %c0_119], %148 {strides = array<i32>} : memref<384x16xf32, #tpu.memory_space<vmem>>, vector<32x1xf32>,
    %c64_120 = arith.constant 64 : index
    %c1_121 = arith.constant 1 : index
    %150 = vector.load %arg27[%c64_120, %c1_121] : memref<384x16xf32, #tpu.memory_space<vmem>>, vector<32x1xf32>
    tpu.vector_store %arg27[%c64_120, %c1_121], %143 {strides = array<i32>} : memref<384x16xf32, #tpu.memory_space<vmem>>, vector<32x1xf32>,
    %c0_122 = arith.constant 0 : index
    %c0_123 = arith.constant 0 : index
    %151 = vector.load %arg8[%c0_122, %c0_123] : memref<64x96xf32, #tpu.memory_space<vmem>>, vector<64x96xf32>
    %c0_124 = arith.constant 0 : index
    %c0_125 = arith.constant 0 : index
    %152 = vector.load %arg27[%c0_124, %c0_125] : memref<384x16xf32, #tpu.memory_space<vmem>>, vector<96x2xf32>
    %cst_126 = arith.constant dense<0.000000e+00> : vector<64x2xf32>
    %153 = tpu.matmul %151, %152, %cst_126 {dimension_numbers = #tpu.dot_dimension_numbers<[1], [0], [0], [1], [0, 0, 1, 1], [], []>} : vector<64x96xf32>, vector<96x2xf32>, vector<64x2xf32> -> vector<64x2xf32>
    %c0_127 = arith.constant 0 : index
    %c6 = arith.constant 6 : index
    %154 = vector.load %arg25[%c0_127, %c6] : memref<128x23xf32, #tpu.memory_space<vmem>>, vector<64x1xf32>
    %155 = vector.broadcast %154 : vector<64x1xf32> to vector<64x2xf32>
    %156 = arith.addf %153, %155 : vector<64x2xf32>
    %157 = math.tanh %156 : vector<64x2xf32>
    %cst_128 = arith.constant 0.000000e+00 : f32
    %158 = vector.broadcast %cst_128 : f32 to vector<64x1xf32>
    %c0_129 = arith.constant 0 : index
    %c0_130 = arith.constant 0 : index
    %159 = vector.load %arg27[%c0_129, %c0_130] : memref<384x16xf32, #tpu.memory_space<vmem>>, vector<64x1xf32>
    tpu.vector_store %arg27[%c0_129, %c0_130], %158 {strides = array<i32>} : memref<384x16xf32, #tpu.memory_space<vmem>>, vector<64x1xf32>,
    %160 = vector.extract_strided_slice %157 {offsets = [0, 0], sizes = [64, 1], strides = [1, 1]} : vector<64x2xf32> to vector<64x1xf32>
    %c0_131 = arith.constant 0 : index
    %c1_132 = arith.constant 1 : index
    %161 = vector.load %arg27[%c0_131, %c1_132] : memref<384x16xf32, #tpu.memory_space<vmem>>, vector<64x1xf32>
    tpu.vector_store %arg27[%c0_131, %c1_132], %160 {strides = array<i32>} : memref<384x16xf32, #tpu.memory_space<vmem>>, vector<64x1xf32>,
    %c64_133 = arith.constant 64 : index
    %c0_134 = arith.constant 0 : index
    %162 = vector.load %arg27[%c64_133, %c0_134] : memref<384x16xf32, #tpu.memory_space<vmem>>, vector<64x2xf32>
    tpu.vector_store %arg27[%c64_133, %c0_134], %157 {strides = array<i32>} : memref<384x16xf32, #tpu.memory_space<vmem>>, vector<64x2xf32>,
    %163 = vector.extract_strided_slice %157 {offsets = [0, 1], sizes = [64, 1], strides = [1, 1]} : vector<64x2xf32> to vector<64x1xf32>
    %c128 = arith.constant 128 : index
    %c0_135 = arith.constant 0 : index
    %164 = vector.load %arg27[%c128, %c0_135] : memref<384x16xf32, #tpu.memory_space<vmem>>, vector<64x1xf32>
    tpu.vector_store %arg27[%c128, %c0_135], %163 {strides = array<i32>} : memref<384x16xf32, #tpu.memory_space<vmem>>, vector<64x1xf32>,
    %c128_136 = arith.constant 128 : index
    %c1_137 = arith.constant 1 : index
    %165 = vector.load %arg27[%c128_136, %c1_137] : memref<384x16xf32, #tpu.memory_space<vmem>>, vector<64x1xf32>
    tpu.vector_store %arg27[%c128_136, %c1_137], %158 {strides = array<i32>} : memref<384x16xf32, #tpu.memory_space<vmem>>, vector<64x1xf32>,
    %c0_138 = arith.constant 0 : index
    %c0_139 = arith.constant 0 : index
    %166 = vector.load %arg9[%c0_138, %c0_139] : memref<64x192xf32, #tpu.memory_space<vmem>>, vector<64x192xf32>
    %c0_140 = arith.constant 0 : index
    %c0_141 = arith.constant 0 : index
    %167 = vector.load %arg27[%c0_140, %c0_141] : memref<384x16xf32, #tpu.memory_space<vmem>>, vector<192x2xf32>
    %cst_142 = arith.constant dense<0.000000e+00> : vector<64x2xf32>
    %168 = tpu.matmul %166, %167, %cst_142 {dimension_numbers = #tpu.dot_dimension_numbers<[1], [0], [0], [1], [0, 0, 1, 1], [], []>} : vector<64x192xf32>, vector<192x2xf32>, vector<64x2xf32> -> vector<64x2xf32>
    %c0_143 = arith.constant 0 : index
    %c7_144 = arith.constant 7 : index
    %169 = vector.load %arg25[%c0_143, %c7_144] : memref<128x23xf32, #tpu.memory_space<vmem>>, vector<64x1xf32>
    %170 = vector.broadcast %169 : vector<64x1xf32> to vector<64x2xf32>
    %171 = arith.addf %168, %170 : vector<64x2xf32>
    %172 = math.tanh %171 : vector<64x2xf32>
    %173 = vector.extract_strided_slice %172 {offsets = [0, 0], sizes = [64, 1], strides = [1, 1]} : vector<64x2xf32> to vector<64x1xf32>
    %174 = vector.extract_strided_slice %172 {offsets = [0, 1], sizes = [64, 1], strides = [1, 1]} : vector<64x2xf32> to vector<64x1xf32>
    %175 = arith.maximumf %173, %174 : vector<64x1xf32>
    %cst_145 = arith.constant 0.000000e+00 : f32
    %176 = vector.broadcast %cst_145 : f32 to vector<64x1xf32>
    %c0_146 = arith.constant 0 : index
    %c0_147 = arith.constant 0 : index
    %177 = vector.load %arg27[%c0_146, %c0_147] : memref<384x16xf32, #tpu.memory_space<vmem>>, vector<64x1xf32>
    tpu.vector_store %arg27[%c0_146, %c0_147], %176 {strides = array<i32>} : memref<384x16xf32, #tpu.memory_space<vmem>>, vector<64x1xf32>,
    %c64_148 = arith.constant 64 : index
    %c0_149 = arith.constant 0 : index
    %178 = vector.load %arg27[%c64_148, %c0_149] : memref<384x16xf32, #tpu.memory_space<vmem>>, vector<64x1xf32>
    tpu.vector_store %arg27[%c64_148, %c0_149], %175 {strides = array<i32>} : memref<384x16xf32, #tpu.memory_space<vmem>>, vector<64x1xf32>,
    %c128_150 = arith.constant 128 : index
    %c0_151 = arith.constant 0 : index
    %179 = vector.load %arg27[%c128_150, %c0_151] : memref<384x16xf32, #tpu.memory_space<vmem>>, vector<64x1xf32>
    tpu.vector_store %arg27[%c128_150, %c0_151], %176 {strides = array<i32>} : memref<384x16xf32, #tpu.memory_space<vmem>>, vector<64x1xf32>,
    %c0_152 = arith.constant 0 : index
    %c0_153 = arith.constant 0 : index
    %180 = vector.load %arg10[%c0_152, %c0_153] : memref<128x192xf32, #tpu.memory_space<vmem>>, vector<128x192xf32>
    %c0_154 = arith.constant 0 : index
    %c0_155 = arith.constant 0 : index
    %181 = vector.load %arg27[%c0_154, %c0_155] : memref<384x16xf32, #tpu.memory_space<vmem>>, vector<192x1xf32>
    %cst_156 = arith.constant dense<0.000000e+00> : vector<128x1xf32>
    %182 = tpu.matmul %180, %181, %cst_156 {dimension_numbers = #tpu.dot_dimension_numbers<[1], [0], [0], [1], [0, 0, 1, 1], [], []>} : vector<128x192xf32>, vector<192x1xf32>, vector<128x1xf32> -> vector<128x1xf32>
    %c0_157 = arith.constant 0 : index
    %c8_158 = arith.constant 8 : index
    %183 = vector.load %arg25[%c0_157, %c8_158] : memref<128x23xf32, #tpu.memory_space<vmem>>, vector<128x1xf32>
    %184 = arith.addf %182, %183 : vector<128x1xf32>
    %185 = math.tanh %184 : vector<128x1xf32>
    %cst_159 = arith.constant 0.000000e+00 : f32
    %186 = vector.broadcast %cst_159 : f32 to vector<128x1xf32>
    %c0_160 = arith.constant 0 : index
    %c0_161 = arith.constant 0 : index
    %187 = vector.load %arg27[%c0_160, %c0_161] : memref<384x16xf32, #tpu.memory_space<vmem>>, vector<128x1xf32>
    tpu.vector_store %arg27[%c0_160, %c0_161], %186 {strides = array<i32>} : memref<384x16xf32, #tpu.memory_space<vmem>>, vector<128x1xf32>,
    %c128_162 = arith.constant 128 : index
    %c0_163 = arith.constant 0 : index
    %188 = vector.load %arg27[%c128_162, %c0_163] : memref<384x16xf32, #tpu.memory_space<vmem>>, vector<128x1xf32>
    tpu.vector_store %arg27[%c128_162, %c0_163], %185 {strides = array<i32>} : memref<384x16xf32, #tpu.memory_space<vmem>>, vector<128x1xf32>,
    %c256 = arith.constant 256 : index
    %c0_164 = arith.constant 0 : index
    %189 = vector.load %arg27[%c256, %c0_164] : memref<384x16xf32, #tpu.memory_space<vmem>>, vector<128x1xf32>
    tpu.vector_store %arg27[%c256, %c0_164], %186 {strides = array<i32>} : memref<384x16xf32, #tpu.memory_space<vmem>>, vector<128x1xf32>,
    %c0_165 = arith.constant 0 : index
    %c0_166 = arith.constant 0 : index
    %190 = vector.load %arg11[%c0_165, %c0_166] : memref<128x384xf32, #tpu.memory_space<vmem>>, vector<128x384xf32>
    %c0_167 = arith.constant 0 : index
    %c0_168 = arith.constant 0 : index
    %191 = vector.load %arg27[%c0_167, %c0_168] : memref<384x16xf32, #tpu.memory_space<vmem>>, vector<384x1xf32>
    %cst_169 = arith.constant dense<0.000000e+00> : vector<128x1xf32>
    %192 = tpu.matmul %190, %191, %cst_169 {dimension_numbers = #tpu.dot_dimension_numbers<[1], [0], [0], [1], [0, 0, 1, 1], [], []>} : vector<128x384xf32>, vector<384x1xf32>, vector<128x1xf32> -> vector<128x1xf32>
    %c0_170 = arith.constant 0 : index
    %c9 = arith.constant 9 : index
    %193 = vector.load %arg25[%c0_170, %c9] : memref<128x23xf32, #tpu.memory_space<vmem>>, vector<128x1xf32>
    %194 = arith.addf %192, %193 : vector<128x1xf32>
    %195 = math.tanh %194 : vector<128x1xf32>
    %c0_171 = arith.constant 0 : index
    %c0_172 = arith.constant 0 : index
    %196 = vector.load %arg12[%c0_171, %c0_172] : memref<128x128xf32, #tpu.memory_space<vmem>>, vector<128x128xf32>
    %cst_173 = arith.constant dense<0.000000e+00> : vector<128x1xf32>
    %197 = tpu.matmul %196, %195, %cst_173 {dimension_numbers = #tpu.dot_dimension_numbers<[1], [0], [0], [1], [0, 0, 1, 1], [], []>} : vector<128x128xf32>, vector<128x1xf32>, vector<128x1xf32> -> vector<128x1xf32>
    %198 = vector.extract_strided_slice %197 {offsets = [0, 0], sizes = [64, 1], strides = [1, 1]} : vector<128x1xf32> to vector<64x1xf32>
    %199 = vector.extract_strided_slice %197 {offsets = [64, 0], sizes = [64, 1], strides = [1, 1]} : vector<128x1xf32> to vector<64x1xf32>
    %c0_174 = arith.constant 0 : index
    %c10 = arith.constant 10 : index
    %200 = vector.load %arg25[%c0_174, %c10] : memref<128x23xf32, #tpu.memory_space<vmem>>, vector<64x1xf32>
    %201 = tpu.iota {dimensions = array<i32: 1>} : vector<64x2xi32>
    %c0_i32 = arith.constant 0 : i32
    %202 = vector.broadcast %c0_i32 : i32 to vector<64x2xi32>
    %203 = arith.cmpi eq, %201, %202 : vector<64x2xi32>
    %204 = vector.shape_cast %198 : vector<64x1xf32> to vector<64x1xf32>
    %205 = vector.broadcast %204 : vector<64x1xf32> to vector<64x2xf32>
    %206 = vector.shape_cast %199 : vector<64x1xf32> to vector<64x1xf32>
    %207 = vector.broadcast %206 : vector<64x1xf32> to vector<64x2xf32>
    %208 = arith.select %203, %205, %207 : vector<64x2xi1>, vector<64x2xf32>
    %209 = vector.broadcast %200 : vector<64x1xf32> to vector<64x2xf32>
    %210 = arith.addf %208, %209 : vector<64x2xf32>
    %cst_175 = arith.constant 0.000000e+00 : f32
    %211 = vector.broadcast %cst_175 : f32 to vector<64x1xf32>
    %c0_176 = arith.constant 0 : index
    %c0_177 = arith.constant 0 : index
    %212 = vector.load %arg27[%c0_176, %c0_177] : memref<384x16xf32, #tpu.memory_space<vmem>>, vector<64x1xf32>
    tpu.vector_store %arg27[%c0_176, %c0_177], %211 {strides = array<i32>} : memref<384x16xf32, #tpu.memory_space<vmem>>, vector<64x1xf32>,
    %213 = vector.extract_strided_slice %210 {offsets = [0, 0], sizes = [64, 1], strides = [1, 1]} : vector<64x2xf32> to vector<64x1xf32>
    %c0_178 = arith.constant 0 : index
    %c1_179 = arith.constant 1 : index
    %214 = vector.load %arg27[%c0_178, %c1_179] : memref<384x16xf32, #tpu.memory_space<vmem>>, vector<64x1xf32>
    tpu.vector_store %arg27[%c0_178, %c1_179], %213 {strides = array<i32>} : memref<384x16xf32, #tpu.memory_space<vmem>>, vector<64x1xf32>,
    %c128_180 = arith.constant 128 : index
    %c0_181 = arith.constant 0 : index
    %215 = vector.load %arg27[%c128_180, %c0_181] : memref<384x16xf32, #tpu.memory_space<vmem>>, vector<64x2xf32>
    tpu.vector_store %arg27[%c128_180, %c0_181], %210 {strides = array<i32>} : memref<384x16xf32, #tpu.memory_space<vmem>>, vector<64x2xf32>,
    %216 = vector.extract_strided_slice %210 {offsets = [0, 1], sizes = [64, 1], strides = [1, 1]} : vector<64x2xf32> to vector<64x1xf32>
    %c256_182 = arith.constant 256 : index
    %c0_183 = arith.constant 0 : index
    %217 = vector.load %arg27[%c256_182, %c0_183] : memref<384x16xf32, #tpu.memory_space<vmem>>, vector<64x1xf32>
    tpu.vector_store %arg27[%c256_182, %c0_183], %216 {strides = array<i32>} : memref<384x16xf32, #tpu.memory_space<vmem>>, vector<64x1xf32>,
    %c256_184 = arith.constant 256 : index
    %c1_185 = arith.constant 1 : index
    %218 = vector.load %arg27[%c256_184, %c1_185] : memref<384x16xf32, #tpu.memory_space<vmem>>, vector<64x1xf32>
    tpu.vector_store %arg27[%c256_184, %c1_185], %211 {strides = array<i32>} : memref<384x16xf32, #tpu.memory_space<vmem>>, vector<64x1xf32>,
    %cst_186 = arith.constant 0.000000e+00 : f32
    %219 = vector.broadcast %cst_186 : f32 to vector<64x1xf32>
    %c64_187 = arith.constant 64 : index
    %c0_188 = arith.constant 0 : index
    %220 = vector.load %arg27[%c64_187, %c0_188] : memref<384x16xf32, #tpu.memory_space<vmem>>, vector<64x1xf32>
    tpu.vector_store %arg27[%c64_187, %c0_188], %219 {strides = array<i32>} : memref<384x16xf32, #tpu.memory_space<vmem>>, vector<64x1xf32>,
    %221 = vector.extract_strided_slice %172 {offsets = [0, 0], sizes = [64, 1], strides = [1, 1]} : vector<64x2xf32> to vector<64x1xf32>
    %c64_189 = arith.constant 64 : index
    %c1_190 = arith.constant 1 : index
    %222 = vector.load %arg27[%c64_189, %c1_190] : memref<384x16xf32, #tpu.memory_space<vmem>>, vector<64x1xf32>
    tpu.vector_store %arg27[%c64_189, %c1_190], %221 {strides = array<i32>} : memref<384x16xf32, #tpu.memory_space<vmem>>, vector<64x1xf32>,
    %c192 = arith.constant 192 : index
    %c0_191 = arith.constant 0 : index
    %223 = vector.load %arg27[%c192, %c0_191] : memref<384x16xf32, #tpu.memory_space<vmem>>, vector<64x2xf32>
    tpu.vector_store %arg27[%c192, %c0_191], %172 {strides = array<i32>} : memref<384x16xf32, #tpu.memory_space<vmem>>, vector<64x2xf32>,
    %224 = vector.extract_strided_slice %172 {offsets = [0, 1], sizes = [64, 1], strides = [1, 1]} : vector<64x2xf32> to vector<64x1xf32>
    %c320 = arith.constant 320 : index
    %c0_192 = arith.constant 0 : index
    %225 = vector.load %arg27[%c320, %c0_192] : memref<384x16xf32, #tpu.memory_space<vmem>>, vector<64x1xf32>
    tpu.vector_store %arg27[%c320, %c0_192], %224 {strides = array<i32>} : memref<384x16xf32, #tpu.memory_space<vmem>>, vector<64x1xf32>,
    %c320_193 = arith.constant 320 : index
    %c1_194 = arith.constant 1 : index
    %226 = vector.load %arg27[%c320_193, %c1_194] : memref<384x16xf32, #tpu.memory_space<vmem>>, vector<64x1xf32>
    tpu.vector_store %arg27[%c320_193, %c1_194], %219 {strides = array<i32>} : memref<384x16xf32, #tpu.memory_space<vmem>>, vector<64x1xf32>,
    %c0_195 = arith.constant 0 : index
    %c0_196 = arith.constant 0 : index
    %227 = vector.load %arg13[%c0_195, %c0_196] : memref<64x384xf32, #tpu.memory_space<vmem>>, vector<64x384xf32>
    %c0_197 = arith.constant 0 : index
    %c0_198 = arith.constant 0 : index
    %228 = vector.load %arg27[%c0_197, %c0_198] : memref<384x16xf32, #tpu.memory_space<vmem>>, vector<384x2xf32>
    %cst_199 = arith.constant dense<0.000000e+00> : vector<64x2xf32>
    %229 = tpu.matmul %227, %228, %cst_199 {dimension_numbers = #tpu.dot_dimension_numbers<[1], [0], [0], [1], [0, 0, 1, 1], [], []>} : vector<64x384xf32>, vector<384x2xf32>, vector<64x2xf32> -> vector<64x2xf32>
    %c0_200 = arith.constant 0 : index
    %c11 = arith.constant 11 : index
    %230 = vector.load %arg25[%c0_200, %c11] : memref<128x23xf32, #tpu.memory_space<vmem>>, vector<64x1xf32>
    %231 = vector.broadcast %230 : vector<64x1xf32> to vector<64x2xf32>
    %232 = arith.addf %229, %231 : vector<64x2xf32>
    %233 = math.tanh %232 : vector<64x2xf32>
    %cst_201 = arith.constant 0.000000e+00 : f32
    %234 = vector.broadcast %cst_201 : f32 to vector<64x1xf32>
    %c0_202 = arith.constant 0 : index
    %c0_203 = arith.constant 0 : index
    %235 = vector.load %arg27[%c0_202, %c0_203] : memref<384x16xf32, #tpu.memory_space<vmem>>, vector<64x1xf32>
    tpu.vector_store %arg27[%c0_202, %c0_203], %234 {strides = array<i32>} : memref<384x16xf32, #tpu.memory_space<vmem>>, vector<64x1xf32>,
    %236 = vector.extract_strided_slice %233 {offsets = [0, 0], sizes = [64, 1], strides = [1, 1]} : vector<64x2xf32> to vector<64x1xf32>
    %c0_204 = arith.constant 0 : index
    %c1_205 = arith.constant 1 : index
    %237 = vector.load %arg27[%c0_204, %c1_205] : memref<384x16xf32, #tpu.memory_space<vmem>>, vector<64x1xf32>
    tpu.vector_store %arg27[%c0_204, %c1_205], %236 {strides = array<i32>} : memref<384x16xf32, #tpu.memory_space<vmem>>, vector<64x1xf32>,
    %c64_206 = arith.constant 64 : index
    %c0_207 = arith.constant 0 : index
    %238 = vector.load %arg27[%c64_206, %c0_207] : memref<384x16xf32, #tpu.memory_space<vmem>>, vector<64x2xf32>
    tpu.vector_store %arg27[%c64_206, %c0_207], %233 {strides = array<i32>} : memref<384x16xf32, #tpu.memory_space<vmem>>, vector<64x2xf32>,
    %239 = vector.extract_strided_slice %233 {offsets = [0, 1], sizes = [64, 1], strides = [1, 1]} : vector<64x2xf32> to vector<64x1xf32>
    %c128_208 = arith.constant 128 : index
    %c0_209 = arith.constant 0 : index
    %240 = vector.load %arg27[%c128_208, %c0_209] : memref<384x16xf32, #tpu.memory_space<vmem>>, vector<64x1xf32>
    tpu.vector_store %arg27[%c128_208, %c0_209], %239 {strides = array<i32>} : memref<384x16xf32, #tpu.memory_space<vmem>>, vector<64x1xf32>,
    %c128_210 = arith.constant 128 : index
    %c1_211 = arith.constant 1 : index
    %241 = vector.load %arg27[%c128_210, %c1_211] : memref<384x16xf32, #tpu.memory_space<vmem>>, vector<64x1xf32>
    tpu.vector_store %arg27[%c128_210, %c1_211], %234 {strides = array<i32>} : memref<384x16xf32, #tpu.memory_space<vmem>>, vector<64x1xf32>,
    %c0_212 = arith.constant 0 : index
    %c0_213 = arith.constant 0 : index
    %242 = vector.load %arg14[%c0_212, %c0_213] : memref<64x192xf32, #tpu.memory_space<vmem>>, vector<64x192xf32>
    %c0_214 = arith.constant 0 : index
    %c0_215 = arith.constant 0 : index
    %243 = vector.load %arg27[%c0_214, %c0_215] : memref<384x16xf32, #tpu.memory_space<vmem>>, vector<192x2xf32>
    %cst_216 = arith.constant dense<0.000000e+00> : vector<64x2xf32>
    %244 = tpu.matmul %242, %243, %cst_216 {dimension_numbers = #tpu.dot_dimension_numbers<[1], [0], [0], [1], [0, 0, 1, 1], [], []>} : vector<64x192xf32>, vector<192x2xf32>, vector<64x2xf32> -> vector<64x2xf32>
    %c0_217 = arith.constant 0 : index
    %c12 = arith.constant 12 : index
    %245 = vector.load %arg25[%c0_217, %c12] : memref<128x23xf32, #tpu.memory_space<vmem>>, vector<64x1xf32>
    %246 = vector.broadcast %245 : vector<64x1xf32> to vector<64x2xf32>
    %247 = arith.addf %244, %246 : vector<64x2xf32>
    %248 = math.tanh %247 : vector<64x2xf32>
    %c0_218 = arith.constant 0 : index
    %c0_219 = arith.constant 0 : index
    %249 = vector.load %arg15[%c0_218, %c0_219] : memref<64x64xf32, #tpu.memory_space<vmem>>, vector<64x64xf32>
    %cst_220 = arith.constant dense<0.000000e+00> : vector<64x2xf32>
    %250 = tpu.matmul %249, %248, %cst_220 {dimension_numbers = #tpu.dot_dimension_numbers<[1], [0], [0], [1], [0, 0, 1, 1], [], []>} : vector<64x64xf32>, vector<64x2xf32>, vector<64x2xf32> -> vector<64x2xf32>
    %251 = vector.extract_strided_slice %250 {offsets = [0, 0], sizes = [32, 2], strides = [1, 1]} : vector<64x2xf32> to vector<32x2xf32>
    %252 = vector.extract_strided_slice %250 {offsets = [32, 0], sizes = [32, 2], strides = [1, 1]} : vector<64x2xf32> to vector<32x2xf32>
    %c0_221 = arith.constant 0 : index
    %c13 = arith.constant 13 : index
    %253 = vector.load %arg25[%c0_221, %c13] : memref<128x23xf32, #tpu.memory_space<vmem>>, vector<32x1xf32>
    %254 = tpu.iota {dimensions = array<i32: 0>} : vector<2x4xi32>
    %255 = tpu.iota {dimensions = array<i32: 1>} : vector<2x4xi32>
    %c2_i32_222 = arith.constant 2 : i32
    %256 = vector.broadcast %c2_i32_222 : i32 to vector<2x4xi32>
    %257 = arith.muli %256, %254 : vector<2x4xi32>
    %258 = arith.cmpi eq, %255, %257 : vector<2x4xi32>
    %259 = arith.extui %258 : vector<2x4xi1> to vector<2x4xi32>
    %260 = arith.sitofp %259 : vector<2x4xi32> to vector<2x4xf32>
    %c2_i32_223 = arith.constant 2 : i32
    %261 = vector.broadcast %c2_i32_223 : i32 to vector<2x4xi32>
    %262 = arith.muli %261, %254 : vector<2x4xi32>
    %c1_i32_224 = arith.constant 1 : i32
    %263 = vector.broadcast %c1_i32_224 : i32 to vector<2x4xi32>
    %264 = arith.addi %262, %263 : vector<2x4xi32>
    %265 = arith.cmpi eq, %255, %264 : vector<2x4xi32>
    %266 = arith.extui %265 : vector<2x4xi1> to vector<2x4xi32>
    %267 = arith.sitofp %266 : vector<2x4xi32> to vector<2x4xf32>
    %cst_225 = arith.constant dense<0.000000e+00> : vector<32x4xf32>
    %268 = tpu.matmul %251, %260, %cst_225 {dimension_numbers = #tpu.dot_dimension_numbers<[1], [0], [0], [1], [0, 0, 1, 1], [], []>} : vector<32x2xf32>, vector<2x4xf32>, vector<32x4xf32> -> vector<32x4xf32>
    %cst_226 = arith.constant dense<0.000000e+00> : vector<32x4xf32>
    %269 = tpu.matmul %252, %267, %cst_226 {dimension_numbers = #tpu.dot_dimension_numbers<[1], [0], [0], [1], [0, 0, 1, 1], [], []>} : vector<32x2xf32>, vector<2x4xf32>, vector<32x4xf32> -> vector<32x4xf32>
    %270 = arith.addf %268, %269 : vector<32x4xf32>
    %271 = vector.broadcast %253 : vector<32x1xf32> to vector<32x4xf32>
    %272 = arith.addf %270, %271 : vector<32x4xf32>
    %cst_227 = arith.constant 0.000000e+00 : f32
    %273 = vector.broadcast %cst_227 : f32 to vector<32x1xf32>
    %c0_228 = arith.constant 0 : index
    %c0_229 = arith.constant 0 : index
    %274 = vector.load %arg27[%c0_228, %c0_229] : memref<384x16xf32, #tpu.memory_space<vmem>>, vector<32x1xf32>
    tpu.vector_store %arg27[%c0_228, %c0_229], %273 {strides = array<i32>} : memref<384x16xf32, #tpu.memory_space<vmem>>, vector<32x1xf32>,
    %275 = vector.extract_strided_slice %272 {offsets = [0, 0], sizes = [32, 3], strides = [1, 1]} : vector<32x4xf32> to vector<32x3xf32>
    %c0_230 = arith.constant 0 : index
    %c1_231 = arith.constant 1 : index
    %276 = vector.load %arg27[%c0_230, %c1_231] : memref<384x16xf32, #tpu.memory_space<vmem>>, vector<32x3xf32>
    tpu.vector_store %arg27[%c0_230, %c1_231], %275 {strides = array<i32>} : memref<384x16xf32, #tpu.memory_space<vmem>>, vector<32x3xf32>,
    %c64_232 = arith.constant 64 : index
    %c0_233 = arith.constant 0 : index
    %277 = vector.load %arg27[%c64_232, %c0_233] : memref<384x16xf32, #tpu.memory_space<vmem>>, vector<32x4xf32>
    tpu.vector_store %arg27[%c64_232, %c0_233], %272 {strides = array<i32>} : memref<384x16xf32, #tpu.memory_space<vmem>>, vector<32x4xf32>,
    %278 = vector.extract_strided_slice %272 {offsets = [0, 1], sizes = [32, 3], strides = [1, 1]} : vector<32x4xf32> to vector<32x3xf32>
    %c128_234 = arith.constant 128 : index
    %c0_235 = arith.constant 0 : index
    %279 = vector.load %arg27[%c128_234, %c0_235] : memref<384x16xf32, #tpu.memory_space<vmem>>, vector<32x3xf32>
    tpu.vector_store %arg27[%c128_234, %c0_235], %278 {strides = array<i32>} : memref<384x16xf32, #tpu.memory_space<vmem>>, vector<32x3xf32>,
    %c128_236 = arith.constant 128 : index
    %c3_237 = arith.constant 3 : index
    %280 = vector.load %arg27[%c128_236, %c3_237] : memref<384x16xf32, #tpu.memory_space<vmem>>, vector<32x1xf32>
    tpu.vector_store %arg27[%c128_236, %c3_237], %273 {strides = array<i32>} : memref<384x16xf32, #tpu.memory_space<vmem>>, vector<32x1xf32>,
    %cst_238 = arith.constant 0.000000e+00 : f32
    %281 = vector.broadcast %cst_238 : f32 to vector<32x1xf32>
    %c32_239 = arith.constant 32 : index
    %c0_240 = arith.constant 0 : index
    %282 = vector.load %arg27[%c32_239, %c0_240] : memref<384x16xf32, #tpu.memory_space<vmem>>, vector<32x1xf32>
    tpu.vector_store %arg27[%c32_239, %c0_240], %281 {strides = array<i32>} : memref<384x16xf32, #tpu.memory_space<vmem>>, vector<32x1xf32>,
    %283 = vector.extract_strided_slice %125 {offsets = [0, 0], sizes = [32, 3], strides = [1, 1]} : vector<32x4xf32> to vector<32x3xf32>
    %c32_241 = arith.constant 32 : index
    %c1_242 = arith.constant 1 : index
    %284 = vector.load %arg27[%c32_241, %c1_242] : memref<384x16xf32, #tpu.memory_space<vmem>>, vector<32x3xf32>
    tpu.vector_store %arg27[%c32_241, %c1_242], %283 {strides = array<i32>} : memref<384x16xf32, #tpu.memory_space<vmem>>, vector<32x3xf32>,
    %c96 = arith.constant 96 : index
    %c0_243 = arith.constant 0 : index
    %285 = vector.load %arg27[%c96, %c0_243] : memref<384x16xf32, #tpu.memory_space<vmem>>, vector<32x4xf32>
    tpu.vector_store %arg27[%c96, %c0_243], %125 {strides = array<i32>} : memref<384x16xf32, #tpu.memory_space<vmem>>, vector<32x4xf32>,
    %286 = vector.extract_strided_slice %125 {offsets = [0, 1], sizes = [32, 3], strides = [1, 1]} : vector<32x4xf32> to vector<32x3xf32>
    %c160 = arith.constant 160 : index
    %c0_244 = arith.constant 0 : index
    %287 = vector.load %arg27[%c160, %c0_244] : memref<384x16xf32, #tpu.memory_space<vmem>>, vector<32x3xf32>
    tpu.vector_store %arg27[%c160, %c0_244], %286 {strides = array<i32>} : memref<384x16xf32, #tpu.memory_space<vmem>>, vector<32x3xf32>,
    %c160_245 = arith.constant 160 : index
    %c3_246 = arith.constant 3 : index
    %288 = vector.load %arg27[%c160_245, %c3_246] : memref<384x16xf32, #tpu.memory_space<vmem>>, vector<32x1xf32>
    tpu.vector_store %arg27[%c160_245, %c3_246], %281 {strides = array<i32>} : memref<384x16xf32, #tpu.memory_space<vmem>>, vector<32x1xf32>,
    %c0_247 = arith.constant 0 : index
    %c0_248 = arith.constant 0 : index
    %289 = vector.load %arg16[%c0_247, %c0_248] : memref<32x192xf32, #tpu.memory_space<vmem>>, vector<32x192xf32>
    %c0_249 = arith.constant 0 : index
    %c0_250 = arith.constant 0 : index
    %290 = vector.load %arg27[%c0_249, %c0_250] : memref<384x16xf32, #tpu.memory_space<vmem>>, vector<192x4xf32>
    %cst_251 = arith.constant dense<0.000000e+00> : vector<32x4xf32>
    %291 = tpu.matmul %289, %290, %cst_251 {dimension_numbers = #tpu.dot_dimension_numbers<[1], [0], [0], [1], [0, 0, 1, 1], [], []>} : vector<32x192xf32>, vector<192x4xf32>, vector<32x4xf32> -> vector<32x4xf32>
    %c0_252 = arith.constant 0 : index
    %c14 = arith.constant 14 : index
    %292 = vector.load %arg25[%c0_252, %c14] : memref<128x23xf32, #tpu.memory_space<vmem>>, vector<32x1xf32>
    %293 = vector.broadcast %292 : vector<32x1xf32> to vector<32x4xf32>
    %294 = arith.addf %291, %293 : vector<32x4xf32>
    %295 = math.tanh %294 : vector<32x4xf32>
    %cst_253 = arith.constant 0.000000e+00 : f32
    %296 = vector.broadcast %cst_253 : f32 to vector<32x1xf32>
    %c0_254 = arith.constant 0 : index
    %c0_255 = arith.constant 0 : index
    %297 = vector.load %arg27[%c0_254, %c0_255] : memref<384x16xf32, #tpu.memory_space<vmem>>, vector<32x1xf32>
    tpu.vector_store %arg27[%c0_254, %c0_255], %296 {strides = array<i32>} : memref<384x16xf32, #tpu.memory_space<vmem>>, vector<32x1xf32>,
    %298 = vector.extract_strided_slice %295 {offsets = [0, 0], sizes = [32, 3], strides = [1, 1]} : vector<32x4xf32> to vector<32x3xf32>
    %c0_256 = arith.constant 0 : index
    %c1_257 = arith.constant 1 : index
    %299 = vector.load %arg27[%c0_256, %c1_257] : memref<384x16xf32, #tpu.memory_space<vmem>>, vector<32x3xf32>
    tpu.vector_store %arg27[%c0_256, %c1_257], %298 {strides = array<i32>} : memref<384x16xf32, #tpu.memory_space<vmem>>, vector<32x3xf32>,
    %c32_258 = arith.constant 32 : index
    %c0_259 = arith.constant 0 : index
    %300 = vector.load %arg27[%c32_258, %c0_259] : memref<384x16xf32, #tpu.memory_space<vmem>>, vector<32x4xf32>
    tpu.vector_store %arg27[%c32_258, %c0_259], %295 {strides = array<i32>} : memref<384x16xf32, #tpu.memory_space<vmem>>, vector<32x4xf32>,
    %301 = vector.extract_strided_slice %295 {offsets = [0, 1], sizes = [32, 3], strides = [1, 1]} : vector<32x4xf32> to vector<32x3xf32>
    %c64_260 = arith.constant 64 : index
    %c0_261 = arith.constant 0 : index
    %302 = vector.load %arg27[%c64_260, %c0_261] : memref<384x16xf32, #tpu.memory_space<vmem>>, vector<32x3xf32>
    tpu.vector_store %arg27[%c64_260, %c0_261], %301 {strides = array<i32>} : memref<384x16xf32, #tpu.memory_space<vmem>>, vector<32x3xf32>,
    %c64_262 = arith.constant 64 : index
    %c3_263 = arith.constant 3 : index
    %303 = vector.load %arg27[%c64_262, %c3_263] : memref<384x16xf32, #tpu.memory_space<vmem>>, vector<32x1xf32>
    tpu.vector_store %arg27[%c64_262, %c3_263], %296 {strides = array<i32>} : memref<384x16xf32, #tpu.memory_space<vmem>>, vector<32x1xf32>,
    %c0_264 = arith.constant 0 : index
    %c0_265 = arith.constant 0 : index
    %304 = vector.load %arg17[%c0_264, %c0_265] : memref<32x96xf32, #tpu.memory_space<vmem>>, vector<32x96xf32>
    %c0_266 = arith.constant 0 : index
    %c0_267 = arith.constant 0 : index
    %305 = vector.load %arg27[%c0_266, %c0_267] : memref<384x16xf32, #tpu.memory_space<vmem>>, vector<96x4xf32>
    %cst_268 = arith.constant dense<0.000000e+00> : vector<32x4xf32>
    %306 = tpu.matmul %304, %305, %cst_268 {dimension_numbers = #tpu.dot_dimension_numbers<[1], [0], [0], [1], [0, 0, 1, 1], [], []>} : vector<32x96xf32>, vector<96x4xf32>, vector<32x4xf32> -> vector<32x4xf32>
    %c0_269 = arith.constant 0 : index
    %c15_270 = arith.constant 15 : index
    %307 = vector.load %arg25[%c0_269, %c15_270] : memref<128x23xf32, #tpu.memory_space<vmem>>, vector<32x1xf32>
    %308 = vector.broadcast %307 : vector<32x1xf32> to vector<32x4xf32>
    %309 = arith.addf %306, %308 : vector<32x4xf32>
    %310 = math.tanh %309 : vector<32x4xf32>
    %c0_271 = arith.constant 0 : index
    %c0_272 = arith.constant 0 : index
    %311 = vector.load %arg18[%c0_271, %c0_272] : memref<32x32xf32, #tpu.memory_space<vmem>>, vector<32x32xf32>
    %cst_273 = arith.constant dense<0.000000e+00> : vector<32x4xf32>
    %312 = tpu.matmul %311, %310, %cst_273 {dimension_numbers = #tpu.dot_dimension_numbers<[1], [0], [0], [1], [0, 0, 1, 1], [], []>} : vector<32x32xf32>, vector<32x4xf32>, vector<32x4xf32> -> vector<32x4xf32>
    %313 = vector.extract_strided_slice %312 {offsets = [0, 0], sizes = [16, 4], strides = [1, 1]} : vector<32x4xf32> to vector<16x4xf32>
    %314 = vector.extract_strided_slice %312 {offsets = [16, 0], sizes = [16, 4], strides = [1, 1]} : vector<32x4xf32> to vector<16x4xf32>
    %c0_274 = arith.constant 0 : index
    %c16_275 = arith.constant 16 : index
    %315 = vector.load %arg25[%c0_274, %c16_275] : memref<128x23xf32, #tpu.memory_space<vmem>>, vector<16x1xf32>
    %316 = tpu.iota {dimensions = array<i32: 0>} : vector<4x8xi32>
    %317 = tpu.iota {dimensions = array<i32: 1>} : vector<4x8xi32>
    %c2_i32_276 = arith.constant 2 : i32
    %318 = vector.broadcast %c2_i32_276 : i32 to vector<4x8xi32>
    %319 = arith.muli %318, %316 : vector<4x8xi32>
    %320 = arith.cmpi eq, %317, %319 : vector<4x8xi32>
    %321 = arith.extui %320 : vector<4x8xi1> to vector<4x8xi32>
    %322 = arith.sitofp %321 : vector<4x8xi32> to vector<4x8xf32>
    %c2_i32_277 = arith.constant 2 : i32
    %323 = vector.broadcast %c2_i32_277 : i32 to vector<4x8xi32>
    %324 = arith.muli %323, %316 : vector<4x8xi32>
    %c1_i32_278 = arith.constant 1 : i32
    %325 = vector.broadcast %c1_i32_278 : i32 to vector<4x8xi32>
    %326 = arith.addi %324, %325 : vector<4x8xi32>
    %327 = arith.cmpi eq, %317, %326 : vector<4x8xi32>
    %328 = arith.extui %327 : vector<4x8xi1> to vector<4x8xi32>
    %329 = arith.sitofp %328 : vector<4x8xi32> to vector<4x8xf32>
    %cst_279 = arith.constant dense<0.000000e+00> : vector<16x8xf32>
    %330 = tpu.matmul %313, %322, %cst_279 {dimension_numbers = #tpu.dot_dimension_numbers<[1], [0], [0], [1], [0, 0, 1, 1], [], []>} : vector<16x4xf32>, vector<4x8xf32>, vector<16x8xf32> -> vector<16x8xf32>
    %cst_280 = arith.constant dense<0.000000e+00> : vector<16x8xf32>
    %331 = tpu.matmul %314, %329, %cst_280 {dimension_numbers = #tpu.dot_dimension_numbers<[1], [0], [0], [1], [0, 0, 1, 1], [], []>} : vector<16x4xf32>, vector<4x8xf32>, vector<16x8xf32> -> vector<16x8xf32>
    %332 = arith.addf %330, %331 : vector<16x8xf32>
    %333 = vector.broadcast %315 : vector<16x1xf32> to vector<16x8xf32>
    %334 = arith.addf %332, %333 : vector<16x8xf32>
    %cst_281 = arith.constant 0.000000e+00 : f32
    %335 = vector.broadcast %cst_281 : f32 to vector<16x1xf32>
    %c0_282 = arith.constant 0 : index
    %c0_283 = arith.constant 0 : index
    %336 = vector.load %arg27[%c0_282, %c0_283] : memref<384x16xf32, #tpu.memory_space<vmem>>, vector<16x1xf32>
    tpu.vector_store %arg27[%c0_282, %c0_283], %335 {strides = array<i32>} : memref<384x16xf32, #tpu.memory_space<vmem>>, vector<16x1xf32>,
    %337 = vector.extract_strided_slice %334 {offsets = [0, 0], sizes = [16, 7], strides = [1, 1]} : vector<16x8xf32> to vector<16x7xf32>
    %c0_284 = arith.constant 0 : index
    %c1_285 = arith.constant 1 : index
    %338 = vector.load %arg27[%c0_284, %c1_285] : memref<384x16xf32, #tpu.memory_space<vmem>>, vector<16x7xf32>
    tpu.vector_store %arg27[%c0_284, %c1_285], %337 {strides = array<i32>} : memref<384x16xf32, #tpu.memory_space<vmem>>, vector<16x7xf32>,
    %c32_286 = arith.constant 32 : index
    %c0_287 = arith.constant 0 : index
    %339 = vector.load %arg27[%c32_286, %c0_287] : memref<384x16xf32, #tpu.memory_space<vmem>>, vector<16x8xf32>
    tpu.vector_store %arg27[%c32_286, %c0_287], %334 {strides = array<i32>} : memref<384x16xf32, #tpu.memory_space<vmem>>, vector<16x8xf32>,
    %340 = vector.extract_strided_slice %334 {offsets = [0, 1], sizes = [16, 7], strides = [1, 1]} : vector<16x8xf32> to vector<16x7xf32>
    %c64_288 = arith.constant 64 : index
    %c0_289 = arith.constant 0 : index
    %341 = vector.load %arg27[%c64_288, %c0_289] : memref<384x16xf32, #tpu.memory_space<vmem>>, vector<16x7xf32>
    tpu.vector_store %arg27[%c64_288, %c0_289], %340 {strides = array<i32>} : memref<384x16xf32, #tpu.memory_space<vmem>>, vector<16x7xf32>,
    %c64_290 = arith.constant 64 : index
    %c7_291 = arith.constant 7 : index
    %342 = vector.load %arg27[%c64_290, %c7_291] : memref<384x16xf32, #tpu.memory_space<vmem>>, vector<16x1xf32>
    tpu.vector_store %arg27[%c64_290, %c7_291], %335 {strides = array<i32>} : memref<384x16xf32, #tpu.memory_space<vmem>>, vector<16x1xf32>,
    %cst_292 = arith.constant 0.000000e+00 : f32
    %343 = vector.broadcast %cst_292 : f32 to vector<16x1xf32>
    %c16_293 = arith.constant 16 : index
    %c0_294 = arith.constant 0 : index
    %344 = vector.load %arg27[%c16_293, %c0_294] : memref<384x16xf32, #tpu.memory_space<vmem>>, vector<16x1xf32>
    tpu.vector_store %arg27[%c16_293, %c0_294], %343 {strides = array<i32>} : memref<384x16xf32, #tpu.memory_space<vmem>>, vector<16x1xf32>,
    %345 = vector.extract_strided_slice %78 {offsets = [0, 0], sizes = [16, 7], strides = [1, 1]} : vector<16x8xf32> to vector<16x7xf32>
    %c16_295 = arith.constant 16 : index
    %c1_296 = arith.constant 1 : index
    %346 = vector.load %arg27[%c16_295, %c1_296] : memref<384x16xf32, #tpu.memory_space<vmem>>, vector<16x7xf32>
    tpu.vector_store %arg27[%c16_295, %c1_296], %345 {strides = array<i32>} : memref<384x16xf32, #tpu.memory_space<vmem>>, vector<16x7xf32>,
    %c48 = arith.constant 48 : index
    %c0_297 = arith.constant 0 : index
    %347 = vector.load %arg27[%c48, %c0_297] : memref<384x16xf32, #tpu.memory_space<vmem>>, vector<16x8xf32>
    tpu.vector_store %arg27[%c48, %c0_297], %78 {strides = array<i32>} : memref<384x16xf32, #tpu.memory_space<vmem>>, vector<16x8xf32>,
    %348 = vector.extract_strided_slice %78 {offsets = [0, 1], sizes = [16, 7], strides = [1, 1]} : vector<16x8xf32> to vector<16x7xf32>
    %c80 = arith.constant 80 : index
    %c0_298 = arith.constant 0 : index
    %349 = vector.load %arg27[%c80, %c0_298] : memref<384x16xf32, #tpu.memory_space<vmem>>, vector<16x7xf32>
    tpu.vector_store %arg27[%c80, %c0_298], %348 {strides = array<i32>} : memref<384x16xf32, #tpu.memory_space<vmem>>, vector<16x7xf32>,
    %c80_299 = arith.constant 80 : index
    %c7_300 = arith.constant 7 : index
    %350 = vector.load %arg27[%c80_299, %c7_300] : memref<384x16xf32, #tpu.memory_space<vmem>>, vector<16x1xf32>
    tpu.vector_store %arg27[%c80_299, %c7_300], %343 {strides = array<i32>} : memref<384x16xf32, #tpu.memory_space<vmem>>, vector<16x1xf32>,
    %c0_301 = arith.constant 0 : index
    %c0_302 = arith.constant 0 : index
    %351 = vector.load %arg19[%c0_301, %c0_302] : memref<16x96xf32, #tpu.memory_space<vmem>>, vector<16x96xf32>
    %c0_303 = arith.constant 0 : index
    %c0_304 = arith.constant 0 : index
    %352 = vector.load %arg27[%c0_303, %c0_304] : memref<384x16xf32, #tpu.memory_space<vmem>>, vector<96x8xf32>
    %cst_305 = arith.constant dense<0.000000e+00> : vector<16x8xf32>
    %353 = tpu.matmul %351, %352, %cst_305 {dimension_numbers = #tpu.dot_dimension_numbers<[1], [0], [0], [1], [0, 0, 1, 1], [], []>} : vector<16x96xf32>, vector<96x8xf32>, vector<16x8xf32> -> vector<16x8xf32>
    %c0_306 = arith.constant 0 : index
    %c17 = arith.constant 17 : index
    %354 = vector.load %arg25[%c0_306, %c17] : memref<128x23xf32, #tpu.memory_space<vmem>>, vector<16x1xf32>
    %355 = vector.broadcast %354 : vector<16x1xf32> to vector<16x8xf32>
    %356 = arith.addf %353, %355 : vector<16x8xf32>
    %357 = math.tanh %356 : vector<16x8xf32>
    %cst_307 = arith.constant 0.000000e+00 : f32
    %358 = vector.broadcast %cst_307 : f32 to vector<16x1xf32>
    %c0_308 = arith.constant 0 : index
    %c0_309 = arith.constant 0 : index
    %359 = vector.load %arg27[%c0_308, %c0_309] : memref<384x16xf32, #tpu.memory_space<vmem>>, vector<16x1xf32>
    tpu.vector_store %arg27[%c0_308, %c0_309], %358 {strides = array<i32>} : memref<384x16xf32, #tpu.memory_space<vmem>>, vector<16x1xf32>,
    %360 = vector.extract_strided_slice %357 {offsets = [0, 0], sizes = [16, 7], strides = [1, 1]} : vector<16x8xf32> to vector<16x7xf32>
    %c0_310 = arith.constant 0 : index
    %c1_311 = arith.constant 1 : index
    %361 = vector.load %arg27[%c0_310, %c1_311] : memref<384x16xf32, #tpu.memory_space<vmem>>, vector<16x7xf32>
    tpu.vector_store %arg27[%c0_310, %c1_311], %360 {strides = array<i32>} : memref<384x16xf32, #tpu.memory_space<vmem>>, vector<16x7xf32>,
    %c16_312 = arith.constant 16 : index
    %c0_313 = arith.constant 0 : index
    %362 = vector.load %arg27[%c16_312, %c0_313] : memref<384x16xf32, #tpu.memory_space<vmem>>, vector<16x8xf32>
    tpu.vector_store %arg27[%c16_312, %c0_313], %357 {strides = array<i32>} : memref<384x16xf32, #tpu.memory_space<vmem>>, vector<16x8xf32>,
    %363 = vector.extract_strided_slice %357 {offsets = [0, 1], sizes = [16, 7], strides = [1, 1]} : vector<16x8xf32> to vector<16x7xf32>
    %c32_314 = arith.constant 32 : index
    %c0_315 = arith.constant 0 : index
    %364 = vector.load %arg27[%c32_314, %c0_315] : memref<384x16xf32, #tpu.memory_space<vmem>>, vector<16x7xf32>
    tpu.vector_store %arg27[%c32_314, %c0_315], %363 {strides = array<i32>} : memref<384x16xf32, #tpu.memory_space<vmem>>, vector<16x7xf32>,
    %c32_316 = arith.constant 32 : index
    %c7_317 = arith.constant 7 : index
    %365 = vector.load %arg27[%c32_316, %c7_317] : memref<384x16xf32, #tpu.memory_space<vmem>>, vector<16x1xf32>
    tpu.vector_store %arg27[%c32_316, %c7_317], %358 {strides = array<i32>} : memref<384x16xf32, #tpu.memory_space<vmem>>, vector<16x1xf32>,
    %c0_318 = arith.constant 0 : index
    %c0_319 = arith.constant 0 : index
    %366 = vector.load %arg20[%c0_318, %c0_319] : memref<16x48xf32, #tpu.memory_space<vmem>>, vector<16x48xf32>
    %c0_320 = arith.constant 0 : index
    %c0_321 = arith.constant 0 : index
    %367 = vector.load %arg27[%c0_320, %c0_321] : memref<384x16xf32, #tpu.memory_space<vmem>>, vector<48x8xf32>
    %cst_322 = arith.constant dense<0.000000e+00> : vector<16x8xf32>
    %368 = tpu.matmul %366, %367, %cst_322 {dimension_numbers = #tpu.dot_dimension_numbers<[1], [0], [0], [1], [0, 0, 1, 1], [], []>} : vector<16x48xf32>, vector<48x8xf32>, vector<16x8xf32> -> vector<16x8xf32>
    %c0_323 = arith.constant 0 : index
    %c18 = arith.constant 18 : index
    %369 = vector.load %arg25[%c0_323, %c18] : memref<128x23xf32, #tpu.memory_space<vmem>>, vector<16x1xf32>
    %370 = vector.broadcast %369 : vector<16x1xf32> to vector<16x8xf32>
    %371 = arith.addf %368, %370 : vector<16x8xf32>
    %372 = math.tanh %371 : vector<16x8xf32>
    %c0_324 = arith.constant 0 : index
    %c0_325 = arith.constant 0 : index
    %373 = vector.load %arg21[%c0_324, %c0_325] : memref<16x16xf32, #tpu.memory_space<vmem>>, vector<16x16xf32>
    %cst_326 = arith.constant dense<0.000000e+00> : vector<16x8xf32>
    %374 = tpu.matmul %373, %372, %cst_326 {dimension_numbers = #tpu.dot_dimension_numbers<[1], [0], [0], [1], [0, 0, 1, 1], [], []>} : vector<16x16xf32>, vector<16x8xf32>, vector<16x8xf32> -> vector<16x8xf32>
    %375 = vector.extract_strided_slice %374 {offsets = [0, 0], sizes = [8, 8], strides = [1, 1]} : vector<16x8xf32> to vector<8x8xf32>
    %376 = vector.extract_strided_slice %374 {offsets = [8, 0], sizes = [8, 8], strides = [1, 1]} : vector<16x8xf32> to vector<8x8xf32>
    %c0_327 = arith.constant 0 : index
    %c19 = arith.constant 19 : index
    %377 = vector.load %arg25[%c0_327, %c19] : memref<128x23xf32, #tpu.memory_space<vmem>>, vector<8x1xf32>
    %378 = tpu.iota {dimensions = array<i32: 0>} : vector<8x16xi32>
    %379 = tpu.iota {dimensions = array<i32: 1>} : vector<8x16xi32>
    %c2_i32_328 = arith.constant 2 : i32
    %380 = vector.broadcast %c2_i32_328 : i32 to vector<8x16xi32>
    %381 = arith.muli %380, %378 : vector<8x16xi32>
    %382 = arith.cmpi eq, %379, %381 : vector<8x16xi32>
    %383 = arith.extui %382 : vector<8x16xi1> to vector<8x16xi32>
    %384 = arith.sitofp %383 : vector<8x16xi32> to vector<8x16xf32>
    %c2_i32_329 = arith.constant 2 : i32
    %385 = vector.broadcast %c2_i32_329 : i32 to vector<8x16xi32>
    %386 = arith.muli %385, %378 : vector<8x16xi32>
    %c1_i32_330 = arith.constant 1 : i32
    %387 = vector.broadcast %c1_i32_330 : i32 to vector<8x16xi32>
    %388 = arith.addi %386, %387 : vector<8x16xi32>
    %389 = arith.cmpi eq, %379, %388 : vector<8x16xi32>
    %390 = arith.extui %389 : vector<8x16xi1> to vector<8x16xi32>
    %391 = arith.sitofp %390 : vector<8x16xi32> to vector<8x16xf32>
    %cst_331 = arith.constant dense<0.000000e+00> : vector<8x16xf32>
    %392 = tpu.matmul %375, %384, %cst_331 {dimension_numbers = #tpu.dot_dimension_numbers<[1], [0], [0], [1], [0, 0, 1, 1], [], []>} : vector<8x8xf32>, vector<8x16xf32>, vector<8x16xf32> -> vector<8x16xf32>
    %cst_332 = arith.constant dense<0.000000e+00> : vector<8x16xf32>
    %393 = tpu.matmul %376, %391, %cst_332 {dimension_numbers = #tpu.dot_dimension_numbers<[1], [0], [0], [1], [0, 0, 1, 1], [], []>} : vector<8x8xf32>, vector<8x16xf32>, vector<8x16xf32> -> vector<8x16xf32>
    %394 = arith.addf %392, %393 : vector<8x16xf32>
    %395 = vector.broadcast %377 : vector<8x1xf32> to vector<8x16xf32>
    %396 = arith.addf %394, %395 : vector<8x16xf32>
    %cst_333 = arith.constant 0.000000e+00 : f32
    %397 = vector.broadcast %cst_333 : f32 to vector<8x1xf32>
    %c0_334 = arith.constant 0 : index
    %c0_335 = arith.constant 0 : index
    %398 = vector.load %arg27[%c0_334, %c0_335] : memref<384x16xf32, #tpu.memory_space<vmem>>, vector<8x1xf32>
    tpu.vector_store %arg27[%c0_334, %c0_335], %397 {strides = array<i32>} : memref<384x16xf32, #tpu.memory_space<vmem>>, vector<8x1xf32>,
    %399 = vector.extract_strided_slice %396 {offsets = [0, 0], sizes = [8, 15], strides = [1, 1]} : vector<8x16xf32> to vector<8x15xf32>
    %c0_336 = arith.constant 0 : index
    %c1_337 = arith.constant 1 : index
    %400 = vector.load %arg27[%c0_336, %c1_337] : memref<384x16xf32, #tpu.memory_space<vmem>>, vector<8x15xf32>
    tpu.vector_store %arg27[%c0_336, %c1_337], %399 {strides = array<i32>} : memref<384x16xf32, #tpu.memory_space<vmem>>, vector<8x15xf32>,
    %c16_338 = arith.constant 16 : index
    %c0_339 = arith.constant 0 : index
    %401 = vector.load %arg27[%c16_338, %c0_339] : memref<384x16xf32, #tpu.memory_space<vmem>>, vector<8x16xf32>
    tpu.vector_store %arg27[%c16_338, %c0_339], %396 {strides = array<i32>} : memref<384x16xf32, #tpu.memory_space<vmem>>, vector<8x16xf32>,
    %402 = vector.extract_strided_slice %396 {offsets = [0, 1], sizes = [8, 15], strides = [1, 1]} : vector<8x16xf32> to vector<8x15xf32>
    %c32_340 = arith.constant 32 : index
    %c0_341 = arith.constant 0 : index
    %403 = vector.load %arg27[%c32_340, %c0_341] : memref<384x16xf32, #tpu.memory_space<vmem>>, vector<8x15xf32>
    tpu.vector_store %arg27[%c32_340, %c0_341], %402 {strides = array<i32>} : memref<384x16xf32, #tpu.memory_space<vmem>>, vector<8x15xf32>,
    %c32_342 = arith.constant 32 : index
    %c15_343 = arith.constant 15 : index
    %404 = vector.load %arg27[%c32_342, %c15_343] : memref<384x16xf32, #tpu.memory_space<vmem>>, vector<8x1xf32>
    tpu.vector_store %arg27[%c32_342, %c15_343], %397 {strides = array<i32>} : memref<384x16xf32, #tpu.memory_space<vmem>>, vector<8x1xf32>,
    %cst_344 = arith.constant 0.000000e+00 : f32
    %405 = vector.broadcast %cst_344 : f32 to vector<8x1xf32>
    %c8_345 = arith.constant 8 : index
    %c0_346 = arith.constant 0 : index
    %406 = vector.load %arg27[%c8_345, %c0_346] : memref<384x16xf32, #tpu.memory_space<vmem>>, vector<8x1xf32>
    tpu.vector_store %arg27[%c8_345, %c0_346], %405 {strides = array<i32>} : memref<384x16xf32, #tpu.memory_space<vmem>>, vector<8x1xf32>,
    %407 = vector.extract_strided_slice %31 {offsets = [0, 0], sizes = [8, 15], strides = [1, 1]} : vector<8x16xf32> to vector<8x15xf32>
    %c8_347 = arith.constant 8 : index
    %c1_348 = arith.constant 1 : index
    %408 = vector.load %arg27[%c8_347, %c1_348] : memref<384x16xf32, #tpu.memory_space<vmem>>, vector<8x15xf32>
    tpu.vector_store %arg27[%c8_347, %c1_348], %407 {strides = array<i32>} : memref<384x16xf32, #tpu.memory_space<vmem>>, vector<8x15xf32>,
    %c24 = arith.constant 24 : index
    %c0_349 = arith.constant 0 : index
    %409 = vector.load %arg27[%c24, %c0_349] : memref<384x16xf32, #tpu.memory_space<vmem>>, vector<8x16xf32>
    tpu.vector_store %arg27[%c24, %c0_349], %31 {strides = array<i32>} : memref<384x16xf32, #tpu.memory_space<vmem>>, vector<8x16xf32>,
    %410 = vector.extract_strided_slice %31 {offsets = [0, 1], sizes = [8, 15], strides = [1, 1]} : vector<8x16xf32> to vector<8x15xf32>
    %c40 = arith.constant 40 : index
    %c0_350 = arith.constant 0 : index
    %411 = vector.load %arg27[%c40, %c0_350] : memref<384x16xf32, #tpu.memory_space<vmem>>, vector<8x15xf32>
    tpu.vector_store %arg27[%c40, %c0_350], %410 {strides = array<i32>} : memref<384x16xf32, #tpu.memory_space<vmem>>, vector<8x15xf32>,
    %c40_351 = arith.constant 40 : index
    %c15_352 = arith.constant 15 : index
    %412 = vector.load %arg27[%c40_351, %c15_352] : memref<384x16xf32, #tpu.memory_space<vmem>>, vector<8x1xf32>
    tpu.vector_store %arg27[%c40_351, %c15_352], %405 {strides = array<i32>} : memref<384x16xf32, #tpu.memory_space<vmem>>, vector<8x1xf32>,
    %c0_353 = arith.constant 0 : index
    %c0_354 = arith.constant 0 : index
    %413 = vector.load %arg22[%c0_353, %c0_354] : memref<8x48xf32, #tpu.memory_space<vmem>>, vector<8x48xf32>
    %c0_355 = arith.constant 0 : index
    %c0_356 = arith.constant 0 : index
    %414 = vector.load %arg27[%c0_355, %c0_356] : memref<384x16xf32, #tpu.memory_space<vmem>>, vector<48x16xf32>
    %cst_357 = arith.constant dense<0.000000e+00> : vector<8x16xf32>
    %415 = tpu.matmul %413, %414, %cst_357 {dimension_numbers = #tpu.dot_dimension_numbers<[1], [0], [0], [1], [0, 0, 1, 1], [], []>} : vector<8x48xf32>, vector<48x16xf32>, vector<8x16xf32> -> vector<8x16xf32>
    %c0_358 = arith.constant 0 : index
    %c20 = arith.constant 20 : index
    %416 = vector.load %arg25[%c0_358, %c20] : memref<128x23xf32, #tpu.memory_space<vmem>>, vector<8x1xf32>
    %417 = vector.broadcast %416 : vector<8x1xf32> to vector<8x16xf32>
    %418 = arith.addf %415, %417 : vector<8x16xf32>
    %419 = math.tanh %418 : vector<8x16xf32>
    %cst_359 = arith.constant 0.000000e+00 : f32
    %420 = vector.broadcast %cst_359 : f32 to vector<8x1xf32>
    %c0_360 = arith.constant 0 : index
    %c0_361 = arith.constant 0 : index
    %421 = vector.load %arg27[%c0_360, %c0_361] : memref<384x16xf32, #tpu.memory_space<vmem>>, vector<8x1xf32>
    tpu.vector_store %arg27[%c0_360, %c0_361], %420 {strides = array<i32>} : memref<384x16xf32, #tpu.memory_space<vmem>>, vector<8x1xf32>,
    %422 = vector.extract_strided_slice %419 {offsets = [0, 0], sizes = [8, 15], strides = [1, 1]} : vector<8x16xf32> to vector<8x15xf32>
    %c0_362 = arith.constant 0 : index
    %c1_363 = arith.constant 1 : index
    %423 = vector.load %arg27[%c0_362, %c1_363] : memref<384x16xf32, #tpu.memory_space<vmem>>, vector<8x15xf32>
    tpu.vector_store %arg27[%c0_362, %c1_363], %422 {strides = array<i32>} : memref<384x16xf32, #tpu.memory_space<vmem>>, vector<8x15xf32>,
    %c8_364 = arith.constant 8 : index
    %c0_365 = arith.constant 0 : index
    %424 = vector.load %arg27[%c8_364, %c0_365] : memref<384x16xf32, #tpu.memory_space<vmem>>, vector<8x16xf32>
    tpu.vector_store %arg27[%c8_364, %c0_365], %419 {strides = array<i32>} : memref<384x16xf32, #tpu.memory_space<vmem>>, vector<8x16xf32>,
    %425 = vector.extract_strided_slice %419 {offsets = [0, 1], sizes = [8, 15], strides = [1, 1]} : vector<8x16xf32> to vector<8x15xf32>
    %c16_366 = arith.constant 16 : index
    %c0_367 = arith.constant 0 : index
    %426 = vector.load %arg27[%c16_366, %c0_367] : memref<384x16xf32, #tpu.memory_space<vmem>>, vector<8x15xf32>
    tpu.vector_store %arg27[%c16_366, %c0_367], %425 {strides = array<i32>} : memref<384x16xf32, #tpu.memory_space<vmem>>, vector<8x15xf32>,
    %c16_368 = arith.constant 16 : index
    %c15_369 = arith.constant 15 : index
    %427 = vector.load %arg27[%c16_368, %c15_369] : memref<384x16xf32, #tpu.memory_space<vmem>>, vector<8x1xf32>
    tpu.vector_store %arg27[%c16_368, %c15_369], %420 {strides = array<i32>} : memref<384x16xf32, #tpu.memory_space<vmem>>, vector<8x1xf32>,
    %c0_370 = arith.constant 0 : index
    %c0_371 = arith.constant 0 : index
    %428 = vector.load %arg23[%c0_370, %c0_371] : memref<8x24xf32, #tpu.memory_space<vmem>>, vector<8x24xf32>
    %c0_372 = arith.constant 0 : index
    %c0_373 = arith.constant 0 : index
    %429 = vector.load %arg27[%c0_372, %c0_373] : memref<384x16xf32, #tpu.memory_space<vmem>>, vector<24x16xf32>
    %cst_374 = arith.constant dense<0.000000e+00> : vector<8x16xf32>
    %430 = tpu.matmul %428, %429, %cst_374 {dimension_numbers = #tpu.dot_dimension_numbers<[1], [0], [0], [1], [0, 0, 1, 1], [], []>} : vector<8x24xf32>, vector<24x16xf32>, vector<8x16xf32> -> vector<8x16xf32>
    %c0_375 = arith.constant 0 : index
    %c21 = arith.constant 21 : index
    %431 = vector.load %arg25[%c0_375, %c21] : memref<128x23xf32, #tpu.memory_space<vmem>>, vector<8x1xf32>
    %432 = vector.broadcast %431 : vector<8x1xf32> to vector<8x16xf32>
    %433 = arith.addf %430, %432 : vector<8x16xf32>
    %434 = math.tanh %433 : vector<8x16xf32>
    %c0_376 = arith.constant 0 : index
    %c0_377 = arith.constant 0 : index
    %435 = vector.load %arg24[%c0_376, %c0_377] : memref<3x8xf32, #tpu.memory_space<vmem>>, vector<3x8xf32>
    %cst_378 = arith.constant dense<0.000000e+00> : vector<3x16xf32>
    %436 = tpu.matmul %435, %434, %cst_378 {dimension_numbers = #tpu.dot_dimension_numbers<[1], [0], [0], [1], [0, 0, 1, 1], [], []>} : vector<3x8xf32>, vector<8x16xf32>, vector<3x16xf32> -> vector<3x16xf32>
    %c0_379 = arith.constant 0 : index
    %c22 = arith.constant 22 : index
    %437 = vector.load %arg25[%c0_379, %c22] : memref<128x23xf32, #tpu.memory_space<vmem>>, vector<3x1xf32>
    %438 = vector.broadcast %437 : vector<3x1xf32> to vector<3x16xf32>
    %439 = arith.addf %436, %438 : vector<3x16xf32>
    %c0_380 = arith.constant 0 : index
    %c0_381 = arith.constant 0 : index
    %c0_382 = arith.constant 0 : index
    %440 = vector.load %arg26[%c0_380, %c0_381, %c0_382] : memref<1x3x16xf32, #tpu.memory_space<vmem>>, vector<1x3x16xf32>
    %441 = vector.shape_cast %440 : vector<1x3x16xf32> to vector<3x16xf32>
    %442 = vector.shape_cast %439 : vector<3x16xf32> to vector<1x3x16xf32>
    tpu.vector_store %arg26[%c0_380, %c0_381, %c0_382], %442 {strides = array<i32>} : memref<1x3x16xf32, #tpu.memory_space<vmem>>, vector<1x3x16xf32>,
    return
  }
  func.func @transform_0(%arg0: i32) -> (i32, i32, i32) {
    %c0_i32 = arith.constant 0 : i32
    %c0_i32_0 = arith.constant 0 : i32
    %c0_i32_1 = arith.constant 0 : i32
    return %arg0, %c0_i32, %c0_i32_0 : i32, i32, i32
  }
  func.func @transform_1(%arg0: i32) -> (i32, i32) {
    %c0_i32 = arith.constant 0 : i32
    %c0_i32_0 = arith.constant 0 : i32
    %c0_i32_1 = arith.constant 0 : i32
    return %c0_i32, %c0_i32_0 : i32, i32
  }
  func.func @transform_2(%arg0: i32) -> (i32, i32) {
    %c0_i32 = arith.constant 0 : i32
    %c0_i32_0 = arith.constant 0 : i32
    %c0_i32_1 = arith.constant 0 : i32
    return %c0_i32, %c0_i32_0 : i32, i32
  }
  func.func @transform_3(%arg0: i32) -> (i32, i32) {
    %c0_i32 = arith.constant 0 : i32
    %c0_i32_0 = arith.constant 0 : i32
    %c0_i32_1 = arith.constant 0 : i32
    return %c0_i32, %c0_i32_0 : i32, i32
  }
  func.func @transform_4(%arg0: i32) -> (i32, i32) {
    %c0_i32 = arith.constant 0 : i32
    %c0_i32_0 = arith.constant 0 : i32
    %c0_i32_1 = arith.constant 0 : i32
    return %c0_i32, %c0_i32_0 : i32, i32
  }
  func.func @transform_5(%arg0: i32) -> (i32, i32) {
    %c0_i32 = arith.constant 0 : i32
    %c0_i32_0 = arith.constant 0 : i32
    %c0_i32_1 = arith.constant 0 : i32
    return %c0_i32, %c0_i32_0 : i32, i32
  }
  func.func @transform_6(%arg0: i32) -> (i32, i32) {
    %c0_i32 = arith.constant 0 : i32
    %c0_i32_0 = arith.constant 0 : i32
    %c0_i32_1 = arith.constant 0 : i32
    return %c0_i32, %c0_i32_0 : i32, i32
  }
  func.func @transform_7(%arg0: i32) -> (i32, i32) {
    %c0_i32 = arith.constant 0 : i32
    %c0_i32_0 = arith.constant 0 : i32
    %c0_i32_1 = arith.constant 0 : i32
    return %c0_i32, %c0_i32_0 : i32, i32
  }
  func.func @transform_8(%arg0: i32) -> (i32, i32) {
    %c0_i32 = arith.constant 0 : i32
    %c0_i32_0 = arith.constant 0 : i32
    %c0_i32_1 = arith.constant 0 : i32
    return %c0_i32, %c0_i32_0 : i32, i32
  }
  func.func @transform_9(%arg0: i32) -> (i32, i32) {
    %c0_i32 = arith.constant 0 : i32
    %c0_i32_0 = arith.constant 0 : i32
    %c0_i32_1 = arith.constant 0 : i32
    return %c0_i32, %c0_i32_0 : i32, i32
  }
  func.func @transform_10(%arg0: i32) -> (i32, i32) {
    %c0_i32 = arith.constant 0 : i32
    %c0_i32_0 = arith.constant 0 : i32
    %c0_i32_1 = arith.constant 0 : i32
    return %c0_i32, %c0_i32_0 : i32, i32
  }
  func.func @transform_11(%arg0: i32) -> (i32, i32) {
    %c0_i32 = arith.constant 0 : i32
    %c0_i32_0 = arith.constant 0 : i32
    %c0_i32_1 = arith.constant 0 : i32
    return %c0_i32, %c0_i32_0 : i32, i32
  }
  func.func @transform_12(%arg0: i32) -> (i32, i32) {
    %c0_i32 = arith.constant 0 : i32
    %c0_i32_0 = arith.constant 0 : i32
    %c0_i32_1 = arith.constant 0 : i32
    return %c0_i32, %c0_i32_0 : i32, i32
  }
  func.func @transform_13(%arg0: i32) -> (i32, i32) {
    %c0_i32 = arith.constant 0 : i32
    %c0_i32_0 = arith.constant 0 : i32
    %c0_i32_1 = arith.constant 0 : i32
    return %c0_i32, %c0_i32_0 : i32, i32
  }
  func.func @transform_14(%arg0: i32) -> (i32, i32) {
    %c0_i32 = arith.constant 0 : i32
    %c0_i32_0 = arith.constant 0 : i32
    %c0_i32_1 = arith.constant 0 : i32
    return %c0_i32, %c0_i32_0 : i32, i32
  }
  func.func @transform_15(%arg0: i32) -> (i32, i32) {
    %c0_i32 = arith.constant 0 : i32
    %c0_i32_0 = arith.constant 0 : i32
    %c0_i32_1 = arith.constant 0 : i32
    return %c0_i32, %c0_i32_0 : i32, i32
  }
  func.func @transform_16(%arg0: i32) -> (i32, i32) {
    %c0_i32 = arith.constant 0 : i32
    %c0_i32_0 = arith.constant 0 : i32
    %c0_i32_1 = arith.constant 0 : i32
    return %c0_i32, %c0_i32_0 : i32, i32
  }
  func.func @transform_17(%arg0: i32) -> (i32, i32) {
    %c0_i32 = arith.constant 0 : i32
    %c0_i32_0 = arith.constant 0 : i32
    %c0_i32_1 = arith.constant 0 : i32
    return %c0_i32, %c0_i32_0 : i32, i32
  }
  func.func @transform_18(%arg0: i32) -> (i32, i32) {
    %c0_i32 = arith.constant 0 : i32
    %c0_i32_0 = arith.constant 0 : i32
    %c0_i32_1 = arith.constant 0 : i32
    return %c0_i32, %c0_i32_0 : i32, i32
  }
  func.func @transform_19(%arg0: i32) -> (i32, i32) {
    %c0_i32 = arith.constant 0 : i32
    %c0_i32_0 = arith.constant 0 : i32
    %c0_i32_1 = arith.constant 0 : i32
    return %c0_i32, %c0_i32_0 : i32, i32
  }
  func.func @transform_20(%arg0: i32) -> (i32, i32) {
    %c0_i32 = arith.constant 0 : i32
    %c0_i32_0 = arith.constant 0 : i32
    %c0_i32_1 = arith.constant 0 : i32
    return %c0_i32, %c0_i32_0 : i32, i32
  }
  func.func @transform_21(%arg0: i32) -> (i32, i32) {
    %c0_i32 = arith.constant 0 : i32
    %c0_i32_0 = arith.constant 0 : i32
    %c0_i32_1 = arith.constant 0 : i32
    return %c0_i32, %c0_i32_0 : i32, i32
  }
  func.func @transform_22(%arg0: i32) -> (i32, i32) {
    %c0_i32 = arith.constant 0 : i32
    %c0_i32_0 = arith.constant 0 : i32
    %c0_i32_1 = arith.constant 0 : i32
    return %c0_i32, %c0_i32_0 : i32, i32
  }
  func.func @transform_23(%arg0: i32) -> (i32, i32) {
    %c0_i32 = arith.constant 0 : i32
    %c0_i32_0 = arith.constant 0 : i32
    %c0_i32_1 = arith.constant 0 : i32
    return %c0_i32, %c0_i32_0 : i32, i32
  }
  func.func @transform_24(%arg0: i32) -> (i32, i32) {
    %c0_i32 = arith.constant 0 : i32
    %c0_i32_0 = arith.constant 0 : i32
    %c0_i32_1 = arith.constant 0 : i32
    return %c0_i32, %c0_i32_0 : i32, i32
  }
  func.func @transform_25(%arg0: i32) -> (i32, i32, i32) {
    %c0_i32 = arith.constant 0 : i32
    %c0_i32_0 = arith.constant 0 : i32
    %c0_i32_1 = arith.constant 0 : i32
    return %arg0, %c0_i32, %c0_i32_0 : i32, i32, i32
  }
}

</mosaic_0001>

<llo_original>
// kernel: unet1d_wrap_forward.1
$region0: #{unet1d_wrap_forward.1}
  #allocation0 [shape = 'u32[]', space=smem, size = 0x4, offset = 0x4, fixed_abs, tag = 'smem constant byte address 0x4 - core index']
  #allocation1 [shape = 'u32[144,128]{1,0:T(1,128)}', space=vmem, size = 0x12000, scoped, tag = 'internal scratch']
  #allocation2 [shape = 'f32[384,16]{1,0:T(8,128)}', space=vmem, size = 0x30000, scoped, tag = 'scratch operand']
  %s0 = inlined_call_operand.vmem [shape: f32[2,8,16], index: 0, kind: input, shape index: {}]
  %s1 = inlined_call_operand.hbm [shape: f32[8,24], index: 1, kind: input, shape index: {}]
  %s2 = inlined_call_operand.hbm [shape: f32[8,24], index: 2, kind: input, shape index: {}]
  %s3 = inlined_call_operand.hbm [shape: f32[16,24], index: 3, kind: input, shape index: {}]
  %s4 = inlined_call_operand.hbm [shape: f32[16,48], index: 4, kind: input, shape index: {}]
  %s5 = inlined_call_operand.hbm [shape: f32[32,48], index: 5, kind: input, shape index: {}]
  %s6 = inlined_call_operand.hbm [shape: f32[32,96], index: 6, kind: input, shape index: {}]
  %s7 = inlined_call_operand.vmem [shape: f32[64,96], index: 7, kind: input, shape index: {}]
  %s8 = inlined_call_operand.hbm [shape: f32[64,192], index: 8, kind: input, shape index: {}]
  %s9 = inlined_call_operand.vmem [shape: f32[128,192], index: 9, kind: input, shape index: {}]
  %s10 = inlined_call_operand.vmem [shape: f32[128,384], index: 10, kind: input, shape index: {}]
  %s11 = inlined_call_operand.hbm [shape: f32[128,128], index: 11, kind: input, shape index: {}]
  %s12 = inlined_call_operand.vmem [shape: f32[64,384], index: 12, kind: input, shape index: {}]
  %s13 = inlined_call_operand.hbm [shape: f32[64,192], index: 13, kind: input, shape index: {}]
  %s14 = inlined_call_operand.hbm [shape: f32[64,64], index: 14, kind: input, shape index: {}]
  %s15 = inlined_call_operand.hbm [shape: f32[32,192], index: 15, kind: input, shape index: {}]
  %s16 = inlined_call_operand.vmem [shape: f32[32,96], index: 16, kind: input, shape index: {}]
  %s17 = inlined_call_operand.hbm [shape: f32[32,32], index: 17, kind: input, shape index: {}]
  %s18 = inlined_call_operand.vmem [shape: f32[16,96], index: 18, kind: input, shape index: {}]
  %s19 = inlined_call_operand.hbm [shape: f32[16,48], index: 19, kind: input, shape index: {}]
  %s20 = inlined_call_operand.hbm [shape: f32[16,16], index: 20, kind: input, shape index: {}]
  %s21 = inlined_call_operand.vmem [shape: f32[8,48], index: 21, kind: input, shape index: {}]
  %s22 = inlined_call_operand.vmem [shape: f32[8,24], index: 22, kind: input, shape index: {}]
  %s23 = inlined_call_operand.hbm [shape: f32[3,8], index: 23, kind: input, shape index: {}]
  %s24 = inlined_call_operand.vmem [shape: f32[128,23], index: 24, kind: input, shape index: {}]
  %s25 = inlined_call_operand.vmem [shape: f32[2,3,16], index: 25, kind: output, shape index: {}]
  %s26 = sld [smem:[#allocation0]]
  $region193: #{unet1d_wrap_forward.1} parent=0
    _
  %s28 = ssub.s32 1, %s26
  %s29 = scalar_select 0, %s28, %s26
  $region1: #{unet1d_wrap_forward.1} parent=0
    #allocation3 [shape = 'u8[4096]{0}', space=vmem, size = 0x1000, scoped, tag = 'input window, operand 1, single buffered']
    #allocation4 [shape = 's32[2]{0}', space=sflag, size = 0x8, scoped, tag = 'scoped memory for unet1d_wrap_forward.1']
    #allocation5 [shape = 'u8[4096]{0}', space=vmem, size = 0x1000, scoped, tag = 'input window, operand 2, single buffered']
    #allocation6 [shape = 's32[1]{0}', space=sflag, size = 0x4, scoped, tag = 'scoped memory for unet1d_wrap_forward.1']
    #allocation7 [shape = 'u8[8192]{0}', space=vmem, size = 0x2000, scoped, tag = 'input window, operand 3, single buffered']
    #allocation8 [shape = 'u8[8192]{0}', space=vmem, size = 0x2000, scoped, tag = 'input window, operand 4, single buffered']
    #allocation9 [shape = 's32[1]{0}', space=sflag, size = 0x4, scoped, tag = 'scoped memory for unet1d_wrap_forward.1']
    #allocation10 [shape = 'u8[16384]{0}', space=vmem, size = 0x4000, scoped, tag = 'input window, operand 5, single buffered']
    #allocation11 [shape = 'u8[16384]{0}', space=vmem, size = 0x4000, scoped, tag = 'input window, operand 6, single buffered']
    #allocation12 [shape = 's32[1]{0}', space=sflag, size = 0x4, scoped, tag = 'scoped memory for unet1d_wrap_forward.1']
    #allocation13 [shape = 'u8[65536]{0}', space=vmem, size = 0x10000, scoped, tag = 'input window, operand 8, single buffered']
    #allocation14 [shape = 'u8[65536]{0}', space=vmem, size = 0x10000, scoped, tag = 'input window, operand 11, single buffered']
    #allocation15 [shape = 's32[1]{0}', space=sflag, size = 0x4, scoped, tag = 'scoped memory for unet1d_wrap_forward.1']
    #allocation16 [shape = 'u8[65536]{0}', space=vmem, size = 0x10000, scoped, tag = 'input window, operand 13, single buffered']
    #allocation17 [shape = 'u8[32768]{0}', space=vmem, size = 0x8000, scoped, tag = 'input window, operand 14, single buffered']
    #allocation18 [shape = 's32[1]{0}', space=sflag, size = 0x4, scoped, tag = 'scoped memory for unet1d_wrap_forward.1']
    #allocation19 [shape = 'u8[32768]{0}', space=vmem, size = 0x8000, scoped, tag = 'input window, operand 15, single buffered']
    #allocation20 [shape = 'u8[16384]{0}', space=vmem, size = 0x4000, scoped, tag = 'input window, operand 17, single buffered']
    #allocation21 [shape = 's32[1]{0}', space=sflag, size = 0x4, scoped, tag = 'scoped memory for unet1d_wrap_forward.1']
    #allocation22 [shape = 'u8[8192]{0}', space=vmem, size = 0x2000, scoped, tag = 'input window, operand 19, single buffered']
    #allocation23 [shape = 'u8[8192]{0}', space=vmem, size = 0x2000, scoped, tag = 'input window, operand 20, single buffered']
    #allocation24 [shape = 's32[1]{0}', space=sflag, size = 0x4, scoped, tag = 'scoped memory for unet1d_wrap_forward.1']
    #allocation25 [shape = 'u8[2048]{0}', space=vmem, size = 0x800, scoped, tag = 'input window, operand 23, single buffered']
    %30 = vsyncpa [#allocation4], 0
    %31 = vsyncpa [#allocation6], 0
    %32 = vsyncpa [#allocation9], 0
    %33 = vsyncpa [#allocation12], 0
    %34 = vsyncpa [#allocation15], 0
    %35 = vsyncpa [#allocation18], 0
    %36 = vsyncpa [#allocation21], 0
    %37 = vsyncpa [#allocation24], 0
    loop: start=0, step=1, limit=4
    $region2: #{unet1d_wrap_forward.1} parent=1 // loop_pre_header
      _
    $region3: #{unet1d_wrap_forward.1} parent=1 // loop_header
      %s39 = sphi 0, %s43
      %p40 = scmp.ge.s32.totalorder %s39, 4
      %s49 = sphi 0, %s51
      %s52 = sphi 0, %s49
      %s53 = sphi 0, %s52
      %s69 = sphi 0, %s53
      %s73 = sphi 0, %s73
      %s75 = sphi 0, %s73
      %s76 = sphi 0, %s75
      %s90 = sphi 0, %s76
      %s94 = sphi 0, %s94
      %s96 = sphi 0, %s94
      %s97 = sphi 0, %s96
      %s111 = sphi 0, %s97
      %s115 = sphi 0, %s115
      %s117 = sphi 0, %s115
      %s118 = sphi 0, %s117
      %s132 = sphi 0, %s118
      %s136 = sphi 0, %s136
      %s138 = sphi 0, %s136
      %s139 = sphi 0, %s138
      %s153 = sphi 0, %s139
      %s157 = sphi 0, %s157
      %s159 = sphi 0, %s157
      %s160 = sphi 0, %s159
      %s174 = sphi 0, %s160
      %s178 = sphi 0, %s178
      %s180 = sphi 0, %s178
      %s181 = sphi 0, %s180
      %s195 = sphi 0, %s181
      %s199 = sphi 0, %s199
      %s201 = sphi 0, %s199
      %s202 = sphi 0, %s201
      %s216 = sphi 0, %s202
      %s220 = sphi 0, %s220
      %s222 = sphi 0, %s220
      %s223 = sphi 0, %s222
      %s237 = sphi 0, %s223
      %s241 = sphi 0, %s241
      %s243 = sphi 0, %s241
      %s244 = sphi 0, %s243
      %s258 = sphi 0, %s244
      %s262 = sphi 0, %s262
      %s264 = sphi 0, %s262
      %s265 = sphi 0, %s264
      %s279 = sphi 0, %s265
      %s283 = sphi 0, %s283
      %s285 = sphi 0, %s283
      %s286 = sphi 0, %s285
      %s300 = sphi 0, %s286
      %s304 = sphi 0, %s304
      %s306 = sphi 0, %s304
      %s307 = sphi 0, %s306
      %s321 = sphi 0, %s307
      %s325 = sphi 0, %s325
      %s327 = sphi 0, %s325
      %s328 = sphi 0, %s327
      %s342 = sphi 0, %s328
      %s346 = sphi 0, %s346
      %s348 = sphi 0, %s346
      %s349 = sphi 0, %s348
      %s363 = sphi 0, %s349
      %s367 = sphi 0, %s367
      %s369 = sphi 0, %s367
      %s370 = sphi 0, %s369
      %s384 = sphi 0, %s370
      %s388 = sphi 0, %s388
      %s390 = sphi 0, %s388
      %s391 = sphi 0, %s390
      %s405 = sphi 0, %s391
      %s409 = sphi 0, %s409
      %s411 = sphi 0, %s409
      %s412 = sphi 0, %s411
      %s426 = sphi 0, %s412
      %s430 = sphi 0, %s430
      %s432 = sphi 0, %s430
      %s433 = sphi 0, %s432
      %s447 = sphi 0, %s433
      %s451 = sphi 0, %s451
      %s453 = sphi 0, %s451
      %s454 = sphi 0, %s453
      %s468 = sphi 0, %s454
      %s472 = sphi 0, %s472
      %s474 = sphi 0, %s472
      %s475 = sphi 0, %s474
      %s489 = sphi 0, %s475
      %s493 = sphi 0, %s493
      %s495 = sphi 0, %s493
      %s496 = sphi 0, %s495
      %s510 = sphi 0, %s496
      %s514 = sphi 0, %s514
      %s516 = sphi 0, %s514
      %s517 = sphi 0, %s516
      %s531 = sphi 0, %s517
      %s535 = sphi 0, %s535
      %s537 = sphi 0, %s535
      %s538 = sphi 0, %s537
      %s552 = sphi 0, %s538
      %s556 = sphi 0, %s556
      %s558 = sphi 0, %s556
      %s559 = sphi 0, %s558
      %s573 = sphi 0, %s559
      %s579 = sphi 0, %s581
      %s582 = sphi 0, %s579
      %s583 = sphi 0, %s582
      %s599 = sphi 0, %s583
    $region4: #{unet1d_wrap_forward.1} parent=1 // loop_header_branch
      %42 = sbr.rel (%p40) target = $region8
    $region5: #{unet1d_wrap_forward.1} parent=1 // loop_body
      %s44 = ssub.s32 %s39, 1
      %s45 = ssub.s32 %s39, 2
      %s46 = sadd.s32 %s39, 1
      %s47 = ssub.s32 %s39, %s46
      %p48 = scmp.eq.s32.totalorder %s47, 0
      %s50 = sadd.s32 %s49, 1
      %s51 = scalar_select %p48, %s49, %s50
      %p54 = pneg %p48
      %p55 = scmp.eq.s32.totalorder %s39, 1
      %p56 = por %p54, %p55
      %p57 = scmp.ne.s32.totalorder %s49, %s52
      %p58 = scmp.eq.s32.totalorder %s39, 0
      %p59 = por %p57, %p58
      %p60 = scmp.ne.s32.totalorder %s49, %s52
      %p61 = scmp.eq.s32.totalorder %s44, 1
      %p62 = por %p60, %p61
      %p63 = scmp.ne.s32.totalorder %s52, %s53
      %p64 = scmp.eq.s32.totalorder %s44, 0
      %p65 = por %p63, %p64
      %p66 = scmp.ne.s32.totalorder %s52, %s53
      %p67 = scmp.eq.s32.totalorder %s45, 1
      %p68 = por %p66, %p67
      %p70 = scmp.ne.s32.totalorder %s53, %s69
      %p71 = scmp.eq.s32.totalorder %s45, 0
      %p72 = por %p70, %p71
      %s74 = sadd.s32 %s73, 1
      %p77 = scmp.eq.s32.totalorder %s39, 1
      %p78 = scmp.ne.s32.totalorder %s73, %s75
      %p79 = scmp.eq.s32.totalorder %s39, 0
      %p80 = por %p78, %p79
      %p81 = scmp.ne.s32.totalorder %s73, %s75
      %p82 = scmp.eq.s32.totalorder %s44, 1
      %p83 = por %p81, %p82
      %p84 = scmp.ne.s32.totalorder %s75, %s76
      %p85 = scmp.eq.s32.totalorder %s44, 0
      %p86 = por %p84, %p85
      %p87 = scmp.ne.s32.totalorder %s75, %s76
      %p88 = scmp.eq.s32.totalorder %s45, 1
      %p89 = por %p87, %p88
      %p91 = scmp.ne.s32.totalorder %s76, %s90
      %p92 = scmp.eq.s32.totalorder %s45, 0
      %p93 = por %p91, %p92
      %s95 = sadd.s32 %s94, 1
      %p98 = scmp.eq.s32.totalorder %s39, 1
      %p99 = scmp.ne.s32.totalorder %s94, %s96
      %p100 = scmp.eq.s32.totalorder %s39, 0
      %p101 = por %p99, %p100
      %p102 = scmp.ne.s32.totalorder %s94, %s96
      %p103 = scmp.eq.s32.totalorder %s44, 1
      %p104 = por %p102, %p103
      %p105 = scmp.ne.s32.totalorder %s96, %s97
      %p106 = scmp.eq.s32.totalorder %s44, 0
      %p107 = por %p105, %p106
      %p108 = scmp.ne.s32.totalorder %s96, %s97
      %p109 = scmp.eq.s32.totalorder %s45, 1
      %p110 = por %p108, %p109
      %p112 = scmp.ne.s32.totalorder %s97, %s111
      %p113 = scmp.eq.s32.totalorder %s45, 0
      %p114 = por %p112, %p113
      %s116 = sadd.s32 %s115, 1
      %p119 = scmp.eq.s32.totalorder %s39, 1
      %p120 = scmp.ne.s32.totalorder %s115, %s117
      %p121 = scmp.eq.s32.totalorder %s39, 0
      %p122 = por %p120, %p121
      %p123 = scmp.ne.s32.totalorder %s115, %s117
      %p124 = scmp.eq.s32.totalorder %s44, 1
      %p125 = por %p123, %p124
      %p126 = scmp.ne.s32.totalorder %s117, %s118
      %p127 = scmp.eq.s32.totalorder %s44, 0
      %p128 = por %p126, %p127
      %p129 = scmp.ne.s32.totalorder %s117, %s118
      %p130 = scmp.eq.s32.totalorder %s45, 1
      %p131 = por %p129, %p130
      %p133 = scmp.ne.s32.totalorder %s118, %s132
      %p134 = scmp.eq.s32.totalorder %s45, 0
      %p135 = por %p133, %p134
      %s137 = sadd.s32 %s136, 1
      %p140 = scmp.eq.s32.totalorder %s39, 1
      %p141 = scmp.ne.s32.totalorder %s136, %s138
      %p142 = scmp.eq.s32.totalorder %s39, 0
      %p143 = por %p141, %p142
      %p144 = scmp.ne.s32.totalorder %s136, %s138
      %p145 = scmp.eq.s32.totalorder %s44, 1
      %p146 = por %p144, %p145
      %p147 = scmp.ne.s32.totalorder %s138, %s139
      %p148 = scmp.eq.s32.totalorder %s44, 0
      %p149 = por %p147, %p148
      %p150 = scmp.ne.s32.totalorder %s138, %s139
      %p151 = scmp.eq.s32.totalorder %s45, 1
      %p152 = por %p150, %p151
      %p154 = scmp.ne.s32.totalorder %s139, %s153
      %p155 = scmp.eq.s32.totalorder %s45, 0
      %p156 = por %p154, %p155
      %s158 = sadd.s32 %s157, 1
      %p161 = scmp.eq.s32.totalorder %s39, 1
      %p162 = scmp.ne.s32.totalorder %s157, %s159
      %p163 = scmp.eq.s32.totalorder %s39, 0
      %p164 = por %p162, %p163
      %p165 = scmp.ne.s32.totalorder %s157, %s159
      %p166 = scmp.eq.s32.totalorder %s44, 1
      %p167 = por %p165, %p166
      %p168 = scmp.ne.s32.totalorder %s159, %s160
      %p169 = scmp.eq.s32.totalorder %s44, 0
      %p170 = por %p168, %p169
      %p171 = scmp.ne.s32.totalorder %s159, %s160
      %p172 = scmp.eq.s32.totalorder %s45, 1
      %p173 = por %p171, %p172
      %p175 = scmp.ne.s32.totalorder %s160, %s174
      %p176 = scmp.eq.s32.totalorder %s45, 0
      %p177 = por %p175, %p176
      %s179 = sadd.s32 %s178, 1
      %p182 = scmp.eq.s32.totalorder %s39, 1
      %p183 = scmp.ne.s32.totalorder %s178, %s180
      %p184 = scmp.eq.s32.totalorder %s39, 0
      %p185 = por %p183, %p184
      %p186 = scmp.ne.s32.totalorder %s178, %s180
      %p187 = scmp.eq.s32.totalorder %s44, 1
      %p188 = por %p186, %p187
      %p189 = scmp.ne.s32.totalorder %s180, %s181
      %p190 = scmp.eq.s32.totalorder %s44, 0
      %p191 = por %p189, %p190
      %p192 = scmp.ne.s32.totalorder %s180, %s181
      %p193 = scmp.eq.s32.totalorder %s45, 1
      %p194 = por %p192, %p193
      %p196 = scmp.ne.s32.totalorder %s181, %s195
      %p197 = scmp.eq.s32.totalorder %s45, 0
      %p198 = por %p196, %p197
      %s200 = sadd.s32 %s199, 1
      %p203 = scmp.eq.s32.totalorder %s39, 1
      %p204 = scmp.ne.s32.totalorder %s199, %s201
      %p205 = scmp.eq.s32.totalorder %s39, 0
      %p206 = por %p204, %p205
      %p207 = scmp.ne.s32.totalorder %s199, %s201
      %p208 = scmp.eq.s32.totalorder %s44, 1
      %p209 = por %p207, %p208
      %p210 = scmp.ne.s32.totalorder %s201, %s202
      %p211 = scmp.eq.s32.totalorder %s44, 0
      %p212 = por %p210, %p211
      %p213 = scmp.ne.s32.totalorder %s201, %s202
      %p214 = scmp.eq.s32.totalorder %s45, 1
      %p215 = por %p213, %p214
      %p217 = scmp.ne.s32.totalorder %s202, %s216
      %p218 = scmp.eq.s32.totalorder %s45, 0
      %p219 = por %p217, %p218
      %s221 = sadd.s32 %s220, 1
      %p224 = scmp.eq.s32.totalorder %s39, 1
      %p225 = scmp.ne.s32.totalorder %s220, %s222
      %p226 = scmp.eq.s32.totalorder %s39, 0
      %p227 = por %p225, %p226
      %p228 = scmp.ne.s32.totalorder %s220, %s222
      %p229 = scmp.eq.s32.totalorder %s44, 1
      %p230 = por %p228, %p229
      %p231 = scmp.ne.s32.totalorder %s222, %s223
      %p232 = scmp.eq.s32.totalorder %s44, 0
      %p233 = por %p231, %p232
      %p234 = scmp.ne.s32.totalorder %s222, %s223
      %p235 = scmp.eq.s32.totalorder %s45, 1
      %p236 = por %p234, %p235
      %p238 = scmp.ne.s32.totalorder %s223, %s237
      %p239 = scmp.eq.s32.totalorder %s45, 0
      %p240 = por %p238, %p239
      %s242 = sadd.s32 %s241, 1
      %p245 = scmp.eq.s32.totalorder %s39, 1
      %p246 = scmp.ne.s32.totalorder %s241, %s243
      %p247 = scmp.eq.s32.totalorder %s39, 0
      %p248 = por %p246, %p247
      %p249 = scmp.ne.s32.totalorder %s241, %s243
      %p250 = scmp.eq.s32.totalorder %s44, 1
      %p251 = por %p249, %p250
      %p252 = scmp.ne.s32.totalorder %s243, %s244
      %p253 = scmp.eq.s32.totalorder %s44, 0
      %p254 = por %p252, %p253
      %p255 = scmp.ne.s32.totalorder %s243, %s244
      %p256 = scmp.eq.s32.totalorder %s45, 1
      %p257 = por %p255, %p256
      %p259 = scmp.ne.s32.totalorder %s244, %s258
      %p260 = scmp.eq.s32.totalorder %s45, 0
      %p261 = por %p259, %p260
      %s263 = sadd.s32 %s262, 1
      %p266 = scmp.eq.s32.totalorder %s39, 1
      %p267 = scmp.ne.s32.totalorder %s262, %s264
      %p268 = scmp.eq.s32.totalorder %s39, 0
      %p269 = por %p267, %p268
      %p270 = scmp.ne.s32.totalorder %s262, %s264
      %p271 = scmp.eq.s32.totalorder %s44, 1
      %p272 = por %p270, %p271
      %p273 = scmp.ne.s32.totalorder %s264, %s265
      %p274 = scmp.eq.s32.totalorder %s44, 0
      %p275 = por %p273, %p274
      %p276 = scmp.ne.s32.totalorder %s264, %s265
      %p277 = scmp.eq.s32.totalorder %s45, 1
      %p278 = por %p276, %p277
      %p280 = scmp.ne.s32.totalorder %s265, %s279
      %p281 = scmp.eq.s32.totalorder %s45, 0
      %p282 = por %p280, %p281
      %s284 = sadd.s32 %s283, 1
      %p287 = scmp.eq.s32.totalorder %s39, 1
      %p288 = scmp.ne.s32.totalorder %s283, %s285
      %p289 = scmp.eq.s32.totalorder %s39, 0
      %p290 = por %p288, %p289
      %p291 = scmp.ne.s32.totalorder %s283, %s285
      %p292 = scmp.eq.s32.totalorder %s44, 1
      %p293 = por %p291, %p292
      %p294 = scmp.ne.s32.totalorder %s285, %s286
      %p295 = scmp.eq.s32.totalorder %s44, 0
      %p296 = por %p294, %p295
      %p297 = scmp.ne.s32.totalorder %s285, %s286
      %p298 = scmp.eq.s32.totalorder %s45, 1
      %p299 = por %p297, %p298
      %p301 = scmp.ne.s32.totalorder %s286, %s300
      %p302 = scmp.eq.s32.totalorder %s45, 0
      %p303 = por %p301, %p302
      %s305 = sadd.s32 %s304, 1
      %p308 = scmp.eq.s32.totalorder %s39, 1
      %p309 = scmp.ne.s32.totalorder %s304, %s306
      %p310 = scmp.eq.s32.totalorder %s39, 0
      %p311 = por %p309, %p310
      %p312 = scmp.ne.s32.totalorder %s304, %s306
      %p313 = scmp.eq.s32.totalorder %s44, 1
      %p314 = por %p312, %p313
      %p315 = scmp.ne.s32.totalorder %s306, %s307
      %p316 = scmp.eq.s32.totalorder %s44, 0
      %p317 = por %p315, %p316
      %p318 = scmp.ne.s32.totalorder %s306, %s307
      %p319 = scmp.eq.s32.totalorder %s45, 1
      %p320 = por %p318, %p319
      %p322 = scmp.ne.s32.totalorder %s307, %s321
      %p323 = scmp.eq.s32.totalorder %s45, 0
      %p324 = por %p322, %p323
      %s326 = sadd.s32 %s325, 1
      %p329 = scmp.eq.s32.totalorder %s39, 1
      %p330 = scmp.ne.s32.totalorder %s325, %s327
      %p331 = scmp.eq.s32.totalorder %s39, 0
      %p332 = por %p330, %p331
      %p333 = scmp.ne.s32.totalorder %s325, %s327
      %p334 = scmp.eq.s32.totalorder %s44, 1
      %p335 = por %p333, %p334
      %p336 = scmp.ne.s32.totalorder %s327, %s328
      %p337 = scmp.eq.s32.totalorder %s44, 0
      %p338 = por %p336, %p337
      %p339 = scmp.ne.s32.totalorder %s327, %s328
      %p340 = scmp.eq.s32.totalorder %s45, 1
      %p341 = por %p339, %p340
      %p343 = scmp.ne.s32.totalorder %s328, %s342
      %p344 = scmp.eq.s32.totalorder %s45, 0
      %p345 = por %p343, %p344
      %s347 = sadd.s32 %s346, 1
      %p350 = scmp.eq.s32.totalorder %s39, 1
      %p351 = scmp.ne.s32.totalorder %s346, %s348
      %p352 = scmp.eq.s32.totalorder %s39, 0
      %p353 = por %p351, %p352
      %p354 = scmp.ne.s32.totalorder %s346, %s348
      %p355 = scmp.eq.s32.totalorder %s44, 1
      %p356 = por %p354, %p355
      %p357 = scmp.ne.s32.totalorder %s348, %s349
      %p358 = scmp.eq.s32.totalorder %s44, 0
      %p359 = por %p357, %p358
      %p360 = scmp.ne.s32.totalorder %s348, %s349
      %p361 = scmp.eq.s32.totalorder %s45, 1
      %p362 = por %p360, %p361
      %p364 = scmp.ne.s32.totalorder %s349, %s363
      %p365 = scmp.eq.s32.totalorder %s45, 0
      %p366 = por %p364, %p365
      %s368 = sadd.s32 %s367, 1
      %p371 = scmp.eq.s32.totalorder %s39, 1
      %p372 = scmp.ne.s32.totalorder %s367, %s369
      %p373 = scmp.eq.s32.totalorder %s39, 0
      %p374 = por %p372, %p373
      %p375 = scmp.ne.s32.totalorder %s367, %s369
      %p376 = scmp.eq.s32.totalorder %s44, 1
      %p377 = por %p375, %p376
      %p378 = scmp.ne.s32.totalorder %s369, %s370
      %p379 = scmp.eq.s32.totalorder %s44, 0
      %p380 = por %p378, %p379
      %p381 = scmp.ne.s32.totalorder %s369, %s370
      %p382 = scmp.eq.s32.totalorder %s45, 1
      %p383 = por %p381, %p382
      %p385 = scmp.ne.s32.totalorder %s370, %s384
      %p386 = scmp.eq.s32.totalorder %s45, 0
      %p387 = por %p385, %p386
      %s389 = sadd.s32 %s388, 1
      %p392 = scmp.eq.s32.totalorder %s39, 1
      %p393 = scmp.ne.s32.totalorder %s388, %s390
      %p394 = scmp.eq.s32.totalorder %s39, 0
      %p395 = por %p393, %p394
      %p396 = scmp.ne.s32.totalorder %s388, %s390
      %p397 = scmp.eq.s32.totalorder %s44, 1
      %p398 = por %p396, %p397
      %p399 = scmp.ne.s32.totalorder %s390, %s391
      %p400 = scmp.eq.s32.totalorder %s44, 0
      %p401 = por %p399, %p400
      %p402 = scmp.ne.s32.totalorder %s390, %s391
      %p403 = scmp.eq.s32.totalorder %s45, 1
      %p404 = por %p402, %p403
      %p406 = scmp.ne.s32.totalorder %s391, %s405
      %p407 = scmp.eq.s32.totalorder %s45, 0
      %p408 = por %p406, %p407
      %s410 = sadd.s32 %s409, 1
      %p413 = scmp.eq.s32.totalorder %s39, 1
      %p414 = scmp.ne.s32.totalorder %s409, %s411
      %p415 = scmp.eq.s32.totalorder %s39, 0
      %p416 = por %p414, %p415
      %p417 = scmp.ne.s32.totalorder %s409, %s411
      %p418 = scmp.eq.s32.totalorder %s44, 1
      %p419 = por %p417, %p418
      %p420 = scmp.ne.s32.totalorder %s411, %s412
      %p421 = scmp.eq.s32.totalorder %s44, 0
      %p422 = por %p420, %p421
      %p423 = scmp.ne.s32.totalorder %s411, %s412
      %p424 = scmp.eq.s32.totalorder %s45, 1
      %p425 = por %p423, %p424
      %p427 = scmp.ne.s32.totalorder %s412, %s426
      %p428 = scmp.eq.s32.totalorder %s45, 0
      %p429 = por %p427, %p428
      %s431 = sadd.s32 %s430, 1
      %p434 = scmp.eq.s32.totalorder %s39, 1
      %p435 = scmp.ne.s32.totalorder %s430, %s432
      %p436 = scmp.eq.s32.totalorder %s39, 0
      %p437 = por %p435, %p436
      %p438 = scmp.ne.s32.totalorder %s430, %s432
      %p439 = scmp.eq.s32.totalorder %s44, 1
      %p440 = por %p438, %p439
      %p441 = scmp.ne.s32.totalorder %s432, %s433
      %p442 = scmp.eq.s32.totalorder %s44, 0
      %p443 = por %p441, %p442
      %p444 = scmp.ne.s32.totalorder %s432, %s433
      %p445 = scmp.eq.s32.totalorder %s45, 1
      %p446 = por %p444, %p445
      %p448 = scmp.ne.s32.totalorder %s433, %s447
      %p449 = scmp.eq.s32.totalorder %s45, 0
      %p450 = por %p448, %p449
      %s452 = sadd.s32 %s451, 1
      %p455 = scmp.eq.s32.totalorder %s39, 1
      %p456 = scmp.ne.s32.totalorder %s451, %s453
      %p457 = scmp.eq.s32.totalorder %s39, 0
      %p458 = por %p456, %p457
      %p459 = scmp.ne.s32.totalorder %s451, %s453
      %p460 = scmp.eq.s32.totalorder %s44, 1
      %p461 = por %p459, %p460
      %p462 = scmp.ne.s32.totalorder %s453, %s454
      %p463 = scmp.eq.s32.totalorder %s44, 0
      %p464 = por %p462, %p463
      %p465 = scmp.ne.s32.totalorder %s453, %s454
      %p466 = scmp.eq.s32.totalorder %s45, 1
      %p467 = por %p465, %p466
      %p469 = scmp.ne.s32.totalorder %s454, %s468
      %p470 = scmp.eq.s32.totalorder %s45, 0
      %p471 = por %p469, %p470
      %s473 = sadd.s32 %s472, 1
      %p476 = scmp.eq.s32.totalorder %s39, 1
      %p477 = scmp.ne.s32.totalorder %s472, %s474
      %p478 = scmp.eq.s32.totalorder %s39, 0
      %p479 = por %p477, %p478
      %p480 = scmp.ne.s32.totalorder %s472, %s474
      %p481 = scmp.eq.s32.totalorder %s44, 1
      %p482 = por %p480, %p481
      %p483 = scmp.ne.s32.totalorder %s474, %s475
      %p484 = scmp.eq.s32.totalorder %s44, 0
      %p485 = por %p483, %p484
      %p486 = scmp.ne.s32.totalorder %s474, %s475
      %p487 = scmp.eq.s32.totalorder %s45, 1
      %p488 = por %p486, %p487
      %p490 = scmp.ne.s32.totalorder %s475, %s489
      %p491 = scmp.eq.s32.totalorder %s45, 0
      %p492 = por %p490, %p491
      %s494 = sadd.s32 %s493, 1
      %p497 = scmp.eq.s32.totalorder %s39, 1
      %p498 = scmp.ne.s32.totalorder %s493, %s495
      %p499 = scmp.eq.s32.totalorder %s39, 0
      %p500 = por %p498, %p499
      %p501 = scmp.ne.s32.totalorder %s493, %s495
      %p502 = scmp.eq.s32.totalorder %s44, 1
      %p503 = por %p501, %p502
      %p504 = scmp.ne.s32.totalorder %s495, %s496
      %p505 = scmp.eq.s32.totalorder %s44, 0
      %p506 = por %p504, %p505
      %p507 = scmp.ne.s32.totalorder %s495, %s496
      %p508 = scmp.eq.s32.totalorder %s45, 1
      %p509 = por %p507, %p508
      %p511 = scmp.ne.s32.totalorder %s496, %s510
      %p512 = scmp.eq.s32.totalorder %s45, 0
      %p513 = por %p511, %p512
      %s515 = sadd.s32 %s514, 1
      %p518 = scmp.eq.s32.totalorder %s39, 1
      %p519 = scmp.ne.s32.totalorder %s514, %s516
      %p520 = scmp.eq.s32.totalorder %s39, 0
      %p521 = por %p519, %p520
      %p522 = scmp.ne.s32.totalorder %s514, %s516
      %p523 = scmp.eq.s32.totalorder %s44, 1
      %p524 = por %p522, %p523
      %p525 = scmp.ne.s32.totalorder %s516, %s517
      %p526 = scmp.eq.s32.totalorder %s44, 0
      %p527 = por %p525, %p526
      %p528 = scmp.ne.s32.totalorder %s516, %s517
      %p529 = scmp.eq.s32.totalorder %s45, 1
      %p530 = por %p528, %p529
      %p532 = scmp.ne.s32.totalorder %s517, %s531
      %p533 = scmp.eq.s32.totalorder %s45, 0
      %p534 = por %p532, %p533
      %s536 = sadd.s32 %s535, 1
      %p539 = scmp.eq.s32.totalorder %s39, 1
      %p540 = scmp.ne.s32.totalorder %s535, %s537
      %p541 = scmp.eq.s32.totalorder %s39, 0
      %p542 = por %p540, %p541
      %p543 = scmp.ne.s32.totalorder %s535, %s537
      %p544 = scmp.eq.s32.totalorder %s44, 1
      %p545 = por %p543, %p544
      %p546 = scmp.ne.s32.totalorder %s537, %s538
      %p547 = scmp.eq.s32.totalorder %s44, 0
      %p548 = por %p546, %p547
      %p549 = scmp.ne.s32.totalorder %s537, %s538
      %p550 = scmp.eq.s32.totalorder %s45, 1
      %p551 = por %p549, %p550
      %p553 = scmp.ne.s32.totalorder %s538, %s552
      %p554 = scmp.eq.s32.totalorder %s45, 0
      %p555 = por %p553, %p554
      %s557 = sadd.s32 %s556, 1
      %p560 = scmp.eq.s32.totalorder %s39, 1
      %p561 = scmp.ne.s32.totalorder %s556, %s558
      %p562 = scmp.eq.s32.totalorder %s39, 0
      %p563 = por %p561, %p562
      %p564 = scmp.ne.s32.totalorder %s556, %s558
      %p565 = scmp.eq.s32.totalorder %s44, 1
      %p566 = por %p564, %p565
      %p567 = scmp.ne.s32.totalorder %s558, %s559
      %p568 = scmp.eq.s32.totalorder %s44, 0
      %p569 = por %p567, %p568
      %p570 = scmp.ne.s32.totalorder %s558, %s559
      %p571 = scmp.eq.s32.totalorder %s45, 1
      %p572 = por %p570, %p571
      %p574 = scmp.ne.s32.totalorder %s559, %s573
      %p575 = scmp.eq.s32.totalorder %s45, 0
      %p576 = por %p574, %p575
      %s577 = ssub.s32 %s39, %s46
      %p578 = scmp.eq.s32.totalorder %s577, 0
      %s580 = sadd.s32 %s579, 1
      %s581 = scalar_select %p578, %s579, %s580
      %p584 = pneg %p578
      %p585 = scmp.eq.s32.totalorder %s39, 1
      %p586 = por %p584, %p585
      %p587 = scmp.ne.s32.totalorder %s579, %s582
      %p588 = scmp.eq.s32.totalorder %s39, 0
      %p589 = por %p587, %p588
      %p590 = scmp.ne.s32.totalorder %s579, %s582
      %p591 = scmp.eq.s32.totalorder %s44, 1
      %p592 = por %p590, %p591
      %p593 = scmp.ne.s32.totalorder %s582, %s583
      %p594 = scmp.eq.s32.totalorder %s44, 0
      %p595 = por %p593, %p594
      %p596 = scmp.ne.s32.totalorder %s582, %s583
      %p597 = scmp.eq.s32.totalorder %s45, 1
      %p598 = por %p596, %p597
      %p600 = scmp.ne.s32.totalorder %s583, %s599
      %p601 = scmp.eq.s32.totalorder %s45, 0
      %p602 = por %p600, %p601
      %p603 = scmp.le.s32.totalorder 1, %s39
      %p604 = scmp.lt.s32.totalorder %s39, 3
      %p605 = pnand %p603, %p604
      %p606 = pneg %p605
      // Predicated region
      $region9: #{unet1d_wrap_forward.1} parent=5 // pred_check
        _
      $region10: #{unet1d_wrap_forward.1} parent=5 // pred_check_branch
        %608 = sbr.rel (%p605) target = $region12
      $region11: #{unet1d_wrap_forward.1} parent=5 // pred_region
        %s609 = ssub.s32 %s39, 1
        // Predicated region
        $region13: #{unet1d_wrap_forward.1} parent=11 // pred_check
          %p610 = pneg %p86
        $region14: #{unet1d_wrap_forward.1} parent=11 // pred_check_branch
          %612 = sbr.rel (%p610) target = $region16
        $region15: #{unet1d_wrap_forward.1} parent=11 // pred_region
          %s614 = ssub.s32 128, 128
          %615 = vsyncadd [#allocation4], %s614
          %s617 = sshll.u32 [#allocation3], 4
          %s618 = int_to_ptr.vmem [resolvable:$true] %s617
          %620 = dma.hbm_to_vmem [thread:$0]  %s1, 128, %s618, [#allocation4]
        $region16: #{unet1d_wrap_forward.1} parent=11 // pred_fallthru
          _
        // Predicated region
        $region17: #{unet1d_wrap_forward.1} parent=11 // pred_check
          %p621 = pneg %p107
        $region18: #{unet1d_wrap_forward.1} parent=11 // pred_check_branch
          %623 = sbr.rel (%p621) target = $region20
        $region19: #{unet1d_wrap_forward.1} parent=11 // pred_region
          %s625 = ssub.s32 128, 128
          %626 = vsyncadd [#allocation6], %s625
          %s628 = sshll.u32 [#allocation5], 4
          %s629 = int_to_ptr.vmem [resolvable:$true] %s628
          %631 = dma.hbm_to_vmem [thread:$0]  %s2, 128, %s629, [#allocation6]
        $region20: #{unet1d_wrap_forward.1} parent=11 // pred_fallthru
          _
        // Predicated region
        $region21: #{unet1d_wrap_forward.1} parent=11 // pred_check
          %p632 = pneg %p128
        $region22: #{unet1d_wrap_forward.1} parent=11 // pred_check_branch
          %634 = sbr.rel (%p632) target = $region24
        $region23: #{unet1d_wrap_forward.1} parent=11 // pred_region
          %s636 = ssub.s32 256, 256
          %637 = vsyncadd [#allocation6], %s636
          %s638 = sshll.u32 [#allocation7], 4
          %s639 = int_to_ptr.vmem [resolvable:$true] %s638
          %644 = dma.hbm_to_vmem [thread:$0]  %s3, 256, %s639, [#allocation6], 128, 128, 8
        $region24: #{unet1d_wrap_forward.1} parent=11 // pred_fallthru
          _
        // Predicated region
        $region25: #{unet1d_wrap_forward.1} parent=11 // pred_check
          %p645 = pneg %p149
        $region26: #{unet1d_wrap_forward.1} parent=11 // pred_check_branch
          %647 = sbr.rel (%p645) target = $region28
        $region27: #{unet1d_wrap_forward.1} parent=11 // pred_region
          %s649 = ssub.s32 256, 256
          %650 = vsyncadd [#allocation9], %s649
          %s651 = sshll.u32 [#allocation8], 4
          %s652 = int_to_ptr.vmem [resolvable:$true] %s651
          %657 = dma.hbm_to_vmem [thread:$0]  %s4, 256, %s652, [#allocation9], 128, 128, 8
        $region28: #{unet1d_wrap_forward.1} parent=11 // pred_fallthru
          _
        // Predicated region
        $region29: #{unet1d_wrap_forward.1} parent=11 // pred_check
          %p658 = pneg %p170
        $region30: #{unet1d_wrap_forward.1} parent=11 // pred_check_branch
          %660 = sbr.rel (%p658) target = $region32
        $region31: #{unet1d_wrap_forward.1} parent=11 // pred_region
          %s662 = ssub.s32 512, 512
          %663 = vsyncadd [#allocation9], %s662
          %s664 = sshll.u32 [#allocation10], 4
          %s665 = int_to_ptr.vmem [resolvable:$true] %s664
          %670 = dma.hbm_to_vmem [thread:$0]  %s5, 512, %s665, [#allocation9], 128, 128, 8
        $region32: #{unet1d_wrap_forward.1} parent=11 // pred_fallthru
          _
        // Predicated region
        $region33: #{unet1d_wrap_forward.1} parent=11 // pred_check
          %p671 = pneg %p191
        $region34: #{unet1d_wrap_forward.1} parent=11 // pred_check_branch
          %673 = sbr.rel (%p671) target = $region36
        $region35: #{unet1d_wrap_forward.1} parent=11 // pred_region
          %s675 = ssub.s32 512, 512
          %676 = vsyncadd [#allocation12], %s675
          %s677 = sshll.u32 [#allocation11], 4
          %s678 = int_to_ptr.vmem [resolvable:$true] %s677
          %683 = dma.hbm_to_vmem [thread:$0]  %s6, 512, %s678, [#allocation12], 128, 128, 8
        $region36: #{unet1d_wrap_forward.1} parent=11 // pred_fallthru
          _
        // Predicated region
        $region37: #{unet1d_wrap_forward.1} parent=11 // pred_check
          %p684 = pneg %p212
        $region38: #{unet1d_wrap_forward.1} parent=11 // pred_check_branch
          %686 = sbr.rel (%p684) target = $region40
        $region39: #{unet1d_wrap_forward.1} parent=11 // pred_region
          _
        $region40: #{unet1d_wrap_forward.1} parent=11 // pred_fallthru
          _
        // Predicated region
        $region41: #{unet1d_wrap_forward.1} parent=11 // pred_check
          %p687 = pneg %p233
        $region42: #{unet1d_wrap_forward.1} parent=11 // pred_check_branch
          %689 = sbr.rel (%p687) target = $region44
        $region43: #{unet1d_wrap_forward.1} parent=11 // pred_region
          %s691 = ssub.s32 2048, 2048
          %692 = vsyncadd [#allocation12], %s691
          %s693 = sshll.u32 [#allocation13], 4
          %s694 = int_to_ptr.vmem [resolvable:$true] %s693
          %699 = dma.hbm_to_vmem [thread:$0]  %s8, 2048, %s694, [#allocation12], 256, 256, 16
        $region44: #{unet1d_wrap_forward.1} parent=11 // pred_fallthru
          _
        // Predicated region
        $region45: #{unet1d_wrap_forward.1} parent=11 // pred_check
          %p700 = pneg %p254
        $region46: #{unet1d_wrap_forward.1} parent=11 // pred_check_branch
          %702 = sbr.rel (%p700) target = $region48
        $region47: #{unet1d_wrap_forward.1} parent=11 // pred_region
          _
        $region48: #{unet1d_wrap_forward.1} parent=11 // pred_fallthru
          _
        // Predicated region
        $region49: #{unet1d_wrap_forward.1} parent=11 // pred_check
          %p703 = pneg %p275
        $region50: #{unet1d_wrap_forward.1} parent=11 // pred_check_branch
          %705 = sbr.rel (%p703) target = $region52
        $region51: #{unet1d_wrap_forward.1} parent=11 // pred_region
          _
        $region52: #{unet1d_wrap_forward.1} parent=11 // pred_fallthru
          _
        // Predicated region
        $region53: #{unet1d_wrap_forward.1} parent=11 // pred_check
          %p706 = pneg %p296
        $region54: #{unet1d_wrap_forward.1} parent=11 // pred_check_branch
          %708 = sbr.rel (%p706) target = $region56
        $region55: #{unet1d_wrap_forward.1} parent=11 // pred_region
          %s710 = ssub.s32 2048, 2048
          %711 = vsyncadd [#allocation15], %s710
          %s712 = sshll.u32 [#allocation14], 4
          %s713 = int_to_ptr.vmem [resolvable:$true] %s712
          %718 = dma.hbm_to_vmem [thread:$0]  %s11, 2048, %s713, [#allocation15], 128, 128, 8
        $region56: #{unet1d_wrap_forward.1} parent=11 // pred_fallthru
          _
        // Predicated region
        $region57: #{unet1d_wrap_forward.1} parent=11 // pred_check
          %p719 = pneg %p317
        $region58: #{unet1d_wrap_forward.1} parent=11 // pred_check_branch
          %721 = sbr.rel (%p719) target = $region60
        $region59: #{unet1d_wrap_forward.1} parent=11 // pred_region
          _
        $region60: #{unet1d_wrap_forward.1} parent=11 // pred_fallthru
          _
        // Predicated region
        $region61: #{unet1d_wrap_forward.1} parent=11 // pred_check
          %p722 = pneg %p338
        $region62: #{unet1d_wrap_forward.1} parent=11 // pred_check_branch
          %724 = sbr.rel (%p722) target = $region64
        $region63: #{unet1d_wrap_forward.1} parent=11 // pred_region
          %s726 = ssub.s32 2048, 2048
          %727 = vsyncadd [#allocation15], %s726
          %s728 = sshll.u32 [#allocation16], 4
          %s729 = int_to_ptr.vmem [resolvable:$true] %s728
          %734 = dma.hbm_to_vmem [thread:$0]  %s13, 2048, %s729, [#allocation15], 256, 256, 16
        $region64: #{unet1d_wrap_forward.1} parent=11 // pred_fallthru
          _
        // Predicated region
        $region65: #{unet1d_wrap_forward.1} parent=11 // pred_check
          %p735 = pneg %p359
        $region66: #{unet1d_wrap_forward.1} parent=11 // pred_check_branch
          %737 = sbr.rel (%p735) target = $region68
        $region67: #{unet1d_wrap_forward.1} parent=11 // pred_region
          %s739 = ssub.s32 1024, 1024
          %740 = vsyncadd [#allocation18], %s739
          %s741 = sshll.u32 [#allocation17], 4
          %s742 = int_to_ptr.vmem [resolvable:$true] %s741
          %747 = dma.hbm_to_vmem [thread:$0]  %s14, 1024, %s742, [#allocation18], 128, 128, 8
        $region68: #{unet1d_wrap_forward.1} parent=11 // pred_fallthru
          _
        // Predicated region
        $region69: #{unet1d_wrap_forward.1} parent=11 // pred_check
          %p748 = pneg %p380
        $region70: #{unet1d_wrap_forward.1} parent=11 // pred_check_branch
          %750 = sbr.rel (%p748) target = $region72
        $region71: #{unet1d_wrap_forward.1} parent=11 // pred_region
          %s752 = ssub.s32 1024, 1024
          %753 = vsyncadd [#allocation18], %s752
          %s754 = sshll.u32 [#allocation19], 4
          %s755 = int_to_ptr.vmem [resolvable:$true] %s754
          %760 = dma.hbm_to_vmem [thread:$0]  %s15, 1024, %s755, [#allocation18], 256, 256, 16
        $region72: #{unet1d_wrap_forward.1} parent=11 // pred_fallthru
          _
        // Predicated region
        $region73: #{unet1d_wrap_forward.1} parent=11 // pred_check
          %p761 = pneg %p401
        $region74: #{unet1d_wrap_forward.1} parent=11 // pred_check_branch
          %763 = sbr.rel (%p761) target = $region76
        $region75: #{unet1d_wrap_forward.1} parent=11 // pred_region
          _
        $region76: #{unet1d_wrap_forward.1} parent=11 // pred_fallthru
          _
        // Predicated region
        $region77: #{unet1d_wrap_forward.1} parent=11 // pred_check
          %p764 = pneg %p422
        $region78: #{unet1d_wrap_forward.1} parent=11 // pred_check_branch
          %766 = sbr.rel (%p764) target = $region80
        $region79: #{unet1d_wrap_forward.1} parent=11 // pred_region
          %s768 = ssub.s32 512, 512
          %769 = vsyncadd [#allocation21], %s768
          %s770 = sshll.u32 [#allocation20], 4
          %s771 = int_to_ptr.vmem [resolvable:$true] %s770
          %776 = dma.hbm_to_vmem [thread:$0]  %s17, 512, %s771, [#allocation21], 128, 128, 8
        $region80: #{unet1d_wrap_forward.1} parent=11 // pred_fallthru
          _
        // Predicated region
        $region81: #{unet1d_wrap_forward.1} parent=11 // pred_check
          %p777 = pneg %p443
        $region82: #{unet1d_wrap_forward.1} parent=11 // pred_check_branch
          %779 = sbr.rel (%p777) target = $region84
        $region83: #{unet1d_wrap_forward.1} parent=11 // pred_region
          _
        $region84: #{unet1d_wrap_forward.1} parent=11 // pred_fallthru
          _
        // Predicated region
        $region85: #{unet1d_wrap_forward.1} parent=11 // pred_check
          %p780 = pneg %p464
        $region86: #{unet1d_wrap_forward.1} parent=11 // pred_check_branch
          %782 = sbr.rel (%p780) target = $region88
        $region87: #{unet1d_wrap_forward.1} parent=11 // pred_region
          %s784 = ssub.s32 256, 256
          %785 = vsyncadd [#allocation21], %s784
          %s786 = sshll.u32 [#allocation22], 4
          %s787 = int_to_ptr.vmem [resolvable:$true] %s786
          %792 = dma.hbm_to_vmem [thread:$0]  %s19, 256, %s787, [#allocation21], 128, 128, 8
        $region88: #{unet1d_wrap_forward.1} parent=11 // pred_fallthru
          _
        // Predicated region
        $region89: #{unet1d_wrap_forward.1} parent=11 // pred_check
          %p793 = pneg %p485
        $region90: #{unet1d_wrap_forward.1} parent=11 // pred_check_branch
          %795 = sbr.rel (%p793) target = $region92
        $region91: #{unet1d_wrap_forward.1} parent=11 // pred_region
          %s797 = ssub.s32 256, 256
          %798 = vsyncadd [#allocation24], %s797
          %s799 = sshll.u32 [#allocation23], 4
          %s800 = int_to_ptr.vmem [resolvable:$true] %s799
          %805 = dma.hbm_to_vmem [thread:$0]  %s20, 256, %s800, [#allocation24], 128, 128, 8
        $region92: #{unet1d_wrap_forward.1} parent=11 // pred_fallthru
          _
        // Predicated region
        $region93: #{unet1d_wrap_forward.1} parent=11 // pred_check
          %p806 = pneg %p506
        $region94: #{unet1d_wrap_forward.1} parent=11 // pred_check_branch
          %808 = sbr.rel (%p806) target = $region96
        $region95: #{unet1d_wrap_forward.1} parent=11 // pred_region
          _
        $region96: #{unet1d_wrap_forward.1} parent=11 // pred_fallthru
          _
        // Predicated region
        $region97: #{unet1d_wrap_forward.1} parent=11 // pred_check
          %p809 = pneg %p527
        $region98: #{unet1d_wrap_forward.1} parent=11 // pred_check_branch
          %811 = sbr.rel (%p809) target = $region100
        $region99: #{unet1d_wrap_forward.1} parent=11 // pred_region
          _
        $region100: #{unet1d_wrap_forward.1} parent=11 // pred_fallthru
          _
        // Predicated region
        $region101: #{unet1d_wrap_forward.1} parent=11 // pred_check
          %p812 = pneg %p548
        $region102: #{unet1d_wrap_forward.1} parent=11 // pred_check_branch
          %814 = sbr.rel (%p812) target = $region104
        $region103: #{unet1d_wrap_forward.1} parent=11 // pred_region
          %s816 = ssub.s32 64, 64
          %817 = vsyncadd [#allocation24], %s816
          %s819 = sshll.u32 [#allocation25], 4
          %s820 = int_to_ptr.vmem [resolvable:$true] %s819
          %822 = dma.hbm_to_vmem [thread:$0]  %s23, 64, %s820, [#allocation24]
        $region104: #{unet1d_wrap_forward.1} parent=11 // pred_fallthru
          _
        // Predicated region
        $region105: #{unet1d_wrap_forward.1} parent=11 // pred_check
          %p823 = pneg %p569
        $region106: #{unet1d_wrap_forward.1} parent=11 // pred_check_branch
          %825 = sbr.rel (%p823) target = $region108
        $region107: #{unet1d_wrap_forward.1} parent=11 // pred_region
          _
        $region108: #{unet1d_wrap_forward.1} parent=11 // pred_fallthru
          _
      $region12: #{unet1d_wrap_forward.1} parent=5 // pred_fallthru
        _
      %p826 = scmp.lt.s32.totalorder %s39, 2
      // Predicated region
      $region109: #{unet1d_wrap_forward.1} parent=5 // pred_check
        %p827 = pneg %p826
      $region110: #{unet1d_wrap_forward.1} parent=5 // pred_check_branch
        %829 = sbr.rel (%p827) target = $region112
      $region111: #{unet1d_wrap_forward.1} parent=5 // pred_region
        // Predicated region
        $region113: #{unet1d_wrap_forward.1} parent=111 // pred_check
          %p830 = pneg %p59
        $region114: #{unet1d_wrap_forward.1} parent=111 // pred_check_branch
          %832 = sbr.rel (%p830) target = $region116
        $region115: #{unet1d_wrap_forward.1} parent=111 // pred_region
          %p833 = scmp.lt.s32.totalorder %s39, 1
          %s834 = scalar_select %p833, %s39, 1
          %s835 = smul.addr %s834, 8
          %s836 = scalar_lea.vmem %s0, %s835
        $region116: #{unet1d_wrap_forward.1} parent=111 // pred_fallthru
          _
      $region112: #{unet1d_wrap_forward.1} parent=5 // pred_fallthru
        _
      %p837 = scmp.le.s32.totalorder 1, %s39
      %p838 = scmp.lt.s32.totalorder %s39, 3
      %p839 = pnand %p837, %p838
      %p840 = pneg %p839
      // Predicated region
      $region117: #{unet1d_wrap_forward.1} parent=5 // pred_check
        _
      $region118: #{unet1d_wrap_forward.1} parent=5 // pred_check_branch
        %842 = sbr.rel (%p839) target = $region120
      $region119: #{unet1d_wrap_forward.1} parent=5 // pred_region
        %s843 = ssub.s32 %s39, 1
        // Predicated region
        $region121: #{unet1d_wrap_forward.1} parent=119 // pred_check
          %p844 = pneg %p86
        $region122: #{unet1d_wrap_forward.1} parent=119 // pred_check_branch
          %846 = sbr.rel (%p844) target = $region124
        $region123: #{unet1d_wrap_forward.1} parent=119 // pred_region
          %847 = dma.done [#allocation4], 128
        $region124: #{unet1d_wrap_forward.1} parent=119 // pred_fallthru
          _
        // Predicated region
        $region125: #{unet1d_wrap_forward.1} parent=119 // pred_check
          %p848 = pneg %p107
        $region126: #{unet1d_wrap_forward.1} parent=119 // pred_check_branch
          %850 = sbr.rel (%p848) target = $region128
        $region127: #{unet1d_wrap_forward.1} parent=119 // pred_region
          %851 = dma.done [#allocation6], 128
        $region128: #{unet1d_wrap_forward.1} parent=119 // pred_fallthru
          _
        // Predicated region
        $region129: #{unet1d_wrap_forward.1} parent=119 // pred_check
          %p852 = pneg %p128
        $region130: #{unet1d_wrap_forward.1} parent=119 // pred_check_branch
          %854 = sbr.rel (%p852) target = $region132
        $region131: #{unet1d_wrap_forward.1} parent=119 // pred_region
          %855 = dma.done [#allocation6], 256
        $region132: #{unet1d_wrap_forward.1} parent=119 // pred_fallthru
          _
        // Predicated region
        $region133: #{unet1d_wrap_forward.1} parent=119 // pred_check
          %p856 = pneg %p149
        $region134: #{unet1d_wrap_forward.1} parent=119 // pred_check_branch
          %858 = sbr.rel (%p856) target = $region136
        $region135: #{unet1d_wrap_forward.1} parent=119 // pred_region
          %859 = dma.done [#allocation9], 256
        $region136: #{unet1d_wrap_forward.1} parent=119 // pred_fallthru
          _
        // Predicated region
        $region137: #{unet1d_wrap_forward.1} parent=119 // pred_check
          %p860 = pneg %p170
        $region138: #{unet1d_wrap_forward.1} parent=119 // pred_check_branch
          %862 = sbr.rel (%p860) target = $region140
        $region139: #{unet1d_wrap_forward.1} parent=119 // pred_region
          %863 = dma.done [#allocation9], 512
        $region140: #{unet1d_wrap_forward.1} parent=119 // pred_fallthru
          _
        // Predicated region
        $region141: #{unet1d_wrap_forward.1} parent=119 // pred_check
          %p864 = pneg %p191
        $region142: #{unet1d_wrap_forward.1} parent=119 // pred_check_branch
          %866 = sbr.rel (%p864) target = $region144
        $region143: #{unet1d_wrap_forward.1} parent=119 // pred_region
          %867 = dma.done [#allocation12], 512
        $region144: #{unet1d_wrap_forward.1} parent=119 // pred_fallthru
          _
        // Predicated region
        $region145: #{unet1d_wrap_forward.1} parent=119 // pred_check
          %p868 = pneg %p233
        $region146: #{unet1d_wrap_forward.1} parent=119 // pred_check_branch
          %870 = sbr.rel (%p868) target = $region148
        $region147: #{unet1d_wrap_forward.1} parent=119 // pred_region
          %871 = dma.done [#allocation12], 2048
        $region148: #{unet1d_wrap_forward.1} parent=119 // pred_fallthru
          _
        // Predicated region
        $region149: #{unet1d_wrap_forward.1} parent=119 // pred_check
          %p872 = pneg %p296
        $region150: #{unet1d_wrap_forward.1} parent=119 // pred_check_branch
          %874 = sbr.rel (%p872) target = $region152
        $region151: #{unet1d_wrap_forward.1} parent=119 // pred_region
          %875 = dma.done [#allocation15], 2048
        $region152: #{unet1d_wrap_forward.1} parent=119 // pred_fallthru
          _
        // Predicated region
        $region153: #{unet1d_wrap_forward.1} parent=119 // pred_check
          %p876 = pneg %p338
        $region154: #{unet1d_wrap_forward.1} parent=119 // pred_check_branch
          %878 = sbr.rel (%p876) target = $region156
        $region155: #{unet1d_wrap_forward.1} parent=119 // pred_region
          %879 = dma.done [#allocation15], 2048
        $region156: #{unet1d_wrap_forward.1} parent=119 // pred_fallthru
          _
        // Predicated region
        $region157: #{unet1d_wrap_forward.1} parent=119 // pred_check
          %p880 = pneg %p359
        $region158: #{unet1d_wrap_forward.1} parent=119 // pred_check_branch
          %882 = sbr.rel (%p880) target = $region160
        $region159: #{unet1d_wrap_forward.1} parent=119 // pred_region
          %883 = dma.done [#allocation18], 1024
        $region160: #{unet1d_wrap_forward.1} parent=119 // pred_fallthru
          _
        // Predicated region
        $region161: #{unet1d_wrap_forward.1} parent=119 // pred_check
          %p884 = pneg %p380
        $region162: #{unet1d_wrap_forward.1} parent=119 // pred_check_branch
          %886 = sbr.rel (%p884) target = $region164
        $region163: #{unet1d_wrap_forward.1} parent=119 // pred_region
          %887 = dma.done [#allocation18], 1024
        $region164: #{unet1d_wrap_forward.1} parent=119 // pred_fallthru
          _
        // Predicated region
        $region165: #{unet1d_wrap_forward.1} parent=119 // pred_check
          %p888 = pneg %p422
        $region166: #{unet1d_wrap_forward.1} parent=119 // pred_check_branch
          %890 = sbr.rel (%p888) target = $region168
        $region167: #{unet1d_wrap_forward.1} parent=119 // pred_region
          %891 = dma.done [#allocation21], 512
        $region168: #{unet1d_wrap_forward.1} parent=119 // pred_fallthru
          _
        // Predicated region
        $region169: #{unet1d_wrap_forward.1} parent=119 // pred_check
          %p892 = pneg %p464
        $region170: #{unet1d_wrap_forward.1} parent=119 // pred_check_branch
          %894 = sbr.rel (%p892) target = $region172
        $region171: #{unet1d_wrap_forward.1} parent=119 // pred_region
          %895 = dma.done [#allocation21], 256
        $region172: #{unet1d_wrap_forward.1} parent=119 // pred_fallthru
          _
        // Predicated region
        $region173: #{unet1d_wrap_forward.1} parent=119 // pred_check
          %p896 = pneg %p485
        $region174: #{unet1d_wrap_forward.1} parent=119 // pred_check_branch
          %898 = sbr.rel (%p896) target = $region176
        $region175: #{unet1d_wrap_forward.1} parent=119 // pred_region
          %899 = dma.done [#allocation24], 256
        $region176: #{unet1d_wrap_forward.1} parent=119 // pred_fallthru
          _
        // Predicated region
        $region177: #{unet1d_wrap_forward.1} parent=119 // pred_check
          %p900 = pneg %p548
        $region178: #{unet1d_wrap_forward.1} parent=119 // pred_check_branch
          %902 = sbr.rel (%p900) target = $region180
        $region179: #{unet1d_wrap_forward.1} parent=119 // pred_region
          %903 = dma.done [#allocation24], 64
        $region180: #{unet1d_wrap_forward.1} parent=119 // pred_fallthru
          _
        %p904 = scmp.lt.s32.totalorder %s44, 1
        %s905 = scalar_select %p904, %s44, 1
        %s906 = smul.addr %s905, 8
        %s907 = scalar_lea.vmem %s0, %s906
        %p908 = pneg %p65
        %p909 = pneg %p62
        %p910 = pneg %p86
        %p911 = pneg %p83
        %p912 = pneg %p107
        %p913 = pneg %p104
        %p914 = pneg %p128
        %p915 = pneg %p125
        %p916 = pneg %p149
        %p917 = pneg %p146
        %p918 = pneg %p170
        %p919 = pneg %p167
        %p920 = pneg %p191
        %p921 = pneg %p188
        %p922 = pneg %p212
        %p923 = pneg %p209
        %p924 = pneg %p233
        %p925 = pneg %p230
        %p926 = pneg %p254
        %p927 = pneg %p251
        %p928 = pneg %p275
        %p929 = pneg %p272
        %p930 = pneg %p296
        %p931 = pneg %p293
        %p932 = pneg %p317
        %p933 = pneg %p314
        %p934 = pneg %p338
        %p935 = pneg %p335
        %p936 = pneg %p359
        %p937 = pneg %p356
        %p938 = pneg %p380
        %p939 = pneg %p377
        %p940 = pneg %p401
        %p941 = pneg %p398
        %p942 = pneg %p422
        %p943 = pneg %p419
        %p944 = pneg %p443
        %p945 = pneg %p440
        %p946 = pneg %p464
        %p947 = pneg %p461
        %p948 = pneg %p485
        %p949 = pneg %p482
        %p950 = pneg %p506
        %p951 = pneg %p503
        %p952 = pneg %p527
        %p953 = pneg %p524
        %p954 = pneg %p548
        %p955 = pneg %p545
        %p956 = pneg %p569
        %p957 = pneg %p566
        %p958 = pneg %p595
        %p959 = pneg %p592
        %p960 = scmp.lt.s32.totalorder %s44, 1
        %s961 = scalar_select %p960, %s44, 1
        %s962 = smul.addr %s961, 4
        %s963 = scalar_lea.vmem %s25, %s962
        %p964 = scmp.lt.s32.totalorder %s44, 1
        %s965 = scalar_select %p964, %s44, 1
        %s966 = smul.addr %s965, 8
        %s967 = scalar_lea.vmem %s0, %s966
        %p968 = scmp.lt.s32.totalorder %s44, 1
        %s969 = scalar_select %p968, %s44, 1
        %s970 = smul.addr %s969, 4
        %s971 = scalar_lea.vmem %s25, %s970
        %v972 = vld [vmem:[%s967] sm:$0xff]
        %vm973 = vcmask 7168
        %974 = vst.msk [vmem:[#allocation2] sm:$0xff] %vm973, 0.0
        %976 = vrot.lane.b32.xlu0 %v972, 1
        %v977 = vpop.permute.xlu0 %976
        %vm979 = vcmask 130056
        %980 = vst.msk [vmem:[#allocation2] sm:$0xff] %vm979, %v977
        %vm981 = vcmask 130048
        %982 = vst.msk [vmem:[#allocation2 + $0x8] sm:$0xff] %vm981, %v972
        %983 = vrot.lane.b32.xlu0 %v972, 127
        %v984 = vpop.permute.xlu0 %983
        %vm986 = vcmask 121856
        %987 = vst.msk [vmem:[#allocation2 + $0x10] sm:$0xff] %vm986, %v984
        %vm988 = vcmask 130168
        %989 = vst.msk [vmem:[#allocation2 + $0x10] sm:$0xff] %vm988, 0.0
        %v990 = vld [vmem:[#allocation3] sm:$0xff]
        %v991 = vld [vmem:[#allocation2] sm:$0xff]
        %v992 = vld [vmem:[#allocation2 + $0x8] sm:$0xff]
        %v993 = vld [vmem:[#allocation2 + $0x10] sm:$0xff]
        %v994 = vld [vmem:[%s24] sm:$0xff]
        %996 = vset.pattern.permute.xlu0 0
        %997 = vperm.xlu0 %996, %v994
        %v998 = vpop.permute.xlu0 %997
        %vm1000 = vcmask 195584
        %v1002 = vsel %vm1000, %v990, 0
        %1004 = vmatprep.subr.mxu0 0.0
        %1005 = vmatpush1.msra.mxu0 %v991
        %1006 = vmatprep.subr.mxu0 0.0
        %1007 = vmatpush1.msra.mxu0 %v992
        %1008 = vmatprep.subr.mxu0 0.0
        %1009 = vmatpush1.msra.mxu0 %v993
        %1010 = vmatprep.subr.mxu0 0.0
        %1011 = vmatpush1.msra.mxu0 0.0
        %1012 = vmatprep.subr.mxu0 0.0
        %1013 = vmatpush1.msra.mxu0 0.0
        %1014 = vmatprep.subr.mxu0 0.0
        %1015 = vmatpush1.msra.mxu0 0.0
        %1016 = vmatprep.subr.mxu0 0.0
        %1017 = vmatpush1.msra.mxu0 0.0
        %1018 = vmatprep.subr.mxu0 0.0
        %1019 = vmatpush1.msra.mxu0 0.0
        %1020 = vmatprep.subr.mxu0 0.0
        %1021 = vmatpush1.msra.mxu0 0.0
        %1022 = vmatprep.subr.mxu0 0.0
        %1023 = vmatpush1.msra.mxu0 0.0
        %1024 = vmatprep.subr.mxu0 0.0
        %1025 = vmatpush1.msra.mxu0 0.0
        %1026 = vmatprep.subr.mxu0 0.0
        %1027 = vmatpush1.msra.mxu0 0.0
        %1028 = vmatprep.subr.mxu0 0.0
        %1029 = vmatpush1.msra.mxu0 0.0
        %1030 = vmatprep.subr.mxu0 0.0
        %1031 = vmatpush1.msra.mxu0 0.0
        %1032 = vmatprep.subr.mxu0 0.0
        %1033 = vmatpush1.msra.mxu0 0.0
        %1034 = vmatprep.subr.mxu0 0.0
        %1035 = vmatpush1.msra.mxu0 0.0
        %1036 = vmatprep.subr.mxu0 0.0
        %1037 = vmatpush1.msra.mxu0 0.0
        %1038 = vmatprep.subr.mxu0 0.0
        %1039 = vmatpush1.msra.mxu0 0.0
        %1040 = vmatprep.subr.mxu0 0.0
        %1041 = vmatpush1.msra.mxu0 0.0
        %1042 = vmatprep.subr.mxu0 0.0
        %1043 = vmatpush1.msra.mxu0 0.0
        %1044 = vmatprep.subr.mxu0 0.0
        %1045 = vmatpush1.msra.mxu0 0.0
        %1046 = vmatprep.subr.mxu0 0.0
        %1047 = vmatpush1.msra.mxu0 0.0
        %1048 = vmatprep.subr.mxu0 0.0
        %1049 = vmatpush1.msra.mxu0 0.0
        %1050 = vmatprep.subr.mxu0 0.0
        %1051 = vmatpush1.msra.mxu0 0.0
        %1052 = vmatprep.subr.mxu0 0.0
        %1053 = vmatpush1.msra.mxu0 0.0
        %1054 = vmatprep.subr.mxu0 0.0
        %1055 = vmatpush1.msra.mxu0 0.0
        %1056 = vmatprep.subr.mxu0 0.0
        %1057 = vmatpush1.msra.mxu0 0.0
        %1058 = vmatprep.subr.mxu0 0.0
        %1059 = vmatpush1.msra.mxu0 0.0
        %1060 = vmatprep.subr.mxu0 0.0
        %1061 = vmatpush1.msra.mxu0 0.0
        %1062 = vmatprep.subr.mxu0 0.0
        %1063 = vmatpush1.msra.mxu0 0.0
        %1064 = vmatprep.subr.mxu0 0.0
        %1065 = vmatpush1.msra.mxu0 0.0
        %1066 = vmatprep.subr.mxu0 0.0
        %1067 = vmatpush1.msra.mxu0 0.0
        %1068 = vmatprep.mubr.f32.mxu0 0.0
        %1069 = vmatmul.mubr.f32.gmra.mrb[0].mxu0 %v1002
        %v1070 = vpop.f32.mrb[0].mxu0
        %v1071 = vadd.f32 %v998, %v1070
        %v1072 = vpop.f32.mrb[0].mxu0
        %1073 = vdwg.mxu0
        %v1074 = vtanh.pop %v1071
        %1075 = vst.msk [vmem:[#allocation2] sm:$0xff] %vm973, 0.0
        %1077 = vrot.lane.b32.xlu0 %v1074, 1
        %v1078 = vpop.permute.xlu0 %1077
        %1080 = vst.msk [vmem:[#allocation2] sm:$0xff] %vm979, %v1078
        %1081 = vst.msk [vmem:[#allocation2 + $0x8] sm:$0xff] %vm981, %v1074
        %1082 = vrot.lane.b32.xlu0 %v1074, 127
        %v1083 = vpop.permute.xlu0 %1082
        %1085 = vst.msk [vmem:[#allocation2 + $0x10] sm:$0xff] %vm986, %v1083
        %1086 = vst.msk [vmem:[#allocation2 + $0x10] sm:$0xff] %vm988, 0.0
        %v1087 = vld [vmem:[#allocation5] sm:$0xff]
        %v1088 = vld [vmem:[#allocation2] sm:$0xff]
        %v1089 = vld [vmem:[#allocation2 + $0x8] sm:$0xff]
        %v1090 = vld [vmem:[#allocation2 + $0x10] sm:$0xff]
        %v1091 = vld [vmem:[%s24] sm:$0xff]
        %1093 = vset.pattern.permute.xlu0 1
        %1094 = vperm.xlu0 %1093, %v1091
        %v1095 = vpop.permute.xlu0 %1094
        %v1098 = vsel %vm1000, %v1087, 0
        %1100 = vmatprep.subr.mxu0 0.0
        %1101 = vmatpush1.msra.mxu0 %v1088
        %1102 = vmatprep.subr.mxu0 0.0
        %1103 = vmatpush1.msra.mxu0 %v1089
        %1104 = vmatprep.subr.mxu0 0.0
        %1105 = vmatpush1.msra.mxu0 %v1090
        %1106 = vmatprep.subr.mxu0 0.0
        %1107 = vmatpush1.msra.mxu0 0.0
        %1108 = vmatprep.subr.mxu0 0.0
        %1109 = vmatpush1.msra.mxu0 0.0
        %1110 = vmatprep.subr.mxu0 0.0
        %1111 = vmatpush1.msra.mxu0 0.0
        %1112 = vmatprep.subr.mxu0 0.0
        %1113 = vmatpush1.msra.mxu0 0.0
        %1114 = vmatprep.subr.mxu0 0.0
        %1115 = vmatpush1.msra.mxu0 0.0
        %1116 = vmatprep.subr.mxu0 0.0
        %1117 = vmatpush1.msra.mxu0 0.0
        %1118 = vmatprep.subr.mxu0 0.0
        %1119 = vmatpush1.msra.mxu0 0.0
        %1120 = vmatprep.subr.mxu0 0.0
        %1121 = vmatpush1.msra.mxu0 0.0
        %1122 = vmatprep.subr.mxu0 0.0
        %1123 = vmatpush1.msra.mxu0 0.0
        %1124 = vmatprep.subr.mxu0 0.0
        %1125 = vmatpush1.msra.mxu0 0.0
        %1126 = vmatprep.subr.mxu0 0.0
        %1127 = vmatpush1.msra.mxu0 0.0
        %1128 = vmatprep.subr.mxu0 0.0
        %1129 = vmatpush1.msra.mxu0 0.0
        %1130 = vmatprep.subr.mxu0 0.0
        %1131 = vmatpush1.msra.mxu0 0.0
        %1132 = vmatprep.subr.mxu0 0.0
        %1133 = vmatpush1.msra.mxu0 0.0
        %1134 = vmatprep.subr.mxu0 0.0
        %1135 = vmatpush1.msra.mxu0 0.0
        %1136 = vmatprep.subr.mxu0 0.0
        %1137 = vmatpush1.msra.mxu0 0.0
        %1138 = vmatprep.subr.mxu0 0.0
        %1139 = vmatpush1.msra.mxu0 0.0
        %1140 = vmatprep.subr.mxu0 0.0
        %1141 = vmatpush1.msra.mxu0 0.0
        %1142 = vmatprep.subr.mxu0 0.0
        %1143 = vmatpush1.msra.mxu0 0.0
        %1144 = vmatprep.subr.mxu0 0.0
        %1145 = vmatpush1.msra.mxu0 0.0
        %1146 = vmatprep.subr.mxu0 0.0
        %1147 = vmatpush1.msra.mxu0 0.0
        %1148 = vmatprep.subr.mxu0 0.0
        %1149 = vmatpush1.msra.mxu0 0.0
        %1150 = vmatprep.subr.mxu0 0.0
        %1151 = vmatpush1.msra.mxu0 0.0
        %1152 = vmatprep.subr.mxu0 0.0
        %1153 = vmatpush1.msra.mxu0 0.0
        %1154 = vmatprep.subr.mxu0 0.0
        %1155 = vmatpush1.msra.mxu0 0.0
        %1156 = vmatprep.subr.mxu0 0.0
        %1157 = vmatpush1.msra.mxu0 0.0
        %1158 = vmatprep.subr.mxu0 0.0
        %1159 = vmatpush1.msra.mxu0 0.0
        %1160 = vmatprep.subr.mxu0 0.0
        %1161 = vmatpush1.msra.mxu0 0.0
        %1162 = vmatprep.subr.mxu0 0.0
        %1163 = vmatpush1.msra.mxu0 0.0
        %1164 = vmatprep.mubr.f32.mxu0 0.0
        %1165 = vmatmul.mubr.f32.gmra.mrb[0].mxu0 %v1098
        %v1166 = vpop.f32.mrb[0].mxu0
        %v1167 = vadd.f32 %v1095, %v1166
        %v1168 = vpop.f32.mrb[0].mxu0
        %1169 = vdwg.mxu0
        %v1170 = vtanh.pop %v1167
        %v1171 = vlaneseq
        %v1172 = vshrl.u32 %v1171, 7
        %v1173 = vadd.s32 %v1172, 8
        %v1174 = vlaneseq
        %v1175 = vand.u32 %v1174, 127
        %v1176 = vmul.u32 %v1175, 2
        %vm1177 = vcmp.eq.s32.totalorder %v1172, %v1176
        %vm1178 = vcmp.eq.s32.totalorder %v1173, %v1176
        %v1179 = vsel %vm1177, 1, 0
        %v1180 = vsel %vm1178, 1, 0
        %v1181 = vcvt.s32.f32 %v1179
        %v1182 = vcvt.s32.f32 %v1180
        %v1183 = vadd.s32 %v1176, 1
        %vm1184 = vcmp.eq.s32.totalorder %v1172, %v1183
        %vm1185 = vcmp.eq.s32.totalorder %v1173, %v1183
        %v1186 = vsel %vm1184, 1, 0
        %v1187 = vsel %vm1185, 1, 0
        %v1188 = vcvt.s32.f32 %v1186
        %v1189 = vcvt.s32.f32 %v1187
        %v1191 = vsel %vm981, %v1170, 0
        %1193 = vmatprep.subr.mxu0 0.0
        %1194 = vmatpush1.msra.mxu0 %v1181
        %1195 = vmatprep.subr.mxu0 0.0
        %1196 = vmatpush1.msra.mxu0 %v1182
        %1197 = vmatprep.subr.mxu0 0.0
        %1198 = vmatpush1.msra.mxu0 0.0
        %1199 = vmatprep.subr.mxu0 0.0
        %1200 = vmatpush1.msra.mxu0 0.0
        %1201 = vmatprep.subr.mxu0 0.0
        %1202 = vmatpush1.msra.mxu0 0.0
        %1203 = vmatprep.subr.mxu0 0.0
        %1204 = vmatpush1.msra.mxu0 0.0
        %1205 = vmatprep.subr.mxu0 0.0
        %1206 = vmatpush1.msra.mxu0 0.0
        %1207 = vmatprep.subr.mxu0 0.0
        %1208 = vmatpush1.msra.mxu0 0.0
        %1209 = vmatprep.subr.mxu0 0.0
        %1210 = vmatpush1.msra.mxu0 0.0
        %1211 = vmatprep.subr.mxu0 0.0
        %1212 = vmatpush1.msra.mxu0 0.0
        %1213 = vmatprep.subr.mxu0 0.0
        %1214 = vmatpush1.msra.mxu0 0.0
        %1215 = vmatprep.subr.mxu0 0.0
        %1216 = vmatpush1.msra.mxu0 0.0
        %1217 = vmatprep.subr.mxu0 0.0
        %1218 = vmatpush1.msra.mxu0 0.0
        %1219 = vmatprep.subr.mxu0 0.0
        %1220 = vmatpush1.msra.mxu0 0.0
        %1221 = vmatprep.subr.mxu0 0.0
        %1222 = vmatpush1.msra.mxu0 0.0
        %1223 = vmatprep.subr.mxu0 0.0
        %1224 = vmatpush1.msra.mxu0 0.0
        %1225 = vmatprep.subr.mxu0 0.0
        %1226 = vmatpush1.msra.mxu0 0.0
        %1227 = vmatprep.subr.mxu0 0.0
        %1228 = vmatpush1.msra.mxu0 0.0
        %1229 = vmatprep.subr.mxu0 0.0
        %1230 = vmatpush1.msra.mxu0 0.0
        %1231 = vmatprep.subr.mxu0 0.0
        %1232 = vmatpush1.msra.mxu0 0.0
        %1233 = vmatprep.subr.mxu0 0.0
        %1234 = vmatpush1.msra.mxu0 0.0
        %1235 = vmatprep.subr.mxu0 0.0
        %1236 = vmatpush1.msra.mxu0 0.0
        %1237 = vmatprep.subr.mxu0 0.0
        %1238 = vmatpush1.msra.mxu0 0.0
        %1239 = vmatprep.subr.mxu0 0.0
        %1240 = vmatpush1.msra.mxu0 0.0
        %1241 = vmatprep.subr.mxu0 0.0
        %1242 = vmatpush1.msra.mxu0 0.0
        %1243 = vmatprep.subr.mxu0 0.0
        %1244 = vmatpush1.msra.mxu0 0.0
        %1245 = vmatprep.subr.mxu0 0.0
        %1246 = vmatpush1.msra.mxu0 0.0
        %1247 = vmatprep.subr.mxu0 0.0
        %1248 = vmatpush1.msra.mxu0 0.0
        %1249 = vmatprep.subr.mxu0 0.0
        %1250 = vmatpush1.msra.mxu0 0.0
        %1251 = vmatprep.subr.mxu0 0.0
        %1252 = vmatpush1.msra.mxu0 0.0
        %1253 = vmatprep.subr.mxu0 0.0
        %1254 = vmatpush1.msra.mxu0 0.0
        %1255 = vmatprep.subr.mxu0 0.0
        %1256 = vmatpush1.msra.mxu0 0.0
        %1257 = vmatprep.mubr.f32.mxu0 0.0
        %1258 = vmatmul.mubr.f32.gmra.mrb[0].mxu0 %v1191
        %v1259 = vpop.f32.mrb[0].mxu0
        %v1260 = vadd.f32 0.0, %v1259
        %v1261 = vpop.f32.mrb[0].mxu0
        %1262 = vdwg.mxu0
        %1263 = vmatprep.subr.mxu0 0.0
        %1264 = vmatpush1.msra.mxu0 %v1188
        %1265 = vmatprep.subr.mxu0 0.0
        %1266 = vmatpush1.msra.mxu0 %v1189
        %1267 = vmatprep.subr.mxu0 0.0
        %1268 = vmatpush1.msra.mxu0 0.0
        %1269 = vmatprep.subr.mxu0 0.0
        %1270 = vmatpush1.msra.mxu0 0.0
        %1271 = vmatprep.subr.mxu0 0.0
        %1272 = vmatpush1.msra.mxu0 0.0
        %1273 = vmatprep.subr.mxu0 0.0
        %1274 = vmatpush1.msra.mxu0 0.0
        %1275 = vmatprep.subr.mxu0 0.0
        %1276 = vmatpush1.msra.mxu0 0.0
        %1277 = vmatprep.subr.mxu0 0.0
        %1278 = vmatpush1.msra.mxu0 0.0
        %1279 = vmatprep.subr.mxu0 0.0
        %1280 = vmatpush1.msra.mxu0 0.0
        %1281 = vmatprep.subr.mxu0 0.0
        %1282 = vmatpush1.msra.mxu0 0.0
        %1283 = vmatprep.subr.mxu0 0.0
        %1284 = vmatpush1.msra.mxu0 0.0
        %1285 = vmatprep.subr.mxu0 0.0
        %1286 = vmatpush1.msra.mxu0 0.0
        %1287 = vmatprep.subr.mxu0 0.0
        %1288 = vmatpush1.msra.mxu0 0.0
        %1289 = vmatprep.subr.mxu0 0.0
        %1290 = vmatpush1.msra.mxu0 0.0
        %1291 = vmatprep.subr.mxu0 0.0
        %1292 = vmatpush1.msra.mxu0 0.0
        %1293 = vmatprep.subr.mxu0 0.0
        %1294 = vmatpush1.msra.mxu0 0.0
        %1295 = vmatprep.subr.mxu0 0.0
        %1296 = vmatpush1.msra.mxu0 0.0
        %1297 = vmatprep.subr.mxu0 0.0
        %1298 = vmatpush1.msra.mxu0 0.0
        %1299 = vmatprep.subr.mxu0 0.0
        %1300 = vmatpush1.msra.mxu0 0.0
        %1301 = vmatprep.subr.mxu0 0.0
        %1302 = vmatpush1.msra.mxu0 0.0
        %1303 = vmatprep.subr.mxu0 0.0
        %1304 = vmatpush1.msra.mxu0 0.0
        %1305 = vmatprep.subr.mxu0 0.0
        %1306 = vmatpush1.msra.mxu0 0.0
        %1307 = vmatprep.subr.mxu0 0.0
        %1308 = vmatpush1.msra.mxu0 0.0
        %1309 = vmatprep.subr.mxu0 0.0
        %1310 = vmatpush1.msra.mxu0 0.0
        %1311 = vmatprep.subr.mxu0 0.0
        %1312 = vmatpush1.msra.mxu0 0.0
        %1313 = vmatprep.subr.mxu0 0.0
        %1314 = vmatpush1.msra.mxu0 0.0
        %1315 = vmatprep.subr.mxu0 0.0
        %1316 = vmatpush1.msra.mxu0 0.0
        %1317 = vmatprep.subr.mxu0 0.0
        %1318 = vmatpush1.msra.mxu0 0.0
        %1319 = vmatprep.subr.mxu0 0.0
        %1320 = vmatpush1.msra.mxu0 0.0
        %1321 = vmatprep.subr.mxu0 0.0
        %1322 = vmatpush1.msra.mxu0 0.0
        %1323 = vmatprep.subr.mxu0 0.0
        %1324 = vmatpush1.msra.mxu0 0.0
        %1325 = vmatprep.subr.mxu0 0.0
        %1326 = vmatpush1.msra.mxu0 0.0
        %1327 = vmatprep.mubr.f32.mxu0 0.0
        %1328 = vmatmul.mubr.f32.gmra.mrb[0].mxu0 %v1191
        %v1329 = vpop.f32.mrb[0].mxu0
        %v1330 = vadd.f32 0.0, %v1329
        %v1331 = vpop.f32.mrb[0].mxu0
        %1332 = vdwg.mxu0
        %v1333 = vmax.f32 %v1260, %v1330
        %1334 = vst.msk [vmem:[#allocation2] sm:$0xff] %vm973, 0.0
        %1336 = vrot.lane.b32.xlu0 %v1333, 1
        %v1337 = vpop.permute.xlu0 %1336
        %vm1339 = vcmask 64520
        %1340 = vst.msk [vmem:[#allocation2] sm:$0xff] %vm1339, %v1337
        %vm1341 = vcmask 64512
        %1342 = vst.msk [vmem:[#allocation2 + $0x8] sm:$0xff] %vm1341, %v1333
        %1343 = vrot.lane.b32.xlu0 %v1333, 127
        %v1344 = vpop.permute.xlu0 %1343
        %vm1346 = vcmask 56320
        %1347 = vst.msk [vmem:[#allocation2 + $0x10] sm:$0xff] %vm1346, %v1344
        %vm1348 = vcmask 64568
        %1349 = vst.msk [vmem:[#allocation2 + $0x10] sm:$0xff] %vm1348, 0.0
        %v1350 = vld [vmem:[#allocation7] sm:$0xff]
        %v1351 = vld [vmem:[#allocation7 + $0x8] sm:$0xff]
        %v1352 = vld [vmem:[#allocation2] sm:$0xff]
        %v1353 = vld [vmem:[#allocation2 + $0x8] sm:$0xff]
        %v1354 = vld [vmem:[#allocation2 + $0x10] sm:$0xff]
        %v1355 = vld [vmem:[%s24] sm:$0xff]
        %v1356 = vld [vmem:[%s24 + $0x8] sm:$0xff]
        %1358 = vset.pattern.permute.xlu0 2
        %1359 = vperm.xlu0 %1358, %v1355
        %v1360 = vpop.permute.xlu0 %1359
        %1363 = vset.pattern.permute.xlu0 2
        %1364 = vperm.xlu0 %1363, %v1356
        %v1365 = vpop.permute.xlu0 %1364
        %v1368 = vsel %vm1000, %v1350, 0
        %v1371 = vsel %vm1000, %v1351, 0
        %1373 = vmatprep.subr.mxu0 0.0
        %1374 = vmatpush1.msra.mxu0 %v1352
        %1375 = vmatprep.subr.mxu0 0.0
        %1376 = vmatpush1.msra.mxu0 %v1353
        %1377 = vmatprep.subr.mxu0 0.0
        %1378 = vmatpush1.msra.mxu0 %v1354
        %1379 = vmatprep.subr.mxu0 0.0
        %1380 = vmatpush1.msra.mxu0 0.0
        %1381 = vmatprep.subr.mxu0 0.0
        %1382 = vmatpush1.msra.mxu0 0.0
        %1383 = vmatprep.subr.mxu0 0.0
        %1384 = vmatpush1.msra.mxu0 0.0
        %1385 = vmatprep.subr.mxu0 0.0
        %1386 = vmatpush1.msra.mxu0 0.0
        %1387 = vmatprep.subr.mxu0 0.0
        %1388 = vmatpush1.msra.mxu0 0.0
        %1389 = vmatprep.subr.mxu0 0.0
        %1390 = vmatpush1.msra.mxu0 0.0
        %1391 = vmatprep.subr.mxu0 0.0
        %1392 = vmatpush1.msra.mxu0 0.0
        %1393 = vmatprep.subr.mxu0 0.0
        %1394 = vmatpush1.msra.mxu0 0.0
        %1395 = vmatprep.subr.mxu0 0.0
        %1396 = vmatpush1.msra.mxu0 0.0
        %1397 = vmatprep.subr.mxu0 0.0
        %1398 = vmatpush1.msra.mxu0 0.0
        %1399 = vmatprep.subr.mxu0 0.0
        %1400 = vmatpush1.msra.mxu0 0.0
        %1401 = vmatprep.subr.mxu0 0.0
        %1402 = vmatpush1.msra.mxu0 0.0
        %1403 = vmatprep.subr.mxu0 0.0
        %1404 = vmatpush1.msra.mxu0 0.0
        %1405 = vmatprep.subr.mxu0 0.0
        %1406 = vmatpush1.msra.mxu0 0.0
        %1407 = vmatprep.subr.mxu0 0.0
        %1408 = vmatpush1.msra.mxu0 0.0
        %1409 = vmatprep.subr.mxu0 0.0
        %1410 = vmatpush1.msra.mxu0 0.0
        %1411 = vmatprep.subr.mxu0 0.0
        %1412 = vmatpush1.msra.mxu0 0.0
        %1413 = vmatprep.subr.mxu0 0.0
        %1414 = vmatpush1.msra.mxu0 0.0
        %1415 = vmatprep.subr.mxu0 0.0
        %1416 = vmatpush1.msra.mxu0 0.0
        %1417 = vmatprep.subr.mxu0 0.0
        %1418 = vmatpush1.msra.mxu0 0.0
        %1419 = vmatprep.subr.mxu0 0.0
        %1420 = vmatpush1.msra.mxu0 0.0
        %1421 = vmatprep.subr.mxu0 0.0
        %1422 = vmatpush1.msra.mxu0 0.0
        %1423 = vmatprep.subr.mxu0 0.0
        %1424 = vmatpush1.msra.mxu0 0.0
        %1425 = vmatprep.subr.mxu0 0.0
        %1426 = vmatpush1.msra.mxu0 0.0
        %1427 = vmatprep.subr.mxu0 0.0
        %1428 = vmatpush1.msra.mxu0 0.0
        %1429 = vmatprep.subr.mxu0 0.0
        %1430 = vmatpush1.msra.mxu0 0.0
        %1431 = vmatprep.subr.mxu0 0.0
        %1432 = vmatpush1.msra.mxu0 0.0
        %1433 = vmatprep.subr.mxu0 0.0
        %1434 = vmatpush1.msra.mxu0 0.0
        %1435 = vmatprep.subr.mxu0 0.0
        %1436 = vmatpush1.msra.mxu0 0.0
        %1437 = vmatprep.mubr.f32.mxu0 0.0
        %1438 = vmatmul.mubr.f32.gmra.mrb[0].mxu0 %v1368
        %v1439 = vpop.f32.mrb[0].mxu0
        %v1440 = vadd.f32 %v1360, %v1439
        %v1441 = vpop.f32.mrb[0].mxu0
        %1442 = vmatprep.mubr.f32.mxu0 0.0
        %1443 = vmatmul.mubr.f32.gmra.mrb[0].mxu0 %v1371
        %v1444 = vpop.f32.mrb[0].mxu0
        %v1445 = vadd.f32 %v1365, %v1444
        %v1446 = vpop.f32.mrb[0].mxu0
        %1447 = vdwg.mxu0
        %v1448 = vtanh.pop %v1440
        %v1449 = vtanh.pop %v1445
        %1450 = vst.msk [vmem:[#allocation2] sm:$0xff] %vm973, 0.0
        %1451 = vst.msk [vmem:[#allocation2 + $0x8] sm:$0xff] %vm973, 0.0
        %1454 = vrot.lane.b32.xlu0 %v1448, 1
        %v1455 = vpop.permute.xlu0 %1454
        %1456 = vrot.lane.b32.xlu0 %v1449, 1
        %v1457 = vpop.permute.xlu0 %1456
        %1460 = vst.msk [vmem:[#allocation2] sm:$0xff] %vm1339, %v1455
        %1461 = vst.msk [vmem:[#allocation2 + $0x8] sm:$0xff] %vm1339, %v1457
        %1462 = vst.msk [vmem:[#allocation2 + $0x10] sm:$0xff] %vm1341, %v1448
        %1463 = vst.msk [vmem:[#allocation2 + $0x18] sm:$0xff] %vm1341, %v1449
        %1464 = vrot.lane.b32.xlu0 %v1448, 127
        %v1465 = vpop.permute.xlu0 %1464
        %1466 = vrot.lane.b32.xlu0 %v1449, 127
        %v1467 = vpop.permute.xlu0 %1466
        %1470 = vst.msk [vmem:[#allocation2 + $0x20] sm:$0xff] %vm1346, %v1465
        %1471 = vst.msk [vmem:[#allocation2 + $0x28] sm:$0xff] %vm1346, %v1467
        %1472 = vst.msk [vmem:[#allocation2 + $0x20] sm:$0xff] %vm1348, 0.0
        %1473 = vst.msk [vmem:[#allocation2 + $0x28] sm:$0xff] %vm1348, 0.0
        %v1474 = vld [vmem:[#allocation8] sm:$0xff]
        %v1475 = vld [vmem:[#allocation8 + $0x8] sm:$0xff]
        %v1476 = vld [vmem:[#allocation2] sm:$0xff]
        %v1477 = vld [vmem:[#allocation2 + $0x8] sm:$0xff]
        %v1478 = vld [vmem:[#allocation2 + $0x10] sm:$0xff]
        %v1479 = vld [vmem:[#allocation2 + $0x18] sm:$0xff]
        %v1480 = vld [vmem:[#allocation2 + $0x20] sm:$0xff]
        %v1481 = vld [vmem:[#allocation2 + $0x28] sm:$0xff]
        %v1482 = vld [vmem:[%s24] sm:$0xff]
        %v1483 = vld [vmem:[%s24 + $0x8] sm:$0xff]
        %1485 = vset.pattern.permute.xlu0 3
        %1486 = vperm.xlu0 %1485, %v1482
        %v1487 = vpop.permute.xlu0 %1486
        %1490 = vset.pattern.permute.xlu0 3
        %1491 = vperm.xlu0 %1490, %v1483
        %v1492 = vpop.permute.xlu0 %1491
        %vm1494 = vcmask 392192
        %v1496 = vsel %vm1494, %v1474, 0
        %v1499 = vsel %vm1494, %v1475, 0
        %1501 = vmatprep.subr.mxu0 0.0
        %1502 = vmatpush1.msra.mxu0 %v1476
        %1503 = vmatprep.subr.mxu0 0.0
        %1504 = vmatpush1.msra.mxu0 %v1477
        %1505 = vmatprep.subr.mxu0 0.0
        %1506 = vmatpush1.msra.mxu0 %v1478
        %1507 = vmatprep.subr.mxu0 0.0
        %1508 = vmatpush1.msra.mxu0 %v1479
        %1509 = vmatprep.subr.mxu0 0.0
        %1510 = vmatpush1.msra.mxu0 %v1480
        %1511 = vmatprep.subr.mxu0 0.0
        %1512 = vmatpush1.msra.mxu0 %v1481
        %1513 = vmatprep.subr.mxu0 0.0
        %1514 = vmatpush1.msra.mxu0 0.0
        %1515 = vmatprep.subr.mxu0 0.0
        %1516 = vmatpush1.msra.mxu0 0.0
        %1517 = vmatprep.subr.mxu0 0.0
        %1518 = vmatpush1.msra.mxu0 0.0
        %1519 = vmatprep.subr.mxu0 0.0
        %1520 = vmatpush1.msra.mxu0 0.0
        %1521 = vmatprep.subr.mxu0 0.0
        %1522 = vmatpush1.msra.mxu0 0.0
        %1523 = vmatprep.subr.mxu0 0.0
        %1524 = vmatpush1.msra.mxu0 0.0
        %1525 = vmatprep.subr.mxu0 0.0
        %1526 = vmatpush1.msra.mxu0 0.0
        %1527 = vmatprep.subr.mxu0 0.0
        %1528 = vmatpush1.msra.mxu0 0.0
        %1529 = vmatprep.subr.mxu0 0.0
        %1530 = vmatpush1.msra.mxu0 0.0
        %1531 = vmatprep.subr.mxu0 0.0
        %1532 = vmatpush1.msra.mxu0 0.0
        %1533 = vmatprep.subr.mxu0 0.0
        %1534 = vmatpush1.msra.mxu0 0.0
        %1535 = vmatprep.subr.mxu0 0.0
        %1536 = vmatpush1.msra.mxu0 0.0
        %1537 = vmatprep.subr.mxu0 0.0
        %1538 = vmatpush1.msra.mxu0 0.0
        %1539 = vmatprep.subr.mxu0 0.0
        %1540 = vmatpush1.msra.mxu0 0.0
        %1541 = vmatprep.subr.mxu0 0.0
        %1542 = vmatpush1.msra.mxu0 0.0
        %1543 = vmatprep.subr.mxu0 0.0
        %1544 = vmatpush1.msra.mxu0 0.0
        %1545 = vmatprep.subr.mxu0 0.0
        %1546 = vmatpush1.msra.mxu0 0.0
        %1547 = vmatprep.subr.mxu0 0.0
        %1548 = vmatpush1.msra.mxu0 0.0
        %1549 = vmatprep.subr.mxu0 0.0
        %1550 = vmatpush1.msra.mxu0 0.0
        %1551 = vmatprep.subr.mxu0 0.0
        %1552 = vmatpush1.msra.mxu0 0.0
        %1553 = vmatprep.subr.mxu0 0.0
        %1554 = vmatpush1.msra.mxu0 0.0
        %1555 = vmatprep.subr.mxu0 0.0
        %1556 = vmatpush1.msra.mxu0 0.0
        %1557 = vmatprep.subr.mxu0 0.0
        %1558 = vmatpush1.msra.mxu0 0.0
        %1559 = vmatprep.subr.mxu0 0.0
        %1560 = vmatpush1.msra.mxu0 0.0
        %1561 = vmatprep.subr.mxu0 0.0
        %1562 = vmatpush1.msra.mxu0 0.0
        %1563 = vmatprep.subr.mxu0 0.0
        %1564 = vmatpush1.msra.mxu0 0.0
        %1565 = vmatprep.mubr.f32.mxu0 0.0
        %1566 = vmatmul.mubr.f32.gmra.mrb[0].mxu0 %v1496
        %v1567 = vpop.f32.mrb[0].mxu0
        %v1568 = vadd.f32 %v1487, %v1567
        %v1569 = vpop.f32.mrb[0].mxu0
        %1570 = vmatprep.mubr.f32.mxu0 0.0
        %1571 = vmatmul.mubr.f32.gmra.mrb[0].mxu0 %v1499
        %v1572 = vpop.f32.mrb[0].mxu0
        %v1573 = vadd.f32 %v1492, %v1572
        %v1574 = vpop.f32.mrb[0].mxu0
        %1575 = vdwg.mxu0
        %v1576 = vtanh.pop %v1568
        %v1577 = vtanh.pop %v1573
        %v1579 = vsel %vm1341, %v1576, 0
        %v1582 = vsel %vm1341, %v1577, 0
        %1584 = vmatprep.subr.mxu0 0.0
        %1585 = vmatpush1.msra.mxu0 %v1181
        %1586 = vmatprep.subr.mxu0 0.0
        %1587 = vmatpush1.msra.mxu0 0.0
        %1588 = vmatprep.subr.mxu0 0.0
        %1589 = vmatpush1.msra.mxu0 0.0
        %1590 = vmatprep.subr.mxu0 0.0
        %1591 = vmatpush1.msra.mxu0 0.0
        %1592 = vmatprep.subr.mxu0 0.0
        %1593 = vmatpush1.msra.mxu0 0.0
        %1594 = vmatprep.subr.mxu0 0.0
        %1595 = vmatpush1.msra.mxu0 0.0
        %1596 = vmatprep.subr.mxu0 0.0
        %1597 = vmatpush1.msra.mxu0 0.0
        %1598 = vmatprep.subr.mxu0 0.0
        %1599 = vmatpush1.msra.mxu0 0.0
        %1600 = vmatprep.subr.mxu0 0.0
        %1601 = vmatpush1.msra.mxu0 0.0
        %1602 = vmatprep.subr.mxu0 0.0
        %1603 = vmatpush1.msra.mxu0 0.0
        %1604 = vmatprep.subr.mxu0 0.0
        %1605 = vmatpush1.msra.mxu0 0.0
        %1606 = vmatprep.subr.mxu0 0.0
        %1607 = vmatpush1.msra.mxu0 0.0
        %1608 = vmatprep.subr.mxu0 0.0
        %1609 = vmatpush1.msra.mxu0 0.0
        %1610 = vmatprep.subr.mxu0 0.0
        %1611 = vmatpush1.msra.mxu0 0.0
        %1612 = vmatprep.subr.mxu0 0.0
        %1613 = vmatpush1.msra.mxu0 0.0
        %1614 = vmatprep.subr.mxu0 0.0
        %1615 = vmatpush1.msra.mxu0 0.0
        %1616 = vmatprep.subr.mxu0 0.0
        %1617 = vmatpush1.msra.mxu0 0.0
        %1618 = vmatprep.subr.mxu0 0.0
        %1619 = vmatpush1.msra.mxu0 0.0
        %1620 = vmatprep.subr.mxu0 0.0
        %1621 = vmatpush1.msra.mxu0 0.0
        %1622 = vmatprep.subr.mxu0 0.0
        %1623 = vmatpush1.msra.mxu0 0.0
        %1624 = vmatprep.subr.mxu0 0.0
        %1625 = vmatpush1.msra.mxu0 0.0
        %1626 = vmatprep.subr.mxu0 0.0
        %1627 = vmatpush1.msra.mxu0 0.0
        %1628 = vmatprep.subr.mxu0 0.0
        %1629 = vmatpush1.msra.mxu0 0.0
        %1630 = vmatprep.subr.mxu0 0.0
        %1631 = vmatpush1.msra.mxu0 0.0
        %1632 = vmatprep.subr.mxu0 0.0
        %1633 = vmatpush1.msra.mxu0 0.0
        %1634 = vmatprep.subr.mxu0 0.0
        %1635 = vmatpush1.msra.mxu0 0.0
        %1636 = vmatprep.subr.mxu0 0.0
        %1637 = vmatpush1.msra.mxu0 0.0
        %1638 = vmatprep.subr.mxu0 0.0
        %1639 = vmatpush1.msra.mxu0 0.0
        %1640 = vmatprep.subr.mxu0 0.0
        %1641 = vmatpush1.msra.mxu0 0.0
        %1642 = vmatprep.subr.mxu0 0.0
        %1643 = vmatpush1.msra.mxu0 0.0
        %1644 = vmatprep.subr.mxu0 0.0
        %1645 = vmatpush1.msra.mxu0 0.0
        %1646 = vmatprep.subr.mxu0 0.0
        %1647 = vmatpush1.msra.mxu0 0.0
        %1648 = vmatprep.mubr.f32.mxu0 0.0
        %1649 = vmatmul.mubr.f32.gmra.mrb[0].mxu0 %v1579
        %v1650 = vpop.f32.mrb[0].mxu0
        %v1651 = vadd.f32 0.0, %v1650
        %v1652 = vpop.f32.mrb[0].mxu0
        %1653 = vmatprep.mubr.f32.mxu0 0.0
        %1654 = vmatmul.mubr.f32.gmra.mrb[0].mxu0 %v1582
        %v1655 = vpop.f32.mrb[0].mxu0
        %v1656 = vadd.f32 0.0, %v1655
        %v1657 = vpop.f32.mrb[0].mxu0
        %1658 = vdwg.mxu0
        %1659 = vmatprep.subr.mxu0 0.0
        %1660 = vmatpush1.msra.mxu0 %v1188
        %1661 = vmatprep.subr.mxu0 0.0
        %1662 = vmatpush1.msra.mxu0 0.0
        %1663 = vmatprep.subr.mxu0 0.0
        %1664 = vmatpush1.msra.mxu0 0.0
        %1665 = vmatprep.subr.mxu0 0.0
        %1666 = vmatpush1.msra.mxu0 0.0
        %1667 = vmatprep.subr.mxu0 0.0
        %1668 = vmatpush1.msra.mxu0 0.0
        %1669 = vmatprep.subr.mxu0 0.0
        %1670 = vmatpush1.msra.mxu0 0.0
        %1671 = vmatprep.subr.mxu0 0.0
        %1672 = vmatpush1.msra.mxu0 0.0
        %1673 = vmatprep.subr.mxu0 0.0
        %1674 = vmatpush1.msra.mxu0 0.0
        %1675 = vmatprep.subr.mxu0 0.0
        %1676 = vmatpush1.msra.mxu0 0.0
        %1677 = vmatprep.subr.mxu0 0.0
        %1678 = vmatpush1.msra.mxu0 0.0
        %1679 = vmatprep.subr.mxu0 0.0
        %1680 = vmatpush1.msra.mxu0 0.0
        %1681 = vmatprep.subr.mxu0 0.0
        %1682 = vmatpush1.msra.mxu0 0.0
        %1683 = vmatprep.subr.mxu0 0.0
        %1684 = vmatpush1.msra.mxu0 0.0
        %1685 = vmatprep.subr.mxu0 0.0
        %1686 = vmatpush1.msra.mxu0 0.0
        %1687 = vmatprep.subr.mxu0 0.0
        %1688 = vmatpush1.msra.mxu0 0.0
        %1689 = vmatprep.subr.mxu0 0.0
        %1690 = vmatpush1.msra.mxu0 0.0
        %1691 = vmatprep.subr.mxu0 0.0
        %1692 = vmatpush1.msra.mxu0 0.0
        %1693 = vmatprep.subr.mxu0 0.0
        %1694 = vmatpush1.msra.mxu0 0.0
        %1695 = vmatprep.subr.mxu0 0.0
        %1696 = vmatpush1.msra.mxu0 0.0
        %1697 = vmatprep.subr.mxu0 0.0
        %1698 = vmatpush1.msra.mxu0 0.0
        %1699 = vmatprep.subr.mxu0 0.0
        %1700 = vmatpush1.msra.mxu0 0.0
        %1701 = vmatprep.subr.mxu0 0.0
        %1702 = vmatpush1.msra.mxu0 0.0
        %1703 = vmatprep.subr.mxu0 0.0
        %1704 = vmatpush1.msra.mxu0 0.0
        %1705 = vmatprep.subr.mxu0 0.0
        %1706 = vmatpush1.msra.mxu0 0.0
        %1707 = vmatprep.subr.mxu0 0.0
        %1708 = vmatpush1.msra.mxu0 0.0
        %1709 = vmatprep.subr.mxu0 0.0
        %1710 = vmatpush1.msra.mxu0 0.0
        %1711 = vmatprep.subr.mxu0 0.0
        %1712 = vmatpush1.msra.mxu0 0.0
        %1713 = vmatprep.subr.mxu0 0.0
        %1714 = vmatpush1.msra.mxu0 0.0
        %1715 = vmatprep.subr.mxu0 0.0
        %1716 = vmatpush1.msra.mxu0 0.0
        %1717 = vmatprep.subr.mxu0 0.0
        %1718 = vmatpush1.msra.mxu0 0.0
        %1719 = vmatprep.subr.mxu0 0.0
        %1720 = vmatpush1.msra.mxu0 0.0
        %1721 = vmatprep.subr.mxu0 0.0
        %1722 = vmatpush1.msra.mxu0 0.0
        %1723 = vmatprep.mubr.f32.mxu0 0.0
        %1724 = vmatmul.mubr.f32.gmra.mrb[0].mxu0 %v1579
        %v1725 = vpop.f32.mrb[0].mxu0
        %v1726 = vadd.f32 0.0, %v1725
        %v1727 = vpop.f32.mrb[0].mxu0
        %1728 = vmatprep.mubr.f32.mxu0 0.0
        %1729 = vmatmul.mubr.f32.gmra.mrb[0].mxu0 %v1582
        %v1730 = vpop.f32.mrb[0].mxu0
        %v1731 = vadd.f32 0.0, %v1730
        %v1732 = vpop.f32.mrb[0].mxu0
        %1733 = vdwg.mxu0
        %v1734 = vmax.f32 %v1651, %v1726
        %v1735 = vmax.f32 %v1656, %v1731
        %1736 = vst.msk [vmem:[#allocation2] sm:$0xff] %vm973, 0.0
        %1737 = vst.msk [vmem:[#allocation2 + $0x8] sm:$0xff] %vm973, 0.0
        %1740 = vrot.lane.b32.xlu0 %v1734, 1
        %v1741 = vpop.permute.xlu0 %1740
        %1742 = vrot.lane.b32.xlu0 %v1735, 1
        %v1743 = vpop.permute.xlu0 %1742
        %vm1746 = vcmask 31752
        %1747 = vst.msk [vmem:[#allocation2] sm:$0xff] %vm1746, %v1741
        %1748 = vst.msk [vmem:[#allocation2 + $0x8] sm:$0xff] %vm1746, %v1743
        %vm1749 = vcmask 31744
        %1750 = vst.msk [vmem:[#allocation2 + $0x10] sm:$0xff] %vm1749, %v1734
        %1751 = vst.msk [vmem:[#allocation2 + $0x18] sm:$0xff] %vm1749, %v1735
        %1752 = vrot.lane.b32.xlu0 %v1734, 127
        %v1753 = vpop.permute.xlu0 %1752
        %1754 = vrot.lane.b32.xlu0 %v1735, 127
        %v1755 = vpop.permute.xlu0 %1754
        %vm1758 = vcmask 23552
        %1759 = vst.msk [vmem:[#allocation2 + $0x20] sm:$0xff] %vm1758, %v1753
        %1760 = vst.msk [vmem:[#allocation2 + $0x28] sm:$0xff] %vm1758, %v1755
        %vm1761 = vcmask 31768
        %1762 = vst.msk [vmem:[#allocation2 + $0x20] sm:$0xff] %vm1761, 0.0
        %1763 = vst.msk [vmem:[#allocation2 + $0x28] sm:$0xff] %vm1761, 0.0
        %v1764 = vld [vmem:[#allocation10] sm:$0xff]
        %v1765 = vld [vmem:[#allocation10 + $0x8] sm:$0xff]
        %v1766 = vld [vmem:[#allocation10 + $0x10] sm:$0xff]
        %v1767 = vld [vmem:[#allocation10 + $0x18] sm:$0xff]
        %v1768 = vld [vmem:[#allocation2] sm:$0xff]
        %v1769 = vld [vmem:[#allocation2 + $0x8] sm:$0xff]
        %v1770 = vld [vmem:[#allocation2 + $0x10] sm:$0xff]
        %v1771 = vld [vmem:[#allocation2 + $0x18] sm:$0xff]
        %v1772 = vld [vmem:[#allocation2 + $0x20] sm:$0xff]
        %v1773 = vld [vmem:[#allocation2 + $0x28] sm:$0xff]
        %v1774 = vld [vmem:[%s24] sm:$0xff]
        %v1775 = vld [vmem:[%s24 + $0x8] sm:$0xff]
        %v1776 = vld [vmem:[%s24 + $0x10] sm:$0xff]
        %v1777 = vld [vmem:[%s24 + $0x18] sm:$0xff]
        %1779 = vset.pattern.permute.xlu0 4
        %1780 = vperm.xlu0 %1779, %v1774
        %v1781 = vpop.permute.xlu0 %1780
        %1784 = vset.pattern.permute.xlu0 4
        %1785 = vperm.xlu0 %1784, %v1775
        %v1786 = vpop.permute.xlu0 %1785
        %1789 = vset.pattern.permute.xlu0 4
        %1790 = vperm.xlu0 %1789, %v1776
        %v1791 = vpop.permute.xlu0 %1790
        %1794 = vset.pattern.permute.xlu0 4
        %1795 = vperm.xlu0 %1794, %v1777
        %v1796 = vpop.permute.xlu0 %1795
        %v1799 = vsel %vm1494, %v1764, 0
        %v1802 = vsel %vm1494, %v1765, 0
        %v1805 = vsel %vm1494, %v1766, 0
        %v1808 = vsel %vm1494, %v1767, 0
        %1810 = vmatprep.subr.mxu0 0.0
        %1811 = vmatpush1.msra.mxu0 %v1768
        %1812 = vmatprep.subr.mxu0 0.0
        %1813 = vmatpush1.msra.mxu0 %v1769
        %1814 = vmatprep.subr.mxu0 0.0
        %1815 = vmatpush1.msra.mxu0 %v1770
        %1816 = vmatprep.subr.mxu0 0.0
        %1817 = vmatpush1.msra.mxu0 %v1771
        %1818 = vmatprep.subr.mxu0 0.0
        %1819 = vmatpush1.msra.mxu0 %v1772
        %1820 = vmatprep.subr.mxu0 0.0
        %1821 = vmatpush1.msra.mxu0 %v1773
        %1822 = vmatprep.subr.mxu0 0.0
        %1823 = vmatpush1.msra.mxu0 0.0
        %1824 = vmatprep.subr.mxu0 0.0
        %1825 = vmatpush1.msra.mxu0 0.0
        %1826 = vmatprep.subr.mxu0 0.0
        %1827 = vmatpush1.msra.mxu0 0.0
        %1828 = vmatprep.subr.mxu0 0.0
        %1829 = vmatpush1.msra.mxu0 0.0
        %1830 = vmatprep.subr.mxu0 0.0
        %1831 = vmatpush1.msra.mxu0 0.0
        %1832 = vmatprep.subr.mxu0 0.0
        %1833 = vmatpush1.msra.mxu0 0.0
        %1834 = vmatprep.subr.mxu0 0.0
        %1835 = vmatpush1.msra.mxu0 0.0
        %1836 = vmatprep.subr.mxu0 0.0
        %1837 = vmatpush1.msra.mxu0 0.0
        %1838 = vmatprep.subr.mxu0 0.0
        %1839 = vmatpush1.msra.mxu0 0.0
        %1840 = vmatprep.subr.mxu0 0.0
        %1841 = vmatpush1.msra.mxu0 0.0
        %1842 = vmatprep.subr.mxu0 0.0
        %1843 = vmatpush1.msra.mxu0 0.0
        %1844 = vmatprep.subr.mxu0 0.0
        %1845 = vmatpush1.msra.mxu0 0.0
        %1846 = vmatprep.subr.mxu0 0.0
        %1847 = vmatpush1.msra.mxu0 0.0
        %1848 = vmatprep.subr.mxu0 0.0
        %1849 = vmatpush1.msra.mxu0 0.0
        %1850 = vmatprep.subr.mxu0 0.0
        %1851 = vmatpush1.msra.mxu0 0.0
        %1852 = vmatprep.subr.mxu0 0.0
        %1853 = vmatpush1.msra.mxu0 0.0
        %1854 = vmatprep.subr.mxu0 0.0
        %1855 = vmatpush1.msra.mxu0 0.0
        %1856 = vmatprep.subr.mxu0 0.0
        %1857 = vmatpush1.msra.mxu0 0.0
        %1858 = vmatprep.subr.mxu0 0.0
        %1859 = vmatpush1.msra.mxu0 0.0
        %1860 = vmatprep.subr.mxu0 0.0
        %1861 = vmatpush1.msra.mxu0 0.0
        %1862 = vmatprep.subr.mxu0 0.0
        %1863 = vmatpush1.msra.mxu0 0.0
        %1864 = vmatprep.subr.mxu0 0.0
        %1865 = vmatpush1.msra.mxu0 0.0
        %1866 = vmatprep.subr.mxu0 0.0
        %1867 = vmatpush1.msra.mxu0 0.0
        %1868 = vmatprep.subr.mxu0 0.0
        %1869 = vmatpush1.msra.mxu0 0.0
        %1870 = vmatprep.subr.mxu0 0.0
        %1871 = vmatpush1.msra.mxu0 0.0
        %1872 = vmatprep.subr.mxu0 0.0
        %1873 = vmatpush1.msra.mxu0 0.0
        %1874 = vmatprep.mubr.f32.mxu0 0.0
        %1875 = vmatmul.mubr.f32.gmra.mrb[0].mxu0 %v1799
        %v1876 = vpop.f32.mrb[0].mxu0
        %v1877 = vadd.f32 %v1781, %v1876
        %v1878 = vpop.f32.mrb[0].mxu0
        %1879 = vmatprep.mubr.f32.mxu0 0.0
        %1880 = vmatmul.mubr.f32.gmra.mrb[0].mxu0 %v1802
        %v1881 = vpop.f32.mrb[0].mxu0
        %v1882 = vadd.f32 %v1786, %v1881
        %v1883 = vpop.f32.mrb[0].mxu0
        %1884 = vmatprep.mubr.f32.mxu0 0.0
        %1885 = vmatmul.mubr.f32.gmra.mrb[0].mxu0 %v1805
        %v1886 = vpop.f32.mrb[0].mxu0
        %v1887 = vadd.f32 %v1791, %v1886
        %v1888 = vpop.f32.mrb[0].mxu0
        %1889 = vmatprep.mubr.f32.mxu0 0.0
        %1890 = vmatmul.mubr.f32.gmra.mrb[0].mxu0 %v1808
        %v1891 = vpop.f32.mrb[0].mxu0
        %v1892 = vadd.f32 %v1796, %v1891
        %v1893 = vpop.f32.mrb[0].mxu0
        %1894 = vdwg.mxu0
        %v1895 = vtanh.pop %v1877
        %v1896 = vtanh.pop %v1882
        %v1897 = vtanh.pop %v1887
        %v1898 = vtanh.pop %v1892
        %1899 = vst.msk [vmem:[#allocation2] sm:$0xff] %vm973, 0.0
        %1900 = vst.msk [vmem:[#allocation2 + $0x8] sm:$0xff] %vm973, 0.0
        %1901 = vst.msk [vmem:[#allocation2 + $0x10] sm:$0xff] %vm973, 0.0
        %1902 = vst.msk [vmem:[#allocation2 + $0x18] sm:$0xff] %vm973, 0.0
        %1907 = vrot.lane.b32.xlu0 %v1895, 1
        %v1908 = vpop.permute.xlu0 %1907
        %1909 = vrot.lane.b32.xlu0 %v1896, 1
        %v1910 = vpop.permute.xlu0 %1909
        %1911 = vrot.lane.b32.xlu0 %v1897, 1
        %v1912 = vpop.permute.xlu0 %1911
        %1913 = vrot.lane.b32.xlu0 %v1898, 1
        %v1914 = vpop.permute.xlu0 %1913
        %1919 = vst.msk [vmem:[#allocation2] sm:$0xff] %vm1746, %v1908
        %1920 = vst.msk [vmem:[#allocation2 + $0x8] sm:$0xff] %vm1746, %v1910
        %1921 = vst.msk [vmem:[#allocation2 + $0x10] sm:$0xff] %vm1746, %v1912
        %1922 = vst.msk [vmem:[#allocation2 + $0x18] sm:$0xff] %vm1746, %v1914
        %1923 = vst.msk [vmem:[#allocation2 + $0x20] sm:$0xff] %vm1749, %v1895
        %1924 = vst.msk [vmem:[#allocation2 + $0x28] sm:$0xff] %vm1749, %v1896
        %1925 = vst.msk [vmem:[#allocation2 + $0x30] sm:$0xff] %vm1749, %v1897
        %1926 = vst.msk [vmem:[#allocation2 + $0x38] sm:$0xff] %vm1749, %v1898
        %1927 = vrot.lane.b32.xlu0 %v1895, 127
        %v1928 = vpop.permute.xlu0 %1927
        %1929 = vrot.lane.b32.xlu0 %v1896, 127
        %v1930 = vpop.permute.xlu0 %1929
        %1931 = vrot.lane.b32.xlu0 %v1897, 127
        %v1932 = vpop.permute.xlu0 %1931
        %1933 = vrot.lane.b32.xlu0 %v1898, 127
        %v1934 = vpop.permute.xlu0 %1933
        %1939 = vst.msk [vmem:[#allocation2 + $0x40] sm:$0xff] %vm1758, %v1928
        %1940 = vst.msk [vmem:[#allocation2 + $0x48] sm:$0xff] %vm1758, %v1930
        %1941 = vst.msk [vmem:[#allocation2 + $0x50] sm:$0xff] %vm1758, %v1932
        %1942 = vst.msk [vmem:[#allocation2 + $0x58] sm:$0xff] %vm1758, %v1934
        %1943 = vst.msk [vmem:[#allocation2 + $0x40] sm:$0xff] %vm1761, 0.0
        %1944 = vst.msk [vmem:[#allocation2 + $0x48] sm:$0xff] %vm1761, 0.0
        %1945 = vst.msk [vmem:[#allocation2 + $0x50] sm:$0xff] %vm1761, 0.0
        %1946 = vst.msk [vmem:[#allocation2 + $0x58] sm:$0xff] %vm1761, 0.0
        %v1947 = vld [vmem:[#allocation11] sm:$0xff]
        %v1948 = vld [vmem:[#allocation11 + $0x8] sm:$0xff]
        %v1949 = vld [vmem:[#allocation11 + $0x10] sm:$0xff]
        %v1950 = vld [vmem:[#allocation11 + $0x18] sm:$0xff]
        %v1951 = vld [vmem:[#allocation2] sm:$0xff]
        %v1952 = vld [vmem:[#allocation2 + $0x8] sm:$0xff]
        %v1953 = vld [vmem:[#allocation2 + $0x10] sm:$0xff]
        %v1954 = vld [vmem:[#allocation2 + $0x18] sm:$0xff]
        %v1955 = vld [vmem:[#allocation2 + $0x20] sm:$0xff]
        %v1956 = vld [vmem:[#allocation2 + $0x28] sm:$0xff]
        %v1957 = vld [vmem:[#allocation2 + $0x30] sm:$0xff]
        %v1958 = vld [vmem:[#allocation2 + $0x38] sm:$0xff]
        %v1959 = vld [vmem:[#allocation2 + $0x40] sm:$0xff]
        %v1960 = vld [vmem:[#allocation2 + $0x48] sm:$0xff]
        %v1961 = vld [vmem:[#allocation2 + $0x50] sm:$0xff]
        %v1962 = vld [vmem:[#allocation2 + $0x58] sm:$0xff]
        %v1963 = vld [vmem:[%s24] sm:$0xff]
        %v1964 = vld [vmem:[%s24 + $0x8] sm:$0xff]
        %v1965 = vld [vmem:[%s24 + $0x10] sm:$0xff]
        %v1966 = vld [vmem:[%s24 + $0x18] sm:$0xff]
        %1968 = vset.pattern.permute.xlu0 5
        %1969 = vperm.xlu0 %1968, %v1963
        %v1970 = vpop.permute.xlu0 %1969
        %1973 = vset.pattern.permute.xlu0 5
        %1974 = vperm.xlu0 %1973, %v1964
        %v1975 = vpop.permute.xlu0 %1974
        %1978 = vset.pattern.permute.xlu0 5
        %1979 = vperm.xlu0 %1978, %v1965
        %v1980 = vpop.permute.xlu0 %1979
        %1983 = vset.pattern.permute.xlu0 5
        %1984 = vperm.xlu0 %1983, %v1966
        %v1985 = vpop.permute.xlu0 %1984
        %vm1987 = vcmask 785408
        %v1989 = vsel %vm1987, %v1947, 0
        %v1992 = vsel %vm1987, %v1948, 0
        %v1995 = vsel %vm1987, %v1949, 0
        %v1998 = vsel %vm1987, %v1950, 0
        %2000 = vmatprep.subr.mxu0 0.0
        %2001 = vmatpush1.msra.mxu0 %v1951
        %2002 = vmatprep.subr.mxu0 0.0
        %2003 = vmatpush1.msra.mxu0 %v1952
        %2004 = vmatprep.subr.mxu0 0.0
        %2005 = vmatpush1.msra.mxu0 %v1953
        %2006 = vmatprep.subr.mxu0 0.0
        %2007 = vmatpush1.msra.mxu0 %v1954
        %2008 = vmatprep.subr.mxu0 0.0
        %2009 = vmatpush1.msra.mxu0 %v1955
        %2010 = vmatprep.subr.mxu0 0.0
        %2011 = vmatpush1.msra.mxu0 %v1956
        %2012 = vmatprep.subr.mxu0 0.0
        %2013 = vmatpush1.msra.mxu0 %v1957
        %2014 = vmatprep.subr.mxu0 0.0
        %2015 = vmatpush1.msra.mxu0 %v1958
        %2016 = vmatprep.subr.mxu0 0.0
        %2017 = vmatpush1.msra.mxu0 %v1959
        %2018 = vmatprep.subr.mxu0 0.0
        %2019 = vmatpush1.msra.mxu0 %v1960
        %2020 = vmatprep.subr.mxu0 0.0
        %2021 = vmatpush1.msra.mxu0 %v1961
        %2022 = vmatprep.subr.mxu0 0.0
        %2023 = vmatpush1.msra.mxu0 %v1962
        %2024 = vmatprep.subr.mxu0 0.0
        %2025 = vmatpush1.msra.mxu0 0.0
        %2026 = vmatprep.subr.mxu0 0.0
        %2027 = vmatpush1.msra.mxu0 0.0
        %2028 = vmatprep.subr.mxu0 0.0
        %2029 = vmatpush1.msra.mxu0 0.0
        %2030 = vmatprep.subr.mxu0 0.0
        %2031 = vmatpush1.msra.mxu0 0.0
        %2032 = vmatprep.subr.mxu0 0.0
        %2033 = vmatpush1.msra.mxu0 0.0
        %2034 = vmatprep.subr.mxu0 0.0
        %2035 = vmatpush1.msra.mxu0 0.0
        %2036 = vmatprep.subr.mxu0 0.0
        %2037 = vmatpush1.msra.mxu0 0.0
        %2038 = vmatprep.subr.mxu0 0.0
        %2039 = vmatpush1.msra.mxu0 0.0
        %2040 = vmatprep.subr.mxu0 0.0
        %2041 = vmatpush1.msra.mxu0 0.0
        %2042 = vmatprep.subr.mxu0 0.0
        %2043 = vmatpush1.msra.mxu0 0.0
        %2044 = vmatprep.subr.mxu0 0.0
        %2045 = vmatpush1.msra.mxu0 0.0
        %2046 = vmatprep.subr.mxu0 0.0
        %2047 = vmatpush1.msra.mxu0 0.0
        %2048 = vmatprep.subr.mxu0 0.0
        %2049 = vmatpush1.msra.mxu0 0.0
        %2050 = vmatprep.subr.mxu0 0.0
        %2051 = vmatpush1.msra.mxu0 0.0
        %2052 = vmatprep.subr.mxu0 0.0
        %2053 = vmatpush1.msra.mxu0 0.0
        %2054 = vmatprep.subr.mxu0 0.0
        %2055 = vmatpush1.msra.mxu0 0.0
        %2056 = vmatprep.subr.mxu0 0.0
        %2057 = vmatpush1.msra.mxu0 0.0
        %2058 = vmatprep.subr.mxu0 0.0
        %2059 = vmatpush1.msra.mxu0 0.0
        %2060 = vmatprep.subr.mxu0 0.0
        %2061 = vmatpush1.msra.mxu0 0.0
        %2062 = vmatprep.subr.mxu0 0.0
        %2063 = vmatpush1.msra.mxu0 0.0
        %2064 = vmatprep.mubr.f32.mxu0 0.0
        %2065 = vmatmul.mubr.f32.gmra.mrb[0].mxu0 %v1989
        %v2066 = vpop.f32.mrb[0].mxu0
        %v2067 = vadd.f32 %v1970, %v2066
        %v2068 = vpop.f32.mrb[0].mxu0
        %2069 = vmatprep.mubr.f32.mxu0 0.0
        %2070 = vmatmul.mubr.f32.gmra.mrb[0].mxu0 %v1992
        %v2071 = vpop.f32.mrb[0].mxu0
        %v2072 = vadd.f32 %v1975, %v2071
        %v2073 = vpop.f32.mrb[0].mxu0
        %2074 = vmatprep.mubr.f32.mxu0 0.0
        %2075 = vmatmul.mubr.f32.gmra.mrb[0].mxu0 %v1995
        %v2076 = vpop.f32.mrb[0].mxu0
        %v2077 = vadd.f32 %v1980, %v2076
        %v2078 = vpop.f32.mrb[0].mxu0
        %2079 = vmatprep.mubr.f32.mxu0 0.0
        %2080 = vmatmul.mubr.f32.gmra.mrb[0].mxu0 %v1998
        %v2081 = vpop.f32.mrb[0].mxu0
        %v2082 = vadd.f32 %v1985, %v2081
        %v2083 = vpop.f32.mrb[0].mxu0
        %2084 = vdwg.mxu0
        %v2085 = vtanh.pop %v2067
        %v2086 = vtanh.pop %v2072
        %v2087 = vtanh.pop %v2077
        %v2088 = vtanh.pop %v2082
        %v2090 = vsel %vm1749, %v2085, 0
        %v2093 = vsel %vm1749, %v2086, 0
        %v2096 = vsel %vm1749, %v2087, 0
        %v2099 = vsel %vm1749, %v2088, 0
        %vm2101 = vcmask 1043456
        %v2103 = vsel %vm2101, %v1181, 0
        %2105 = vmatprep.subr.mxu0 0.0
        %2106 = vmatpush1.msra.mxu0 %v2103
        %2107 = vmatprep.subr.mxu0 0.0
        %2108 = vmatpush1.msra.mxu0 0.0
        %2109 = vmatprep.subr.mxu0 0.0
        %2110 = vmatpush1.msra.mxu0 0.0
        %2111 = vmatprep.subr.mxu0 0.0
        %2112 = vmatpush1.msra.mxu0 0.0
        %2113 = vmatprep.subr.mxu0 0.0
        %2114 = vmatpush1.msra.mxu0 0.0
        %2115 = vmatprep.subr.mxu0 0.0
        %2116 = vmatpush1.msra.mxu0 0.0
        %2117 = vmatprep.subr.mxu0 0.0
        %2118 = vmatpush1.msra.mxu0 0.0
        %2119 = vmatprep.subr.mxu0 0.0
        %2120 = vmatpush1.msra.mxu0 0.0
        %2121 = vmatprep.subr.mxu0 0.0
        %2122 = vmatpush1.msra.mxu0 0.0
        %2123 = vmatprep.subr.mxu0 0.0
        %2124 = vmatpush1.msra.mxu0 0.0
        %2125 = vmatprep.subr.mxu0 0.0
        %2126 = vmatpush1.msra.mxu0 0.0
        %2127 = vmatprep.subr.mxu0 0.0
        %2128 = vmatpush1.msra.mxu0 0.0
        %2129 = vmatprep.subr.mxu0 0.0
        %2130 = vmatpush1.msra.mxu0 0.0
        %2131 = vmatprep.subr.mxu0 0.0
        %2132 = vmatpush1.msra.mxu0 0.0
        %2133 = vmatprep.subr.mxu0 0.0
        %2134 = vmatpush1.msra.mxu0 0.0
        %2135 = vmatprep.subr.mxu0 0.0
        %2136 = vmatpush1.msra.mxu0 0.0
        %2137 = vmatprep.subr.mxu0 0.0
        %2138 = vmatpush1.msra.mxu0 0.0
        %2139 = vmatprep.subr.mxu0 0.0
        %2140 = vmatpush1.msra.mxu0 0.0
        %2141 = vmatprep.subr.mxu0 0.0
        %2142 = vmatpush1.msra.mxu0 0.0
        %2143 = vmatprep.subr.mxu0 0.0
        %2144 = vmatpush1.msra.mxu0 0.0
        %2145 = vmatprep.subr.mxu0 0.0
        %2146 = vmatpush1.msra.mxu0 0.0
        %2147 = vmatprep.subr.mxu0 0.0
        %2148 = vmatpush1.msra.mxu0 0.0
        %2149 = vmatprep.subr.mxu0 0.0
        %2150 = vmatpush1.msra.mxu0 0.0
        %2151 = vmatprep.subr.mxu0 0.0
        %2152 = vmatpush1.msra.mxu0 0.0
        %2153 = vmatprep.subr.mxu0 0.0
        %2154 = vmatpush1.msra.mxu0 0.0
        %2155 = vmatprep.subr.mxu0 0.0
        %2156 = vmatpush1.msra.mxu0 0.0
        %2157 = vmatprep.subr.mxu0 0.0
        %2158 = vmatpush1.msra.mxu0 0.0
        %2159 = vmatprep.subr.mxu0 0.0
        %2160 = vmatpush1.msra.mxu0 0.0
        %2161 = vmatprep.subr.mxu0 0.0
        %2162 = vmatpush1.msra.mxu0 0.0
        %2163 = vmatprep.subr.mxu0 0.0
        %2164 = vmatpush1.msra.mxu0 0.0
        %2165 = vmatprep.subr.mxu0 0.0
        %2166 = vmatpush1.msra.mxu0 0.0
        %2167 = vmatprep.subr.mxu0 0.0
        %2168 = vmatpush1.msra.mxu0 0.0
        %2169 = vmatprep.mubr.f32.mxu0 0.0
        %2170 = vmatmul.mubr.f32.gmra.mrb[0].mxu0 %v2090
        %v2171 = vpop.f32.mrb[0].mxu0
        %v2172 = vadd.f32 0.0, %v2171
        %v2173 = vpop.f32.mrb[0].mxu0
        %2174 = vmatprep.mubr.f32.mxu0 0.0
        %2175 = vmatmul.mubr.f32.gmra.mrb[0].mxu0 %v2093
        %v2176 = vpop.f32.mrb[0].mxu0
        %v2177 = vadd.f32 0.0, %v2176
        %v2178 = vpop.f32.mrb[0].mxu0
        %2179 = vmatprep.mubr.f32.mxu0 0.0
        %2180 = vmatmul.mubr.f32.gmra.mrb[0].mxu0 %v2096
        %v2181 = vpop.f32.mrb[0].mxu0
        %v2182 = vadd.f32 0.0, %v2181
        %v2183 = vpop.f32.mrb[0].mxu0
        %2184 = vmatprep.mubr.f32.mxu0 0.0
        %2185 = vmatmul.mubr.f32.gmra.mrb[0].mxu0 %v2099
        %v2186 = vpop.f32.mrb[0].mxu0
        %v2187 = vadd.f32 0.0, %v2186
        %v2188 = vpop.f32.mrb[0].mxu0
        %2189 = vdwg.mxu0
        %v2191 = vsel %vm2101, %v1188, 0
        %2193 = vmatprep.subr.mxu0 0.0
        %2194 = vmatpush1.msra.mxu0 %v2191
        %2195 = vmatprep.subr.mxu0 0.0
        %2196 = vmatpush1.msra.mxu0 0.0
        %2197 = vmatprep.subr.mxu0 0.0
        %2198 = vmatpush1.msra.mxu0 0.0
        %2199 = vmatprep.subr.mxu0 0.0
        %2200 = vmatpush1.msra.mxu0 0.0
        %2201 = vmatprep.subr.mxu0 0.0
        %2202 = vmatpush1.msra.mxu0 0.0
        %2203 = vmatprep.subr.mxu0 0.0
        %2204 = vmatpush1.msra.mxu0 0.0
        %2205 = vmatprep.subr.mxu0 0.0
        %2206 = vmatpush1.msra.mxu0 0.0
        %2207 = vmatprep.subr.mxu0 0.0
        %2208 = vmatpush1.msra.mxu0 0.0
        %2209 = vmatprep.subr.mxu0 0.0
        %2210 = vmatpush1.msra.mxu0 0.0
        %2211 = vmatprep.subr.mxu0 0.0
        %2212 = vmatpush1.msra.mxu0 0.0
        %2213 = vmatprep.subr.mxu0 0.0
        %2214 = vmatpush1.msra.mxu0 0.0
        %2215 = vmatprep.subr.mxu0 0.0
        %2216 = vmatpush1.msra.mxu0 0.0
        %2217 = vmatprep.subr.mxu0 0.0
        %2218 = vmatpush1.msra.mxu0 0.0
        %2219 = vmatprep.subr.mxu0 0.0
        %2220 = vmatpush1.msra.mxu0 0.0
        %2221 = vmatprep.subr.mxu0 0.0
        %2222 = vmatpush1.msra.mxu0 0.0
        %2223 = vmatprep.subr.mxu0 0.0
        %2224 = vmatpush1.msra.mxu0 0.0
        %2225 = vmatprep.subr.mxu0 0.0
        %2226 = vmatpush1.msra.mxu0 0.0
        %2227 = vmatprep.subr.mxu0 0.0
        %2228 = vmatpush1.msra.mxu0 0.0
        %2229 = vmatprep.subr.mxu0 0.0
        %2230 = vmatpush1.msra.mxu0 0.0
        %2231 = vmatprep.subr.mxu0 0.0
        %2232 = vmatpush1.msra.mxu0 0.0
        %2233 = vmatprep.subr.mxu0 0.0
        %2234 = vmatpush1.msra.mxu0 0.0
        %2235 = vmatprep.subr.mxu0 0.0
        %2236 = vmatpush1.msra.mxu0 0.0
        %2237 = vmatprep.subr.mxu0 0.0
        %2238 = vmatpush1.msra.mxu0 0.0
        %2239 = vmatprep.subr.mxu0 0.0
        %2240 = vmatpush1.msra.mxu0 0.0
        %2241 = vmatprep.subr.mxu0 0.0
        %2242 = vmatpush1.msra.mxu0 0.0
        %2243 = vmatprep.subr.mxu0 0.0
        %2244 = vmatpush1.msra.mxu0 0.0
        %2245 = vmatprep.subr.mxu0 0.0
        %2246 = vmatpush1.msra.mxu0 0.0
        %2247 = vmatprep.subr.mxu0 0.0
        %2248 = vmatpush1.msra.mxu0 0.0
        %2249 = vmatprep.subr.mxu0 0.0
        %2250 = vmatpush1.msra.mxu0 0.0
        %2251 = vmatprep.subr.mxu0 0.0
        %2252 = vmatpush1.msra.mxu0 0.0
        %2253 = vmatprep.subr.mxu0 0.0
        %2254 = vmatpush1.msra.mxu0 0.0
        %2255 = vmatprep.subr.mxu0 0.0
        %2256 = vmatpush1.msra.mxu0 0.0
        %2257 = vmatprep.mubr.f32.mxu0 0.0
        %2258 = vmatmul.mubr.f32.gmra.mrb[0].mxu0 %v2090
        %v2259 = vpop.f32.mrb[0].mxu0
        %v2260 = vadd.f32 0.0, %v2259
        %v2261 = vpop.f32.mrb[0].mxu0
        %2262 = vmatprep.mubr.f32.mxu0 0.0
        %2263 = vmatmul.mubr.f32.gmra.mrb[0].mxu0 %v2093
        %v2264 = vpop.f32.mrb[0].mxu0
        %v2265 = vadd.f32 0.0, %v2264
        %v2266 = vpop.f32.mrb[0].mxu0
        %2267 = vmatprep.mubr.f32.mxu0 0.0
        %2268 = vmatmul.mubr.f32.gmra.mrb[0].mxu0 %v2096
        %v2269 = vpop.f32.mrb[0].mxu0
        %v2270 = vadd.f32 0.0, %v2269
        %v2271 = vpop.f32.mrb[0].mxu0
        %2272 = vmatprep.mubr.f32.mxu0 0.0
        %2273 = vmatmul.mubr.f32.gmra.mrb[0].mxu0 %v2099
        %v2274 = vpop.f32.mrb[0].mxu0
        %v2275 = vadd.f32 0.0, %v2274
        %v2276 = vpop.f32.mrb[0].mxu0
        %2277 = vdwg.mxu0
        %v2278 = vmax.f32 %v2172, %v2260
        %v2279 = vmax.f32 %v2177, %v2265
        %v2280 = vmax.f32 %v2182, %v2270
        %v2281 = vmax.f32 %v2187, %v2275
        %2282 = vst.msk [vmem:[#allocation2] sm:$0xff] %vm973, 0.0
        %2283 = vst.msk [vmem:[#allocation2 + $0x8] sm:$0xff] %vm973, 0.0
        %2284 = vst.msk [vmem:[#allocation2 + $0x10] sm:$0xff] %vm973, 0.0
        %2285 = vst.msk [vmem:[#allocation2 + $0x18] sm:$0xff] %vm973, 0.0
        %2290 = vrot.lane.b32.xlu0 %v2278, 1
        %v2291 = vpop.permute.xlu0 %2290
        %2292 = vrot.lane.b32.xlu0 %v2279, 1
        %v2293 = vpop.permute.xlu0 %2292
        %2294 = vrot.lane.b32.xlu0 %v2280, 1
        %v2295 = vpop.permute.xlu0 %2294
        %2296 = vrot.lane.b32.xlu0 %v2281, 1
        %v2297 = vpop.permute.xlu0 %2296
        %vm2302 = vcmask 15368
        %2303 = vst.msk [vmem:[#allocation2] sm:$0xff] %vm2302, %v2291
        %2304 = vst.msk [vmem:[#allocation2 + $0x8] sm:$0xff] %vm2302, %v2293
        %2305 = vst.msk [vmem:[#allocation2 + $0x10] sm:$0xff] %vm2302, %v2295
        %2306 = vst.msk [vmem:[#allocation2 + $0x18] sm:$0xff] %vm2302, %v2297
        %vm2307 = vcmask 15360
        %2308 = vst.msk [vmem:[#allocation2 + $0x20] sm:$0xff] %vm2307, %v2278
        %2309 = vst.msk [vmem:[#allocation2 + $0x28] sm:$0xff] %vm2307, %v2279
        %2310 = vst.msk [vmem:[#allocation2 + $0x30] sm:$0xff] %vm2307, %v2280
        %2311 = vst.msk [vmem:[#allocation2 + $0x38] sm:$0xff] %vm2307, %v2281
        %2312 = vrot.lane.b32.xlu0 %v2278, 127
        %v2313 = vpop.permute.xlu0 %2312
        %2314 = vrot.lane.b32.xlu0 %v2279, 127
        %v2315 = vpop.permute.xlu0 %2314
        %2316 = vrot.lane.b32.xlu0 %v2280, 127
        %v2317 = vpop.permute.xlu0 %2316
        %2318 = vrot.lane.b32.xlu0 %v2281, 127
        %v2319 = vpop.permute.xlu0 %2318
        %2324 = vst.msk [vmem:[#allocation2 + $0x40] sm:$0xff] %vm973, %v2313
        %2325 = vst.msk [vmem:[#allocation2 + $0x48] sm:$0xff] %vm973, %v2315
        %2326 = vst.msk [vmem:[#allocation2 + $0x50] sm:$0xff] %vm973, %v2317
        %2327 = vst.msk [vmem:[#allocation2 + $0x58] sm:$0xff] %vm973, %v2319
        %2328 = vst.msk [vmem:[#allocation2 + $0x40] sm:$0xff] %vm2302, 0.0
        %2329 = vst.msk [vmem:[#allocation2 + $0x48] sm:$0xff] %vm2302, 0.0
        %2330 = vst.msk [vmem:[#allocation2 + $0x50] sm:$0xff] %vm2302, 0.0
        %2331 = vst.msk [vmem:[#allocation2 + $0x58] sm:$0xff] %vm2302, 0.0
        %v2332 = vld [vmem:[%s7] sm:$0xff]
        %v2333 = vld [vmem:[%s7 + $0x8] sm:$0xff]
        %v2334 = vld [vmem:[%s7 + $0x10] sm:$0xff]
        %v2335 = vld [vmem:[%s7 + $0x18] sm:$0xff]
        %v2336 = vld [vmem:[%s7 + $0x20] sm:$0xff]
        %v2337 = vld [vmem:[%s7 + $0x28] sm:$0xff]
        %v2338 = vld [vmem:[%s7 + $0x30] sm:$0xff]
        %v2339 = vld [vmem:[%s7 + $0x38] sm:$0xff]
        %v2340 = vld [vmem:[#allocation2] sm:$0xff]
        %v2341 = vld [vmem:[#allocation2 + $0x8] sm:$0xff]
        %v2342 = vld [vmem:[#allocation2 + $0x10] sm:$0xff]
        %v2343 = vld [vmem:[#allocation2 + $0x18] sm:$0xff]
        %v2344 = vld [vmem:[#allocation2 + $0x20] sm:$0xff]
        %v2345 = vld [vmem:[#allocation2 + $0x28] sm:$0xff]
        %v2346 = vld [vmem:[#allocation2 + $0x30] sm:$0xff]
        %v2347 = vld [vmem:[#allocation2 + $0x38] sm:$0xff]
        %v2348 = vld [vmem:[#allocation2 + $0x40] sm:$0xff]
        %v2349 = vld [vmem:[#allocation2 + $0x48] sm:$0xff]
        %v2350 = vld [vmem:[#allocation2 + $0x50] sm:$0xff]
        %v2351 = vld [vmem:[#allocation2 + $0x58] sm:$0xff]
        %v2352 = vld [vmem:[%s24] sm:$0xff]
        %v2353 = vld [vmem:[%s24 + $0x8] sm:$0xff]
        %v2354 = vld [vmem:[%s24 + $0x10] sm:$0xff]
        %v2355 = vld [vmem:[%s24 + $0x18] sm:$0xff]
        %v2356 = vld [vmem:[%s24 + $0x20] sm:$0xff]
        %v2357 = vld [vmem:[%s24 + $0x28] sm:$0xff]
        %v2358 = vld [vmem:[%s24 + $0x30] sm:$0xff]
        %v2359 = vld [vmem:[%s24 + $0x38] sm:$0xff]
        %2361 = vset.pattern.permute.xlu0 6
        %2362 = vperm.xlu0 %2361, %v2352
        %v2363 = vpop.permute.xlu0 %2362
        %2366 = vset.pattern.permute.xlu0 6
        %2367 = vperm.xlu0 %2366, %v2353
        %v2368 = vpop.permute.xlu0 %2367
        %2371 = vset.pattern.permute.xlu0 6
        %2372 = vperm.xlu0 %2371, %v2354
        %v2373 = vpop.permute.xlu0 %2372
        %2376 = vset.pattern.permute.xlu0 6
        %2377 = vperm.xlu0 %2376, %v2355
        %v2378 = vpop.permute.xlu0 %2377
        %2381 = vset.pattern.permute.xlu0 6
        %2382 = vperm.xlu0 %2381, %v2356
        %v2383 = vpop.permute.xlu0 %2382
        %2386 = vset.pattern.permute.xlu0 6
        %2387 = vperm.xlu0 %2386, %v2357
        %v2388 = vpop.permute.xlu0 %2387
        %2391 = vset.pattern.permute.xlu0 6
        %2392 = vperm.xlu0 %2391, %v2358
        %v2393 = vpop.permute.xlu0 %2392
        %2396 = vset.pattern.permute.xlu0 6
        %2397 = vperm.xlu0 %2396, %v2359
        %v2398 = vpop.permute.xlu0 %2397
        %v2401 = vsel %vm1987, %v2332, 0
        %v2404 = vsel %vm1987, %v2333, 0
        %v2407 = vsel %vm1987, %v2334, 0
        %v2410 = vsel %vm1987, %v2335, 0
        %v2413 = vsel %vm1987, %v2336, 0
        %v2416 = vsel %vm1987, %v2337, 0
        %v2419 = vsel %vm1987, %v2338, 0
        %v2422 = vsel %vm1987, %v2339, 0
        %2424 = vmatprep.subr.mxu0 0.0
        %2425 = vmatpush1.msra.mxu0 %v2340
        %2426 = vmatprep.subr.mxu0 0.0
        %2427 = vmatpush1.msra.mxu0 %v2341
        %2428 = vmatprep.subr.mxu0 0.0
        %2429 = vmatpush1.msra.mxu0 %v2342
        %2430 = vmatprep.subr.mxu0 0.0
        %2431 = vmatpush1.msra.mxu0 %v2343
        %2432 = vmatprep.subr.mxu0 0.0
        %2433 = vmatpush1.msra.mxu0 %v2344
        %2434 = vmatprep.subr.mxu0 0.0
        %2435 = vmatpush1.msra.mxu0 %v2345
        %2436 = vmatprep.subr.mxu0 0.0
        %2437 = vmatpush1.msra.mxu0 %v2346
        %2438 = vmatprep.subr.mxu0 0.0
        %2439 = vmatpush1.msra.mxu0 %v2347
        %2440 = vmatprep.subr.mxu0 0.0
        %2441 = vmatpush1.msra.mxu0 %v2348
        %2442 = vmatprep.subr.mxu0 0.0
        %2443 = vmatpush1.msra.mxu0 %v2349
        %2444 = vmatprep.subr.mxu0 0.0
        %2445 = vmatpush1.msra.mxu0 %v2350
        %2446 = vmatprep.subr.mxu0 0.0
        %2447 = vmatpush1.msra.mxu0 %v2351
        %2448 = vmatprep.subr.mxu0 0.0
        %2449 = vmatpush1.msra.mxu0 0.0
        %2450 = vmatprep.subr.mxu0 0.0
        %2451 = vmatpush1.msra.mxu0 0.0
        %2452 = vmatprep.subr.mxu0 0.0
        %2453 = vmatpush1.msra.mxu0 0.0
        %2454 = vmatprep.subr.mxu0 0.0
        %2455 = vmatpush1.msra.mxu0 0.0
        %2456 = vmatprep.subr.mxu0 0.0
        %2457 = vmatpush1.msra.mxu0 0.0
        %2458 = vmatprep.subr.mxu0 0.0
        %2459 = vmatpush1.msra.mxu0 0.0
        %2460 = vmatprep.subr.mxu0 0.0
        %2461 = vmatpush1.msra.mxu0 0.0
        %2462 = vmatprep.subr.mxu0 0.0
        %2463 = vmatpush1.msra.mxu0 0.0
        %2464 = vmatprep.subr.mxu0 0.0
        %2465 = vmatpush1.msra.mxu0 0.0
        %2466 = vmatprep.subr.mxu0 0.0
        %2467 = vmatpush1.msra.mxu0 0.0
        %2468 = vmatprep.subr.mxu0 0.0
        %2469 = vmatpush1.msra.mxu0 0.0
        %2470 = vmatprep.subr.mxu0 0.0
        %2471 = vmatpush1.msra.mxu0 0.0
        %2472 = vmatprep.subr.mxu0 0.0
        %2473 = vmatpush1.msra.mxu0 0.0
        %2474 = vmatprep.subr.mxu0 0.0
        %2475 = vmatpush1.msra.mxu0 0.0
        %2476 = vmatprep.subr.mxu0 0.0
        %2477 = vmatpush1.msra.mxu0 0.0
        %2478 = vmatprep.subr.mxu0 0.0
        %2479 = vmatpush1.msra.mxu0 0.0
        %2480 = vmatprep.subr.mxu0 0.0
        %2481 = vmatpush1.msra.mxu0 0.0
        %2482 = vmatprep.subr.mxu0 0.0
        %2483 = vmatpush1.msra.mxu0 0.0
        %2484 = vmatprep.subr.mxu0 0.0
        %2485 = vmatpush1.msra.mxu0 0.0
        %2486 = vmatprep.subr.mxu0 0.0
        %2487 = vmatpush1.msra.mxu0 0.0
        %2488 = vmatprep.mubr.f32.mxu0 0.0
        %2489 = vmatmul.mubr.f32.gmra.mrb[0].mxu0 %v2401
        %v2490 = vpop.f32.mrb[0].mxu0
        %v2491 = vadd.f32 %v2363, %v2490
        %v2492 = vpop.f32.mrb[0].mxu0
        %2493 = vmatprep.mubr.f32.mxu0 0.0
        %2494 = vmatmul.mubr.f32.gmra.mrb[0].mxu0 %v2404
        %v2495 = vpop.f32.mrb[0].mxu0
        %v2496 = vadd.f32 %v2368, %v2495
        %v2497 = vpop.f32.mrb[0].mxu0
        %2498 = vmatprep.mubr.f32.mxu0 0.0
        %2499 = vmatmul.mubr.f32.gmra.mrb[0].mxu0 %v2407
        %v2500 = vpop.f32.mrb[0].mxu0
        %v2501 = vadd.f32 %v2373, %v2500
        %v2502 = vpop.f32.mrb[0].mxu0
        %2503 = vmatprep.mubr.f32.mxu0 0.0
        %2504 = vmatmul.mubr.f32.gmra.mrb[0].mxu0 %v2410
        %v2505 = vpop.f32.mrb[0].mxu0
        %v2506 = vadd.f32 %v2378, %v2505
        %v2507 = vpop.f32.mrb[0].mxu0
        %2508 = vmatprep.mubr.f32.mxu0 0.0
        %2509 = vmatmul.mubr.f32.gmra.mrb[0].mxu0 %v2413
        %v2510 = vpop.f32.mrb[0].mxu0
        %v2511 = vadd.f32 %v2383, %v2510
        %v2512 = vpop.f32.mrb[0].mxu0
        %2513 = vmatprep.mubr.f32.mxu0 0.0
        %2514 = vmatmul.mubr.f32.gmra.mrb[0].mxu0 %v2416
        %v2515 = vpop.f32.mrb[0].mxu0
        %v2516 = vadd.f32 %v2388, %v2515
        %v2517 = vpop.f32.mrb[0].mxu0
        %2518 = vmatprep.mubr.f32.mxu0 0.0
        %2519 = vmatmul.mubr.f32.gmra.mrb[0].mxu0 %v2419
        %v2520 = vpop.f32.mrb[0].mxu0
        %v2521 = vadd.f32 %v2393, %v2520
        %v2522 = vpop.f32.mrb[0].mxu0
        %2523 = vmatprep.mubr.f32.mxu0 0.0
        %2524 = vmatmul.mubr.f32.gmra.mrb[0].mxu0 %v2422
        %v2525 = vpop.f32.mrb[0].mxu0
        %v2526 = vadd.f32 %v2398, %v2525
        %v2527 = vpop.f32.mrb[0].mxu0
        %2528 = vdwg.mxu0
        %v2529 = vtanh.pop %v2491
        %v2530 = vtanh.pop %v2496
        %v2531 = vtanh.pop %v2501
        %v2532 = vtanh.pop %v2506
        %v2533 = vtanh.pop %v2511
        %v2534 = vtanh.pop %v2516
        %v2535 = vtanh.pop %v2521
        %v2536 = vtanh.pop %v2526
        %2537 = vst.msk [vmem:[#allocation2] sm:$0xff] %vm973, 0.0
        %2538 = vst.msk [vmem:[#allocation2 + $0x8] sm:$0xff] %vm973, 0.0
        %2539 = vst.msk [vmem:[#allocation2 + $0x10] sm:$0xff] %vm973, 0.0
        %2540 = vst.msk [vmem:[#allocation2 + $0x18] sm:$0xff] %vm973, 0.0
        %2541 = vst.msk [vmem:[#allocation2 + $0x20] sm:$0xff] %vm973, 0.0
        %2542 = vst.msk [vmem:[#allocation2 + $0x28] sm:$0xff] %vm973, 0.0
        %2543 = vst.msk [vmem:[#allocation2 + $0x30] sm:$0xff] %vm973, 0.0
        %2544 = vst.msk [vmem:[#allocation2 + $0x38] sm:$0xff] %vm973, 0.0
        %2553 = vrot.lane.b32.xlu0 %v2529, 1
        %v2554 = vpop.permute.xlu0 %2553
        %2555 = vrot.lane.b32.xlu0 %v2530, 1
        %v2556 = vpop.permute.xlu0 %2555
        %2557 = vrot.lane.b32.xlu0 %v2531, 1
        %v2558 = vpop.permute.xlu0 %2557
        %2559 = vrot.lane.b32.xlu0 %v2532, 1
        %v2560 = vpop.permute.xlu0 %2559
        %2561 = vrot.lane.b32.xlu0 %v2533, 1
        %v2562 = vpop.permute.xlu0 %2561
        %2563 = vrot.lane.b32.xlu0 %v2534, 1
        %v2564 = vpop.permute.xlu0 %2563
        %2565 = vrot.lane.b32.xlu0 %v2535, 1
        %v2566 = vpop.permute.xlu0 %2565
        %2567 = vrot.lane.b32.xlu0 %v2536, 1
        %v2568 = vpop.permute.xlu0 %2567
        %2577 = vst.msk [vmem:[#allocation2] sm:$0xff] %vm2302, %v2554
        %2578 = vst.msk [vmem:[#allocation2 + $0x8] sm:$0xff] %vm2302, %v2556
        %2579 = vst.msk [vmem:[#allocation2 + $0x10] sm:$0xff] %vm2302, %v2558
        %2580 = vst.msk [vmem:[#allocation2 + $0x18] sm:$0xff] %vm2302, %v2560
        %2581 = vst.msk [vmem:[#allocation2 + $0x20] sm:$0xff] %vm2302, %v2562
        %2582 = vst.msk [vmem:[#allocation2 + $0x28] sm:$0xff] %vm2302, %v2564
        %2583 = vst.msk [vmem:[#allocation2 + $0x30] sm:$0xff] %vm2302, %v2566
        %2584 = vst.msk [vmem:[#allocation2 + $0x38] sm:$0xff] %vm2302, %v2568
        %2585 = vst.msk [vmem:[#allocation2 + $0x40] sm:$0xff] %vm2307, %v2529
        %2586 = vst.msk [vmem:[#allocation2 + $0x48] sm:$0xff] %vm2307, %v2530
        %2587 = vst.msk [vmem:[#allocation2 + $0x50] sm:$0xff] %vm2307, %v2531
        %2588 = vst.msk [vmem:[#allocation2 + $0x58] sm:$0xff] %vm2307, %v2532
        %2589 = vst.msk [vmem:[#allocation2 + $0x60] sm:$0xff] %vm2307, %v2533
        %2590 = vst.msk [vmem:[#allocation2 + $0x68] sm:$0xff] %vm2307, %v2534
        %2591 = vst.msk [vmem:[#allocation2 + $0x70] sm:$0xff] %vm2307, %v2535
        %2592 = vst.msk [vmem:[#allocation2 + $0x78] sm:$0xff] %vm2307, %v2536
        %2593 = vrot.lane.b32.xlu0 %v2529, 127
        %v2594 = vpop.permute.xlu0 %2593
        %2595 = vrot.lane.b32.xlu0 %v2530, 127
        %v2596 = vpop.permute.xlu0 %2595
        %2597 = vrot.lane.b32.xlu0 %v2531, 127
        %v2598 = vpop.permute.xlu0 %2597
        %2599 = vrot.lane.b32.xlu0 %v2532, 127
        %v2600 = vpop.permute.xlu0 %2599
        %2601 = vrot.lane.b32.xlu0 %v2533, 127
        %v2602 = vpop.permute.xlu0 %2601
        %2603 = vrot.lane.b32.xlu0 %v2534, 127
        %v2604 = vpop.permute.xlu0 %2603
        %2605 = vrot.lane.b32.xlu0 %v2535, 127
        %v2606 = vpop.permute.xlu0 %2605
        %2607 = vrot.lane.b32.xlu0 %v2536, 127
        %v2608 = vpop.permute.xlu0 %2607
        %2617 = vst.msk [vmem:[#allocation2 + $0x80] sm:$0xff] %vm973, %v2594
        %2618 = vst.msk [vmem:[#allocation2 + $0x88] sm:$0xff] %vm973, %v2596
        %2619 = vst.msk [vmem:[#allocation2 + $0x90] sm:$0xff] %vm973, %v2598
        %2620 = vst.msk [vmem:[#allocation2 + $0x98] sm:$0xff] %vm973, %v2600
        %2621 = vst.msk [vmem:[#allocation2 + $0xa0] sm:$0xff] %vm973, %v2602
        %2622 = vst.msk [vmem:[#allocation2 + $0xa8] sm:$0xff] %vm973, %v2604
        %2623 = vst.msk [vmem:[#allocation2 + $0xb0] sm:$0xff] %vm973, %v2606
        %2624 = vst.msk [vmem:[#allocation2 + $0xb8] sm:$0xff] %vm973, %v2608
        %2625 = vst.msk [vmem:[#allocation2 + $0x80] sm:$0xff] %vm2302, 0.0
        %2626 = vst.msk [vmem:[#allocation2 + $0x88] sm:$0xff] %vm2302, 0.0
        %2627 = vst.msk [vmem:[#allocation2 + $0x90] sm:$0xff] %vm2302, 0.0
        %2628 = vst.msk [vmem:[#allocation2 + $0x98] sm:$0xff] %vm2302, 0.0
        %2629 = vst.msk [vmem:[#allocation2 + $0xa0] sm:$0xff] %vm2302, 0.0
        %2630 = vst.msk [vmem:[#allocation2 + $0xa8] sm:$0xff] %vm2302, 0.0
        %2631 = vst.msk [vmem:[#allocation2 + $0xb0] sm:$0xff] %vm2302, 0.0
        %2632 = vst.msk [vmem:[#allocation2 + $0xb8] sm:$0xff] %vm2302, 0.0
        %v2633 = vld [vmem:[#allocation13] sm:$0xff]
        %v2634 = vld [vmem:[#allocation13 + $0x8] sm:$0xff]
        %v2635 = vld [vmem:[#allocation13 + $0x10] sm:$0xff]
        %v2636 = vld [vmem:[#allocation13 + $0x18] sm:$0xff]
        %v2637 = vld [vmem:[#allocation13 + $0x20] sm:$0xff]
        %v2638 = vld [vmem:[#allocation13 + $0x28] sm:$0xff]
        %v2639 = vld [vmem:[#allocation13 + $0x30] sm:$0xff]
        %v2640 = vld [vmem:[#allocation13 + $0x38] sm:$0xff]
        %v2641 = vld [vmem:[#allocation13 + $0x40] sm:$0xff]
        %v2642 = vld [vmem:[#allocation13 + $0x48] sm:$0xff]
        %v2643 = vld [vmem:[#allocation13 + $0x50] sm:$0xff]
        %v2644 = vld [vmem:[#allocation13 + $0x58] sm:$0xff]
        %v2645 = vld [vmem:[#allocation13 + $0x60] sm:$0xff]
        %v2646 = vld [vmem:[#allocation13 + $0x68] sm:$0xff]
        %v2647 = vld [vmem:[#allocation13 + $0x70] sm:$0xff]
        %v2648 = vld [vmem:[#allocation13 + $0x78] sm:$0xff]
        %v2649 = vld [vmem:[#allocation2] sm:$0xff]
        %v2650 = vld [vmem:[#allocation2 + $0x8] sm:$0xff]
        %v2651 = vld [vmem:[#allocation2 + $0x10] sm:$0xff]
        %v2652 = vld [vmem:[#allocation2 + $0x18] sm:$0xff]
        %v2653 = vld [vmem:[#allocation2 + $0x20] sm:$0xff]
        %v2654 = vld [vmem:[#allocation2 + $0x28] sm:$0xff]
        %v2655 = vld [vmem:[#allocation2 + $0x30] sm:$0xff]
        %v2656 = vld [vmem:[#allocation2 + $0x38] sm:$0xff]
        %v2657 = vld [vmem:[#allocation2 + $0x40] sm:$0xff]
        %v2658 = vld [vmem:[#allocation2 + $0x48] sm:$0xff]
        %v2659 = vld [vmem:[#allocation2 + $0x50] sm:$0xff]
        %v2660 = vld [vmem:[#allocation2 + $0x58] sm:$0xff]
        %v2661 = vld [vmem:[#allocation2 + $0x60] sm:$0xff]
        %v2662 = vld [vmem:[#allocation2 + $0x68] sm:$0xff]
        %v2663 = vld [vmem:[#allocation2 + $0x70] sm:$0xff]
        %v2664 = vld [vmem:[#allocation2 + $0x78] sm:$0xff]
        %v2665 = vld [vmem:[#allocation2 + $0x80] sm:$0xff]
        %v2666 = vld [vmem:[#allocation2 + $0x88] sm:$0xff]
        %v2667 = vld [vmem:[#allocation2 + $0x90] sm:$0xff]
        %v2668 = vld [vmem:[#allocation2 + $0x98] sm:$0xff]
        %v2669 = vld [vmem:[#allocation2 + $0xa0] sm:$0xff]
        %v2670 = vld [vmem:[#allocation2 + $0xa8] sm:$0xff]
        %v2671 = vld [vmem:[#allocation2 + $0xb0] sm:$0xff]
        %v2672 = vld [vmem:[#allocation2 + $0xb8] sm:$0xff]
        %v2673 = vld [vmem:[%s24] sm:$0xff]
        %v2674 = vld [vmem:[%s24 + $0x8] sm:$0xff]
        %v2675 = vld [vmem:[%s24 + $0x10] sm:$0xff]
        %v2676 = vld [vmem:[%s24 + $0x18] sm:$0xff]
        %v2677 = vld [vmem:[%s24 + $0x20] sm:$0xff]
        %v2678 = vld [vmem:[%s24 + $0x28] sm:$0xff]
        %v2679 = vld [vmem:[%s24 + $0x30] sm:$0xff]
        %v2680 = vld [vmem:[%s24 + $0x38] sm:$0xff]
        %2682 = vset.pattern.permute.xlu0 7
        %2683 = vperm.xlu0 %2682, %v2673
        %v2684 = vpop.permute.xlu0 %2683
        %2687 = vset.pattern.permute.xlu0 7
        %2688 = vperm.xlu0 %2687, %v2674
        %v2689 = vpop.permute.xlu0 %2688
        %2692 = vset.pattern.permute.xlu0 7
        %2693 = vperm.xlu0 %2692, %v2675
        %v2694 = vpop.permute.xlu0 %2693
        %2697 = vset.pattern.permute.xlu0 7
        %2698 = vperm.xlu0 %2697, %v2676
        %v2699 = vpop.permute.xlu0 %2698
        %2702 = vset.pattern.permute.xlu0 7
        %2703 = vperm.xlu0 %2702, %v2677
        %v2704 = vpop.permute.xlu0 %2703
        %2707 = vset.pattern.permute.xlu0 7
        %2708 = vperm.xlu0 %2707, %v2678
        %v2709 = vpop.permute.xlu0 %2708
        %2712 = vset.pattern.permute.xlu0 7
        %2713 = vperm.xlu0 %2712, %v2679
        %v2714 = vpop.permute.xlu0 %2713
        %2717 = vset.pattern.permute.xlu0 7
        %2718 = vperm.xlu0 %2717, %v2680
        %v2719 = vpop.permute.xlu0 %2718
        %vm2721 = vcmask 523264
        %v2723 = vsel %vm2721, %v2634, 0
        %v2726 = vsel %vm2721, %v2636, 0
        %v2729 = vsel %vm2721, %v2638, 0
        %v2732 = vsel %vm2721, %v2640, 0
        %v2735 = vsel %vm2721, %v2642, 0
        %v2738 = vsel %vm2721, %v2644, 0
        %v2741 = vsel %vm2721, %v2646, 0
        %v2744 = vsel %vm2721, %v2648, 0
        %2746 = vmatprep.subr.mxu0 0.0
        %2747 = vmatpush1.msra.mxu0 %v2649
        %2748 = vmatprep.subr.mxu0 0.0
        %2749 = vmatpush1.msra.mxu0 %v2650
        %2750 = vmatprep.subr.mxu0 0.0
        %2751 = vmatpush1.msra.mxu0 %v2651
        %2752 = vmatprep.subr.mxu0 0.0
        %2753 = vmatpush1.msra.mxu0 %v2652
        %2754 = vmatprep.subr.mxu0 0.0
        %2755 = vmatpush1.msra.mxu0 %v2653
        %2756 = vmatprep.subr.mxu0 0.0
        %2757 = vmatpush1.msra.mxu0 %v2654
        %2758 = vmatprep.subr.mxu0 0.0
        %2759 = vmatpush1.msra.mxu0 %v2655
        %2760 = vmatprep.subr.mxu0 0.0
        %2761 = vmatpush1.msra.mxu0 %v2656
        %2762 = vmatprep.subr.mxu0 0.0
        %2763 = vmatpush1.msra.mxu0 %v2657
        %2764 = vmatprep.subr.mxu0 0.0
        %2765 = vmatpush1.msra.mxu0 %v2658
        %2766 = vmatprep.subr.mxu0 0.0
        %2767 = vmatpush1.msra.mxu0 %v2659
        %2768 = vmatprep.subr.mxu0 0.0
        %2769 = vmatpush1.msra.mxu0 %v2660
        %2770 = vmatprep.subr.mxu0 0.0
        %2771 = vmatpush1.msra.mxu0 %v2661
        %2772 = vmatprep.subr.mxu0 0.0
        %2773 = vmatpush1.msra.mxu0 %v2662
        %2774 = vmatprep.subr.mxu0 0.0
        %2775 = vmatpush1.msra.mxu0 %v2663
        %2776 = vmatprep.subr.mxu0 0.0
        %2777 = vmatpush1.msra.mxu0 %v2664
        %2778 = vmatprep.subr.mxu0 0.0
        %2779 = vmatpush1.msra.mxu0 %v2665
        %2780 = vmatprep.subr.mxu0 0.0
        %2781 = vmatpush1.msra.mxu0 %v2666
        %2782 = vmatprep.subr.mxu0 0.0
        %2783 = vmatpush1.msra.mxu0 %v2667
        %2784 = vmatprep.subr.mxu0 0.0
        %2785 = vmatpush1.msra.mxu0 %v2668
        %2786 = vmatprep.subr.mxu0 0.0
        %2787 = vmatpush1.msra.mxu0 %v2669
        %2788 = vmatprep.subr.mxu0 0.0
        %2789 = vmatpush1.msra.mxu0 %v2670
        %2790 = vmatprep.subr.mxu0 0.0
        %2791 = vmatpush1.msra.mxu0 %v2671
        %2792 = vmatprep.subr.mxu0 0.0
        %2793 = vmatpush1.msra.mxu0 %v2672
        %2794 = vmatprep.subr.mxu0 0.0
        %2795 = vmatpush1.msra.mxu0 0.0
        %2796 = vmatprep.subr.mxu0 0.0
        %2797 = vmatpush1.msra.mxu0 0.0
        %2798 = vmatprep.subr.mxu0 0.0
        %2799 = vmatpush1.msra.mxu0 0.0
        %2800 = vmatprep.subr.mxu0 0.0
        %2801 = vmatpush1.msra.mxu0 0.0
        %2802 = vmatprep.subr.mxu0 0.0
        %2803 = vmatpush1.msra.mxu0 0.0
        %2804 = vmatprep.subr.mxu0 0.0
        %2805 = vmatpush1.msra.mxu0 0.0
        %2806 = vmatprep.subr.mxu0 0.0
        %2807 = vmatpush1.msra.mxu0 0.0
        %2808 = vmatprep.subr.mxu0 0.0
        %2809 = vmatpush1.msra.mxu0 0.0
        %2810 = vmatprep.mubr.f32.mxu0 %v2723
        %2811 = vmatmul.mubr.f32.gmra.mrb[0].mxu0 %v2633
        %v2812 = vpop.f32.mrb[0].mxu0
        %v2813 = vadd.f32 %v2684, %v2812
        %v2814 = vpop.f32.mrb[0].mxu0
        %2815 = vmatprep.mubr.f32.mxu0 %v2726
        %2816 = vmatmul.mubr.f32.gmra.mrb[0].mxu0 %v2635
        %v2817 = vpop.f32.mrb[0].mxu0
        %v2818 = vadd.f32 %v2689, %v2817
        %v2819 = vpop.f32.mrb[0].mxu0
        %2820 = vmatprep.mubr.f32.mxu0 %v2729
        %2821 = vmatmul.mubr.f32.gmra.mrb[0].mxu0 %v2637
        %v2822 = vpop.f32.mrb[0].mxu0
        %v2823 = vadd.f32 %v2694, %v2822
        %v2824 = vpop.f32.mrb[0].mxu0
        %2825 = vmatprep.mubr.f32.mxu0 %v2732
        %2826 = vmatmul.mubr.f32.gmra.mrb[0].mxu0 %v2639
        %v2827 = vpop.f32.mrb[0].mxu0
        %v2828 = vadd.f32 %v2699, %v2827
        %v2829 = vpop.f32.mrb[0].mxu0
        %2830 = vmatprep.mubr.f32.mxu0 %v2735
        %2831 = vmatmul.mubr.f32.gmra.mrb[0].mxu0 %v2641
        %v2832 = vpop.f32.mrb[0].mxu0
        %v2833 = vadd.f32 %v2704, %v2832
        %v2834 = vpop.f32.mrb[0].mxu0
        %2835 = vmatprep.mubr.f32.mxu0 %v2738
        %2836 = vmatmul.mubr.f32.gmra.mrb[0].mxu0 %v2643
        %v2837 = vpop.f32.mrb[0].mxu0
        %v2838 = vadd.f32 %v2709, %v2837
        %v2839 = vpop.f32.mrb[0].mxu0
        %2840 = vmatprep.mubr.f32.mxu0 %v2741
        %2841 = vmatmul.mubr.f32.gmra.mrb[0].mxu0 %v2645
        %v2842 = vpop.f32.mrb[0].mxu0
        %v2843 = vadd.f32 %v2714, %v2842
        %v2844 = vpop.f32.mrb[0].mxu0
        %2845 = vmatprep.mubr.f32.mxu0 %v2744
        %2846 = vmatmul.mubr.f32.gmra.mrb[0].mxu0 %v2647
        %v2847 = vpop.f32.mrb[0].mxu0
        %v2848 = vadd.f32 %v2719, %v2847
        %v2849 = vpop.f32.mrb[0].mxu0
        %2850 = vdwg.mxu0
        %v2851 = vtanh.pop %v2813
        %v2852 = vtanh.pop %v2818
        %v2853 = vtanh.pop %v2823
        %v2854 = vtanh.pop %v2828
        %v2855 = vtanh.pop %v2833
        %v2856 = vtanh.pop %v2838
        %v2857 = vtanh.pop %v2843
        %v2858 = vtanh.pop %v2848
        %2867 = vrot.lane.b32.xlu0 %v2851, 127
        %v2868 = vpop.permute.xlu0 %2867
        %2869 = vrot.lane.b32.xlu0 %v2852, 127
        %v2870 = vpop.permute.xlu0 %2869
        %2871 = vrot.lane.b32.xlu0 %v2853, 127
        %v2872 = vpop.permute.xlu0 %2871
        %2873 = vrot.lane.b32.xlu0 %v2854, 127
        %v2874 = vpop.permute.xlu0 %2873
        %2875 = vrot.lane.b32.xlu0 %v2855, 127
        %v2876 = vpop.permute.xlu0 %2875
        %2877 = vrot.lane.b32.xlu0 %v2856, 127
        %v2878 = vpop.permute.xlu0 %2877
        %2879 = vrot.lane.b32.xlu0 %v2857, 127
        %v2880 = vpop.permute.xlu0 %2879
        %2881 = vrot.lane.b32.xlu0 %v2858, 127
        %v2882 = vpop.permute.xlu0 %2881
        %v2891 = vmax.f32 %v2851, %v2868
        %v2892 = vmax.f32 %v2852, %v2870
        %v2893 = vmax.f32 %v2853, %v2872
        %v2894 = vmax.f32 %v2854, %v2874
        %v2895 = vmax.f32 %v2855, %v2876
        %v2896 = vmax.f32 %v2856, %v2878
        %v2897 = vmax.f32 %v2857, %v2880
        %v2898 = vmax.f32 %v2858, %v2882
        %2899 = vst.msk [vmem:[#allocation2] sm:$0xff] %vm973, 0.0
        %2900 = vst.msk [vmem:[#allocation2 + $0x8] sm:$0xff] %vm973, 0.0
        %2901 = vst.msk [vmem:[#allocation2 + $0x10] sm:$0xff] %vm973, 0.0
        %2902 = vst.msk [vmem:[#allocation2 + $0x18] sm:$0xff] %vm973, 0.0
        %2903 = vst.msk [vmem:[#allocation2 + $0x20] sm:$0xff] %vm973, 0.0
        %2904 = vst.msk [vmem:[#allocation2 + $0x28] sm:$0xff] %vm973, 0.0
        %2905 = vst.msk [vmem:[#allocation2 + $0x30] sm:$0xff] %vm973, 0.0
        %2906 = vst.msk [vmem:[#allocation2 + $0x38] sm:$0xff] %vm973, 0.0
        %2907 = vst.msk [vmem:[#allocation2 + $0x40] sm:$0xff] %vm973, %v2891
        %2908 = vst.msk [vmem:[#allocation2 + $0x48] sm:$0xff] %vm973, %v2892
        %2909 = vst.msk [vmem:[#allocation2 + $0x50] sm:$0xff] %vm973, %v2893
        %2910 = vst.msk [vmem:[#allocation2 + $0x58] sm:$0xff] %vm973, %v2894
        %2911 = vst.msk [vmem:[#allocation2 + $0x60] sm:$0xff] %vm973, %v2895
        %2912 = vst.msk [vmem:[#allocation2 + $0x68] sm:$0xff] %vm973, %v2896
        %2913 = vst.msk [vmem:[#allocation2 + $0x70] sm:$0xff] %vm973, %v2897
        %2914 = vst.msk [vmem:[#allocation2 + $0x78] sm:$0xff] %vm973, %v2898
        %2915 = vst.msk [vmem:[#allocation2 + $0x80] sm:$0xff] %vm973, 0.0
        %2916 = vst.msk [vmem:[#allocation2 + $0x88] sm:$0xff] %vm973, 0.0
        %2917 = vst.msk [vmem:[#allocation2 + $0x90] sm:$0xff] %vm973, 0.0
        %2918 = vst.msk [vmem:[#allocation2 + $0x98] sm:$0xff] %vm973, 0.0
        %2919 = vst.msk [vmem:[#allocation2 + $0xa0] sm:$0xff] %vm973, 0.0
        %2920 = vst.msk [vmem:[#allocation2 + $0xa8] sm:$0xff] %vm973, 0.0
        %2921 = vst.msk [vmem:[#allocation2 + $0xb0] sm:$0xff] %vm973, 0.0
        %2922 = vst.msk [vmem:[#allocation2 + $0xb8] sm:$0xff] %vm973, 0.0
        %v2923 = vld [vmem:[%s9] sm:$0xff]
        %v2924 = vld [vmem:[%s9 + $0x8] sm:$0xff]
        %v2925 = vld [vmem:[%s9 + $0x10] sm:$0xff]
        %v2926 = vld [vmem:[%s9 + $0x18] sm:$0xff]
        %v2927 = vld [vmem:[%s9 + $0x20] sm:$0xff]
        %v2928 = vld [vmem:[%s9 + $0x28] sm:$0xff]
        %v2929 = vld [vmem:[%s9 + $0x30] sm:$0xff]
        %v2930 = vld [vmem:[%s9 + $0x38] sm:$0xff]
        %v2931 = vld [vmem:[%s9 + $0x40] sm:$0xff]
        %v2932 = vld [vmem:[%s9 + $0x48] sm:$0xff]
        %v2933 = vld [vmem:[%s9 + $0x50] sm:$0xff]
        %v2934 = vld [vmem:[%s9 + $0x58] sm:$0xff]
        %v2935 = vld [vmem:[%s9 + $0x60] sm:$0xff]
        %v2936 = vld [vmem:[%s9 + $0x68] sm:$0xff]
        %v2937 = vld [vmem:[%s9 + $0x70] sm:$0xff]
        %v2938 = vld [vmem:[%s9 + $0x78] sm:$0xff]
        %v2939 = vld [vmem:[%s9 + $0x80] sm:$0xff]
        %v2940 = vld [vmem:[%s9 + $0x88] sm:$0xff]
        %v2941 = vld [vmem:[%s9 + $0x90] sm:$0xff]
        %v2942 = vld [vmem:[%s9 + $0x98] sm:$0xff]
        %v2943 = vld [vmem:[%s9 + $0xa0] sm:$0xff]
        %v2944 = vld [vmem:[%s9 + $0xa8] sm:$0xff]
        %v2945 = vld [vmem:[%s9 + $0xb0] sm:$0xff]
        %v2946 = vld [vmem:[%s9 + $0xb8] sm:$0xff]
        %v2947 = vld [vmem:[%s9 + $0xc0] sm:$0xff]
        %v2948 = vld [vmem:[%s9 + $0xc8] sm:$0xff]
        %v2949 = vld [vmem:[%s9 + $0xd0] sm:$0xff]
        %v2950 = vld [vmem:[%s9 + $0xd8] sm:$0xff]
        %v2951 = vld [vmem:[%s9 + $0xe0] sm:$0xff]
        %v2952 = vld [vmem:[%s9 + $0xe8] sm:$0xff]
        %v2953 = vld [vmem:[%s9 + $0xf0] sm:$0xff]
        %v2954 = vld [vmem:[%s9 + $0xf8] sm:$0xff]
        %v2955 = vld [vmem:[#allocation2] sm:$0xff]
        %v2956 = vld [vmem:[#allocation2 + $0x8] sm:$0xff]
        %v2957 = vld [vmem:[#allocation2 + $0x10] sm:$0xff]
        %v2958 = vld [vmem:[#allocation2 + $0x18] sm:$0xff]
        %v2959 = vld [vmem:[#allocation2 + $0x20] sm:$0xff]
        %v2960 = vld [vmem:[#allocation2 + $0x28] sm:$0xff]
        %v2961 = vld [vmem:[#allocation2 + $0x30] sm:$0xff]
        %v2962 = vld [vmem:[#allocation2 + $0x38] sm:$0xff]
        %v2963 = vld [vmem:[#allocation2 + $0x40] sm:$0xff]
        %v2964 = vld [vmem:[#allocation2 + $0x48] sm:$0xff]
        %v2965 = vld [vmem:[#allocation2 + $0x50] sm:$0xff]
        %v2966 = vld [vmem:[#allocation2 + $0x58] sm:$0xff]
        %v2967 = vld [vmem:[#allocation2 + $0x60] sm:$0xff]
        %v2968 = vld [vmem:[#allocation2 + $0x68] sm:$0xff]
        %v2969 = vld [vmem:[#allocation2 + $0x70] sm:$0xff]
        %v2970 = vld [vmem:[#allocation2 + $0x78] sm:$0xff]
        %v2971 = vld [vmem:[#allocation2 + $0x80] sm:$0xff]
        %v2972 = vld [vmem:[#allocation2 + $0x88] sm:$0xff]
        %v2973 = vld [vmem:[#allocation2 + $0x90] sm:$0xff]
        %v2974 = vld [vmem:[#allocation2 + $0x98] sm:$0xff]
        %v2975 = vld [vmem:[#allocation2 + $0xa0] sm:$0xff]
        %v2976 = vld [vmem:[#allocation2 + $0xa8] sm:$0xff]
        %v2977 = vld [vmem:[#allocation2 + $0xb0] sm:$0xff]
        %v2978 = vld [vmem:[#allocation2 + $0xb8] sm:$0xff]
        %v2979 = vld [vmem:[%s24] sm:$0xff]
        %v2980 = vld [vmem:[%s24 + $0x8] sm:$0xff]
        %v2981 = vld [vmem:[%s24 + $0x10] sm:$0xff]
        %v2982 = vld [vmem:[%s24 + $0x18] sm:$0xff]
        %v2983 = vld [vmem:[%s24 + $0x20] sm:$0xff]
        %v2984 = vld [vmem:[%s24 + $0x28] sm:$0xff]
        %v2985 = vld [vmem:[%s24 + $0x30] sm:$0xff]
        %v2986 = vld [vmem:[%s24 + $0x38] sm:$0xff]
        %v2987 = vld [vmem:[%s24 + $0x40] sm:$0xff]
        %v2988 = vld [vmem:[%s24 + $0x48] sm:$0xff]
        %v2989 = vld [vmem:[%s24 + $0x50] sm:$0xff]
        %v2990 = vld [vmem:[%s24 + $0x58] sm:$0xff]
        %v2991 = vld [vmem:[%s24 + $0x60] sm:$0xff]
        %v2992 = vld [vmem:[%s24 + $0x68] sm:$0xff]
        %v2993 = vld [vmem:[%s24 + $0x70] sm:$0xff]
        %v2994 = vld [vmem:[%s24 + $0x78] sm:$0xff]
        %3011 = vrot.lane.b32.xlu0 %v2979, 120
        %v3012 = vpop.permute.xlu0 %3011
        %3013 = vrot.lane.b32.xlu0 %v2980, 120
        %v3014 = vpop.permute.xlu0 %3013
        %3015 = vrot.lane.b32.xlu0 %v2981, 120
        %v3016 = vpop.permute.xlu0 %3015
        %3017 = vrot.lane.b32.xlu0 %v2982, 120
        %v3018 = vpop.permute.xlu0 %3017
        %3019 = vrot.lane.b32.xlu0 %v2983, 120
        %v3020 = vpop.permute.xlu0 %3019
        %3021 = vrot.lane.b32.xlu0 %v2984, 120
        %v3022 = vpop.permute.xlu0 %3021
        %3023 = vrot.lane.b32.xlu0 %v2985, 120
        %v3024 = vpop.permute.xlu0 %3023
        %3025 = vrot.lane.b32.xlu0 %v2986, 120
        %v3026 = vpop.permute.xlu0 %3025
        %3027 = vrot.lane.b32.xlu0 %v2987, 120
        %v3028 = vpop.permute.xlu0 %3027
        %3029 = vrot.lane.b32.xlu0 %v2988, 120
        %v3030 = vpop.permute.xlu0 %3029
        %3031 = vrot.lane.b32.xlu0 %v2989, 120
        %v3032 = vpop.permute.xlu0 %3031
        %3033 = vrot.lane.b32.xlu0 %v2990, 120
        %v3034 = vpop.permute.xlu0 %3033
        %3035 = vrot.lane.b32.xlu0 %v2991, 120
        %v3036 = vpop.permute.xlu0 %3035
        %3037 = vrot.lane.b32.xlu0 %v2992, 120
        %v3038 = vpop.permute.xlu0 %3037
        %3039 = vrot.lane.b32.xlu0 %v2993, 120
        %v3040 = vpop.permute.xlu0 %3039
        %3041 = vrot.lane.b32.xlu0 %v2994, 120
        %v3042 = vpop.permute.xlu0 %3041
        %v3060 = vsel %vm2721, %v2924, 0
        %v3063 = vsel %vm2721, %v2926, 0
        %v3066 = vsel %vm2721, %v2928, 0
        %v3069 = vsel %vm2721, %v2930, 0
        %v3072 = vsel %vm2721, %v2932, 0
        %v3075 = vsel %vm2721, %v2934, 0
        %v3078 = vsel %vm2721, %v2936, 0
        %v3081 = vsel %vm2721, %v2938, 0
        %v3084 = vsel %vm2721, %v2940, 0
        %v3087 = vsel %vm2721, %v2942, 0
        %v3090 = vsel %vm2721, %v2944, 0
        %v3093 = vsel %vm2721, %v2946, 0
        %v3096 = vsel %vm2721, %v2948, 0
        %v3099 = vsel %vm2721, %v2950, 0
        %v3102 = vsel %vm2721, %v2952, 0
        %v3105 = vsel %vm2721, %v2954, 0
        %3107 = vmatprep.subr.mxu0 0.0
        %3108 = vmatpush1.msra.mxu0 %v2955
        %3109 = vmatprep.subr.mxu0 0.0
        %3110 = vmatpush1.msra.mxu0 %v2956
        %3111 = vmatprep.subr.mxu0 0.0
        %3112 = vmatpush1.msra.mxu0 %v2957
        %3113 = vmatprep.subr.mxu0 0.0
        %3114 = vmatpush1.msra.mxu0 %v2958
        %3115 = vmatprep.subr.mxu0 0.0
        %3116 = vmatpush1.msra.mxu0 %v2959
        %3117 = vmatprep.subr.mxu0 0.0
        %3118 = vmatpush1.msra.mxu0 %v2960
        %3119 = vmatprep.subr.mxu0 0.0
        %3120 = vmatpush1.msra.mxu0 %v2961
        %3121 = vmatprep.subr.mxu0 0.0
        %3122 = vmatpush1.msra.mxu0 %v2962
        %3123 = vmatprep.subr.mxu0 0.0
        %3124 = vmatpush1.msra.mxu0 %v2963
        %3125 = vmatprep.subr.mxu0 0.0
        %3126 = vmatpush1.msra.mxu0 %v2964
        %3127 = vmatprep.subr.mxu0 0.0
        %3128 = vmatpush1.msra.mxu0 %v2965
        %3129 = vmatprep.subr.mxu0 0.0
        %3130 = vmatpush1.msra.mxu0 %v2966
        %3131 = vmatprep.subr.mxu0 0.0
        %3132 = vmatpush1.msra.mxu0 %v2967
        %3133 = vmatprep.subr.mxu0 0.0
        %3134 = vmatpush1.msra.mxu0 %v2968
        %3135 = vmatprep.subr.mxu0 0.0
        %3136 = vmatpush1.msra.mxu0 %v2969
        %3137 = vmatprep.subr.mxu0 0.0
        %3138 = vmatpush1.msra.mxu0 %v2970
        %3139 = vmatprep.subr.mxu0 0.0
        %3140 = vmatpush1.msra.mxu0 %v2971
        %3141 = vmatprep.subr.mxu0 0.0
        %3142 = vmatpush1.msra.mxu0 %v2972
        %3143 = vmatprep.subr.mxu0 0.0
        %3144 = vmatpush1.msra.mxu0 %v2973
        %3145 = vmatprep.subr.mxu0 0.0
        %3146 = vmatpush1.msra.mxu0 %v2974
        %3147 = vmatprep.subr.mxu0 0.0
        %3148 = vmatpush1.msra.mxu0 %v2975
        %3149 = vmatprep.subr.mxu0 0.0
        %3150 = vmatpush1.msra.mxu0 %v2976
        %3151 = vmatprep.subr.mxu0 0.0
        %3152 = vmatpush1.msra.mxu0 %v2977
        %3153 = vmatprep.subr.mxu0 0.0
        %3154 = vmatpush1.msra.mxu0 %v2978
        %3155 = vmatprep.subr.mxu0 0.0
        %3156 = vmatpush1.msra.mxu0 0.0
        %3157 = vmatprep.subr.mxu0 0.0
        %3158 = vmatpush1.msra.mxu0 0.0
        %3159 = vmatprep.subr.mxu0 0.0
        %3160 = vmatpush1.msra.mxu0 0.0
        %3161 = vmatprep.subr.mxu0 0.0
        %3162 = vmatpush1.msra.mxu0 0.0
        %3163 = vmatprep.subr.mxu0 0.0
        %3164 = vmatpush1.msra.mxu0 0.0
        %3165 = vmatprep.subr.mxu0 0.0
        %3166 = vmatpush1.msra.mxu0 0.0
        %3167 = vmatprep.subr.mxu0 0.0
        %3168 = vmatpush1.msra.mxu0 0.0
        %3169 = vmatprep.subr.mxu0 0.0
        %3170 = vmatpush1.msra.mxu0 0.0
        %3171 = vmatprep.mubr.f32.mxu0 %v3060
        %3172 = vmatmul.mubr.f32.gmra.mrb[0].mxu0 %v2923
        %v3173 = vpop.f32.mrb[0].mxu0
        %v3174 = vadd.f32 %v3012, %v3173
        %v3175 = vpop.f32.mrb[0].mxu0
        %3176 = vmatprep.mubr.f32.mxu0 %v3063
        %3177 = vmatmul.mubr.f32.gmra.mrb[0].mxu0 %v2925
        %v3178 = vpop.f32.mrb[0].mxu0
        %v3179 = vadd.f32 %v3014, %v3178
        %v3180 = vpop.f32.mrb[0].mxu0
        %3181 = vmatprep.mubr.f32.mxu0 %v3066
        %3182 = vmatmul.mubr.f32.gmra.mrb[0].mxu0 %v2927
        %v3183 = vpop.f32.mrb[0].mxu0
        %v3184 = vadd.f32 %v3016, %v3183
        %v3185 = vpop.f32.mrb[0].mxu0
        %3186 = vmatprep.mubr.f32.mxu0 %v3069
        %3187 = vmatmul.mubr.f32.gmra.mrb[0].mxu0 %v2929
        %v3188 = vpop.f32.mrb[0].mxu0
        %v3189 = vadd.f32 %v3018, %v3188
        %v3190 = vpop.f32.mrb[0].mxu0
        %3191 = vmatprep.mubr.f32.mxu0 %v3072
        %3192 = vmatmul.mubr.f32.gmra.mrb[0].mxu0 %v2931
        %v3193 = vpop.f32.mrb[0].mxu0
        %v3194 = vadd.f32 %v3020, %v3193
        %v3195 = vpop.f32.mrb[0].mxu0
        %3196 = vmatprep.mubr.f32.mxu0 %v3075
        %3197 = vmatmul.mubr.f32.gmra.mrb[0].mxu0 %v2933
        %v3198 = vpop.f32.mrb[0].mxu0
        %v3199 = vadd.f32 %v3022, %v3198
        %v3200 = vpop.f32.mrb[0].mxu0
        %3201 = vmatprep.mubr.f32.mxu0 %v3078
        %3202 = vmatmul.mubr.f32.gmra.mrb[0].mxu0 %v2935
        %v3203 = vpop.f32.mrb[0].mxu0
        %v3204 = vadd.f32 %v3024, %v3203
        %v3205 = vpop.f32.mrb[0].mxu0
        %3206 = vmatprep.mubr.f32.mxu0 %v3081
        %3207 = vmatmul.mubr.f32.gmra.mrb[0].mxu0 %v2937
        %v3208 = vpop.f32.mrb[0].mxu0
        %v3209 = vadd.f32 %v3026, %v3208
        %v3210 = vpop.f32.mrb[0].mxu0
        %3211 = vmatprep.mubr.f32.mxu0 %v3084
        %3212 = vmatmul.mubr.f32.gmra.mrb[0].mxu0 %v2939
        %v3213 = vpop.f32.mrb[0].mxu0
        %v3214 = vadd.f32 %v3028, %v3213
        %v3215 = vpop.f32.mrb[0].mxu0
        %3216 = vmatprep.mubr.f32.mxu0 %v3087
        %3217 = vmatmul.mubr.f32.gmra.mrb[0].mxu0 %v2941
        %v3218 = vpop.f32.mrb[0].mxu0
        %v3219 = vadd.f32 %v3030, %v3218
        %v3220 = vpop.f32.mrb[0].mxu0
        %3221 = vmatprep.mubr.f32.mxu0 %v3090
        %3222 = vmatmul.mubr.f32.gmra.mrb[0].mxu0 %v2943
        %v3223 = vpop.f32.mrb[0].mxu0
        %v3224 = vadd.f32 %v3032, %v3223
        %v3225 = vpop.f32.mrb[0].mxu0
        %3226 = vmatprep.mubr.f32.mxu0 %v3093
        %3227 = vmatmul.mubr.f32.gmra.mrb[0].mxu0 %v2945
        %v3228 = vpop.f32.mrb[0].mxu0
        %v3229 = vadd.f32 %v3034, %v3228
        %v3230 = vpop.f32.mrb[0].mxu0
        %3231 = vmatprep.mubr.f32.mxu0 %v3096
        %3232 = vmatmul.mubr.f32.gmra.mrb[0].mxu0 %v2947
        %v3233 = vpop.f32.mrb[0].mxu0
        %v3234 = vadd.f32 %v3036, %v3233
        %v3235 = vpop.f32.mrb[0].mxu0
        %3236 = vmatprep.mubr.f32.mxu0 %v3099
        %3237 = vmatmul.mubr.f32.gmra.mrb[0].mxu0 %v2949
        %v3238 = vpop.f32.mrb[0].mxu0
        %v3239 = vadd.f32 %v3038, %v3238
        %v3240 = vpop.f32.mrb[0].mxu0
        %3241 = vmatprep.mubr.f32.mxu0 %v3102
        %3242 = vmatmul.mubr.f32.gmra.mrb[0].mxu0 %v2951
        %v3243 = vpop.f32.mrb[0].mxu0
        %v3244 = vadd.f32 %v3040, %v3243
        %v3245 = vpop.f32.mrb[0].mxu0
        %3246 = vmatprep.mubr.f32.mxu0 %v3105
        %3247 = vmatmul.mubr.f32.gmra.mrb[0].mxu0 %v2953
        %v3248 = vpop.f32.mrb[0].mxu0
        %v3249 = vadd.f32 %v3042, %v3248
        %v3250 = vpop.f32.mrb[0].mxu0
        %3251 = vdwg.mxu0
        %v3252 = vtanh.pop %v3174
        %v3253 = vtanh.pop %v3179
        %v3254 = vtanh.pop %v3184
        %v3255 = vtanh.pop %v3189
        %v3256 = vtanh.pop %v3194
        %v3257 = vtanh.pop %v3199
        %v3258 = vtanh.pop %v3204
        %v3259 = vtanh.pop %v3209
        %v3260 = vtanh.pop %v3214
        %v3261 = vtanh.pop %v3219
        %v3262 = vtanh.pop %v3224
        %v3263 = vtanh.pop %v3229
        %v3264 = vtanh.pop %v3234
        %v3265 = vtanh.pop %v3239
        %v3266 = vtanh.pop %v3244
        %v3267 = vtanh.pop %v3249
        %3268 = vst.msk [vmem:[#allocation2] sm:$0xff] %vm973, 0.0
        %3269 = vst.msk [vmem:[#allocation2 + $0x8] sm:$0xff] %vm973, 0.0
        %3270 = vst.msk [vmem:[#allocation2 + $0x10] sm:$0xff] %vm973, 0.0
        %3271 = vst.msk [vmem:[#allocation2 + $0x18] sm:$0xff] %vm973, 0.0
        %3272 = vst.msk [vmem:[#allocation2 + $0x20] sm:$0xff] %vm973, 0.0
        %3273 = vst.msk [vmem:[#allocation2 + $0x28] sm:$0xff] %vm973, 0.0
        %3274 = vst.msk [vmem:[#allocation2 + $0x30] sm:$0xff] %vm973, 0.0
        %3275 = vst.msk [vmem:[#allocation2 + $0x38] sm:$0xff] %vm973, 0.0
        %3276 = vst.msk [vmem:[#allocation2 + $0x40] sm:$0xff] %vm973, 0.0
        %3277 = vst.msk [vmem:[#allocation2 + $0x48] sm:$0xff] %vm973, 0.0
        %3278 = vst.msk [vmem:[#allocation2 + $0x50] sm:$0xff] %vm973, 0.0
        %3279 = vst.msk [vmem:[#allocation2 + $0x58] sm:$0xff] %vm973, 0.0
        %3280 = vst.msk [vmem:[#allocation2 + $0x60] sm:$0xff] %vm973, 0.0
        %3281 = vst.msk [vmem:[#allocation2 + $0x68] sm:$0xff] %vm973, 0.0
        %3282 = vst.msk [vmem:[#allocation2 + $0x70] sm:$0xff] %vm973, 0.0
        %3283 = vst.msk [vmem:[#allocation2 + $0x78] sm:$0xff] %vm973, 0.0
        %3284 = vst.msk [vmem:[#allocation2 + $0x80] sm:$0xff] %vm973, %v3252
        %3285 = vst.msk [vmem:[#allocation2 + $0x88] sm:$0xff] %vm973, %v3253
        %3286 = vst.msk [vmem:[#allocation2 + $0x90] sm:$0xff] %vm973, %v3254
        %3287 = vst.msk [vmem:[#allocation2 + $0x98] sm:$0xff] %vm973, %v3255
        %3288 = vst.msk [vmem:[#allocation2 + $0xa0] sm:$0xff] %vm973, %v3256
        %3289 = vst.msk [vmem:[#allocation2 + $0xa8] sm:$0xff] %vm973, %v3257
        %3290 = vst.msk [vmem:[#allocation2 + $0xb0] sm:$0xff] %vm973, %v3258
        %3291 = vst.msk [vmem:[#allocation2 + $0xb8] sm:$0xff] %vm973, %v3259
        %3292 = vst.msk [vmem:[#allocation2 + $0xc0] sm:$0xff] %vm973, %v3260
        %3293 = vst.msk [vmem:[#allocation2 + $0xc8] sm:$0xff] %vm973, %v3261
        %3294 = vst.msk [vmem:[#allocation2 + $0xd0] sm:$0xff] %vm973, %v3262
        %3295 = vst.msk [vmem:[#allocation2 + $0xd8] sm:$0xff] %vm973, %v3263
        %3296 = vst.msk [vmem:[#allocation2 + $0xe0] sm:$0xff] %vm973, %v3264
        %3297 = vst.msk [vmem:[#allocation2 + $0xe8] sm:$0xff] %vm973, %v3265
        %3298 = vst.msk [vmem:[#allocation2 + $0xf0] sm:$0xff] %vm973, %v3266
        %3299 = vst.msk [vmem:[#allocation2 + $0xf8] sm:$0xff] %vm973, %v3267
        %3300 = vst.msk [vmem:[#allocation2 + $0x100] sm:$0xff] %vm973, 0.0
        %3301 = vst.msk [vmem:[#allocation2 + $0x108] sm:$0xff] %vm973, 0.0
        %3302 = vst.msk [vmem:[#allocation2 + $0x110] sm:$0xff] %vm973, 0.0
        %3303 = vst.msk [vmem:[#allocation2 + $0x118] sm:$0xff] %vm973, 0.0
        %3304 = vst.msk [vmem:[#allocation2 + $0x120] sm:$0xff] %vm973, 0.0
        %3305 = vst.msk [vmem:[#allocation2 + $0x128] sm:$0xff] %vm973, 0.0
        %3306 = vst.msk [vmem:[#allocation2 + $0x130] sm:$0xff] %vm973, 0.0
        %3307 = vst.msk [vmem:[#allocation2 + $0x138] sm:$0xff] %vm973, 0.0
        %3308 = vst.msk [vmem:[#allocation2 + $0x140] sm:$0xff] %vm973, 0.0
        %3309 = vst.msk [vmem:[#allocation2 + $0x148] sm:$0xff] %vm973, 0.0
        %3310 = vst.msk [vmem:[#allocation2 + $0x150] sm:$0xff] %vm973, 0.0
        %3311 = vst.msk [vmem:[#allocation2 + $0x158] sm:$0xff] %vm973, 0.0
        %3312 = vst.msk [vmem:[#allocation2 + $0x160] sm:$0xff] %vm973, 0.0
        %3313 = vst.msk [vmem:[#allocation2 + $0x168] sm:$0xff] %vm973, 0.0
        %3314 = vst.msk [vmem:[#allocation2 + $0x170] sm:$0xff] %vm973, 0.0
        %3315 = vst.msk [vmem:[#allocation2 + $0x178] sm:$0xff] %vm973, 0.0
        %v3316 = vld [vmem:[%s10] sm:$0xff]
        %v3317 = vld [vmem:[%s10 + $0x8] sm:$0xff]
        %v3318 = vld [vmem:[%s10 + $0x10] sm:$0xff]
        %v3319 = vld [vmem:[%s10 + $0x18] sm:$0xff]
        %v3320 = vld [vmem:[%s10 + $0x20] sm:$0xff]
        %v3321 = vld [vmem:[%s10 + $0x28] sm:$0xff]
        %v3322 = vld [vmem:[%s10 + $0x30] sm:$0xff]
        %v3323 = vld [vmem:[%s10 + $0x38] sm:$0xff]
        %v3324 = vld [vmem:[%s10 + $0x40] sm:$0xff]
        %v3325 = vld [vmem:[%s10 + $0x48] sm:$0xff]
        %v3326 = vld [vmem:[%s10 + $0x50] sm:$0xff]
        %v3327 = vld [vmem:[%s10 + $0x58] sm:$0xff]
        %v3328 = vld [vmem:[%s10 + $0x60] sm:$0xff]
        %v3329 = vld [vmem:[%s10 + $0x68] sm:$0xff]
        %v3330 = vld [vmem:[%s10 + $0x70] sm:$0xff]
        %v3331 = vld [vmem:[%s10 + $0x78] sm:$0xff]
        %v3332 = vld [vmem:[%s10 + $0x80] sm:$0xff]
        %v3333 = vld [vmem:[%s10 + $0x88] sm:$0xff]
        %v3334 = vld [vmem:[%s10 + $0x90] sm:$0xff]
        %v3335 = vld [vmem:[%s10 + $0x98] sm:$0xff]
        %v3336 = vld [vmem:[%s10 + $0xa0] sm:$0xff]
        %v3337 = vld [vmem:[%s10 + $0xa8] sm:$0xff]
        %v3338 = vld [vmem:[%s10 + $0xb0] sm:$0xff]
        %v3339 = vld [vmem:[%s10 + $0xb8] sm:$0xff]
        %v3340 = vld [vmem:[%s10 + $0xc0] sm:$0xff]
        %v3341 = vld [vmem:[%s10 + $0xc8] sm:$0xff]
        %v3342 = vld [vmem:[%s10 + $0xd0] sm:$0xff]
        %v3343 = vld [vmem:[%s10 + $0xd8] sm:$0xff]
        %v3344 = vld [vmem:[%s10 + $0xe0] sm:$0xff]
        %v3345 = vld [vmem:[%s10 + $0xe8] sm:$0xff]
        %v3346 = vld [vmem:[%s10 + $0xf0] sm:$0xff]
        %v3347 = vld [vmem:[%s10 + $0xf8] sm:$0xff]
        %v3348 = vld [vmem:[%s10 + $0x100] sm:$0xff]
        %v3349 = vld [vmem:[%s10 + $0x108] sm:$0xff]
        %v3350 = vld [vmem:[%s10 + $0x110] sm:$0xff]
        %v3351 = vld [vmem:[%s10 + $0x118] sm:$0xff]
        %v3352 = vld [vmem:[%s10 + $0x120] sm:$0xff]
        %v3353 = vld [vmem:[%s10 + $0x128] sm:$0xff]
        %v3354 = vld [vmem:[%s10 + $0x130] sm:$0xff]
        %v3355 = vld [vmem:[%s10 + $0x138] sm:$0xff]
        %v3356 = vld [vmem:[%s10 + $0x140] sm:$0xff]
        %v3357 = vld [vmem:[%s10 + $0x148] sm:$0xff]
        %v3358 = vld [vmem:[%s10 + $0x150] sm:$0xff]
        %v3359 = vld [vmem:[%s10 + $0x158] sm:$0xff]
        %v3360 = vld [vmem:[%s10 + $0x160] sm:$0xff]
        %v3361 = vld [vmem:[%s10 + $0x168] sm:$0xff]
        %v3362 = vld [vmem:[%s10 + $0x170] sm:$0xff]
        %v3363 = vld [vmem:[%s10 + $0x178] sm:$0xff]
        %v3364 = vld [vmem:[#allocation2] sm:$0xff]
        %v3365 = vld [vmem:[#allocation2 + $0x8] sm:$0xff]
        %v3366 = vld [vmem:[#allocation2 + $0x10] sm:$0xff]
        %v3367 = vld [vmem:[#allocation2 + $0x18] sm:$0xff]
        %v3368 = vld [vmem:[#allocation2 + $0x20] sm:$0xff]
        %v3369 = vld [vmem:[#allocation2 + $0x28] sm:$0xff]
        %v3370 = vld [vmem:[#allocation2 + $0x30] sm:$0xff]
        %v3371 = vld [vmem:[#allocation2 + $0x38] sm:$0xff]
        %v3372 = vld [vmem:[#allocation2 + $0x40] sm:$0xff]
        %v3373 = vld [vmem:[#allocation2 + $0x48] sm:$0xff]
        %v3374 = vld [vmem:[#allocation2 + $0x50] sm:$0xff]
        %v3375 = vld [vmem:[#allocation2 + $0x58] sm:$0xff]
        %v3376 = vld [vmem:[#allocation2 + $0x60] sm:$0xff]
        %v3377 = vld [vmem:[#allocation2 + $0x68] sm:$0xff]
        %v3378 = vld [vmem:[#allocation2 + $0x70] sm:$0xff]
        %v3379 = vld [vmem:[#allocation2 + $0x78] sm:$0xff]
        %v3380 = vld [vmem:[#allocation2 + $0x80] sm:$0xff]
        %v3381 = vld [vmem:[#allocation2 + $0x88] sm:$0xff]
        %v3382 = vld [vmem:[#allocation2 + $0x90] sm:$0xff]
        %v3383 = vld [vmem:[#allocation2 + $0x98] sm:$0xff]
        %v3384 = vld [vmem:[#allocation2 + $0xa0] sm:$0xff]
        %v3385 = vld [vmem:[#allocation2 + $0xa8] sm:$0xff]
        %v3386 = vld [vmem:[#allocation2 + $0xb0] sm:$0xff]
        %v3387 = vld [vmem:[#allocation2 + $0xb8] sm:$0xff]
        %v3388 = vld [vmem:[#allocation2 + $0xc0] sm:$0xff]
        %v3389 = vld [vmem:[#allocation2 + $0xc8] sm:$0xff]
        %v3390 = vld [vmem:[#allocation2 + $0xd0] sm:$0xff]
        %v3391 = vld [vmem:[#allocation2 + $0xd8] sm:$0xff]
        %v3392 = vld [vmem:[#allocation2 + $0xe0] sm:$0xff]
        %v3393 = vld [vmem:[#allocation2 + $0xe8] sm:$0xff]
        %v3394 = vld [vmem:[#allocation2 + $0xf0] sm:$0xff]
        %v3395 = vld [vmem:[#allocation2 + $0xf8] sm:$0xff]
        %v3396 = vld [vmem:[#allocation2 + $0x100] sm:$0xff]
        %v3397 = vld [vmem:[#allocation2 + $0x108] sm:$0xff]
        %v3398 = vld [vmem:[#allocation2 + $0x110] sm:$0xff]
        %v3399 = vld [vmem:[#allocation2 + $0x118] sm:$0xff]
        %v3400 = vld [vmem:[#allocation2 + $0x120] sm:$0xff]
        %v3401 = vld [vmem:[#allocation2 + $0x128] sm:$0xff]
        %v3402 = vld [vmem:[#allocation2 + $0x130] sm:$0xff]
        %v3403 = vld [vmem:[#allocation2 + $0x138] sm:$0xff]
        %v3404 = vld [vmem:[#allocation2 + $0x140] sm:$0xff]
        %v3405 = vld [vmem:[#allocation2 + $0x148] sm:$0xff]
        %v3406 = vld [vmem:[#allocation2 + $0x150] sm:$0xff]
        %v3407 = vld [vmem:[#allocation2 + $0x158] sm:$0xff]
        %v3408 = vld [vmem:[#allocation2 + $0x160] sm:$0xff]
        %v3409 = vld [vmem:[#allocation2 + $0x168] sm:$0xff]
        %v3410 = vld [vmem:[#allocation2 + $0x170] sm:$0xff]
        %v3411 = vld [vmem:[#allocation2 + $0x178] sm:$0xff]
        %v3412 = vld [vmem:[%s24] sm:$0xff]
        %v3413 = vld [vmem:[%s24 + $0x8] sm:$0xff]
        %v3414 = vld [vmem:[%s24 + $0x10] sm:$0xff]
        %v3415 = vld [vmem:[%s24 + $0x18] sm:$0xff]
        %v3416 = vld [vmem:[%s24 + $0x20] sm:$0xff]
        %v3417 = vld [vmem:[%s24 + $0x28] sm:$0xff]
        %v3418 = vld [vmem:[%s24 + $0x30] sm:$0xff]
        %v3419 = vld [vmem:[%s24 + $0x38] sm:$0xff]
        %v3420 = vld [vmem:[%s24 + $0x40] sm:$0xff]
        %v3421 = vld [vmem:[%s24 + $0x48] sm:$0xff]
        %v3422 = vld [vmem:[%s24 + $0x50] sm:$0xff]
        %v3423 = vld [vmem:[%s24 + $0x58] sm:$0xff]
        %v3424 = vld [vmem:[%s24 + $0x60] sm:$0xff]
        %v3425 = vld [vmem:[%s24 + $0x68] sm:$0xff]
        %v3426 = vld [vmem:[%s24 + $0x70] sm:$0xff]
        %v3427 = vld [vmem:[%s24 + $0x78] sm:$0xff]
        %3444 = vrot.lane.b32.xlu0 %v3412, 119
        %v3445 = vpop.permute.xlu0 %3444
        %3446 = vrot.lane.b32.xlu0 %v3413, 119
        %v3447 = vpop.permute.xlu0 %3446
        %3448 = vrot.lane.b32.xlu0 %v3414, 119
        %v3449 = vpop.permute.xlu0 %3448
        %3450 = vrot.lane.b32.xlu0 %v3415, 119
        %v3451 = vpop.permute.xlu0 %3450
        %3452 = vrot.lane.b32.xlu0 %v3416, 119
        %v3453 = vpop.permute.xlu0 %3452
        %3454 = vrot.lane.b32.xlu0 %v3417, 119
        %v3455 = vpop.permute.xlu0 %3454
        %3456 = vrot.lane.b32.xlu0 %v3418, 119
        %v3457 = vpop.permute.xlu0 %3456
        %3458 = vrot.lane.b32.xlu0 %v3419, 119
        %v3459 = vpop.permute.xlu0 %3458
        %3460 = vrot.lane.b32.xlu0 %v3420, 119
        %v3461 = vpop.permute.xlu0 %3460
        %3462 = vrot.lane.b32.xlu0 %v3421, 119
        %v3463 = vpop.permute.xlu0 %3462
        %3464 = vrot.lane.b32.xlu0 %v3422, 119
        %v3465 = vpop.permute.xlu0 %3464
        %3466 = vrot.lane.b32.xlu0 %v3423, 119
        %v3467 = vpop.permute.xlu0 %3466
        %3468 = vrot.lane.b32.xlu0 %v3424, 119
        %v3469 = vpop.permute.xlu0 %3468
        %3470 = vrot.lane.b32.xlu0 %v3425, 119
        %v3471 = vpop.permute.xlu0 %3470
        %3472 = vrot.lane.b32.xlu0 %v3426, 119
        %v3473 = vpop.permute.xlu0 %3472
        %3474 = vrot.lane.b32.xlu0 %v3427, 119
        %v3475 = vpop.permute.xlu0 %3474
        %3492 = vmatprep.subr.mxu0 0.0
        %3493 = vmatpush1.msra.mxu0 %v3364
        %3494 = vmatprep.subr.mxu0 0.0
        %3495 = vmatpush1.msra.mxu0 %v3365
        %3496 = vmatprep.subr.mxu0 0.0
        %3497 = vmatpush1.msra.mxu0 %v3366
        %3498 = vmatprep.subr.mxu0 0.0
        %3499 = vmatpush1.msra.mxu0 %v3367
        %3500 = vmatprep.subr.mxu0 0.0
        %3501 = vmatpush1.msra.mxu0 %v3368
        %3502 = vmatprep.subr.mxu0 0.0
        %3503 = vmatpush1.msra.mxu0 %v3369
        %3504 = vmatprep.subr.mxu0 0.0
        %3505 = vmatpush1.msra.mxu0 %v3370
        %3506 = vmatprep.subr.mxu0 0.0
        %3507 = vmatpush1.msra.mxu0 %v3371
        %3508 = vmatprep.subr.mxu0 0.0
        %3509 = vmatpush1.msra.mxu0 %v3372
        %3510 = vmatprep.subr.mxu0 0.0
        %3511 = vmatpush1.msra.mxu0 %v3373
        %3512 = vmatprep.subr.mxu0 0.0
        %3513 = vmatpush1.msra.mxu0 %v3374
        %3514 = vmatprep.subr.mxu0 0.0
        %3515 = vmatpush1.msra.mxu0 %v3375
        %3516 = vmatprep.subr.mxu0 0.0
        %3517 = vmatpush1.msra.mxu0 %v3376
        %3518 = vmatprep.subr.mxu0 0.0
        %3519 = vmatpush1.msra.mxu0 %v3377
        %3520 = vmatprep.subr.mxu0 0.0
        %3521 = vmatpush1.msra.mxu0 %v3378
        %3522 = vmatprep.subr.mxu0 0.0
        %3523 = vmatpush1.msra.mxu0 %v3379
        %3524 = vmatprep.subr.mxu0 0.0
        %3525 = vmatpush1.msra.mxu0 %v3380
        %3526 = vmatprep.subr.mxu0 0.0
        %3527 = vmatpush1.msra.mxu0 %v3381
        %3528 = vmatprep.subr.mxu0 0.0
        %3529 = vmatpush1.msra.mxu0 %v3382
        %3530 = vmatprep.subr.mxu0 0.0
        %3531 = vmatpush1.msra.mxu0 %v3383
        %3532 = vmatprep.subr.mxu0 0.0
        %3533 = vmatpush1.msra.mxu0 %v3384
        %3534 = vmatprep.subr.mxu0 0.0
        %3535 = vmatpush1.msra.mxu0 %v3385
        %3536 = vmatprep.subr.mxu0 0.0
        %3537 = vmatpush1.msra.mxu0 %v3386
        %3538 = vmatprep.subr.mxu0 0.0
        %3539 = vmatpush1.msra.mxu0 %v3387
        %3540 = vmatprep.subr.mxu0 0.0
        %3541 = vmatpush1.msra.mxu0 %v3388
        %3542 = vmatprep.subr.mxu0 0.0
        %3543 = vmatpush1.msra.mxu0 %v3389
        %3544 = vmatprep.subr.mxu0 0.0
        %3545 = vmatpush1.msra.mxu0 %v3390
        %3546 = vmatprep.subr.mxu0 0.0
        %3547 = vmatpush1.msra.mxu0 %v3391
        %3548 = vmatprep.subr.mxu0 0.0
        %3549 = vmatpush1.msra.mxu0 %v3392
        %3550 = vmatprep.subr.mxu0 0.0
        %3551 = vmatpush1.msra.mxu0 %v3393
        %3552 = vmatprep.subr.mxu0 0.0
        %3553 = vmatpush1.msra.mxu0 %v3394
        %3554 = vmatprep.subr.mxu0 0.0
        %3555 = vmatpush1.msra.mxu0 %v3395
        %3556 = vmatprep.mubr.f32.mxu0 %v3317
        %3557 = vmatmul.mubr.f32.gmra.mrb[0].mxu0 %v3316
        %v3558 = vpop.f32.mrb[0].mxu0
        %v3559 = vadd.f32 %v3445, %v3558
        %v3560 = vpop.f32.mrb[0].mxu0
        %3561 = vmatprep.mubr.f32.mxu0 %v3320
        %3562 = vmatmul.mubr.f32.gmra.mrb[0].mxu0 %v3319
        %v3563 = vpop.f32.mrb[0].mxu0
        %v3564 = vadd.f32 %v3447, %v3563
        %v3565 = vpop.f32.mrb[0].mxu0
        %3566 = vmatprep.mubr.f32.mxu0 %v3323
        %3567 = vmatmul.mubr.f32.gmra.mrb[0].mxu0 %v3322
        %v3568 = vpop.f32.mrb[0].mxu0
        %v3569 = vadd.f32 %v3449, %v3568
        %v3570 = vpop.f32.mrb[0].mxu0
        %3571 = vmatprep.mubr.f32.mxu0 %v3326
        %3572 = vmatmul.mubr.f32.gmra.mrb[0].mxu0 %v3325
        %v3573 = vpop.f32.mrb[0].mxu0
        %v3574 = vadd.f32 %v3451, %v3573
        %v3575 = vpop.f32.mrb[0].mxu0
        %3576 = vmatprep.mubr.f32.mxu0 %v3329
        %3577 = vmatmul.mubr.f32.gmra.mrb[0].mxu0 %v3328
        %v3578 = vpop.f32.mrb[0].mxu0
        %v3579 = vadd.f32 %v3453, %v3578
        %v3580 = vpop.f32.mrb[0].mxu0
        %3581 = vmatprep.mubr.f32.mxu0 %v3332
        %3582 = vmatmul.mubr.f32.gmra.mrb[0].mxu0 %v3331
        %v3583 = vpop.f32.mrb[0].mxu0
        %v3584 = vadd.f32 %v3455, %v3583
        %v3585 = vpop.f32.mrb[0].mxu0
        %3586 = vmatprep.mubr.f32.mxu0 %v3335
        %3587 = vmatmul.mubr.f32.gmra.mrb[0].mxu0 %v3334
        %v3588 = vpop.f32.mrb[0].mxu0
        %v3589 = vadd.f32 %v3457, %v3588
        %v3590 = vpop.f32.mrb[0].mxu0
        %3591 = vmatprep.mubr.f32.mxu0 %v3338
        %3592 = vmatmul.mubr.f32.gmra.mrb[0].mxu0 %v3337
        %v3593 = vpop.f32.mrb[0].mxu0
        %v3594 = vadd.f32 %v3459, %v3593
        %v3595 = vpop.f32.mrb[0].mxu0
        %3596 = vmatprep.mubr.f32.mxu0 %v3341
        %3597 = vmatmul.mubr.f32.gmra.mrb[0].mxu0 %v3340
        %v3598 = vpop.f32.mrb[0].mxu0
        %v3599 = vadd.f32 %v3461, %v3598
        %v3600 = vpop.f32.mrb[0].mxu0
        %3601 = vmatprep.mubr.f32.mxu0 %v3344
        %3602 = vmatmul.mubr.f32.gmra.mrb[0].mxu0 %v3343
        %v3603 = vpop.f32.mrb[0].mxu0
        %v3604 = vadd.f32 %v3463, %v3603
        %v3605 = vpop.f32.mrb[0].mxu0
        %3606 = vmatprep.mubr.f32.mxu0 %v3347
        %3607 = vmatmul.mubr.f32.gmra.mrb[0].mxu0 %v3346
        %v3608 = vpop.f32.mrb[0].mxu0
        %v3609 = vadd.f32 %v3465, %v3608
        %v3610 = vpop.f32.mrb[0].mxu0
        %3611 = vmatprep.mubr.f32.mxu0 %v3350
        %3612 = vmatmul.mubr.f32.gmra.mrb[0].mxu0 %v3349
        %v3613 = vpop.f32.mrb[0].mxu0
        %v3614 = vadd.f32 %v3467, %v3613
        %v3615 = vpop.f32.mrb[0].mxu0
        %3616 = vmatprep.mubr.f32.mxu0 %v3353
        %3617 = vmatmul.mubr.f32.gmra.mrb[0].mxu0 %v3352
        %v3618 = vpop.f32.mrb[0].mxu0
        %v3619 = vadd.f32 %v3469, %v3618
        %v3620 = vpop.f32.mrb[0].mxu0
        %3621 = vmatprep.mubr.f32.mxu0 %v3356
        %3622 = vmatmul.mubr.f32.gmra.mrb[0].mxu0 %v3355
        %v3623 = vpop.f32.mrb[0].mxu0
        %v3624 = vadd.f32 %v3471, %v3623
        %v3625 = vpop.f32.mrb[0].mxu0
        %3626 = vmatprep.mubr.f32.mxu0 %v3359
        %3627 = vmatmul.mubr.f32.gmra.mrb[0].mxu0 %v3358
        %v3628 = vpop.f32.mrb[0].mxu0
        %v3629 = vadd.f32 %v3473, %v3628
        %v3630 = vpop.f32.mrb[0].mxu0
        %3631 = vmatprep.mubr.f32.mxu0 %v3362
        %3632 = vmatmul.mubr.f32.gmra.mrb[0].mxu0 %v3361
        %v3633 = vpop.f32.mrb[0].mxu0
        %v3634 = vadd.f32 %v3475, %v3633
        %v3635 = vpop.f32.mrb[0].mxu0
        %3636 = vdwg.mxu0
        %3637 = vmatprep.subr.mxu0 0.0
        %3638 = vmatpush1.msra.mxu0 %v3396
        %3639 = vmatprep.subr.mxu0 0.0
        %3640 = vmatpush1.msra.mxu0 %v3397
        %3641 = vmatprep.subr.mxu0 0.0
        %3642 = vmatpush1.msra.mxu0 %v3398
        %3643 = vmatprep.subr.mxu0 0.0
        %3644 = vmatpush1.msra.mxu0 %v3399
        %3645 = vmatprep.subr.mxu0 0.0
        %3646 = vmatpush1.msra.mxu0 %v3400
        %3647 = vmatprep.subr.mxu0 0.0
        %3648 = vmatpush1.msra.mxu0 %v3401
        %3649 = vmatprep.subr.mxu0 0.0
        %3650 = vmatpush1.msra.mxu0 %v3402
        %3651 = vmatprep.subr.mxu0 0.0
        %3652 = vmatpush1.msra.mxu0 %v3403
        %3653 = vmatprep.subr.mxu0 0.0
        %3654 = vmatpush1.msra.mxu0 %v3404
        %3655 = vmatprep.subr.mxu0 0.0
        %3656 = vmatpush1.msra.mxu0 %v3405
        %3657 = vmatprep.subr.mxu0 0.0
        %3658 = vmatpush1.msra.mxu0 %v3406
        %3659 = vmatprep.subr.mxu0 0.0
        %3660 = vmatpush1.msra.mxu0 %v3407
        %3661 = vmatprep.subr.mxu0 0.0
        %3662 = vmatpush1.msra.mxu0 %v3408
        %3663 = vmatprep.subr.mxu0 0.0
        %3664 = vmatpush1.msra.mxu0 %v3409
        %3665 = vmatprep.subr.mxu0 0.0
        %3666 = vmatpush1.msra.mxu0 %v3410
        %3667 = vmatprep.subr.mxu0 0.0
        %3668 = vmatpush1.msra.mxu0 %v3411
        %3669 = vmatprep.subr.mxu0 0.0
        %3670 = vmatpush1.msra.mxu0 0.0
        %3671 = vmatprep.subr.mxu0 0.0
        %3672 = vmatpush1.msra.mxu0 0.0
        %3673 = vmatprep.subr.mxu0 0.0
        %3674 = vmatpush1.msra.mxu0 0.0
        %3675 = vmatprep.subr.mxu0 0.0
        %3676 = vmatpush1.msra.mxu0 0.0
        %3677 = vmatprep.subr.mxu0 0.0
        %3678 = vmatpush1.msra.mxu0 0.0
        %3679 = vmatprep.subr.mxu0 0.0
        %3680 = vmatpush1.msra.mxu0 0.0
        %3681 = vmatprep.subr.mxu0 0.0
        %3682 = vmatpush1.msra.mxu0 0.0
        %3683 = vmatprep.subr.mxu0 0.0
        %3684 = vmatpush1.msra.mxu0 0.0
        %3685 = vmatprep.subr.mxu0 0.0
        %3686 = vmatpush1.msra.mxu0 0.0
        %3687 = vmatprep.subr.mxu0 0.0
        %3688 = vmatpush1.msra.mxu0 0.0
        %3689 = vmatprep.subr.mxu0 0.0
        %3690 = vmatpush1.msra.mxu0 0.0
        %3691 = vmatprep.subr.mxu0 0.0
        %3692 = vmatpush1.msra.mxu0 0.0
        %3693 = vmatprep.subr.mxu0 0.0
        %3694 = vmatpush1.msra.mxu0 0.0
        %3695 = vmatprep.subr.mxu0 0.0
        %3696 = vmatpush1.msra.mxu0 0.0
        %3697 = vmatprep.subr.mxu0 0.0
        %3698 = vmatpush1.msra.mxu0 0.0
        %3699 = vmatprep.subr.mxu0 0.0
        %3700 = vmatpush1.msra.mxu0 0.0
        %3701 = vmatprep.mubr.f32.mxu0 0.0
        %3702 = vmatmul.mubr.f32.gmra.mrb[0].mxu0 %v3318
        %v3703 = vpop.f32.mrb[0].mxu0
        %v3704 = vadd.f32 %v3559, %v3703
        %v3705 = vpop.f32.mrb[0].mxu0
        %3706 = vmatprep.mubr.f32.mxu0 0.0
        %3707 = vmatmul.mubr.f32.gmra.mrb[0].mxu0 %v3321
        %v3708 = vpop.f32.mrb[0].mxu0
        %v3709 = vadd.f32 %v3564, %v3708
        %v3710 = vpop.f32.mrb[0].mxu0
        %3711 = vmatprep.mubr.f32.mxu0 0.0
        %3712 = vmatmul.mubr.f32.gmra.mrb[0].mxu0 %v3324
        %v3713 = vpop.f32.mrb[0].mxu0
        %v3714 = vadd.f32 %v3569, %v3713
        %v3715 = vpop.f32.mrb[0].mxu0
        %3716 = vmatprep.mubr.f32.mxu0 0.0
        %3717 = vmatmul.mubr.f32.gmra.mrb[0].mxu0 %v3327
        %v3718 = vpop.f32.mrb[0].mxu0
        %v3719 = vadd.f32 %v3574, %v3718
        %v3720 = vpop.f32.mrb[0].mxu0
        %3721 = vmatprep.mubr.f32.mxu0 0.0
        %3722 = vmatmul.mubr.f32.gmra.mrb[0].mxu0 %v3330
        %v3723 = vpop.f32.mrb[0].mxu0
        %v3724 = vadd.f32 %v3579, %v3723
        %v3725 = vpop.f32.mrb[0].mxu0
        %3726 = vmatprep.mubr.f32.mxu0 0.0
        %3727 = vmatmul.mubr.f32.gmra.mrb[0].mxu0 %v3333
        %v3728 = vpop.f32.mrb[0].mxu0
        %v3729 = vadd.f32 %v3584, %v3728
        %v3730 = vpop.f32.mrb[0].mxu0
        %3731 = vmatprep.mubr.f32.mxu0 0.0
        %3732 = vmatmul.mubr.f32.gmra.mrb[0].mxu0 %v3336
        %v3733 = vpop.f32.mrb[0].mxu0
        %v3734 = vadd.f32 %v3589, %v3733
        %v3735 = vpop.f32.mrb[0].mxu0
        %3736 = vmatprep.mubr.f32.mxu0 0.0
        %3737 = vmatmul.mubr.f32.gmra.mrb[0].mxu0 %v3339
        %v3738 = vpop.f32.mrb[0].mxu0
        %v3739 = vadd.f32 %v3594, %v3738
        %v3740 = vpop.f32.mrb[0].mxu0
        %3741 = vmatprep.mubr.f32.mxu0 0.0
        %3742 = vmatmul.mubr.f32.gmra.mrb[0].mxu0 %v3342
        %v3743 = vpop.f32.mrb[0].mxu0
        %v3744 = vadd.f32 %v3599, %v3743
        %v3745 = vpop.f32.mrb[0].mxu0
        %3746 = vmatprep.mubr.f32.mxu0 0.0
        %3747 = vmatmul.mubr.f32.gmra.mrb[0].mxu0 %v3345
        %v3748 = vpop.f32.mrb[0].mxu0
        %v3749 = vadd.f32 %v3604, %v3748
        %v3750 = vpop.f32.mrb[0].mxu0
        %3751 = vmatprep.mubr.f32.mxu0 0.0
        %3752 = vmatmul.mubr.f32.gmra.mrb[0].mxu0 %v3348
        %v3753 = vpop.f32.mrb[0].mxu0
        %v3754 = vadd.f32 %v3609, %v3753
        %v3755 = vpop.f32.mrb[0].mxu0
        %3756 = vmatprep.mubr.f32.mxu0 0.0
        %3757 = vmatmul.mubr.f32.gmra.mrb[0].mxu0 %v3351
        %v3758 = vpop.f32.mrb[0].mxu0
        %v3759 = vadd.f32 %v3614, %v3758
        %v3760 = vpop.f32.mrb[0].mxu0
        %3761 = vmatprep.mubr.f32.mxu0 0.0
        %3762 = vmatmul.mubr.f32.gmra.mrb[0].mxu0 %v3354
        %v3763 = vpop.f32.mrb[0].mxu0
        %v3764 = vadd.f32 %v3619, %v3763
        %v3765 = vpop.f32.mrb[0].mxu0
        %3766 = vmatprep.mubr.f32.mxu0 0.0
        %3767 = vmatmul.mubr.f32.gmra.mrb[0].mxu0 %v3357
        %v3768 = vpop.f32.mrb[0].mxu0
        %v3769 = vadd.f32 %v3624, %v3768
        %v3770 = vpop.f32.mrb[0].mxu0
        %3771 = vmatprep.mubr.f32.mxu0 0.0
        %3772 = vmatmul.mubr.f32.gmra.mrb[0].mxu0 %v3360
        %v3773 = vpop.f32.mrb[0].mxu0
        %v3774 = vadd.f32 %v3629, %v3773
        %v3775 = vpop.f32.mrb[0].mxu0
        %3776 = vmatprep.mubr.f32.mxu0 0.0
        %3777 = vmatmul.mubr.f32.gmra.mrb[0].mxu0 %v3363
        %v3778 = vpop.f32.mrb[0].mxu0
        %v3779 = vadd.f32 %v3634, %v3778
        %v3780 = vpop.f32.mrb[0].mxu0
        %3781 = vdwg.mxu0
        %v3782 = vtanh.pop %v3704
        %v3783 = vtanh.pop %v3709
        %v3784 = vtanh.pop %v3714
        %v3785 = vtanh.pop %v3719
        %v3786 = vtanh.pop %v3724
        %v3787 = vtanh.pop %v3729
        %v3788 = vtanh.pop %v3734
        %v3789 = vtanh.pop %v3739
        %v3790 = vtanh.pop %v3744
        %v3791 = vtanh.pop %v3749
        %v3792 = vtanh.pop %v3754
        %v3793 = vtanh.pop %v3759
        %v3794 = vtanh.pop %v3764
        %v3795 = vtanh.pop %v3769
        %v3796 = vtanh.pop %v3774
        %v3797 = vtanh.pop %v3779
        %v3798 = vld [vmem:[#allocation14] sm:$0xff]
        %v3799 = vld [vmem:[#allocation14 + $0x8] sm:$0xff]
        %v3800 = vld [vmem:[#allocation14 + $0x10] sm:$0xff]
        %v3801 = vld [vmem:[#allocation14 + $0x18] sm:$0xff]
        %v3802 = vld [vmem:[#allocation14 + $0x20] sm:$0xff]
        %v3803 = vld [vmem:[#allocation14 + $0x28] sm:$0xff]
        %v3804 = vld [vmem:[#allocation14 + $0x30] sm:$0xff]
        %v3805 = vld [vmem:[#allocation14 + $0x38] sm:$0xff]
        %v3806 = vld [vmem:[#allocation14 + $0x40] sm:$0xff]
        %v3807 = vld [vmem:[#allocation14 + $0x48] sm:$0xff]
        %v3808 = vld [vmem:[#allocation14 + $0x50] sm:$0xff]
        %v3809 = vld [vmem:[#allocation14 + $0x58] sm:$0xff]
        %v3810 = vld [vmem:[#allocation14 + $0x60] sm:$0xff]
        %v3811 = vld [vmem:[#allocation14 + $0x68] sm:$0xff]
        %v3812 = vld [vmem:[#allocation14 + $0x70] sm:$0xff]
        %v3813 = vld [vmem:[#allocation14 + $0x78] sm:$0xff]
        %3814 = vmatprep.subr.mxu0 0.0
        %3815 = vmatpush1.msra.mxu0 %v3782
        %3816 = vmatprep.subr.mxu0 0.0
        %3817 = vmatpush1.msra.mxu0 %v3783
        %3818 = vmatprep.subr.mxu0 0.0
        %3819 = vmatpush1.msra.mxu0 %v3784
        %3820 = vmatprep.subr.mxu0 0.0
        %3821 = vmatpush1.msra.mxu0 %v3785
        %3822 = vmatprep.subr.mxu0 0.0
        %3823 = vmatpush1.msra.mxu0 %v3786
        %3824 = vmatprep.subr.mxu0 0.0
        %3825 = vmatpush1.msra.mxu0 %v3787
        %3826 = vmatprep.subr.mxu0 0.0
        %3827 = vmatpush1.msra.mxu0 %v3788
        %3828 = vmatprep.subr.mxu0 0.0
        %3829 = vmatpush1.msra.mxu0 %v3789
        %3830 = vmatprep.subr.mxu0 0.0
        %3831 = vmatpush1.msra.mxu0 %v3790
        %3832 = vmatprep.subr.mxu0 0.0
        %3833 = vmatpush1.msra.mxu0 %v3791
        %3834 = vmatprep.subr.mxu0 0.0
        %3835 = vmatpush1.msra.mxu0 %v3792
        %3836 = vmatprep.subr.mxu0 0.0
        %3837 = vmatpush1.msra.mxu0 %v3793
        %3838 = vmatprep.subr.mxu0 0.0
        %3839 = vmatpush1.msra.mxu0 %v3794
        %3840 = vmatprep.subr.mxu0 0.0
        %3841 = vmatpush1.msra.mxu0 %v3795
        %3842 = vmatprep.subr.mxu0 0.0
        %3843 = vmatpush1.msra.mxu0 %v3796
        %3844 = vmatprep.subr.mxu0 0.0
        %3845 = vmatpush1.msra.mxu0 %v3797
        %3846 = vmatprep.subr.mxu0 0.0
        %3847 = vmatpush1.msra.mxu0 0.0
        %3848 = vmatprep.subr.mxu0 0.0
        %3849 = vmatpush1.msra.mxu0 0.0
        %3850 = vmatprep.subr.mxu0 0.0
        %3851 = vmatpush1.msra.mxu0 0.0
        %3852 = vmatprep.subr.mxu0 0.0
        %3853 = vmatpush1.msra.mxu0 0.0
        %3854 = vmatprep.subr.mxu0 0.0
        %3855 = vmatpush1.msra.mxu0 0.0
        %3856 = vmatprep.subr.mxu0 0.0
        %3857 = vmatpush1.msra.mxu0 0.0
        %3858 = vmatprep.subr.mxu0 0.0
        %3859 = vmatpush1.msra.mxu0 0.0
        %3860 = vmatprep.subr.mxu0 0.0
        %3861 = vmatpush1.msra.mxu0 0.0
        %3862 = vmatprep.subr.mxu0 0.0
        %3863 = vmatpush1.msra.mxu0 0.0
        %3864 = vmatprep.subr.mxu0 0.0
        %3865 = vmatpush1.msra.mxu0 0.0
        %3866 = vmatprep.subr.mxu0 0.0
        %3867 = vmatpush1.msra.mxu0 0.0
        %3868 = vmatprep.subr.mxu0 0.0
        %3869 = vmatpush1.msra.mxu0 0.0
        %3870 = vmatprep.subr.mxu0 0.0
        %3871 = vmatpush1.msra.mxu0 0.0
        %3872 = vmatprep.subr.mxu0 0.0
        %3873 = vmatpush1.msra.mxu0 0.0
        %3874 = vmatprep.subr.mxu0 0.0
        %3875 = vmatpush1.msra.mxu0 0.0
        %3876 = vmatprep.subr.mxu0 0.0
        %3877 = vmatpush1.msra.mxu0 0.0
        %3878 = vmatprep.mubr.f32.mxu0 0.0
        %3879 = vmatmul.mubr.f32.gmra.mrb[0].mxu0 %v3798
        %v3880 = vpop.f32.mrb[0].mxu0
        %v3881 = vadd.f32 0.0, %v3880
        %v3882 = vpop.f32.mrb[0].mxu0
        %3883 = vmatprep.mubr.f32.mxu0 0.0
        %3884 = vmatmul.mubr.f32.gmra.mrb[0].mxu0 %v3799
        %v3885 = vpop.f32.mrb[0].mxu0
        %v3886 = vadd.f32 0.0, %v3885
        %v3887 = vpop.f32.mrb[0].mxu0
        %3888 = vmatprep.mubr.f32.mxu0 0.0
        %3889 = vmatmul.mubr.f32.gmra.mrb[0].mxu0 %v3800
        %v3890 = vpop.f32.mrb[0].mxu0
        %v3891 = vadd.f32 0.0, %v3890
        %v3892 = vpop.f32.mrb[0].mxu0
        %3893 = vmatprep.mubr.f32.mxu0 0.0
        %3894 = vmatmul.mubr.f32.gmra.mrb[0].mxu0 %v3801
        %v3895 = vpop.f32.mrb[0].mxu0
        %v3896 = vadd.f32 0.0, %v3895
        %v3897 = vpop.f32.mrb[0].mxu0
        %3898 = vmatprep.mubr.f32.mxu0 0.0
        %3899 = vmatmul.mubr.f32.gmra.mrb[0].mxu0 %v3802
        %v3900 = vpop.f32.mrb[0].mxu0
        %v3901 = vadd.f32 0.0, %v3900
        %v3902 = vpop.f32.mrb[0].mxu0
        %3903 = vmatprep.mubr.f32.mxu0 0.0
        %3904 = vmatmul.mubr.f32.gmra.mrb[0].mxu0 %v3803
        %v3905 = vpop.f32.mrb[0].mxu0
        %v3906 = vadd.f32 0.0, %v3905
        %v3907 = vpop.f32.mrb[0].mxu0
        %3908 = vmatprep.mubr.f32.mxu0 0.0
        %3909 = vmatmul.mubr.f32.gmra.mrb[0].mxu0 %v3804
        %v3910 = vpop.f32.mrb[0].mxu0
        %v3911 = vadd.f32 0.0, %v3910
        %v3912 = vpop.f32.mrb[0].mxu0
        %3913 = vmatprep.mubr.f32.mxu0 0.0
        %3914 = vmatmul.mubr.f32.gmra.mrb[0].mxu0 %v3805
        %v3915 = vpop.f32.mrb[0].mxu0
        %v3916 = vadd.f32 0.0, %v3915
        %v3917 = vpop.f32.mrb[0].mxu0
        %3918 = vmatprep.mubr.f32.mxu0 0.0
        %3919 = vmatmul.mubr.f32.gmra.mrb[0].mxu0 %v3806
        %v3920 = vpop.f32.mrb[0].mxu0
        %v3921 = vadd.f32 0.0, %v3920
        %v3922 = vpop.f32.mrb[0].mxu0
        %3923 = vmatprep.mubr.f32.mxu0 0.0
        %3924 = vmatmul.mubr.f32.gmra.mrb[0].mxu0 %v3807
        %v3925 = vpop.f32.mrb[0].mxu0
        %v3926 = vadd.f32 0.0, %v3925
        %v3927 = vpop.f32.mrb[0].mxu0
        %3928 = vmatprep.mubr.f32.mxu0 0.0
        %3929 = vmatmul.mubr.f32.gmra.mrb[0].mxu0 %v3808
        %v3930 = vpop.f32.mrb[0].mxu0
        %v3931 = vadd.f32 0.0, %v3930
        %v3932 = vpop.f32.mrb[0].mxu0
        %3933 = vmatprep.mubr.f32.mxu0 0.0
        %3934 = vmatmul.mubr.f32.gmra.mrb[0].mxu0 %v3809
        %v3935 = vpop.f32.mrb[0].mxu0
        %v3936 = vadd.f32 0.0, %v3935
        %v3937 = vpop.f32.mrb[0].mxu0
        %3938 = vmatprep.mubr.f32.mxu0 0.0
        %3939 = vmatmul.mubr.f32.gmra.mrb[0].mxu0 %v3810
        %v3940 = vpop.f32.mrb[0].mxu0
        %v3941 = vadd.f32 0.0, %v3940
        %v3942 = vpop.f32.mrb[0].mxu0
        %3943 = vmatprep.mubr.f32.mxu0 0.0
        %3944 = vmatmul.mubr.f32.gmra.mrb[0].mxu0 %v3811
        %v3945 = vpop.f32.mrb[0].mxu0
        %v3946 = vadd.f32 0.0, %v3945
        %v3947 = vpop.f32.mrb[0].mxu0
        %3948 = vmatprep.mubr.f32.mxu0 0.0
        %3949 = vmatmul.mubr.f32.gmra.mrb[0].mxu0 %v3812
        %v3950 = vpop.f32.mrb[0].mxu0
        %v3951 = vadd.f32 0.0, %v3950
        %v3952 = vpop.f32.mrb[0].mxu0
        %3953 = vmatprep.mubr.f32.mxu0 0.0
        %3954 = vmatmul.mubr.f32.gmra.mrb[0].mxu0 %v3813
        %v3955 = vpop.f32.mrb[0].mxu0
        %v3956 = vadd.f32 0.0, %v3955
        %v3957 = vpop.f32.mrb[0].mxu0
        %3958 = vdwg.mxu0
        %v3959 = vld [vmem:[%s24] sm:$0xff]
        %v3960 = vld [vmem:[%s24 + $0x8] sm:$0xff]
        %v3961 = vld [vmem:[%s24 + $0x10] sm:$0xff]
        %v3962 = vld [vmem:[%s24 + $0x18] sm:$0xff]
        %v3963 = vld [vmem:[%s24 + $0x20] sm:$0xff]
        %v3964 = vld [vmem:[%s24 + $0x28] sm:$0xff]
        %v3965 = vld [vmem:[%s24 + $0x30] sm:$0xff]
        %v3966 = vld [vmem:[%s24 + $0x38] sm:$0xff]
        %vm3967 = vcmp.eq.s32.totalorder %v1175, 0
        %3969 = vset.pattern.permute.xlu0 0
        %3970 = vperm.xlu0 %3969, %v3881
        %v3971 = vpop.permute.xlu0 %3970
        %3974 = vset.pattern.permute.xlu0 0
        %3975 = vperm.xlu0 %3974, %v3886
        %v3976 = vpop.permute.xlu0 %3975
        %3979 = vset.pattern.permute.xlu0 0
        %3980 = vperm.xlu0 %3979, %v3891
        %v3981 = vpop.permute.xlu0 %3980
        %3984 = vset.pattern.permute.xlu0 0
        %3985 = vperm.xlu0 %3984, %v3896
        %v3986 = vpop.permute.xlu0 %3985
        %3989 = vset.pattern.permute.xlu0 0
        %3990 = vperm.xlu0 %3989, %v3901
        %v3991 = vpop.permute.xlu0 %3990
        %3994 = vset.pattern.permute.xlu0 0
        %3995 = vperm.xlu0 %3994, %v3906
        %v3996 = vpop.permute.xlu0 %3995
        %3999 = vset.pattern.permute.xlu0 0
        %4000 = vperm.xlu0 %3999, %v3911
        %v4001 = vpop.permute.xlu0 %4000
        %4004 = vset.pattern.permute.xlu0 0
        %4005 = vperm.xlu0 %4004, %v3916
        %v4006 = vpop.permute.xlu0 %4005
        %4009 = vset.pattern.permute.xlu0 0
        %4010 = vperm.xlu0 %4009, %v3921
        %v4011 = vpop.permute.xlu0 %4010
        %4014 = vset.pattern.permute.xlu0 0
        %4015 = vperm.xlu0 %4014, %v3926
        %v4016 = vpop.permute.xlu0 %4015
        %4019 = vset.pattern.permute.xlu0 0
        %4020 = vperm.xlu0 %4019, %v3931
        %v4021 = vpop.permute.xlu0 %4020
        %4024 = vset.pattern.permute.xlu0 0
        %4025 = vperm.xlu0 %4024, %v3936
        %v4026 = vpop.permute.xlu0 %4025
        %4029 = vset.pattern.permute.xlu0 0
        %4030 = vperm.xlu0 %4029, %v3941
        %v4031 = vpop.permute.xlu0 %4030
        %4034 = vset.pattern.permute.xlu0 0
        %4035 = vperm.xlu0 %4034, %v3946
        %v4036 = vpop.permute.xlu0 %4035
        %4039 = vset.pattern.permute.xlu0 0
        %4040 = vperm.xlu0 %4039, %v3951
        %v4041 = vpop.permute.xlu0 %4040
        %4044 = vset.pattern.permute.xlu0 0
        %4045 = vperm.xlu0 %4044, %v3956
        %v4046 = vpop.permute.xlu0 %4045
        %v4048 = vsel %vm3967, %v3971, %v4011
        %v4049 = vsel %vm3967, %v3976, %v4016
        %v4050 = vsel %vm3967, %v3981, %v4021
        %v4051 = vsel %vm3967, %v3986, %v4026
        %v4052 = vsel %vm3967, %v3991, %v4031
        %v4053 = vsel %vm3967, %v3996, %v4036
        %v4054 = vsel %vm3967, %v4001, %v4041
        %v4055 = vsel %vm3967, %v4006, %v4046
        %4057 = vset.pattern.permute.xlu0 10
        %4058 = vperm.xlu0 %4057, %v3959
        %v4059 = vpop.permute.xlu0 %4058
        %4062 = vset.pattern.permute.xlu0 10
        %4063 = vperm.xlu0 %4062, %v3960
        %v4064 = vpop.permute.xlu0 %4063
        %4067 = vset.pattern.permute.xlu0 10
        %4068 = vperm.xlu0 %4067, %v3961
        %v4069 = vpop.permute.xlu0 %4068
        %4072 = vset.pattern.permute.xlu0 10
        %4073 = vperm.xlu0 %4072, %v3962
        %v4074 = vpop.permute.xlu0 %4073
        %4077 = vset.pattern.permute.xlu0 10
        %4078 = vperm.xlu0 %4077, %v3963
        %v4079 = vpop.permute.xlu0 %4078
        %4082 = vset.pattern.permute.xlu0 10
        %4083 = vperm.xlu0 %4082, %v3964
        %v4084 = vpop.permute.xlu0 %4083
        %4087 = vset.pattern.permute.xlu0 10
        %4088 = vperm.xlu0 %4087, %v3965
        %v4089 = vpop.permute.xlu0 %4088
        %4092 = vset.pattern.permute.xlu0 10
        %4093 = vperm.xlu0 %4092, %v3966
        %v4094 = vpop.permute.xlu0 %4093
        %v4096 = vadd.f32 %v4048, %v4059
        %v4097 = vadd.f32 %v4049, %v4064
        %v4098 = vadd.f32 %v4050, %v4069
        %v4099 = vadd.f32 %v4051, %v4074
        %v4100 = vadd.f32 %v4052, %v4079
        %v4101 = vadd.f32 %v4053, %v4084
        %v4102 = vadd.f32 %v4054, %v4089
        %v4103 = vadd.f32 %v4055, %v4094
        %4104 = vst.msk [vmem:[#allocation2] sm:$0xff] %vm973, 0.0
        %4105 = vst.msk [vmem:[#allocation2 + $0x8] sm:$0xff] %vm973, 0.0
        %4106 = vst.msk [vmem:[#allocation2 + $0x10] sm:$0xff] %vm973, 0.0
        %4107 = vst.msk [vmem:[#allocation2 + $0x18] sm:$0xff] %vm973, 0.0
        %4108 = vst.msk [vmem:[#allocation2 + $0x20] sm:$0xff] %vm973, 0.0
        %4109 = vst.msk [vmem:[#allocation2 + $0x28] sm:$0xff] %vm973, 0.0
        %4110 = vst.msk [vmem:[#allocation2 + $0x30] sm:$0xff] %vm973, 0.0
        %4111 = vst.msk [vmem:[#allocation2 + $0x38] sm:$0xff] %vm973, 0.0
        %4120 = vrot.lane.b32.xlu0 %v4096, 1
        %v4121 = vpop.permute.xlu0 %4120
        %4122 = vrot.lane.b32.xlu0 %v4097, 1
        %v4123 = vpop.permute.xlu0 %4122
        %4124 = vrot.lane.b32.xlu0 %v4098, 1
        %v4125 = vpop.permute.xlu0 %4124
        %4126 = vrot.lane.b32.xlu0 %v4099, 1
        %v4127 = vpop.permute.xlu0 %4126
        %4128 = vrot.lane.b32.xlu0 %v4100, 1
        %v4129 = vpop.permute.xlu0 %4128
        %4130 = vrot.lane.b32.xlu0 %v4101, 1
        %v4131 = vpop.permute.xlu0 %4130
        %4132 = vrot.lane.b32.xlu0 %v4102, 1
        %v4133 = vpop.permute.xlu0 %4132
        %4134 = vrot.lane.b32.xlu0 %v4103, 1
        %v4135 = vpop.permute.xlu0 %4134
        %4144 = vst.msk [vmem:[#allocation2] sm:$0xff] %vm2302, %v4121
        %4145 = vst.msk [vmem:[#allocation2 + $0x8] sm:$0xff] %vm2302, %v4123
        %4146 = vst.msk [vmem:[#allocation2 + $0x10] sm:$0xff] %vm2302, %v4125
        %4147 = vst.msk [vmem:[#allocation2 + $0x18] sm:$0xff] %vm2302, %v4127
        %4148 = vst.msk [vmem:[#allocation2 + $0x20] sm:$0xff] %vm2302, %v4129
        %4149 = vst.msk [vmem:[#allocation2 + $0x28] sm:$0xff] %vm2302, %v4131
        %4150 = vst.msk [vmem:[#allocation2 + $0x30] sm:$0xff] %vm2302, %v4133
        %4151 = vst.msk [vmem:[#allocation2 + $0x38] sm:$0xff] %vm2302, %v4135
        %4152 = vst.msk [vmem:[#allocation2 + $0x80] sm:$0xff] %vm2307, %v4096
        %4153 = vst.msk [vmem:[#allocation2 + $0x88] sm:$0xff] %vm2307, %v4097
        %4154 = vst.msk [vmem:[#allocation2 + $0x90] sm:$0xff] %vm2307, %v4098
        %4155 = vst.msk [vmem:[#allocation2 + $0x98] sm:$0xff] %vm2307, %v4099
        %4156 = vst.msk [vmem:[#allocation2 + $0xa0] sm:$0xff] %vm2307, %v4100
        %4157 = vst.msk [vmem:[#allocation2 + $0xa8] sm:$0xff] %vm2307, %v4101
        %4158 = vst.msk [vmem:[#allocation2 + $0xb0] sm:$0xff] %vm2307, %v4102
        %4159 = vst.msk [vmem:[#allocation2 + $0xb8] sm:$0xff] %vm2307, %v4103
        %4160 = vrot.lane.b32.xlu0 %v4096, 127
        %v4161 = vpop.permute.xlu0 %4160
        %4162 = vrot.lane.b32.xlu0 %v4097, 127
        %v4163 = vpop.permute.xlu0 %4162
        %4164 = vrot.lane.b32.xlu0 %v4098, 127
        %v4165 = vpop.permute.xlu0 %4164
        %4166 = vrot.lane.b32.xlu0 %v4099, 127
        %v4167 = vpop.permute.xlu0 %4166
        %4168 = vrot.lane.b32.xlu0 %v4100, 127
        %v4169 = vpop.permute.xlu0 %4168
        %4170 = vrot.lane.b32.xlu0 %v4101, 127
        %v4171 = vpop.permute.xlu0 %4170
        %4172 = vrot.lane.b32.xlu0 %v4102, 127
        %v4173 = vpop.permute.xlu0 %4172
        %4174 = vrot.lane.b32.xlu0 %v4103, 127
        %v4175 = vpop.permute.xlu0 %4174
        %4184 = vst.msk [vmem:[#allocation2 + $0x100] sm:$0xff] %vm973, %v4161
        %4185 = vst.msk [vmem:[#allocation2 + $0x108] sm:$0xff] %vm973, %v4163
        %4186 = vst.msk [vmem:[#allocation2 + $0x110] sm:$0xff] %vm973, %v4165
        %4187 = vst.msk [vmem:[#allocation2 + $0x118] sm:$0xff] %vm973, %v4167
        %4188 = vst.msk [vmem:[#allocation2 + $0x120] sm:$0xff] %vm973, %v4169
        %4189 = vst.msk [vmem:[#allocation2 + $0x128] sm:$0xff] %vm973, %v4171
        %4190 = vst.msk [vmem:[#allocation2 + $0x130] sm:$0xff] %vm973, %v4173
        %4191 = vst.msk [vmem:[#allocation2 + $0x138] sm:$0xff] %vm973, %v4175
        %4192 = vst.msk [vmem:[#allocation2 + $0x100] sm:$0xff] %vm2302, 0.0
        %4193 = vst.msk [vmem:[#allocation2 + $0x108] sm:$0xff] %vm2302, 0.0
        %4194 = vst.msk [vmem:[#allocation2 + $0x110] sm:$0xff] %vm2302, 0.0
        %4195 = vst.msk [vmem:[#allocation2 + $0x118] sm:$0xff] %vm2302, 0.0
        %4196 = vst.msk [vmem:[#allocation2 + $0x120] sm:$0xff] %vm2302, 0.0
        %4197 = vst.msk [vmem:[#allocation2 + $0x128] sm:$0xff] %vm2302, 0.0
        %4198 = vst.msk [vmem:[#allocation2 + $0x130] sm:$0xff] %vm2302, 0.0
        %4199 = vst.msk [vmem:[#allocation2 + $0x138] sm:$0xff] %vm2302, 0.0
        %4200 = vst.msk [vmem:[#allocation2 + $0x40] sm:$0xff] %vm973, 0.0
        %4201 = vst.msk [vmem:[#allocation2 + $0x48] sm:$0xff] %vm973, 0.0
        %4202 = vst.msk [vmem:[#allocation2 + $0x50] sm:$0xff] %vm973, 0.0
        %4203 = vst.msk [vmem:[#allocation2 + $0x58] sm:$0xff] %vm973, 0.0
        %4204 = vst.msk [vmem:[#allocation2 + $0x60] sm:$0xff] %vm973, 0.0
        %4205 = vst.msk [vmem:[#allocation2 + $0x68] sm:$0xff] %vm973, 0.0
        %4206 = vst.msk [vmem:[#allocation2 + $0x70] sm:$0xff] %vm973, 0.0
        %4207 = vst.msk [vmem:[#allocation2 + $0x78] sm:$0xff] %vm973, 0.0
        %4208 = vrot.lane.b32.xlu0 %v2851, 1
        %v4209 = vpop.permute.xlu0 %4208
        %4210 = vrot.lane.b32.xlu0 %v2852, 1
        %v4211 = vpop.permute.xlu0 %4210
        %4212 = vrot.lane.b32.xlu0 %v2853, 1
        %v4213 = vpop.permute.xlu0 %4212
        %4214 = vrot.lane.b32.xlu0 %v2854, 1
        %v4215 = vpop.permute.xlu0 %4214
        %4216 = vrot.lane.b32.xlu0 %v2855, 1
        %v4217 = vpop.permute.xlu0 %4216
        %4218 = vrot.lane.b32.xlu0 %v2856, 1
        %v4219 = vpop.permute.xlu0 %4218
        %4220 = vrot.lane.b32.xlu0 %v2857, 1
        %v4221 = vpop.permute.xlu0 %4220
        %4222 = vrot.lane.b32.xlu0 %v2858, 1
        %v4223 = vpop.permute.xlu0 %4222
        %4232 = vst.msk [vmem:[#allocation2 + $0x40] sm:$0xff] %vm2302, %v4209
        %4233 = vst.msk [vmem:[#allocation2 + $0x48] sm:$0xff] %vm2302, %v4211
        %4234 = vst.msk [vmem:[#allocation2 + $0x50] sm:$0xff] %vm2302, %v4213
        %4235 = vst.msk [vmem:[#allocation2 + $0x58] sm:$0xff] %vm2302, %v4215
        %4236 = vst.msk [vmem:[#allocation2 + $0x60] sm:$0xff] %vm2302, %v4217
        %4237 = vst.msk [vmem:[#allocation2 + $0x68] sm:$0xff] %vm2302, %v4219
        %4238 = vst.msk [vmem:[#allocation2 + $0x70] sm:$0xff] %vm2302, %v4221
        %4239 = vst.msk [vmem:[#allocation2 + $0x78] sm:$0xff] %vm2302, %v4223
        %4240 = vst.msk [vmem:[#allocation2 + $0xc0] sm:$0xff] %vm2307, %v2851
        %4241 = vst.msk [vmem:[#allocation2 + $0xc8] sm:$0xff] %vm2307, %v2852
        %4242 = vst.msk [vmem:[#allocation2 + $0xd0] sm:$0xff] %vm2307, %v2853
        %4243 = vst.msk [vmem:[#allocation2 + $0xd8] sm:$0xff] %vm2307, %v2854
        %4244 = vst.msk [vmem:[#allocation2 + $0xe0] sm:$0xff] %vm2307, %v2855
        %4245 = vst.msk [vmem:[#allocation2 + $0xe8] sm:$0xff] %vm2307, %v2856
        %4246 = vst.msk [vmem:[#allocation2 + $0xf0] sm:$0xff] %vm2307, %v2857
        %4247 = vst.msk [vmem:[#allocation2 + $0xf8] sm:$0xff] %vm2307, %v2858
        %4248 = vst.msk [vmem:[#allocation2 + $0x140] sm:$0xff] %vm973, %v2868
        %4249 = vst.msk [vmem:[#allocation2 + $0x148] sm:$0xff] %vm973, %v2870
        %4250 = vst.msk [vmem:[#allocation2 + $0x150] sm:$0xff] %vm973, %v2872
        %4251 = vst.msk [vmem:[#allocation2 + $0x158] sm:$0xff] %vm973, %v2874
        %4252 = vst.msk [vmem:[#allocation2 + $0x160] sm:$0xff] %vm973, %v2876
        %4253 = vst.msk [vmem:[#allocation2 + $0x168] sm:$0xff] %vm973, %v2878
        %4254 = vst.msk [vmem:[#allocation2 + $0x170] sm:$0xff] %vm973, %v2880
        %4255 = vst.msk [vmem:[#allocation2 + $0x178] sm:$0xff] %vm973, %v2882
        %4256 = vst.msk [vmem:[#allocation2 + $0x140] sm:$0xff] %vm2302, 0.0
        %4257 = vst.msk [vmem:[#allocation2 + $0x148] sm:$0xff] %vm2302, 0.0
        %4258 = vst.msk [vmem:[#allocation2 + $0x150] sm:$0xff] %vm2302, 0.0
        %4259 = vst.msk [vmem:[#allocation2 + $0x158] sm:$0xff] %vm2302, 0.0
        %4260 = vst.msk [vmem:[#allocation2 + $0x160] sm:$0xff] %vm2302, 0.0
        %4261 = vst.msk [vmem:[#allocation2 + $0x168] sm:$0xff] %vm2302, 0.0
        %4262 = vst.msk [vmem:[#allocation2 + $0x170] sm:$0xff] %vm2302, 0.0
        %4263 = vst.msk [vmem:[#allocation2 + $0x178] sm:$0xff] %vm2302, 0.0
        %v4264 = vld [vmem:[%s12] sm:$0xff]
        %v4265 = vld [vmem:[%s12 + $0x8] sm:$0xff]
        %v4266 = vld [vmem:[%s12 + $0x10] sm:$0xff]
        %v4267 = vld [vmem:[%s12 + $0x18] sm:$0xff]
        %v4268 = vld [vmem:[%s12 + $0x20] sm:$0xff]
        %v4269 = vld [vmem:[%s12 + $0x28] sm:$0xff]
        %v4270 = vld [vmem:[%s12 + $0x30] sm:$0xff]
        %v4271 = vld [vmem:[%s12 + $0x38] sm:$0xff]
        %v4272 = vld [vmem:[%s12 + $0x40] sm:$0xff]
        %v4273 = vld [vmem:[%s12 + $0x48] sm:$0xff]
        %v4274 = vld [vmem:[%s12 + $0x50] sm:$0xff]
        %v4275 = vld [vmem:[%s12 + $0x58] sm:$0xff]
        %v4276 = vld [vmem:[%s12 + $0x60] sm:$0xff]
        %v4277 = vld [vmem:[%s12 + $0x68] sm:$0xff]
        %v4278 = vld [vmem:[%s12 + $0x70] sm:$0xff]
        %v4279 = vld [vmem:[%s12 + $0x78] sm:$0xff]
        %v4280 = vld [vmem:[%s12 + $0x80] sm:$0xff]
        %v4281 = vld [vmem:[%s12 + $0x88] sm:$0xff]
        %v4282 = vld [vmem:[%s12 + $0x90] sm:$0xff]
        %v4283 = vld [vmem:[%s12 + $0x98] sm:$0xff]
        %v4284 = vld [vmem:[%s12 + $0xa0] sm:$0xff]
        %v4285 = vld [vmem:[%s12 + $0xa8] sm:$0xff]
        %v4286 = vld [vmem:[%s12 + $0xb0] sm:$0xff]
        %v4287 = vld [vmem:[%s12 + $0xb8] sm:$0xff]
        %v4288 = vld [vmem:[#allocation2] sm:$0xff]
        %v4289 = vld [vmem:[#allocation2 + $0x8] sm:$0xff]
        %v4290 = vld [vmem:[#allocation2 + $0x10] sm:$0xff]
        %v4291 = vld [vmem:[#allocation2 + $0x18] sm:$0xff]
        %v4292 = vld [vmem:[#allocation2 + $0x20] sm:$0xff]
        %v4293 = vld [vmem:[#allocation2 + $0x28] sm:$0xff]
        %v4294 = vld [vmem:[#allocation2 + $0x30] sm:$0xff]
        %v4295 = vld [vmem:[#allocation2 + $0x38] sm:$0xff]
        %v4296 = vld [vmem:[#allocation2 + $0x40] sm:$0xff]
        %v4297 = vld [vmem:[#allocation2 + $0x48] sm:$0xff]
        %v4298 = vld [vmem:[#allocation2 + $0x50] sm:$0xff]
        %v4299 = vld [vmem:[#allocation2 + $0x58] sm:$0xff]
        %v4300 = vld [vmem:[#allocation2 + $0x60] sm:$0xff]
        %v4301 = vld [vmem:[#allocation2 + $0x68] sm:$0xff]
        %v4302 = vld [vmem:[#allocation2 + $0x70] sm:$0xff]
        %v4303 = vld [vmem:[#allocation2 + $0x78] sm:$0xff]
        %v4304 = vld [vmem:[#allocation2 + $0x80] sm:$0xff]
        %v4305 = vld [vmem:[#allocation2 + $0x88] sm:$0xff]
        %v4306 = vld [vmem:[#allocation2 + $0x90] sm:$0xff]
        %v4307 = vld [vmem:[#allocation2 + $0x98] sm:$0xff]
        %v4308 = vld [vmem:[#allocation2 + $0xa0] sm:$0xff]
        %v4309 = vld [vmem:[#allocation2 + $0xa8] sm:$0xff]
        %v4310 = vld [vmem:[#allocation2 + $0xb0] sm:$0xff]
        %v4311 = vld [vmem:[#allocation2 + $0xb8] sm:$0xff]
        %v4312 = vld [vmem:[#allocation2 + $0xc0] sm:$0xff]
        %v4313 = vld [vmem:[#allocation2 + $0xc8] sm:$0xff]
        %v4314 = vld [vmem:[#allocation2 + $0xd0] sm:$0xff]
        %v4315 = vld [vmem:[#allocation2 + $0xd8] sm:$0xff]
        %v4316 = vld [vmem:[#allocation2 + $0xe0] sm:$0xff]
        %v4317 = vld [vmem:[#allocation2 + $0xe8] sm:$0xff]
        %v4318 = vld [vmem:[#allocation2 + $0xf0] sm:$0xff]
        %v4319 = vld [vmem:[#allocation2 + $0xf8] sm:$0xff]
        %v4320 = vld [vmem:[#allocation2 + $0x100] sm:$0xff]
        %v4321 = vld [vmem:[#allocation2 + $0x108] sm:$0xff]
        %v4322 = vld [vmem:[#allocation2 + $0x110] sm:$0xff]
        %v4323 = vld [vmem:[#allocation2 + $0x118] sm:$0xff]
        %v4324 = vld [vmem:[#allocation2 + $0x120] sm:$0xff]
        %v4325 = vld [vmem:[#allocation2 + $0x128] sm:$0xff]
        %v4326 = vld [vmem:[#allocation2 + $0x130] sm:$0xff]
        %v4327 = vld [vmem:[#allocation2 + $0x138] sm:$0xff]
        %v4328 = vld [vmem:[#allocation2 + $0x140] sm:$0xff]
        %v4329 = vld [vmem:[#allocation2 + $0x148] sm:$0xff]
        %v4330 = vld [vmem:[#allocation2 + $0x150] sm:$0xff]
        %v4331 = vld [vmem:[#allocation2 + $0x158] sm:$0xff]
        %v4332 = vld [vmem:[#allocation2 + $0x160] sm:$0xff]
        %v4333 = vld [vmem:[#allocation2 + $0x168] sm:$0xff]
        %v4334 = vld [vmem:[#allocation2 + $0x170] sm:$0xff]
        %v4335 = vld [vmem:[#allocation2 + $0x178] sm:$0xff]
        %v4336 = vld [vmem:[%s24] sm:$0xff]
        %v4337 = vld [vmem:[%s24 + $0x8] sm:$0xff]
        %v4338 = vld [vmem:[%s24 + $0x10] sm:$0xff]
        %v4339 = vld [vmem:[%s24 + $0x18] sm:$0xff]
        %v4340 = vld [vmem:[%s24 + $0x20] sm:$0xff]
        %v4341 = vld [vmem:[%s24 + $0x28] sm:$0xff]
        %v4342 = vld [vmem:[%s24 + $0x30] sm:$0xff]
        %v4343 = vld [vmem:[%s24 + $0x38] sm:$0xff]
        %4345 = vset.pattern.permute.xlu0 11
        %4346 = vperm.xlu0 %4345, %v4336
        %v4347 = vpop.permute.xlu0 %4346
        %4350 = vset.pattern.permute.xlu0 11
        %4351 = vperm.xlu0 %4350, %v4337
        %v4352 = vpop.permute.xlu0 %4351
        %4355 = vset.pattern.permute.xlu0 11
        %4356 = vperm.xlu0 %4355, %v4338
        %v4357 = vpop.permute.xlu0 %4356
        %4360 = vset.pattern.permute.xlu0 11
        %4361 = vperm.xlu0 %4360, %v4339
        %v4362 = vpop.permute.xlu0 %4361
        %4365 = vset.pattern.permute.xlu0 11
        %4366 = vperm.xlu0 %4365, %v4340
        %v4367 = vpop.permute.xlu0 %4366
        %4370 = vset.pattern.permute.xlu0 11
        %4371 = vperm.xlu0 %4370, %v4341
        %v4372 = vpop.permute.xlu0 %4371
        %4375 = vset.pattern.permute.xlu0 11
        %4376 = vperm.xlu0 %4375, %v4342
        %v4377 = vpop.permute.xlu0 %4376
        %4380 = vset.pattern.permute.xlu0 11
        %4381 = vperm.xlu0 %4380, %v4343
        %v4382 = vpop.permute.xlu0 %4381
        %4384 = vmatprep.subr.mxu0 0.0
        %4385 = vmatpush1.msra.mxu0 %v4288
        %4386 = vmatprep.subr.mxu0 0.0
        %4387 = vmatpush1.msra.mxu0 %v4289
        %4388 = vmatprep.subr.mxu0 0.0
        %4389 = vmatpush1.msra.mxu0 %v4290
        %4390 = vmatprep.subr.mxu0 0.0
        %4391 = vmatpush1.msra.mxu0 %v4291
        %4392 = vmatprep.subr.mxu0 0.0
        %4393 = vmatpush1.msra.mxu0 %v4292
        %4394 = vmatprep.subr.mxu0 0.0
        %4395 = vmatpush1.msra.mxu0 %v4293
        %4396 = vmatprep.subr.mxu0 0.0
        %4397 = vmatpush1.msra.mxu0 %v4294
        %4398 = vmatprep.subr.mxu0 0.0
        %4399 = vmatpush1.msra.mxu0 %v4295
        %4400 = vmatprep.subr.mxu0 0.0
        %4401 = vmatpush1.msra.mxu0 %v4296
        %4402 = vmatprep.subr.mxu0 0.0
        %4403 = vmatpush1.msra.mxu0 %v4297
        %4404 = vmatprep.subr.mxu0 0.0
        %4405 = vmatpush1.msra.mxu0 %v4298
        %4406 = vmatprep.subr.mxu0 0.0
        %4407 = vmatpush1.msra.mxu0 %v4299
        %4408 = vmatprep.subr.mxu0 0.0
        %4409 = vmatpush1.msra.mxu0 %v4300
        %4410 = vmatprep.subr.mxu0 0.0
        %4411 = vmatpush1.msra.mxu0 %v4301
        %4412 = vmatprep.subr.mxu0 0.0
        %4413 = vmatpush1.msra.mxu0 %v4302
        %4414 = vmatprep.subr.mxu0 0.0
        %4415 = vmatpush1.msra.mxu0 %v4303
        %4416 = vmatprep.subr.mxu0 0.0
        %4417 = vmatpush1.msra.mxu0 %v4304
        %4418 = vmatprep.subr.mxu0 0.0
        %4419 = vmatpush1.msra.mxu0 %v4305
        %4420 = vmatprep.subr.mxu0 0.0
        %4421 = vmatpush1.msra.mxu0 %v4306
        %4422 = vmatprep.subr.mxu0 0.0
        %4423 = vmatpush1.msra.mxu0 %v4307
        %4424 = vmatprep.subr.mxu0 0.0
        %4425 = vmatpush1.msra.mxu0 %v4308
        %4426 = vmatprep.subr.mxu0 0.0
        %4427 = vmatpush1.msra.mxu0 %v4309
        %4428 = vmatprep.subr.mxu0 0.0
        %4429 = vmatpush1.msra.mxu0 %v4310
        %4430 = vmatprep.subr.mxu0 0.0
        %4431 = vmatpush1.msra.mxu0 %v4311
        %4432 = vmatprep.subr.mxu0 0.0
        %4433 = vmatpush1.msra.mxu0 %v4312
        %4434 = vmatprep.subr.mxu0 0.0
        %4435 = vmatpush1.msra.mxu0 %v4313
        %4436 = vmatprep.subr.mxu0 0.0
        %4437 = vmatpush1.msra.mxu0 %v4314
        %4438 = vmatprep.subr.mxu0 0.0
        %4439 = vmatpush1.msra.mxu0 %v4315
        %4440 = vmatprep.subr.mxu0 0.0
        %4441 = vmatpush1.msra.mxu0 %v4316
        %4442 = vmatprep.subr.mxu0 0.0
        %4443 = vmatpush1.msra.mxu0 %v4317
        %4444 = vmatprep.subr.mxu0 0.0
        %4445 = vmatpush1.msra.mxu0 %v4318
        %4446 = vmatprep.subr.mxu0 0.0
        %4447 = vmatpush1.msra.mxu0 %v4319
        %4448 = vmatprep.mubr.f32.mxu0 %v4265
        %4449 = vmatmul.mubr.f32.gmra.mrb[0].mxu0 %v4264
        %v4450 = vpop.f32.mrb[0].mxu0
        %v4451 = vadd.f32 %v4347, %v4450
        %v4452 = vpop.f32.mrb[0].mxu0
        %4453 = vmatprep.mubr.f32.mxu0 %v4268
        %4454 = vmatmul.mubr.f32.gmra.mrb[0].mxu0 %v4267
        %v4455 = vpop.f32.mrb[0].mxu0
        %v4456 = vadd.f32 %v4352, %v4455
        %v4457 = vpop.f32.mrb[0].mxu0
        %4458 = vmatprep.mubr.f32.mxu0 %v4271
        %4459 = vmatmul.mubr.f32.gmra.mrb[0].mxu0 %v4270
        %v4460 = vpop.f32.mrb[0].mxu0
        %v4461 = vadd.f32 %v4357, %v4460
        %v4462 = vpop.f32.mrb[0].mxu0
        %4463 = vmatprep.mubr.f32.mxu0 %v4274
        %4464 = vmatmul.mubr.f32.gmra.mrb[0].mxu0 %v4273
        %v4465 = vpop.f32.mrb[0].mxu0
        %v4466 = vadd.f32 %v4362, %v4465
        %v4467 = vpop.f32.mrb[0].mxu0
        %4468 = vmatprep.mubr.f32.mxu0 %v4277
        %4469 = vmatmul.mubr.f32.gmra.mrb[0].mxu0 %v4276
        %v4470 = vpop.f32.mrb[0].mxu0
        %v4471 = vadd.f32 %v4367, %v4470
        %v4472 = vpop.f32.mrb[0].mxu0
        %4473 = vmatprep.mubr.f32.mxu0 %v4280
        %4474 = vmatmul.mubr.f32.gmra.mrb[0].mxu0 %v4279
        %v4475 = vpop.f32.mrb[0].mxu0
        %v4476 = vadd.f32 %v4372, %v4475
        %v4477 = vpop.f32.mrb[0].mxu0
        %4478 = vmatprep.mubr.f32.mxu0 %v4283
        %4479 = vmatmul.mubr.f32.gmra.mrb[0].mxu0 %v4282
        %v4480 = vpop.f32.mrb[0].mxu0
        %v4481 = vadd.f32 %v4377, %v4480
        %v4482 = vpop.f32.mrb[0].mxu0
        %4483 = vmatprep.mubr.f32.mxu0 %v4286
        %4484 = vmatmul.mubr.f32.gmra.mrb[0].mxu0 %v4285
        %v4485 = vpop.f32.mrb[0].mxu0
        %v4486 = vadd.f32 %v4382, %v4485
        %v4487 = vpop.f32.mrb[0].mxu0
        %4488 = vdwg.mxu0
        %4489 = vmatprep.subr.mxu0 0.0
        %4490 = vmatpush1.msra.mxu0 %v4320
        %4491 = vmatprep.subr.mxu0 0.0
        %4492 = vmatpush1.msra.mxu0 %v4321
        %4493 = vmatprep.subr.mxu0 0.0
        %4494 = vmatpush1.msra.mxu0 %v4322
        %4495 = vmatprep.subr.mxu0 0.0
        %4496 = vmatpush1.msra.mxu0 %v4323
        %4497 = vmatprep.subr.mxu0 0.0
        %4498 = vmatpush1.msra.mxu0 %v4324
        %4499 = vmatprep.subr.mxu0 0.0
        %4500 = vmatpush1.msra.mxu0 %v4325
        %4501 = vmatprep.subr.mxu0 0.0
        %4502 = vmatpush1.msra.mxu0 %v4326
        %4503 = vmatprep.subr.mxu0 0.0
        %4504 = vmatpush1.msra.mxu0 %v4327
        %4505 = vmatprep.subr.mxu0 0.0
        %4506 = vmatpush1.msra.mxu0 %v4328
        %4507 = vmatprep.subr.mxu0 0.0
        %4508 = vmatpush1.msra.mxu0 %v4329
        %4509 = vmatprep.subr.mxu0 0.0
        %4510 = vmatpush1.msra.mxu0 %v4330
        %4511 = vmatprep.subr.mxu0 0.0
        %4512 = vmatpush1.msra.mxu0 %v4331
        %4513 = vmatprep.subr.mxu0 0.0
        %4514 = vmatpush1.msra.mxu0 %v4332
        %4515 = vmatprep.subr.mxu0 0.0
        %4516 = vmatpush1.msra.mxu0 %v4333
        %4517 = vmatprep.subr.mxu0 0.0
        %4518 = vmatpush1.msra.mxu0 %v4334
        %4519 = vmatprep.subr.mxu0 0.0
        %4520 = vmatpush1.msra.mxu0 %v4335
        %4521 = vmatprep.subr.mxu0 0.0
        %4522 = vmatpush1.msra.mxu0 0.0
        %4523 = vmatprep.subr.mxu0 0.0
        %4524 = vmatpush1.msra.mxu0 0.0
        %4525 = vmatprep.subr.mxu0 0.0
        %4526 = vmatpush1.msra.mxu0 0.0
        %4527 = vmatprep.subr.mxu0 0.0
        %4528 = vmatpush1.msra.mxu0 0.0
        %4529 = vmatprep.subr.mxu0 0.0
        %4530 = vmatpush1.msra.mxu0 0.0
        %4531 = vmatprep.subr.mxu0 0.0
        %4532 = vmatpush1.msra.mxu0 0.0
        %4533 = vmatprep.subr.mxu0 0.0
        %4534 = vmatpush1.msra.mxu0 0.0
        %4535 = vmatprep.subr.mxu0 0.0
        %4536 = vmatpush1.msra.mxu0 0.0
        %4537 = vmatprep.subr.mxu0 0.0
        %4538 = vmatpush1.msra.mxu0 0.0
        %4539 = vmatprep.subr.mxu0 0.0
        %4540 = vmatpush1.msra.mxu0 0.0
        %4541 = vmatprep.subr.mxu0 0.0
        %4542 = vmatpush1.msra.mxu0 0.0
        %4543 = vmatprep.subr.mxu0 0.0
        %4544 = vmatpush1.msra.mxu0 0.0
        %4545 = vmatprep.subr.mxu0 0.0
        %4546 = vmatpush1.msra.mxu0 0.0
        %4547 = vmatprep.subr.mxu0 0.0
        %4548 = vmatpush1.msra.mxu0 0.0
        %4549 = vmatprep.subr.mxu0 0.0
        %4550 = vmatpush1.msra.mxu0 0.0
        %4551 = vmatprep.subr.mxu0 0.0
        %4552 = vmatpush1.msra.mxu0 0.0
        %4553 = vmatprep.mubr.f32.mxu0 0.0
        %4554 = vmatmul.mubr.f32.gmra.mrb[0].mxu0 %v4266
        %v4555 = vpop.f32.mrb[0].mxu0
        %v4556 = vadd.f32 %v4451, %v4555
        %v4557 = vpop.f32.mrb[0].mxu0
        %4558 = vmatprep.mubr.f32.mxu0 0.0
        %4559 = vmatmul.mubr.f32.gmra.mrb[0].mxu0 %v4269
        %v4560 = vpop.f32.mrb[0].mxu0
        %v4561 = vadd.f32 %v4456, %v4560
        %v4562 = vpop.f32.mrb[0].mxu0
        %4563 = vmatprep.mubr.f32.mxu0 0.0
        %4564 = vmatmul.mubr.f32.gmra.mrb[0].mxu0 %v4272
        %v4565 = vpop.f32.mrb[0].mxu0
        %v4566 = vadd.f32 %v4461, %v4565
        %v4567 = vpop.f32.mrb[0].mxu0
        %4568 = vmatprep.mubr.f32.mxu0 0.0
        %4569 = vmatmul.mubr.f32.gmra.mrb[0].mxu0 %v4275
        %v4570 = vpop.f32.mrb[0].mxu0
        %v4571 = vadd.f32 %v4466, %v4570
        %v4572 = vpop.f32.mrb[0].mxu0
        %4573 = vmatprep.mubr.f32.mxu0 0.0
        %4574 = vmatmul.mubr.f32.gmra.mrb[0].mxu0 %v4278
        %v4575 = vpop.f32.mrb[0].mxu0
        %v4576 = vadd.f32 %v4471, %v4575
        %v4577 = vpop.f32.mrb[0].mxu0
        %4578 = vmatprep.mubr.f32.mxu0 0.0
        %4579 = vmatmul.mubr.f32.gmra.mrb[0].mxu0 %v4281
        %v4580 = vpop.f32.mrb[0].mxu0
        %v4581 = vadd.f32 %v4476, %v4580
        %v4582 = vpop.f32.mrb[0].mxu0
        %4583 = vmatprep.mubr.f32.mxu0 0.0
        %4584 = vmatmul.mubr.f32.gmra.mrb[0].mxu0 %v4284
        %v4585 = vpop.f32.mrb[0].mxu0
        %v4586 = vadd.f32 %v4481, %v4585
        %v4587 = vpop.f32.mrb[0].mxu0
        %4588 = vmatprep.mubr.f32.mxu0 0.0
        %4589 = vmatmul.mubr.f32.gmra.mrb[0].mxu0 %v4287
        %v4590 = vpop.f32.mrb[0].mxu0
        %v4591 = vadd.f32 %v4486, %v4590
        %v4592 = vpop.f32.mrb[0].mxu0
        %4593 = vdwg.mxu0
        %v4594 = vtanh.pop %v4556
        %v4595 = vtanh.pop %v4561
        %v4596 = vtanh.pop %v4566
        %v4597 = vtanh.pop %v4571
        %v4598 = vtanh.pop %v4576
        %v4599 = vtanh.pop %v4581
        %v4600 = vtanh.pop %v4586
        %v4601 = vtanh.pop %v4591
        %4602 = vst.msk [vmem:[#allocation2] sm:$0xff] %vm973, 0.0
        %4603 = vst.msk [vmem:[#allocation2 + $0x8] sm:$0xff] %vm973, 0.0
        %4604 = vst.msk [vmem:[#allocation2 + $0x10] sm:$0xff] %vm973, 0.0
        %4605 = vst.msk [vmem:[#allocation2 + $0x18] sm:$0xff] %vm973, 0.0
        %4606 = vst.msk [vmem:[#allocation2 + $0x20] sm:$0xff] %vm973, 0.0
        %4607 = vst.msk [vmem:[#allocation2 + $0x28] sm:$0xff] %vm973, 0.0
        %4608 = vst.msk [vmem:[#allocation2 + $0x30] sm:$0xff] %vm973, 0.0
        %4609 = vst.msk [vmem:[#allocation2 + $0x38] sm:$0xff] %vm973, 0.0
        %4618 = vrot.lane.b32.xlu0 %v4594, 1
        %v4619 = vpop.permute.xlu0 %4618
        %4620 = vrot.lane.b32.xlu0 %v4595, 1
        %v4621 = vpop.permute.xlu0 %4620
        %4622 = vrot.lane.b32.xlu0 %v4596, 1
        %v4623 = vpop.permute.xlu0 %4622
        %4624 = vrot.lane.b32.xlu0 %v4597, 1
        %v4625 = vpop.permute.xlu0 %4624
        %4626 = vrot.lane.b32.xlu0 %v4598, 1
        %v4627 = vpop.permute.xlu0 %4626
        %4628 = vrot.lane.b32.xlu0 %v4599, 1
        %v4629 = vpop.permute.xlu0 %4628
        %4630 = vrot.lane.b32.xlu0 %v4600, 1
        %v4631 = vpop.permute.xlu0 %4630
        %4632 = vrot.lane.b32.xlu0 %v4601, 1
        %v4633 = vpop.permute.xlu0 %4632
        %4642 = vst.msk [vmem:[#allocation2] sm:$0xff] %vm2302, %v4619
        %4643 = vst.msk [vmem:[#allocation2 + $0x8] sm:$0xff] %vm2302, %v4621
        %4644 = vst.msk [vmem:[#allocation2 + $0x10] sm:$0xff] %vm2302, %v4623
        %4645 = vst.msk [vmem:[#allocation2 + $0x18] sm:$0xff] %vm2302, %v4625
        %4646 = vst.msk [vmem:[#allocation2 + $0x20] sm:$0xff] %vm2302, %v4627
        %4647 = vst.msk [vmem:[#allocation2 + $0x28] sm:$0xff] %vm2302, %v4629
        %4648 = vst.msk [vmem:[#allocation2 + $0x30] sm:$0xff] %vm2302, %v4631
        %4649 = vst.msk [vmem:[#allocation2 + $0x38] sm:$0xff] %vm2302, %v4633
        %4650 = vst.msk [vmem:[#allocation2 + $0x40] sm:$0xff] %vm2307, %v4594
        %4651 = vst.msk [vmem:[#allocation2 + $0x48] sm:$0xff] %vm2307, %v4595
        %4652 = vst.msk [vmem:[#allocation2 + $0x50] sm:$0xff] %vm2307, %v4596
        %4653 = vst.msk [vmem:[#allocation2 + $0x58] sm:$0xff] %vm2307, %v4597
        %4654 = vst.msk [vmem:[#allocation2 + $0x60] sm:$0xff] %vm2307, %v4598
        %4655 = vst.msk [vmem:[#allocation2 + $0x68] sm:$0xff] %vm2307, %v4599
        %4656 = vst.msk [vmem:[#allocation2 + $0x70] sm:$0xff] %vm2307, %v4600
        %4657 = vst.msk [vmem:[#allocation2 + $0x78] sm:$0xff] %vm2307, %v4601
        %4658 = vrot.lane.b32.xlu0 %v4594, 127
        %v4659 = vpop.permute.xlu0 %4658
        %4660 = vrot.lane.b32.xlu0 %v4595, 127
        %v4661 = vpop.permute.xlu0 %4660
        %4662 = vrot.lane.b32.xlu0 %v4596, 127
        %v4663 = vpop.permute.xlu0 %4662
        %4664 = vrot.lane.b32.xlu0 %v4597, 127
        %v4665 = vpop.permute.xlu0 %4664
        %4666 = vrot.lane.b32.xlu0 %v4598, 127
        %v4667 = vpop.permute.xlu0 %4666
        %4668 = vrot.lane.b32.xlu0 %v4599, 127
        %v4669 = vpop.permute.xlu0 %4668
        %4670 = vrot.lane.b32.xlu0 %v4600, 127
        %v4671 = vpop.permute.xlu0 %4670
        %4672 = vrot.lane.b32.xlu0 %v4601, 127
        %v4673 = vpop.permute.xlu0 %4672
        %4682 = vst.msk [vmem:[#allocation2 + $0x80] sm:$0xff] %vm973, %v4659
        %4683 = vst.msk [vmem:[#allocation2 + $0x88] sm:$0xff] %vm973, %v4661
        %4684 = vst.msk [vmem:[#allocation2 + $0x90] sm:$0xff] %vm973, %v4663
        %4685 = vst.msk [vmem:[#allocation2 + $0x98] sm:$0xff] %vm973, %v4665
        %4686 = vst.msk [vmem:[#allocation2 + $0xa0] sm:$0xff] %vm973, %v4667
        %4687 = vst.msk [vmem:[#allocation2 + $0xa8] sm:$0xff] %vm973, %v4669
        %4688 = vst.msk [vmem:[#allocation2 + $0xb0] sm:$0xff] %vm973, %v4671
        %4689 = vst.msk [vmem:[#allocation2 + $0xb8] sm:$0xff] %vm973, %v4673
        %4690 = vst.msk [vmem:[#allocation2 + $0x80] sm:$0xff] %vm2302, 0.0
        %4691 = vst.msk [vmem:[#allocation2 + $0x88] sm:$0xff] %vm2302, 0.0
        %4692 = vst.msk [vmem:[#allocation2 + $0x90] sm:$0xff] %vm2302, 0.0
        %4693 = vst.msk [vmem:[#allocation2 + $0x98] sm:$0xff] %vm2302, 0.0
        %4694 = vst.msk [vmem:[#allocation2 + $0xa0] sm:$0xff] %vm2302, 0.0
        %4695 = vst.msk [vmem:[#allocation2 + $0xa8] sm:$0xff] %vm2302, 0.0
        %4696 = vst.msk [vmem:[#allocation2 + $0xb0] sm:$0xff] %vm2302, 0.0
        %4697 = vst.msk [vmem:[#allocation2 + $0xb8] sm:$0xff] %vm2302, 0.0
        %v4698 = vld [vmem:[#allocation16] sm:$0xff]
        %v4699 = vld [vmem:[#allocation16 + $0x8] sm:$0xff]
        %v4700 = vld [vmem:[#allocation16 + $0x10] sm:$0xff]
        %v4701 = vld [vmem:[#allocation16 + $0x18] sm:$0xff]
        %v4702 = vld [vmem:[#allocation16 + $0x20] sm:$0xff]
        %v4703 = vld [vmem:[#allocation16 + $0x28] sm:$0xff]
        %v4704 = vld [vmem:[#allocation16 + $0x30] sm:$0xff]
        %v4705 = vld [vmem:[#allocation16 + $0x38] sm:$0xff]
        %v4706 = vld [vmem:[#allocation16 + $0x40] sm:$0xff]
        %v4707 = vld [vmem:[#allocation16 + $0x48] sm:$0xff]
        %v4708 = vld [vmem:[#allocation16 + $0x50] sm:$0xff]
        %v4709 = vld [vmem:[#allocation16 + $0x58] sm:$0xff]
        %v4710 = vld [vmem:[#allocation16 + $0x60] sm:$0xff]
        %v4711 = vld [vmem:[#allocation16 + $0x68] sm:$0xff]
        %v4712 = vld [vmem:[#allocation16 + $0x70] sm:$0xff]
        %v4713 = vld [vmem:[#allocation16 + $0x78] sm:$0xff]
        %v4714 = vld [vmem:[#allocation2] sm:$0xff]
        %v4715 = vld [vmem:[#allocation2 + $0x8] sm:$0xff]
        %v4716 = vld [vmem:[#allocation2 + $0x10] sm:$0xff]
        %v4717 = vld [vmem:[#allocation2 + $0x18] sm:$0xff]
        %v4718 = vld [vmem:[#allocation2 + $0x20] sm:$0xff]
        %v4719 = vld [vmem:[#allocation2 + $0x28] sm:$0xff]
        %v4720 = vld [vmem:[#allocation2 + $0x30] sm:$0xff]
        %v4721 = vld [vmem:[#allocation2 + $0x38] sm:$0xff]
        %v4722 = vld [vmem:[#allocation2 + $0x40] sm:$0xff]
        %v4723 = vld [vmem:[#allocation2 + $0x48] sm:$0xff]
        %v4724 = vld [vmem:[#allocation2 + $0x50] sm:$0xff]
        %v4725 = vld [vmem:[#allocation2 + $0x58] sm:$0xff]
        %v4726 = vld [vmem:[#allocation2 + $0x60] sm:$0xff]
        %v4727 = vld [vmem:[#allocation2 + $0x68] sm:$0xff]
        %v4728 = vld [vmem:[#allocation2 + $0x70] sm:$0xff]
        %v4729 = vld [vmem:[#allocation2 + $0x78] sm:$0xff]
        %v4730 = vld [vmem:[#allocation2 + $0x80] sm:$0xff]
        %v4731 = vld [vmem:[#allocation2 + $0x88] sm:$0xff]
        %v4732 = vld [vmem:[#allocation2 + $0x90] sm:$0xff]
        %v4733 = vld [vmem:[#allocation2 + $0x98] sm:$0xff]
        %v4734 = vld [vmem:[#allocation2 + $0xa0] sm:$0xff]
        %v4735 = vld [vmem:[#allocation2 + $0xa8] sm:$0xff]
        %v4736 = vld [vmem:[#allocation2 + $0xb0] sm:$0xff]
        %v4737 = vld [vmem:[#allocation2 + $0xb8] sm:$0xff]
        %v4738 = vld [vmem:[%s24] sm:$0xff]
        %v4739 = vld [vmem:[%s24 + $0x8] sm:$0xff]
        %v4740 = vld [vmem:[%s24 + $0x10] sm:$0xff]
        %v4741 = vld [vmem:[%s24 + $0x18] sm:$0xff]
        %v4742 = vld [vmem:[%s24 + $0x20] sm:$0xff]
        %v4743 = vld [vmem:[%s24 + $0x28] sm:$0xff]
        %v4744 = vld [vmem:[%s24 + $0x30] sm:$0xff]
        %v4745 = vld [vmem:[%s24 + $0x38] sm:$0xff]
        %4747 = vset.pattern.permute.xlu0 12
        %4748 = vperm.xlu0 %4747, %v4738
        %v4749 = vpop.permute.xlu0 %4748
        %4752 = vset.pattern.permute.xlu0 12
        %4753 = vperm.xlu0 %4752, %v4739
        %v4754 = vpop.permute.xlu0 %4753
        %4757 = vset.pattern.permute.xlu0 12
        %4758 = vperm.xlu0 %4757, %v4740
        %v4759 = vpop.permute.xlu0 %4758
        %4762 = vset.pattern.permute.xlu0 12
        %4763 = vperm.xlu0 %4762, %v4741
        %v4764 = vpop.permute.xlu0 %4763
        %4767 = vset.pattern.permute.xlu0 12
        %4768 = vperm.xlu0 %4767, %v4742
        %v4769 = vpop.permute.xlu0 %4768
        %4772 = vset.pattern.permute.xlu0 12
        %4773 = vperm.xlu0 %4772, %v4743
        %v4774 = vpop.permute.xlu0 %4773
        %4777 = vset.pattern.permute.xlu0 12
        %4778 = vperm.xlu0 %4777, %v4744
        %v4779 = vpop.permute.xlu0 %4778
        %4782 = vset.pattern.permute.xlu0 12
        %4783 = vperm.xlu0 %4782, %v4745
        %v4784 = vpop.permute.xlu0 %4783
        %v4787 = vsel %vm2721, %v4699, 0
        %v4790 = vsel %vm2721, %v4701, 0
        %v4793 = vsel %vm2721, %v4703, 0
        %v4796 = vsel %vm2721, %v4705, 0
        %v4799 = vsel %vm2721, %v4707, 0
        %v4802 = vsel %vm2721, %v4709, 0
        %v4805 = vsel %vm2721, %v4711, 0
        %v4808 = vsel %vm2721, %v4713, 0
        %4810 = vmatprep.subr.mxu0 0.0
        %4811 = vmatpush1.msra.mxu0 %v4714
        %4812 = vmatprep.subr.mxu0 0.0
        %4813 = vmatpush1.msra.mxu0 %v4715
        %4814 = vmatprep.subr.mxu0 0.0
        %4815 = vmatpush1.msra.mxu0 %v4716
        %4816 = vmatprep.subr.mxu0 0.0
        %4817 = vmatpush1.msra.mxu0 %v4717
        %4818 = vmatprep.subr.mxu0 0.0
        %4819 = vmatpush1.msra.mxu0 %v4718
        %4820 = vmatprep.subr.mxu0 0.0
        %4821 = vmatpush1.msra.mxu0 %v4719
        %4822 = vmatprep.subr.mxu0 0.0
        %4823 = vmatpush1.msra.mxu0 %v4720
        %4824 = vmatprep.subr.mxu0 0.0
        %4825 = vmatpush1.msra.mxu0 %v4721
        %4826 = vmatprep.subr.mxu0 0.0
        %4827 = vmatpush1.msra.mxu0 %v4722
        %4828 = vmatprep.subr.mxu0 0.0
        %4829 = vmatpush1.msra.mxu0 %v4723
        %4830 = vmatprep.subr.mxu0 0.0
        %4831 = vmatpush1.msra.mxu0 %v4724
        %4832 = vmatprep.subr.mxu0 0.0
        %4833 = vmatpush1.msra.mxu0 %v4725
        %4834 = vmatprep.subr.mxu0 0.0
        %4835 = vmatpush1.msra.mxu0 %v4726
        %4836 = vmatprep.subr.mxu0 0.0
        %4837 = vmatpush1.msra.mxu0 %v4727
        %4838 = vmatprep.subr.mxu0 0.0
        %4839 = vmatpush1.msra.mxu0 %v4728
        %4840 = vmatprep.subr.mxu0 0.0
        %4841 = vmatpush1.msra.mxu0 %v4729
        %4842 = vmatprep.subr.mxu0 0.0
        %4843 = vmatpush1.msra.mxu0 %v4730
        %4844 = vmatprep.subr.mxu0 0.0
        %4845 = vmatpush1.msra.mxu0 %v4731
        %4846 = vmatprep.subr.mxu0 0.0
        %4847 = vmatpush1.msra.mxu0 %v4732
        %4848 = vmatprep.subr.mxu0 0.0
        %4849 = vmatpush1.msra.mxu0 %v4733
        %4850 = vmatprep.subr.mxu0 0.0
        %4851 = vmatpush1.msra.mxu0 %v4734
        %4852 = vmatprep.subr.mxu0 0.0
        %4853 = vmatpush1.msra.mxu0 %v4735
        %4854 = vmatprep.subr.mxu0 0.0
        %4855 = vmatpush1.msra.mxu0 %v4736
        %4856 = vmatprep.subr.mxu0 0.0
        %4857 = vmatpush1.msra.mxu0 %v4737
        %4858 = vmatprep.subr.mxu0 0.0
        %4859 = vmatpush1.msra.mxu0 0.0
        %4860 = vmatprep.subr.mxu0 0.0
        %4861 = vmatpush1.msra.mxu0 0.0
        %4862 = vmatprep.subr.mxu0 0.0
        %4863 = vmatpush1.msra.mxu0 0.0
        %4864 = vmatprep.subr.mxu0 0.0
        %4865 = vmatpush1.msra.mxu0 0.0
        %4866 = vmatprep.subr.mxu0 0.0
        %4867 = vmatpush1.msra.mxu0 0.0
        %4868 = vmatprep.subr.mxu0 0.0
        %4869 = vmatpush1.msra.mxu0 0.0
        %4870 = vmatprep.subr.mxu0 0.0
        %4871 = vmatpush1.msra.mxu0 0.0
        %4872 = vmatprep.subr.mxu0 0.0
        %4873 = vmatpush1.msra.mxu0 0.0
        %4874 = vmatprep.mubr.f32.mxu0 %v4787
        %4875 = vmatmul.mubr.f32.gmra.mrb[0].mxu0 %v4698
        %v4876 = vpop.f32.mrb[0].mxu0
        %v4877 = vadd.f32 %v4749, %v4876
        %v4878 = vpop.f32.mrb[0].mxu0
        %4879 = vmatprep.mubr.f32.mxu0 %v4790
        %4880 = vmatmul.mubr.f32.gmra.mrb[0].mxu0 %v4700
        %v4881 = vpop.f32.mrb[0].mxu0
        %v4882 = vadd.f32 %v4754, %v4881
        %v4883 = vpop.f32.mrb[0].mxu0
        %4884 = vmatprep.mubr.f32.mxu0 %v4793
        %4885 = vmatmul.mubr.f32.gmra.mrb[0].mxu0 %v4702
        %v4886 = vpop.f32.mrb[0].mxu0
        %v4887 = vadd.f32 %v4759, %v4886
        %v4888 = vpop.f32.mrb[0].mxu0
        %4889 = vmatprep.mubr.f32.mxu0 %v4796
        %4890 = vmatmul.mubr.f32.gmra.mrb[0].mxu0 %v4704
        %v4891 = vpop.f32.mrb[0].mxu0
        %v4892 = vadd.f32 %v4764, %v4891
        %v4893 = vpop.f32.mrb[0].mxu0
        %4894 = vmatprep.mubr.f32.mxu0 %v4799
        %4895 = vmatmul.mubr.f32.gmra.mrb[0].mxu0 %v4706
        %v4896 = vpop.f32.mrb[0].mxu0
        %v4897 = vadd.f32 %v4769, %v4896
        %v4898 = vpop.f32.mrb[0].mxu0
        %4899 = vmatprep.mubr.f32.mxu0 %v4802
        %4900 = vmatmul.mubr.f32.gmra.mrb[0].mxu0 %v4708
        %v4901 = vpop.f32.mrb[0].mxu0
        %v4902 = vadd.f32 %v4774, %v4901
        %v4903 = vpop.f32.mrb[0].mxu0
        %4904 = vmatprep.mubr.f32.mxu0 %v4805
        %4905 = vmatmul.mubr.f32.gmra.mrb[0].mxu0 %v4710
        %v4906 = vpop.f32.mrb[0].mxu0
        %v4907 = vadd.f32 %v4779, %v4906
        %v4908 = vpop.f32.mrb[0].mxu0
        %4909 = vmatprep.mubr.f32.mxu0 %v4808
        %4910 = vmatmul.mubr.f32.gmra.mrb[0].mxu0 %v4712
        %v4911 = vpop.f32.mrb[0].mxu0
        %v4912 = vadd.f32 %v4784, %v4911
        %v4913 = vpop.f32.mrb[0].mxu0
        %4914 = vdwg.mxu0
        %v4915 = vtanh.pop %v4877
        %v4916 = vtanh.pop %v4882
        %v4917 = vtanh.pop %v4887
        %v4918 = vtanh.pop %v4892
        %v4919 = vtanh.pop %v4897
        %v4920 = vtanh.pop %v4902
        %v4921 = vtanh.pop %v4907
        %v4922 = vtanh.pop %v4912
        %v4923 = vld [vmem:[#allocation17] sm:$0xff]
        %v4924 = vld [vmem:[#allocation17 + $0x8] sm:$0xff]
        %v4925 = vld [vmem:[#allocation17 + $0x10] sm:$0xff]
        %v4926 = vld [vmem:[#allocation17 + $0x18] sm:$0xff]
        %v4927 = vld [vmem:[#allocation17 + $0x20] sm:$0xff]
        %v4928 = vld [vmem:[#allocation17 + $0x28] sm:$0xff]
        %v4929 = vld [vmem:[#allocation17 + $0x30] sm:$0xff]
        %v4930 = vld [vmem:[#allocation17 + $0x38] sm:$0xff]
        %v4932 = vsel %vm2721, %v4923, 0
        %v4935 = vsel %vm2721, %v4924, 0
        %v4938 = vsel %vm2721, %v4925, 0
        %v4941 = vsel %vm2721, %v4926, 0
        %v4944 = vsel %vm2721, %v4927, 0
        %v4947 = vsel %vm2721, %v4928, 0
        %v4950 = vsel %vm2721, %v4929, 0
        %v4953 = vsel %vm2721, %v4930, 0
        %4955 = vmatprep.subr.mxu0 0.0
        %4956 = vmatpush1.msra.mxu0 %v4915
        %4957 = vmatprep.subr.mxu0 0.0
        %4958 = vmatpush1.msra.mxu0 %v4916
        %4959 = vmatprep.subr.mxu0 0.0
        %4960 = vmatpush1.msra.mxu0 %v4917
        %4961 = vmatprep.subr.mxu0 0.0
        %4962 = vmatpush1.msra.mxu0 %v4918
        %4963 = vmatprep.subr.mxu0 0.0
        %4964 = vmatpush1.msra.mxu0 %v4919
        %4965 = vmatprep.subr.mxu0 0.0
        %4966 = vmatpush1.msra.mxu0 %v4920
        %4967 = vmatprep.subr.mxu0 0.0
        %4968 = vmatpush1.msra.mxu0 %v4921
        %4969 = vmatprep.subr.mxu0 0.0
        %4970 = vmatpush1.msra.mxu0 %v4922
        %4971 = vmatprep.subr.mxu0 0.0
        %4972 = vmatpush1.msra.mxu0 0.0
        %4973 = vmatprep.subr.mxu0 0.0
        %4974 = vmatpush1.msra.mxu0 0.0
        %4975 = vmatprep.subr.mxu0 0.0
        %4976 = vmatpush1.msra.mxu0 0.0
        %4977 = vmatprep.subr.mxu0 0.0
        %4978 = vmatpush1.msra.mxu0 0.0
        %4979 = vmatprep.subr.mxu0 0.0
        %4980 = vmatpush1.msra.mxu0 0.0
        %4981 = vmatprep.subr.mxu0 0.0
        %4982 = vmatpush1.msra.mxu0 0.0
        %4983 = vmatprep.subr.mxu0 0.0
        %4984 = vmatpush1.msra.mxu0 0.0
        %4985 = vmatprep.subr.mxu0 0.0
        %4986 = vmatpush1.msra.mxu0 0.0
        %4987 = vmatprep.subr.mxu0 0.0
        %4988 = vmatpush1.msra.mxu0 0.0
        %4989 = vmatprep.subr.mxu0 0.0
        %4990 = vmatpush1.msra.mxu0 0.0
        %4991 = vmatprep.subr.mxu0 0.0
        %4992 = vmatpush1.msra.mxu0 0.0
        %4993 = vmatprep.subr.mxu0 0.0
        %4994 = vmatpush1.msra.mxu0 0.0
        %4995 = vmatprep.subr.mxu0 0.0
        %4996 = vmatpush1.msra.mxu0 0.0
        %4997 = vmatprep.subr.mxu0 0.0
        %4998 = vmatpush1.msra.mxu0 0.0
        %4999 = vmatprep.subr.mxu0 0.0
        %5000 = vmatpush1.msra.mxu0 0.0
        %5001 = vmatprep.subr.mxu0 0.0
        %5002 = vmatpush1.msra.mxu0 0.0
        %5003 = vmatprep.subr.mxu0 0.0
        %5004 = vmatpush1.msra.mxu0 0.0
        %5005 = vmatprep.subr.mxu0 0.0
        %5006 = vmatpush1.msra.mxu0 0.0
        %5007 = vmatprep.subr.mxu0 0.0
        %5008 = vmatpush1.msra.mxu0 0.0
        %5009 = vmatprep.subr.mxu0 0.0
        %5010 = vmatpush1.msra.mxu0 0.0
        %5011 = vmatprep.subr.mxu0 0.0
        %5012 = vmatpush1.msra.mxu0 0.0
        %5013 = vmatprep.subr.mxu0 0.0
        %5014 = vmatpush1.msra.mxu0 0.0
        %5015 = vmatprep.subr.mxu0 0.0
        %5016 = vmatpush1.msra.mxu0 0.0
        %5017 = vmatprep.subr.mxu0 0.0
        %5018 = vmatpush1.msra.mxu0 0.0
        %5019 = vmatprep.mubr.f32.mxu0 0.0
        %5020 = vmatmul.mubr.f32.gmra.mrb[0].mxu0 %v4932
        %v5021 = vpop.f32.mrb[0].mxu0
        %v5022 = vadd.f32 0.0, %v5021
        %v5023 = vpop.f32.mrb[0].mxu0
        %5024 = vmatprep.mubr.f32.mxu0 0.0
        %5025 = vmatmul.mubr.f32.gmra.mrb[0].mxu0 %v4935
        %v5026 = vpop.f32.mrb[0].mxu0
        %v5027 = vadd.f32 0.0, %v5026
        %v5028 = vpop.f32.mrb[0].mxu0
        %5029 = vmatprep.mubr.f32.mxu0 0.0
        %5030 = vmatmul.mubr.f32.gmra.mrb[0].mxu0 %v4938
        %v5031 = vpop.f32.mrb[0].mxu0
        %v5032 = vadd.f32 0.0, %v5031
        %v5033 = vpop.f32.mrb[0].mxu0
        %5034 = vmatprep.mubr.f32.mxu0 0.0
        %5035 = vmatmul.mubr.f32.gmra.mrb[0].mxu0 %v4941
        %v5036 = vpop.f32.mrb[0].mxu0
        %v5037 = vadd.f32 0.0, %v5036
        %v5038 = vpop.f32.mrb[0].mxu0
        %5039 = vmatprep.mubr.f32.mxu0 0.0
        %5040 = vmatmul.mubr.f32.gmra.mrb[0].mxu0 %v4944
        %v5041 = vpop.f32.mrb[0].mxu0
        %v5042 = vadd.f32 0.0, %v5041
        %v5043 = vpop.f32.mrb[0].mxu0
        %5044 = vmatprep.mubr.f32.mxu0 0.0
        %5045 = vmatmul.mubr.f32.gmra.mrb[0].mxu0 %v4947
        %v5046 = vpop.f32.mrb[0].mxu0
        %v5047 = vadd.f32 0.0, %v5046
        %v5048 = vpop.f32.mrb[0].mxu0
        %5049 = vmatprep.mubr.f32.mxu0 0.0
        %5050 = vmatmul.mubr.f32.gmra.mrb[0].mxu0 %v4950
        %v5051 = vpop.f32.mrb[0].mxu0
        %v5052 = vadd.f32 0.0, %v5051
        %v5053 = vpop.f32.mrb[0].mxu0
        %5054 = vmatprep.mubr.f32.mxu0 0.0
        %5055 = vmatmul.mubr.f32.gmra.mrb[0].mxu0 %v4953
        %v5056 = vpop.f32.mrb[0].mxu0
        %v5057 = vadd.f32 0.0, %v5056
        %v5058 = vpop.f32.mrb[0].mxu0
        %5059 = vdwg.mxu0
        %v5060 = vld [vmem:[%s24] sm:$0xff]
        %v5061 = vld [vmem:[%s24 + $0x8] sm:$0xff]
        %v5062 = vld [vmem:[%s24 + $0x10] sm:$0xff]
        %v5063 = vld [vmem:[%s24 + $0x18] sm:$0xff]
        %v5064 = vmul.u32 %v1172, 2
        %vm5065 = vcmp.eq.s32.totalorder %v1175, %v5064
        %v5066 = vsel %vm5065, 1, 0
        %v5067 = vcvt.s32.f32 %v5066
        %v5068 = vadd.s32 %v5064, 1
        %vm5069 = vcmp.eq.s32.totalorder %v1175, %v5068
        %v5070 = vsel %vm5069, 1, 0
        %v5071 = vcvt.s32.f32 %v5070
        %v5073 = vsel %vm2307, %v5042, 0
        %v5076 = vsel %vm2307, %v5047, 0
        %v5079 = vsel %vm2307, %v5052, 0
        %v5082 = vsel %vm2307, %v5057, 0
        %vm5084 = vcmask 1041408
        %v5086 = vsel %vm5084, %v5071, 0
        %5088 = vmatprep.subr.mxu0 0.0
        %5089 = vmatpush1.msra.mxu0 %v5086
        %5090 = vmatprep.subr.mxu0 0.0
        %5091 = vmatpush1.msra.mxu0 0.0
        %5092 = vmatprep.subr.mxu0 0.0
        %5093 = vmatpush1.msra.mxu0 0.0
        %5094 = vmatprep.subr.mxu0 0.0
        %5095 = vmatpush1.msra.mxu0 0.0
        %5096 = vmatprep.subr.mxu0 0.0
        %5097 = vmatpush1.msra.mxu0 0.0
        %5098 = vmatprep.subr.mxu0 0.0
        %5099 = vmatpush1.msra.mxu0 0.0
        %5100 = vmatprep.subr.mxu0 0.0
        %5101 = vmatpush1.msra.mxu0 0.0
        %5102 = vmatprep.subr.mxu0 0.0
        %5103 = vmatpush1.msra.mxu0 0.0
        %5104 = vmatprep.subr.mxu0 0.0
        %5105 = vmatpush1.msra.mxu0 0.0
        %5106 = vmatprep.subr.mxu0 0.0
        %5107 = vmatpush1.msra.mxu0 0.0
        %5108 = vmatprep.subr.mxu0 0.0
        %5109 = vmatpush1.msra.mxu0 0.0
        %5110 = vmatprep.subr.mxu0 0.0
        %5111 = vmatpush1.msra.mxu0 0.0
        %5112 = vmatprep.subr.mxu0 0.0
        %5113 = vmatpush1.msra.mxu0 0.0
        %5114 = vmatprep.subr.mxu0 0.0
        %5115 = vmatpush1.msra.mxu0 0.0
        %5116 = vmatprep.subr.mxu0 0.0
        %5117 = vmatpush1.msra.mxu0 0.0
        %5118 = vmatprep.subr.mxu0 0.0
        %5119 = vmatpush1.msra.mxu0 0.0
        %5120 = vmatprep.subr.mxu0 0.0
        %5121 = vmatpush1.msra.mxu0 0.0
        %5122 = vmatprep.subr.mxu0 0.0
        %5123 = vmatpush1.msra.mxu0 0.0
        %5124 = vmatprep.subr.mxu0 0.0
        %5125 = vmatpush1.msra.mxu0 0.0
        %5126 = vmatprep.subr.mxu0 0.0
        %5127 = vmatpush1.msra.mxu0 0.0
        %5128 = vmatprep.subr.mxu0 0.0
        %5129 = vmatpush1.msra.mxu0 0.0
        %5130 = vmatprep.subr.mxu0 0.0
        %5131 = vmatpush1.msra.mxu0 0.0
        %5132 = vmatprep.subr.mxu0 0.0
        %5133 = vmatpush1.msra.mxu0 0.0
        %5134 = vmatprep.subr.mxu0 0.0
        %5135 = vmatpush1.msra.mxu0 0.0
        %5136 = vmatprep.subr.mxu0 0.0
        %5137 = vmatpush1.msra.mxu0 0.0
        %5138 = vmatprep.subr.mxu0 0.0
        %5139 = vmatpush1.msra.mxu0 0.0
        %5140 = vmatprep.subr.mxu0 0.0
        %5141 = vmatpush1.msra.mxu0 0.0
        %5142 = vmatprep.subr.mxu0 0.0
        %5143 = vmatpush1.msra.mxu0 0.0
        %5144 = vmatprep.subr.mxu0 0.0
        %5145 = vmatpush1.msra.mxu0 0.0
        %5146 = vmatprep.subr.mxu0 0.0
        %5147 = vmatpush1.msra.mxu0 0.0
        %5148 = vmatprep.subr.mxu0 0.0
        %5149 = vmatpush1.msra.mxu0 0.0
        %5150 = vmatprep.subr.mxu0 0.0
        %5151 = vmatpush1.msra.mxu0 0.0
        %5152 = vmatprep.mubr.f32.mxu0 0.0
        %5153 = vmatmul.mubr.f32.gmra.mrb[0].mxu0 %v5073
        %v5154 = vpop.f32.mrb[0].mxu0
        %v5155 = vadd.f32 0.0, %v5154
        %v5156 = vpop.f32.mrb[0].mxu0
        %5157 = vmatprep.mubr.f32.mxu0 0.0
        %5158 = vmatmul.mubr.f32.gmra.mrb[0].mxu0 %v5076
        %v5159 = vpop.f32.mrb[0].mxu0
        %v5160 = vadd.f32 0.0, %v5159
        %v5161 = vpop.f32.mrb[0].mxu0
        %5162 = vmatprep.mubr.f32.mxu0 0.0
        %5163 = vmatmul.mubr.f32.gmra.mrb[0].mxu0 %v5079
        %v5164 = vpop.f32.mrb[0].mxu0
        %v5165 = vadd.f32 0.0, %v5164
        %v5166 = vpop.f32.mrb[0].mxu0
        %5167 = vmatprep.mubr.f32.mxu0 0.0
        %5168 = vmatmul.mubr.f32.gmra.mrb[0].mxu0 %v5082
        %v5169 = vpop.f32.mrb[0].mxu0
        %v5170 = vadd.f32 0.0, %v5169
        %v5171 = vpop.f32.mrb[0].mxu0
        %5172 = vdwg.mxu0
        %v5174 = vsel %vm2307, %v5022, 0
        %v5177 = vsel %vm2307, %v5027, 0
        %v5180 = vsel %vm2307, %v5032, 0
        %v5183 = vsel %vm2307, %v5037, 0
        %v5186 = vsel %vm5084, %v5067, 0
        %5188 = vmatprep.subr.mxu0 0.0
        %5189 = vmatpush1.msra.mxu0 %v5186
        %5190 = vmatprep.subr.mxu0 0.0
        %5191 = vmatpush1.msra.mxu0 0.0
        %5192 = vmatprep.subr.mxu0 0.0
        %5193 = vmatpush1.msra.mxu0 0.0
        %5194 = vmatprep.subr.mxu0 0.0
        %5195 = vmatpush1.msra.mxu0 0.0
        %5196 = vmatprep.subr.mxu0 0.0
        %5197 = vmatpush1.msra.mxu0 0.0
        %5198 = vmatprep.subr.mxu0 0.0
        %5199 = vmatpush1.msra.mxu0 0.0
        %5200 = vmatprep.subr.mxu0 0.0
        %5201 = vmatpush1.msra.mxu0 0.0
        %5202 = vmatprep.subr.mxu0 0.0
        %5203 = vmatpush1.msra.mxu0 0.0
        %5204 = vmatprep.subr.mxu0 0.0
        %5205 = vmatpush1.msra.mxu0 0.0
        %5206 = vmatprep.subr.mxu0 0.0
        %5207 = vmatpush1.msra.mxu0 0.0
        %5208 = vmatprep.subr.mxu0 0.0
        %5209 = vmatpush1.msra.mxu0 0.0
        %5210 = vmatprep.subr.mxu0 0.0
        %5211 = vmatpush1.msra.mxu0 0.0
        %5212 = vmatprep.subr.mxu0 0.0
        %5213 = vmatpush1.msra.mxu0 0.0
        %5214 = vmatprep.subr.mxu0 0.0
        %5215 = vmatpush1.msra.mxu0 0.0
        %5216 = vmatprep.subr.mxu0 0.0
        %5217 = vmatpush1.msra.mxu0 0.0
        %5218 = vmatprep.subr.mxu0 0.0
        %5219 = vmatpush1.msra.mxu0 0.0
        %5220 = vmatprep.subr.mxu0 0.0
        %5221 = vmatpush1.msra.mxu0 0.0
        %5222 = vmatprep.subr.mxu0 0.0
        %5223 = vmatpush1.msra.mxu0 0.0
        %5224 = vmatprep.subr.mxu0 0.0
        %5225 = vmatpush1.msra.mxu0 0.0
        %5226 = vmatprep.subr.mxu0 0.0
        %5227 = vmatpush1.msra.mxu0 0.0
        %5228 = vmatprep.subr.mxu0 0.0
        %5229 = vmatpush1.msra.mxu0 0.0
        %5230 = vmatprep.subr.mxu0 0.0
        %5231 = vmatpush1.msra.mxu0 0.0
        %5232 = vmatprep.subr.mxu0 0.0
        %5233 = vmatpush1.msra.mxu0 0.0
        %5234 = vmatprep.subr.mxu0 0.0
        %5235 = vmatpush1.msra.mxu0 0.0
        %5236 = vmatprep.subr.mxu0 0.0
        %5237 = vmatpush1.msra.mxu0 0.0
        %5238 = vmatprep.subr.mxu0 0.0
        %5239 = vmatpush1.msra.mxu0 0.0
        %5240 = vmatprep.subr.mxu0 0.0
        %5241 = vmatpush1.msra.mxu0 0.0
        %5242 = vmatprep.subr.mxu0 0.0
        %5243 = vmatpush1.msra.mxu0 0.0
        %5244 = vmatprep.subr.mxu0 0.0
        %5245 = vmatpush1.msra.mxu0 0.0
        %5246 = vmatprep.subr.mxu0 0.0
        %5247 = vmatpush1.msra.mxu0 0.0
        %5248 = vmatprep.subr.mxu0 0.0
        %5249 = vmatpush1.msra.mxu0 0.0
        %5250 = vmatprep.subr.mxu0 0.0
        %5251 = vmatpush1.msra.mxu0 0.0
        %5252 = vmatprep.mubr.f32.mxu0 0.0
        %5253 = vmatmul.mubr.f32.gmra.mrb[0].mxu0 %v5174
        %v5254 = vpop.f32.mrb[0].mxu0
        %v5255 = vadd.f32 %v5155, %v5254
        %v5256 = vpop.f32.mrb[0].mxu0
        %5257 = vmatprep.mubr.f32.mxu0 0.0
        %5258 = vmatmul.mubr.f32.gmra.mrb[0].mxu0 %v5177
        %v5259 = vpop.f32.mrb[0].mxu0
        %v5260 = vadd.f32 %v5160, %v5259
        %v5261 = vpop.f32.mrb[0].mxu0
        %5262 = vmatprep.mubr.f32.mxu0 0.0
        %5263 = vmatmul.mubr.f32.gmra.mrb[0].mxu0 %v5180
        %v5264 = vpop.f32.mrb[0].mxu0
        %v5265 = vadd.f32 %v5165, %v5264
        %v5266 = vpop.f32.mrb[0].mxu0
        %5267 = vmatprep.mubr.f32.mxu0 0.0
        %5268 = vmatmul.mubr.f32.gmra.mrb[0].mxu0 %v5183
        %v5269 = vpop.f32.mrb[0].mxu0
        %v5270 = vadd.f32 %v5170, %v5269
        %v5271 = vpop.f32.mrb[0].mxu0
        %5272 = vdwg.mxu0
        %5274 = vset.pattern.permute.xlu0 13
        %5275 = vperm.xlu0 %5274, %v5060
        %v5276 = vpop.permute.xlu0 %5275
        %5279 = vset.pattern.permute.xlu0 13
        %5280 = vperm.xlu0 %5279, %v5061
        %v5281 = vpop.permute.xlu0 %5280
        %5284 = vset.pattern.permute.xlu0 13
        %5285 = vperm.xlu0 %5284, %v5062
        %v5286 = vpop.permute.xlu0 %5285
        %5289 = vset.pattern.permute.xlu0 13
        %5290 = vperm.xlu0 %5289, %v5063
        %v5291 = vpop.permute.xlu0 %5290
        %v5293 = vadd.f32 %v5255, %v5276
        %v5294 = vadd.f32 %v5260, %v5281
        %v5295 = vadd.f32 %v5265, %v5286
        %v5296 = vadd.f32 %v5270, %v5291
        %5297 = vst.msk [vmem:[#allocation2] sm:$0xff] %vm973, 0.0
        %5298 = vst.msk [vmem:[#allocation2 + $0x8] sm:$0xff] %vm973, 0.0
        %5299 = vst.msk [vmem:[#allocation2 + $0x10] sm:$0xff] %vm973, 0.0
        %5300 = vst.msk [vmem:[#allocation2 + $0x18] sm:$0xff] %vm973, 0.0
        %5305 = vrot.lane.b32.xlu0 %v5293, 1
        %v5306 = vpop.permute.xlu0 %5305
        %5307 = vrot.lane.b32.xlu0 %v5294, 1
        %v5308 = vpop.permute.xlu0 %5307
        %5309 = vrot.lane.b32.xlu0 %v5295, 1
        %v5310 = vpop.permute.xlu0 %5309
        %5311 = vrot.lane.b32.xlu0 %v5296, 1
        %v5312 = vpop.permute.xlu0 %5311
        %5317 = vst.msk [vmem:[#allocation2] sm:$0xff] %vm1746, %v5306
        %5318 = vst.msk [vmem:[#allocation2 + $0x8] sm:$0xff] %vm1746, %v5308
        %5319 = vst.msk [vmem:[#allocation2 + $0x10] sm:$0xff] %vm1746, %v5310
        %5320 = vst.msk [vmem:[#allocation2 + $0x18] sm:$0xff] %vm1746, %v5312
        %5321 = vst.msk [vmem:[#allocation2 + $0x40] sm:$0xff] %vm1749, %v5293
        %5322 = vst.msk [vmem:[#allocation2 + $0x48] sm:$0xff] %vm1749, %v5294
        %5323 = vst.msk [vmem:[#allocation2 + $0x50] sm:$0xff] %vm1749, %v5295
        %5324 = vst.msk [vmem:[#allocation2 + $0x58] sm:$0xff] %vm1749, %v5296
        %5325 = vrot.lane.b32.xlu0 %v5293, 127
        %v5326 = vpop.permute.xlu0 %5325
        %5327 = vrot.lane.b32.xlu0 %v5294, 127
        %v5328 = vpop.permute.xlu0 %5327
        %5329 = vrot.lane.b32.xlu0 %v5295, 127
        %v5330 = vpop.permute.xlu0 %5329
        %5331 = vrot.lane.b32.xlu0 %v5296, 127
        %v5332 = vpop.permute.xlu0 %5331
        %5337 = vst.msk [vmem:[#allocation2 + $0x80] sm:$0xff] %vm1758, %v5326
        %5338 = vst.msk [vmem:[#allocation2 + $0x88] sm:$0xff] %vm1758, %v5328
        %5339 = vst.msk [vmem:[#allocation2 + $0x90] sm:$0xff] %vm1758, %v5330
        %5340 = vst.msk [vmem:[#allocation2 + $0x98] sm:$0xff] %vm1758, %v5332
        %5341 = vst.msk [vmem:[#allocation2 + $0x80] sm:$0xff] %vm1761, 0.0
        %5342 = vst.msk [vmem:[#allocation2 + $0x88] sm:$0xff] %vm1761, 0.0
        %5343 = vst.msk [vmem:[#allocation2 + $0x90] sm:$0xff] %vm1761, 0.0
        %5344 = vst.msk [vmem:[#allocation2 + $0x98] sm:$0xff] %vm1761, 0.0
        %5345 = vst.msk [vmem:[#allocation2 + $0x20] sm:$0xff] %vm973, 0.0
        %5346 = vst.msk [vmem:[#allocation2 + $0x28] sm:$0xff] %vm973, 0.0
        %5347 = vst.msk [vmem:[#allocation2 + $0x30] sm:$0xff] %vm973, 0.0
        %5348 = vst.msk [vmem:[#allocation2 + $0x38] sm:$0xff] %vm973, 0.0
        %5349 = vrot.lane.b32.xlu0 %v2085, 1
        %v5350 = vpop.permute.xlu0 %5349
        %5351 = vrot.lane.b32.xlu0 %v2086, 1
        %v5352 = vpop.permute.xlu0 %5351
        %5353 = vrot.lane.b32.xlu0 %v2087, 1
        %v5354 = vpop.permute.xlu0 %5353
        %5355 = vrot.lane.b32.xlu0 %v2088, 1
        %v5356 = vpop.permute.xlu0 %5355
        %5361 = vst.msk [vmem:[#allocation2 + $0x20] sm:$0xff] %vm1746, %v5350
        %5362 = vst.msk [vmem:[#allocation2 + $0x28] sm:$0xff] %vm1746, %v5352
        %5363 = vst.msk [vmem:[#allocation2 + $0x30] sm:$0xff] %vm1746, %v5354
        %5364 = vst.msk [vmem:[#allocation2 + $0x38] sm:$0xff] %vm1746, %v5356
        %5365 = vst.msk [vmem:[#allocation2 + $0x60] sm:$0xff] %vm1749, %v2085
        %5366 = vst.msk [vmem:[#allocation2 + $0x68] sm:$0xff] %vm1749, %v2086
        %5367 = vst.msk [vmem:[#allocation2 + $0x70] sm:$0xff] %vm1749, %v2087
        %5368 = vst.msk [vmem:[#allocation2 + $0x78] sm:$0xff] %vm1749, %v2088
        %5369 = vrot.lane.b32.xlu0 %v2085, 127
        %v5370 = vpop.permute.xlu0 %5369
        %5371 = vrot.lane.b32.xlu0 %v2086, 127
        %v5372 = vpop.permute.xlu0 %5371
        %5373 = vrot.lane.b32.xlu0 %v2087, 127
        %v5374 = vpop.permute.xlu0 %5373
        %5375 = vrot.lane.b32.xlu0 %v2088, 127
        %v5376 = vpop.permute.xlu0 %5375
        %5381 = vst.msk [vmem:[#allocation2 + $0xa0] sm:$0xff] %vm1758, %v5370
        %5382 = vst.msk [vmem:[#allocation2 + $0xa8] sm:$0xff] %vm1758, %v5372
        %5383 = vst.msk [vmem:[#allocation2 + $0xb0] sm:$0xff] %vm1758, %v5374
        %5384 = vst.msk [vmem:[#allocation2 + $0xb8] sm:$0xff] %vm1758, %v5376
        %5385 = vst.msk [vmem:[#allocation2 + $0xa0] sm:$0xff] %vm1761, 0.0
        %5386 = vst.msk [vmem:[#allocation2 + $0xa8] sm:$0xff] %vm1761, 0.0
        %5387 = vst.msk [vmem:[#allocation2 + $0xb0] sm:$0xff] %vm1761, 0.0
        %5388 = vst.msk [vmem:[#allocation2 + $0xb8] sm:$0xff] %vm1761, 0.0
        %v5389 = vld [vmem:[#allocation19] sm:$0xff]
        %v5390 = vld [vmem:[#allocation19 + $0x8] sm:$0xff]
        %v5391 = vld [vmem:[#allocation19 + $0x10] sm:$0xff]
        %v5392 = vld [vmem:[#allocation19 + $0x18] sm:$0xff]
        %v5393 = vld [vmem:[#allocation19 + $0x20] sm:$0xff]
        %v5394 = vld [vmem:[#allocation19 + $0x28] sm:$0xff]
        %v5395 = vld [vmem:[#allocation19 + $0x30] sm:$0xff]
        %v5396 = vld [vmem:[#allocation19 + $0x38] sm:$0xff]
        %v5397 = vld [vmem:[#allocation2] sm:$0xff]
        %v5398 = vld [vmem:[#allocation2 + $0x8] sm:$0xff]
        %v5399 = vld [vmem:[#allocation2 + $0x10] sm:$0xff]
        %v5400 = vld [vmem:[#allocation2 + $0x18] sm:$0xff]
        %v5401 = vld [vmem:[#allocation2 + $0x20] sm:$0xff]
        %v5402 = vld [vmem:[#allocation2 + $0x28] sm:$0xff]
        %v5403 = vld [vmem:[#allocation2 + $0x30] sm:$0xff]
        %v5404 = vld [vmem:[#allocation2 + $0x38] sm:$0xff]
        %v5405 = vld [vmem:[#allocation2 + $0x40] sm:$0xff]
        %v5406 = vld [vmem:[#allocation2 + $0x48] sm:$0xff]
        %v5407 = vld [vmem:[#allocation2 + $0x50] sm:$0xff]
        %v5408 = vld [vmem:[#allocation2 + $0x58] sm:$0xff]
        %v5409 = vld [vmem:[#allocation2 + $0x60] sm:$0xff]
        %v5410 = vld [vmem:[#allocation2 + $0x68] sm:$0xff]
        %v5411 = vld [vmem:[#allocation2 + $0x70] sm:$0xff]
        %v5412 = vld [vmem:[#allocation2 + $0x78] sm:$0xff]
        %v5413 = vld [vmem:[#allocation2 + $0x80] sm:$0xff]
        %v5414 = vld [vmem:[#allocation2 + $0x88] sm:$0xff]
        %v5415 = vld [vmem:[#allocation2 + $0x90] sm:$0xff]
        %v5416 = vld [vmem:[#allocation2 + $0x98] sm:$0xff]
        %v5417 = vld [vmem:[#allocation2 + $0xa0] sm:$0xff]
        %v5418 = vld [vmem:[#allocation2 + $0xa8] sm:$0xff]
        %v5419 = vld [vmem:[#allocation2 + $0xb0] sm:$0xff]
        %v5420 = vld [vmem:[#allocation2 + $0xb8] sm:$0xff]
        %v5421 = vld [vmem:[%s24] sm:$0xff]
        %v5422 = vld [vmem:[%s24 + $0x8] sm:$0xff]
        %v5423 = vld [vmem:[%s24 + $0x10] sm:$0xff]
        %v5424 = vld [vmem:[%s24 + $0x18] sm:$0xff]
        %5426 = vset.pattern.permute.xlu0 14
        %5427 = vperm.xlu0 %5426, %v5421
        %v5428 = vpop.permute.xlu0 %5427
        %5431 = vset.pattern.permute.xlu0 14
        %5432 = vperm.xlu0 %5431, %v5422
        %v5433 = vpop.permute.xlu0 %5432
        %5436 = vset.pattern.permute.xlu0 14
        %5437 = vperm.xlu0 %5436, %v5423
        %v5438 = vpop.permute.xlu0 %5437
        %5441 = vset.pattern.permute.xlu0 14
        %5442 = vperm.xlu0 %5441, %v5424
        %v5443 = vpop.permute.xlu0 %5442
        %v5446 = vsel %vm2721, %v5390, 0
        %v5449 = vsel %vm2721, %v5392, 0
        %v5452 = vsel %vm2721, %v5394, 0
        %v5455 = vsel %vm2721, %v5396, 0
        %5457 = vmatprep.subr.mxu0 0.0
        %5458 = vmatpush1.msra.mxu0 %v5397
        %5459 = vmatprep.subr.mxu0 0.0
        %5460 = vmatpush1.msra.mxu0 %v5398
        %5461 = vmatprep.subr.mxu0 0.0
        %5462 = vmatpush1.msra.mxu0 %v5399
        %5463 = vmatprep.subr.mxu0 0.0
        %5464 = vmatpush1.msra.mxu0 %v5400
        %5465 = vmatprep.subr.mxu0 0.0
        %5466 = vmatpush1.msra.mxu0 %v5401
        %5467 = vmatprep.subr.mxu0 0.0
        %5468 = vmatpush1.msra.mxu0 %v5402
        %5469 = vmatprep.subr.mxu0 0.0
        %5470 = vmatpush1.msra.mxu0 %v5403
        %5471 = vmatprep.subr.mxu0 0.0
        %5472 = vmatpush1.msra.mxu0 %v5404
        %5473 = vmatprep.subr.mxu0 0.0
        %5474 = vmatpush1.msra.mxu0 %v5405
        %5475 = vmatprep.subr.mxu0 0.0
        %5476 = vmatpush1.msra.mxu0 %v5406
        %5477 = vmatprep.subr.mxu0 0.0
        %5478 = vmatpush1.msra.mxu0 %v5407
        %5479 = vmatprep.subr.mxu0 0.0
        %5480 = vmatpush1.msra.mxu0 %v5408
        %5481 = vmatprep.subr.mxu0 0.0
        %5482 = vmatpush1.msra.mxu0 %v5409
        %5483 = vmatprep.subr.mxu0 0.0
        %5484 = vmatpush1.msra.mxu0 %v5410
        %5485 = vmatprep.subr.mxu0 0.0
        %5486 = vmatpush1.msra.mxu0 %v5411
        %5487 = vmatprep.subr.mxu0 0.0
        %5488 = vmatpush1.msra.mxu0 %v5412
        %5489 = vmatprep.subr.mxu0 0.0
        %5490 = vmatpush1.msra.mxu0 %v5413
        %5491 = vmatprep.subr.mxu0 0.0
        %5492 = vmatpush1.msra.mxu0 %v5414
        %5493 = vmatprep.subr.mxu0 0.0
        %5494 = vmatpush1.msra.mxu0 %v5415
        %5495 = vmatprep.subr.mxu0 0.0
        %5496 = vmatpush1.msra.mxu0 %v5416
        %5497 = vmatprep.subr.mxu0 0.0
        %5498 = vmatpush1.msra.mxu0 %v5417
        %5499 = vmatprep.subr.mxu0 0.0
        %5500 = vmatpush1.msra.mxu0 %v5418
        %5501 = vmatprep.subr.mxu0 0.0
        %5502 = vmatpush1.msra.mxu0 %v5419
        %5503 = vmatprep.subr.mxu0 0.0
        %5504 = vmatpush1.msra.mxu0 %v5420
        %5505 = vmatprep.subr.mxu0 0.0
        %5506 = vmatpush1.msra.mxu0 0.0
        %5507 = vmatprep.subr.mxu0 0.0
        %5508 = vmatpush1.msra.mxu0 0.0
        %5509 = vmatprep.subr.mxu0 0.0
        %5510 = vmatpush1.msra.mxu0 0.0
        %5511 = vmatprep.subr.mxu0 0.0
        %5512 = vmatpush1.msra.mxu0 0.0
        %5513 = vmatprep.subr.mxu0 0.0
        %5514 = vmatpush1.msra.mxu0 0.0
        %5515 = vmatprep.subr.mxu0 0.0
        %5516 = vmatpush1.msra.mxu0 0.0
        %5517 = vmatprep.subr.mxu0 0.0
        %5518 = vmatpush1.msra.mxu0 0.0
        %5519 = vmatprep.subr.mxu0 0.0
        %5520 = vmatpush1.msra.mxu0 0.0
        %5521 = vmatprep.mubr.f32.mxu0 %v5446
        %5522 = vmatmul.mubr.f32.gmra.mrb[0].mxu0 %v5389
        %v5523 = vpop.f32.mrb[0].mxu0
        %v5524 = vadd.f32 %v5428, %v5523
        %v5525 = vpop.f32.mrb[0].mxu0
        %5526 = vmatprep.mubr.f32.mxu0 %v5449
        %5527 = vmatmul.mubr.f32.gmra.mrb[0].mxu0 %v5391
        %v5528 = vpop.f32.mrb[0].mxu0
        %v5529 = vadd.f32 %v5433, %v5528
        %v5530 = vpop.f32.mrb[0].mxu0
        %5531 = vmatprep.mubr.f32.mxu0 %v5452
        %5532 = vmatmul.mubr.f32.gmra.mrb[0].mxu0 %v5393
        %v5533 = vpop.f32.mrb[0].mxu0
        %v5534 = vadd.f32 %v5438, %v5533
        %v5535 = vpop.f32.mrb[0].mxu0
        %5536 = vmatprep.mubr.f32.mxu0 %v5455
        %5537 = vmatmul.mubr.f32.gmra.mrb[0].mxu0 %v5395
        %v5538 = vpop.f32.mrb[0].mxu0
        %v5539 = vadd.f32 %v5443, %v5538
        %v5540 = vpop.f32.mrb[0].mxu0
        %5541 = vdwg.mxu0
        %v5542 = vtanh.pop %v5524
        %v5543 = vtanh.pop %v5529
        %v5544 = vtanh.pop %v5534
        %v5545 = vtanh.pop %v5539
        %5546 = vst.msk [vmem:[#allocation2] sm:$0xff] %vm973, 0.0
        %5547 = vst.msk [vmem:[#allocation2 + $0x8] sm:$0xff] %vm973, 0.0
        %5548 = vst.msk [vmem:[#allocation2 + $0x10] sm:$0xff] %vm973, 0.0
        %5549 = vst.msk [vmem:[#allocation2 + $0x18] sm:$0xff] %vm973, 0.0
        %5554 = vrot.lane.b32.xlu0 %v5542, 1
        %v5555 = vpop.permute.xlu0 %5554
        %5556 = vrot.lane.b32.xlu0 %v5543, 1
        %v5557 = vpop.permute.xlu0 %5556
        %5558 = vrot.lane.b32.xlu0 %v5544, 1
        %v5559 = vpop.permute.xlu0 %5558
        %5560 = vrot.lane.b32.xlu0 %v5545, 1
        %v5561 = vpop.permute.xlu0 %5560
        %5566 = vst.msk [vmem:[#allocation2] sm:$0xff] %vm1746, %v5555
        %5567 = vst.msk [vmem:[#allocation2 + $0x8] sm:$0xff] %vm1746, %v5557
        %5568 = vst.msk [vmem:[#allocation2 + $0x10] sm:$0xff] %vm1746, %v5559
        %5569 = vst.msk [vmem:[#allocation2 + $0x18] sm:$0xff] %vm1746, %v5561
        %5570 = vst.msk [vmem:[#allocation2 + $0x20] sm:$0xff] %vm1749, %v5542
        %5571 = vst.msk [vmem:[#allocation2 + $0x28] sm:$0xff] %vm1749, %v5543
        %5572 = vst.msk [vmem:[#allocation2 + $0x30] sm:$0xff] %vm1749, %v5544
        %5573 = vst.msk [vmem:[#allocation2 + $0x38] sm:$0xff] %vm1749, %v5545
        %5574 = vrot.lane.b32.xlu0 %v5542, 127
        %v5575 = vpop.permute.xlu0 %5574
        %5576 = vrot.lane.b32.xlu0 %v5543, 127
        %v5577 = vpop.permute.xlu0 %5576
        %5578 = vrot.lane.b32.xlu0 %v5544, 127
        %v5579 = vpop.permute.xlu0 %5578
        %5580 = vrot.lane.b32.xlu0 %v5545, 127
        %v5581 = vpop.permute.xlu0 %5580
        %5586 = vst.msk [vmem:[#allocation2 + $0x40] sm:$0xff] %vm1758, %v5575
        %5587 = vst.msk [vmem:[#allocation2 + $0x48] sm:$0xff] %vm1758, %v5577
        %5588 = vst.msk [vmem:[#allocation2 + $0x50] sm:$0xff] %vm1758, %v5579
        %5589 = vst.msk [vmem:[#allocation2 + $0x58] sm:$0xff] %vm1758, %v5581
        %5590 = vst.msk [vmem:[#allocation2 + $0x40] sm:$0xff] %vm1761, 0.0
        %5591 = vst.msk [vmem:[#allocation2 + $0x48] sm:$0xff] %vm1761, 0.0
        %5592 = vst.msk [vmem:[#allocation2 + $0x50] sm:$0xff] %vm1761, 0.0
        %5593 = vst.msk [vmem:[#allocation2 + $0x58] sm:$0xff] %vm1761, 0.0
        %v5594 = vld [vmem:[%s16] sm:$0xff]
        %v5595 = vld [vmem:[%s16 + $0x8] sm:$0xff]
        %v5596 = vld [vmem:[%s16 + $0x10] sm:$0xff]
        %v5597 = vld [vmem:[%s16 + $0x18] sm:$0xff]
        %v5598 = vld [vmem:[#allocation2] sm:$0xff]
        %v5599 = vld [vmem:[#allocation2 + $0x8] sm:$0xff]
        %v5600 = vld [vmem:[#allocation2 + $0x10] sm:$0xff]
        %v5601 = vld [vmem:[#allocation2 + $0x18] sm:$0xff]
        %v5602 = vld [vmem:[#allocation2 + $0x20] sm:$0xff]
        %v5603 = vld [vmem:[#allocation2 + $0x28] sm:$0xff]
        %v5604 = vld [vmem:[#allocation2 + $0x30] sm:$0xff]
        %v5605 = vld [vmem:[#allocation2 + $0x38] sm:$0xff]
        %v5606 = vld [vmem:[#allocation2 + $0x40] sm:$0xff]
        %v5607 = vld [vmem:[#allocation2 + $0x48] sm:$0xff]
        %v5608 = vld [vmem:[#allocation2 + $0x50] sm:$0xff]
        %v5609 = vld [vmem:[#allocation2 + $0x58] sm:$0xff]
        %v5610 = vld [vmem:[%s24] sm:$0xff]
        %v5611 = vld [vmem:[%s24 + $0x8] sm:$0xff]
        %v5612 = vld [vmem:[%s24 + $0x10] sm:$0xff]
        %v5613 = vld [vmem:[%s24 + $0x18] sm:$0xff]
        %5615 = vset.pattern.permute.xlu0 15
        %5616 = vperm.xlu0 %5615, %v5610
        %v5617 = vpop.permute.xlu0 %5616
        %5620 = vset.pattern.permute.xlu0 15
        %5621 = vperm.xlu0 %5620, %v5611
        %v5622 = vpop.permute.xlu0 %5621
        %5625 = vset.pattern.permute.xlu0 15
        %5626 = vperm.xlu0 %5625, %v5612
        %v5627 = vpop.permute.xlu0 %5626
        %5630 = vset.pattern.permute.xlu0 15
        %5631 = vperm.xlu0 %5630, %v5613
        %v5632 = vpop.permute.xlu0 %5631
        %v5635 = vsel %vm1987, %v5594, 0
        %v5638 = vsel %vm1987, %v5595, 0
        %v5641 = vsel %vm1987, %v5596, 0
        %v5644 = vsel %vm1987, %v5597, 0
        %5646 = vmatprep.subr.mxu0 0.0
        %5647 = vmatpush1.msra.mxu0 %v5598
        %5648 = vmatprep.subr.mxu0 0.0
        %5649 = vmatpush1.msra.mxu0 %v5599
        %5650 = vmatprep.subr.mxu0 0.0
        %5651 = vmatpush1.msra.mxu0 %v5600
        %5652 = vmatprep.subr.mxu0 0.0
        %5653 = vmatpush1.msra.mxu0 %v5601
        %5654 = vmatprep.subr.mxu0 0.0
        %5655 = vmatpush1.msra.mxu0 %v5602
        %5656 = vmatprep.subr.mxu0 0.0
        %5657 = vmatpush1.msra.mxu0 %v5603
        %5658 = vmatprep.subr.mxu0 0.0
        %5659 = vmatpush1.msra.mxu0 %v5604
        %5660 = vmatprep.subr.mxu0 0.0
        %5661 = vmatpush1.msra.mxu0 %v5605
        %5662 = vmatprep.subr.mxu0 0.0
        %5663 = vmatpush1.msra.mxu0 %v5606
        %5664 = vmatprep.subr.mxu0 0.0
        %5665 = vmatpush1.msra.mxu0 %v5607
        %5666 = vmatprep.subr.mxu0 0.0
        %5667 = vmatpush1.msra.mxu0 %v5608
        %5668 = vmatprep.subr.mxu0 0.0
        %5669 = vmatpush1.msra.mxu0 %v5609
        %5670 = vmatprep.subr.mxu0 0.0
        %5671 = vmatpush1.msra.mxu0 0.0
        %5672 = vmatprep.subr.mxu0 0.0
        %5673 = vmatpush1.msra.mxu0 0.0
        %5674 = vmatprep.subr.mxu0 0.0
        %5675 = vmatpush1.msra.mxu0 0.0
        %5676 = vmatprep.subr.mxu0 0.0
        %5677 = vmatpush1.msra.mxu0 0.0
        %5678 = vmatprep.subr.mxu0 0.0
        %5679 = vmatpush1.msra.mxu0 0.0
        %5680 = vmatprep.subr.mxu0 0.0
        %5681 = vmatpush1.msra.mxu0 0.0
        %5682 = vmatprep.subr.mxu0 0.0
        %5683 = vmatpush1.msra.mxu0 0.0
        %5684 = vmatprep.subr.mxu0 0.0
        %5685 = vmatpush1.msra.mxu0 0.0
        %5686 = vmatprep.subr.mxu0 0.0
        %5687 = vmatpush1.msra.mxu0 0.0
        %5688 = vmatprep.subr.mxu0 0.0
        %5689 = vmatpush1.msra.mxu0 0.0
        %5690 = vmatprep.subr.mxu0 0.0
        %5691 = vmatpush1.msra.mxu0 0.0
        %5692 = vmatprep.subr.mxu0 0.0
        %5693 = vmatpush1.msra.mxu0 0.0
        %5694 = vmatprep.subr.mxu0 0.0
        %5695 = vmatpush1.msra.mxu0 0.0
        %5696 = vmatprep.subr.mxu0 0.0
        %5697 = vmatpush1.msra.mxu0 0.0
        %5698 = vmatprep.subr.mxu0 0.0
        %5699 = vmatpush1.msra.mxu0 0.0
        %5700 = vmatprep.subr.mxu0 0.0
        %5701 = vmatpush1.msra.mxu0 0.0
        %5702 = vmatprep.subr.mxu0 0.0
        %5703 = vmatpush1.msra.mxu0 0.0
        %5704 = vmatprep.subr.mxu0 0.0
        %5705 = vmatpush1.msra.mxu0 0.0
        %5706 = vmatprep.subr.mxu0 0.0
        %5707 = vmatpush1.msra.mxu0 0.0
        %5708 = vmatprep.subr.mxu0 0.0
        %5709 = vmatpush1.msra.mxu0 0.0
        %5710 = vmatprep.mubr.f32.mxu0 0.0
        %5711 = vmatmul.mubr.f32.gmra.mrb[0].mxu0 %v5635
        %v5712 = vpop.f32.mrb[0].mxu0
        %v5713 = vadd.f32 %v5617, %v5712
        %v5714 = vpop.f32.mrb[0].mxu0
        %5715 = vmatprep.mubr.f32.mxu0 0.0
        %5716 = vmatmul.mubr.f32.gmra.mrb[0].mxu0 %v5638
        %v5717 = vpop.f32.mrb[0].mxu0
        %v5718 = vadd.f32 %v5622, %v5717
        %v5719 = vpop.f32.mrb[0].mxu0
        %5720 = vmatprep.mubr.f32.mxu0 0.0
        %5721 = vmatmul.mubr.f32.gmra.mrb[0].mxu0 %v5641
        %v5722 = vpop.f32.mrb[0].mxu0
        %v5723 = vadd.f32 %v5627, %v5722
        %v5724 = vpop.f32.mrb[0].mxu0
        %5725 = vmatprep.mubr.f32.mxu0 0.0
        %5726 = vmatmul.mubr.f32.gmra.mrb[0].mxu0 %v5644
        %v5727 = vpop.f32.mrb[0].mxu0
        %v5728 = vadd.f32 %v5632, %v5727
        %v5729 = vpop.f32.mrb[0].mxu0
        %5730 = vdwg.mxu0
        %v5731 = vtanh.pop %v5713
        %v5732 = vtanh.pop %v5718
        %v5733 = vtanh.pop %v5723
        %v5734 = vtanh.pop %v5728
        %v5735 = vld [vmem:[#allocation20] sm:$0xff]
        %v5736 = vld [vmem:[#allocation20 + $0x8] sm:$0xff]
        %v5737 = vld [vmem:[#allocation20 + $0x10] sm:$0xff]
        %v5738 = vld [vmem:[#allocation20 + $0x18] sm:$0xff]
        %vm5739 = vcmask 261120
        %v5741 = vsel %vm5739, %v5735, 0
        %v5744 = vsel %vm5739, %v5736, 0
        %v5747 = vsel %vm5739, %v5737, 0
        %v5750 = vsel %vm5739, %v5738, 0
        %5752 = vmatprep.subr.mxu0 0.0
        %5753 = vmatpush1.msra.mxu0 %v5731
        %5754 = vmatprep.subr.mxu0 0.0
        %5755 = vmatpush1.msra.mxu0 %v5732
        %5756 = vmatprep.subr.mxu0 0.0
        %5757 = vmatpush1.msra.mxu0 %v5733
        %5758 = vmatprep.subr.mxu0 0.0
        %5759 = vmatpush1.msra.mxu0 %v5734
        %5760 = vmatprep.subr.mxu0 0.0
        %5761 = vmatpush1.msra.mxu0 0.0
        %5762 = vmatprep.subr.mxu0 0.0
        %5763 = vmatpush1.msra.mxu0 0.0
        %5764 = vmatprep.subr.mxu0 0.0
        %5765 = vmatpush1.msra.mxu0 0.0
        %5766 = vmatprep.subr.mxu0 0.0
        %5767 = vmatpush1.msra.mxu0 0.0
        %5768 = vmatprep.subr.mxu0 0.0
        %5769 = vmatpush1.msra.mxu0 0.0
        %5770 = vmatprep.subr.mxu0 0.0
        %5771 = vmatpush1.msra.mxu0 0.0
        %5772 = vmatprep.subr.mxu0 0.0
        %5773 = vmatpush1.msra.mxu0 0.0
        %5774 = vmatprep.subr.mxu0 0.0
        %5775 = vmatpush1.msra.mxu0 0.0
        %5776 = vmatprep.subr.mxu0 0.0
        %5777 = vmatpush1.msra.mxu0 0.0
        %5778 = vmatprep.subr.mxu0 0.0
        %5779 = vmatpush1.msra.mxu0 0.0
        %5780 = vmatprep.subr.mxu0 0.0
        %5781 = vmatpush1.msra.mxu0 0.0
        %5782 = vmatprep.subr.mxu0 0.0
        %5783 = vmatpush1.msra.mxu0 0.0
        %5784 = vmatprep.subr.mxu0 0.0
        %5785 = vmatpush1.msra.mxu0 0.0
        %5786 = vmatprep.subr.mxu0 0.0
        %5787 = vmatpush1.msra.mxu0 0.0
        %5788 = vmatprep.subr.mxu0 0.0
        %5789 = vmatpush1.msra.mxu0 0.0
        %5790 = vmatprep.subr.mxu0 0.0
        %5791 = vmatpush1.msra.mxu0 0.0
        %5792 = vmatprep.subr.mxu0 0.0
        %5793 = vmatpush1.msra.mxu0 0.0
        %5794 = vmatprep.subr.mxu0 0.0
        %5795 = vmatpush1.msra.mxu0 0.0
        %5796 = vmatprep.subr.mxu0 0.0
        %5797 = vmatpush1.msra.mxu0 0.0
        %5798 = vmatprep.subr.mxu0 0.0
        %5799 = vmatpush1.msra.mxu0 0.0
        %5800 = vmatprep.subr.mxu0 0.0
        %5801 = vmatpush1.msra.mxu0 0.0
        %5802 = vmatprep.subr.mxu0 0.0
        %5803 = vmatpush1.msra.mxu0 0.0
        %5804 = vmatprep.subr.mxu0 0.0
        %5805 = vmatpush1.msra.mxu0 0.0
        %5806 = vmatprep.subr.mxu0 0.0
        %5807 = vmatpush1.msra.mxu0 0.0
        %5808 = vmatprep.subr.mxu0 0.0
        %5809 = vmatpush1.msra.mxu0 0.0
        %5810 = vmatprep.subr.mxu0 0.0
        %5811 = vmatpush1.msra.mxu0 0.0
        %5812 = vmatprep.subr.mxu0 0.0
        %5813 = vmatpush1.msra.mxu0 0.0
        %5814 = vmatprep.subr.mxu0 0.0
        %5815 = vmatpush1.msra.mxu0 0.0
        %5816 = vmatprep.mubr.f32.mxu0 0.0
        %5817 = vmatmul.mubr.f32.gmra.mrb[0].mxu0 %v5741
        %v5818 = vpop.f32.mrb[0].mxu0
        %v5819 = vadd.f32 0.0, %v5818
        %v5820 = vpop.f32.mrb[0].mxu0
        %5821 = vmatprep.mubr.f32.mxu0 0.0
        %5822 = vmatmul.mubr.f32.gmra.mrb[0].mxu0 %v5744
        %v5823 = vpop.f32.mrb[0].mxu0
        %v5824 = vadd.f32 0.0, %v5823
        %v5825 = vpop.f32.mrb[0].mxu0
        %5826 = vmatprep.mubr.f32.mxu0 0.0
        %5827 = vmatmul.mubr.f32.gmra.mrb[0].mxu0 %v5747
        %v5828 = vpop.f32.mrb[0].mxu0
        %v5829 = vadd.f32 0.0, %v5828
        %v5830 = vpop.f32.mrb[0].mxu0
        %5831 = vmatprep.mubr.f32.mxu0 0.0
        %5832 = vmatmul.mubr.f32.gmra.mrb[0].mxu0 %v5750
        %v5833 = vpop.f32.mrb[0].mxu0
        %v5834 = vadd.f32 0.0, %v5833
        %v5835 = vpop.f32.mrb[0].mxu0
        %5836 = vdwg.mxu0
        %v5837 = vld [vmem:[%s24] sm:$0xff]
        %v5838 = vld [vmem:[%s24 + $0x8] sm:$0xff]
        %v5840 = vsel %vm1749, %v5829, 0
        %v5843 = vsel %vm1749, %v5834, 0
        %v5845 = vsel %vm2101, %v5071, 0
        %5847 = vmatprep.subr.mxu0 0.0
        %5848 = vmatpush1.msra.mxu0 %v5845
        %5849 = vmatprep.subr.mxu0 0.0
        %5850 = vmatpush1.msra.mxu0 0.0
        %5851 = vmatprep.subr.mxu0 0.0
        %5852 = vmatpush1.msra.mxu0 0.0
        %5853 = vmatprep.subr.mxu0 0.0
        %5854 = vmatpush1.msra.mxu0 0.0
        %5855 = vmatprep.subr.mxu0 0.0
        %5856 = vmatpush1.msra.mxu0 0.0
        %5857 = vmatprep.subr.mxu0 0.0
        %5858 = vmatpush1.msra.mxu0 0.0
        %5859 = vmatprep.subr.mxu0 0.0
        %5860 = vmatpush1.msra.mxu0 0.0
        %5861 = vmatprep.subr.mxu0 0.0
        %5862 = vmatpush1.msra.mxu0 0.0
        %5863 = vmatprep.subr.mxu0 0.0
        %5864 = vmatpush1.msra.mxu0 0.0
        %5865 = vmatprep.subr.mxu0 0.0
        %5866 = vmatpush1.msra.mxu0 0.0
        %5867 = vmatprep.subr.mxu0 0.0
        %5868 = vmatpush1.msra.mxu0 0.0
        %5869 = vmatprep.subr.mxu0 0.0
        %5870 = vmatpush1.msra.mxu0 0.0
        %5871 = vmatprep.subr.mxu0 0.0
        %5872 = vmatpush1.msra.mxu0 0.0
        %5873 = vmatprep.subr.mxu0 0.0
        %5874 = vmatpush1.msra.mxu0 0.0
        %5875 = vmatprep.subr.mxu0 0.0
        %5876 = vmatpush1.msra.mxu0 0.0
        %5877 = vmatprep.subr.mxu0 0.0
        %5878 = vmatpush1.msra.mxu0 0.0
        %5879 = vmatprep.subr.mxu0 0.0
        %5880 = vmatpush1.msra.mxu0 0.0
        %5881 = vmatprep.subr.mxu0 0.0
        %5882 = vmatpush1.msra.mxu0 0.0
        %5883 = vmatprep.subr.mxu0 0.0
        %5884 = vmatpush1.msra.mxu0 0.0
        %5885 = vmatprep.subr.mxu0 0.0
        %5886 = vmatpush1.msra.mxu0 0.0
        %5887 = vmatprep.subr.mxu0 0.0
        %5888 = vmatpush1.msra.mxu0 0.0
        %5889 = vmatprep.subr.mxu0 0.0
        %5890 = vmatpush1.msra.mxu0 0.0
        %5891 = vmatprep.subr.mxu0 0.0
        %5892 = vmatpush1.msra.mxu0 0.0
        %5893 = vmatprep.subr.mxu0 0.0
        %5894 = vmatpush1.msra.mxu0 0.0
        %5895 = vmatprep.subr.mxu0 0.0
        %5896 = vmatpush1.msra.mxu0 0.0
        %5897 = vmatprep.subr.mxu0 0.0
        %5898 = vmatpush1.msra.mxu0 0.0
        %5899 = vmatprep.subr.mxu0 0.0
        %5900 = vmatpush1.msra.mxu0 0.0
        %5901 = vmatprep.subr.mxu0 0.0
        %5902 = vmatpush1.msra.mxu0 0.0
        %5903 = vmatprep.subr.mxu0 0.0
        %5904 = vmatpush1.msra.mxu0 0.0
        %5905 = vmatprep.subr.mxu0 0.0
        %5906 = vmatpush1.msra.mxu0 0.0
        %5907 = vmatprep.subr.mxu0 0.0
        %5908 = vmatpush1.msra.mxu0 0.0
        %5909 = vmatprep.subr.mxu0 0.0
        %5910 = vmatpush1.msra.mxu0 0.0
        %5911 = vmatprep.mubr.f32.mxu0 0.0
        %5912 = vmatmul.mubr.f32.gmra.mrb[0].mxu0 %v5840
        %v5913 = vpop.f32.mrb[0].mxu0
        %v5914 = vadd.f32 0.0, %v5913
        %v5915 = vpop.f32.mrb[0].mxu0
        %5916 = vmatprep.mubr.f32.mxu0 0.0
        %5917 = vmatmul.mubr.f32.gmra.mrb[0].mxu0 %v5843
        %v5918 = vpop.f32.mrb[0].mxu0
        %v5919 = vadd.f32 0.0, %v5918
        %v5920 = vpop.f32.mrb[0].mxu0
        %5921 = vdwg.mxu0
        %v5923 = vsel %vm1749, %v5819, 0
        %v5926 = vsel %vm1749, %v5824, 0
        %v5928 = vsel %vm2101, %v5067, 0
        %5930 = vmatprep.subr.mxu0 0.0
        %5931 = vmatpush1.msra.mxu0 %v5928
        %5932 = vmatprep.subr.mxu0 0.0
        %5933 = vmatpush1.msra.mxu0 0.0
        %5934 = vmatprep.subr.mxu0 0.0
        %5935 = vmatpush1.msra.mxu0 0.0
        %5936 = vmatprep.subr.mxu0 0.0
        %5937 = vmatpush1.msra.mxu0 0.0
        %5938 = vmatprep.subr.mxu0 0.0
        %5939 = vmatpush1.msra.mxu0 0.0
        %5940 = vmatprep.subr.mxu0 0.0
        %5941 = vmatpush1.msra.mxu0 0.0
        %5942 = vmatprep.subr.mxu0 0.0
        %5943 = vmatpush1.msra.mxu0 0.0
        %5944 = vmatprep.subr.mxu0 0.0
        %5945 = vmatpush1.msra.mxu0 0.0
        %5946 = vmatprep.subr.mxu0 0.0
        %5947 = vmatpush1.msra.mxu0 0.0
        %5948 = vmatprep.subr.mxu0 0.0
        %5949 = vmatpush1.msra.mxu0 0.0
        %5950 = vmatprep.subr.mxu0 0.0
        %5951 = vmatpush1.msra.mxu0 0.0
        %5952 = vmatprep.subr.mxu0 0.0
        %5953 = vmatpush1.msra.mxu0 0.0
        %5954 = vmatprep.subr.mxu0 0.0
        %5955 = vmatpush1.msra.mxu0 0.0
        %5956 = vmatprep.subr.mxu0 0.0
        %5957 = vmatpush1.msra.mxu0 0.0
        %5958 = vmatprep.subr.mxu0 0.0
        %5959 = vmatpush1.msra.mxu0 0.0
        %5960 = vmatprep.subr.mxu0 0.0
        %5961 = vmatpush1.msra.mxu0 0.0
        %5962 = vmatprep.subr.mxu0 0.0
        %5963 = vmatpush1.msra.mxu0 0.0
        %5964 = vmatprep.subr.mxu0 0.0
        %5965 = vmatpush1.msra.mxu0 0.0
        %5966 = vmatprep.subr.mxu0 0.0
        %5967 = vmatpush1.msra.mxu0 0.0
        %5968 = vmatprep.subr.mxu0 0.0
        %5969 = vmatpush1.msra.mxu0 0.0
        %5970 = vmatprep.subr.mxu0 0.0
        %5971 = vmatpush1.msra.mxu0 0.0
        %5972 = vmatprep.subr.mxu0 0.0
        %5973 = vmatpush1.msra.mxu0 0.0
        %5974 = vmatprep.subr.mxu0 0.0
        %5975 = vmatpush1.msra.mxu0 0.0
        %5976 = vmatprep.subr.mxu0 0.0
        %5977 = vmatpush1.msra.mxu0 0.0
        %5978 = vmatprep.subr.mxu0 0.0
        %5979 = vmatpush1.msra.mxu0 0.0
        %5980 = vmatprep.subr.mxu0 0.0
        %5981 = vmatpush1.msra.mxu0 0.0
        %5982 = vmatprep.subr.mxu0 0.0
        %5983 = vmatpush1.msra.mxu0 0.0
        %5984 = vmatprep.subr.mxu0 0.0
        %5985 = vmatpush1.msra.mxu0 0.0
        %5986 = vmatprep.subr.mxu0 0.0
        %5987 = vmatpush1.msra.mxu0 0.0
        %5988 = vmatprep.subr.mxu0 0.0
        %5989 = vmatpush1.msra.mxu0 0.0
        %5990 = vmatprep.subr.mxu0 0.0
        %5991 = vmatpush1.msra.mxu0 0.0
        %5992 = vmatprep.subr.mxu0 0.0
        %5993 = vmatpush1.msra.mxu0 0.0
        %5994 = vmatprep.mubr.f32.mxu0 0.0
        %5995 = vmatmul.mubr.f32.gmra.mrb[0].mxu0 %v5923
        %v5996 = vpop.f32.mrb[0].mxu0
        %v5997 = vadd.f32 %v5914, %v5996
        %v5998 = vpop.f32.mrb[0].mxu0
        %5999 = vmatprep.mubr.f32.mxu0 0.0
        %6000 = vmatmul.mubr.f32.gmra.mrb[0].mxu0 %v5926
        %v6001 = vpop.f32.mrb[0].mxu0
        %v6002 = vadd.f32 %v5919, %v6001
        %v6003 = vpop.f32.mrb[0].mxu0
        %6004 = vdwg.mxu0
        %6006 = vset.pattern.permute.xlu0 16
        %6007 = vperm.xlu0 %6006, %v5837
        %v6008 = vpop.permute.xlu0 %6007
        %6011 = vset.pattern.permute.xlu0 16
        %6012 = vperm.xlu0 %6011, %v5838
        %v6013 = vpop.permute.xlu0 %6012
        %v6015 = vadd.f32 %v5997, %v6008
        %v6016 = vadd.f32 %v6002, %v6013
        %6017 = vst.msk [vmem:[#allocation2] sm:$0xff] %vm973, 0.0
        %6018 = vst.msk [vmem:[#allocation2 + $0x8] sm:$0xff] %vm973, 0.0
        %6021 = vrot.lane.b32.xlu0 %v6015, 1
        %v6022 = vpop.permute.xlu0 %6021
        %6023 = vrot.lane.b32.xlu0 %v6016, 1
        %v6024 = vpop.permute.xlu0 %6023
        %6027 = vst.msk [vmem:[#allocation2] sm:$0xff] %vm1339, %v6022
        %6028 = vst.msk [vmem:[#allocation2 + $0x8] sm:$0xff] %vm1339, %v6024
        %6029 = vst.msk [vmem:[#allocation2 + $0x20] sm:$0xff] %vm1341, %v6015
        %6030 = vst.msk [vmem:[#allocation2 + $0x28] sm:$0xff] %vm1341, %v6016
        %6031 = vrot.lane.b32.xlu0 %v6015, 127
        %v6032 = vpop.permute.xlu0 %6031
        %6033 = vrot.lane.b32.xlu0 %v6016, 127
        %v6034 = vpop.permute.xlu0 %6033
        %6037 = vst.msk [vmem:[#allocation2 + $0x40] sm:$0xff] %vm1346, %v6032
        %6038 = vst.msk [vmem:[#allocation2 + $0x48] sm:$0xff] %vm1346, %v6034
        %6039 = vst.msk [vmem:[#allocation2 + $0x40] sm:$0xff] %vm1348, 0.0
        %6040 = vst.msk [vmem:[#allocation2 + $0x48] sm:$0xff] %vm1348, 0.0
        %6041 = vst.msk [vmem:[#allocation2 + $0x10] sm:$0xff] %vm973, 0.0
        %6042 = vst.msk [vmem:[#allocation2 + $0x18] sm:$0xff] %vm973, 0.0
        %6043 = vrot.lane.b32.xlu0 %v1576, 1
        %v6044 = vpop.permute.xlu0 %6043
        %6045 = vrot.lane.b32.xlu0 %v1577, 1
        %v6046 = vpop.permute.xlu0 %6045
        %6049 = vst.msk [vmem:[#allocation2 + $0x10] sm:$0xff] %vm1339, %v6044
        %6050 = vst.msk [vmem:[#allocation2 + $0x18] sm:$0xff] %vm1339, %v6046
        %6051 = vst.msk [vmem:[#allocation2 + $0x30] sm:$0xff] %vm1341, %v1576
        %6052 = vst.msk [vmem:[#allocation2 + $0x38] sm:$0xff] %vm1341, %v1577
        %6053 = vrot.lane.b32.xlu0 %v1576, 127
        %v6054 = vpop.permute.xlu0 %6053
        %6055 = vrot.lane.b32.xlu0 %v1577, 127
        %v6056 = vpop.permute.xlu0 %6055
        %6059 = vst.msk [vmem:[#allocation2 + $0x50] sm:$0xff] %vm1346, %v6054
        %6060 = vst.msk [vmem:[#allocation2 + $0x58] sm:$0xff] %vm1346, %v6056
        %6061 = vst.msk [vmem:[#allocation2 + $0x50] sm:$0xff] %vm1348, 0.0
        %6062 = vst.msk [vmem:[#allocation2 + $0x58] sm:$0xff] %vm1348, 0.0
        %v6063 = vld [vmem:[%s18] sm:$0xff]
        %v6064 = vld [vmem:[%s18 + $0x8] sm:$0xff]
        %v6065 = vld [vmem:[#allocation2] sm:$0xff]
        %v6066 = vld [vmem:[#allocation2 + $0x8] sm:$0xff]
        %v6067 = vld [vmem:[#allocation2 + $0x10] sm:$0xff]
        %v6068 = vld [vmem:[#allocation2 + $0x18] sm:$0xff]
        %v6069 = vld [vmem:[#allocation2 + $0x20] sm:$0xff]
        %v6070 = vld [vmem:[#allocation2 + $0x28] sm:$0xff]
        %v6071 = vld [vmem:[#allocation2 + $0x30] sm:$0xff]
        %v6072 = vld [vmem:[#allocation2 + $0x38] sm:$0xff]
        %v6073 = vld [vmem:[#allocation2 + $0x40] sm:$0xff]
        %v6074 = vld [vmem:[#allocation2 + $0x48] sm:$0xff]
        %v6075 = vld [vmem:[#allocation2 + $0x50] sm:$0xff]
        %v6076 = vld [vmem:[#allocation2 + $0x58] sm:$0xff]
        %v6077 = vld [vmem:[%s24] sm:$0xff]
        %v6078 = vld [vmem:[%s24 + $0x8] sm:$0xff]
        %6080 = vset.pattern.permute.xlu0 17
        %6081 = vperm.xlu0 %6080, %v6077
        %v6082 = vpop.permute.xlu0 %6081
        %6085 = vset.pattern.permute.xlu0 17
        %6086 = vperm.xlu0 %6085, %v6078
        %v6087 = vpop.permute.xlu0 %6086
        %v6090 = vsel %vm1987, %v6063, 0
        %v6093 = vsel %vm1987, %v6064, 0
        %6095 = vmatprep.subr.mxu0 0.0
        %6096 = vmatpush1.msra.mxu0 %v6065
        %6097 = vmatprep.subr.mxu0 0.0
        %6098 = vmatpush1.msra.mxu0 %v6066
        %6099 = vmatprep.subr.mxu0 0.0
        %6100 = vmatpush1.msra.mxu0 %v6067
        %6101 = vmatprep.subr.mxu0 0.0
        %6102 = vmatpush1.msra.mxu0 %v6068
        %6103 = vmatprep.subr.mxu0 0.0
        %6104 = vmatpush1.msra.mxu0 %v6069
        %6105 = vmatprep.subr.mxu0 0.0
        %6106 = vmatpush1.msra.mxu0 %v6070
        %6107 = vmatprep.subr.mxu0 0.0
        %6108 = vmatpush1.msra.mxu0 %v6071
        %6109 = vmatprep.subr.mxu0 0.0
        %6110 = vmatpush1.msra.mxu0 %v6072
        %6111 = vmatprep.subr.mxu0 0.0
        %6112 = vmatpush1.msra.mxu0 %v6073
        %6113 = vmatprep.subr.mxu0 0.0
        %6114 = vmatpush1.msra.mxu0 %v6074
        %6115 = vmatprep.subr.mxu0 0.0
        %6116 = vmatpush1.msra.mxu0 %v6075
        %6117 = vmatprep.subr.mxu0 0.0
        %6118 = vmatpush1.msra.mxu0 %v6076
        %6119 = vmatprep.subr.mxu0 0.0
        %6120 = vmatpush1.msra.mxu0 0.0
        %6121 = vmatprep.subr.mxu0 0.0
        %6122 = vmatpush1.msra.mxu0 0.0
        %6123 = vmatprep.subr.mxu0 0.0
        %6124 = vmatpush1.msra.mxu0 0.0
        %6125 = vmatprep.subr.mxu0 0.0
        %6126 = vmatpush1.msra.mxu0 0.0
        %6127 = vmatprep.subr.mxu0 0.0
        %6128 = vmatpush1.msra.mxu0 0.0
        %6129 = vmatprep.subr.mxu0 0.0
        %6130 = vmatpush1.msra.mxu0 0.0
        %6131 = vmatprep.subr.mxu0 0.0
        %6132 = vmatpush1.msra.mxu0 0.0
        %6133 = vmatprep.subr.mxu0 0.0
        %6134 = vmatpush1.msra.mxu0 0.0
        %6135 = vmatprep.subr.mxu0 0.0
        %6136 = vmatpush1.msra.mxu0 0.0
        %6137 = vmatprep.subr.mxu0 0.0
        %6138 = vmatpush1.msra.mxu0 0.0
        %6139 = vmatprep.subr.mxu0 0.0
        %6140 = vmatpush1.msra.mxu0 0.0
        %6141 = vmatprep.subr.mxu0 0.0
        %6142 = vmatpush1.msra.mxu0 0.0
        %6143 = vmatprep.subr.mxu0 0.0
        %6144 = vmatpush1.msra.mxu0 0.0
        %6145 = vmatprep.subr.mxu0 0.0
        %6146 = vmatpush1.msra.mxu0 0.0
        %6147 = vmatprep.subr.mxu0 0.0
        %6148 = vmatpush1.msra.mxu0 0.0
        %6149 = vmatprep.subr.mxu0 0.0
        %6150 = vmatpush1.msra.mxu0 0.0
        %6151 = vmatprep.subr.mxu0 0.0
        %6152 = vmatpush1.msra.mxu0 0.0
        %6153 = vmatprep.subr.mxu0 0.0
        %6154 = vmatpush1.msra.mxu0 0.0
        %6155 = vmatprep.subr.mxu0 0.0
        %6156 = vmatpush1.msra.mxu0 0.0
        %6157 = vmatprep.subr.mxu0 0.0
        %6158 = vmatpush1.msra.mxu0 0.0
        %6159 = vmatprep.mubr.f32.mxu0 0.0
        %6160 = vmatmul.mubr.f32.gmra.mrb[0].mxu0 %v6090
        %v6161 = vpop.f32.mrb[0].mxu0
        %v6162 = vadd.f32 %v6082, %v6161
        %v6163 = vpop.f32.mrb[0].mxu0
        %6164 = vmatprep.mubr.f32.mxu0 0.0
        %6165 = vmatmul.mubr.f32.gmra.mrb[0].mxu0 %v6093
        %v6166 = vpop.f32.mrb[0].mxu0
        %v6167 = vadd.f32 %v6087, %v6166
        %v6168 = vpop.f32.mrb[0].mxu0
        %6169 = vdwg.mxu0
        %v6170 = vtanh.pop %v6162
        %v6171 = vtanh.pop %v6167
        %6172 = vst.msk [vmem:[#allocation2] sm:$0xff] %vm973, 0.0
        %6173 = vst.msk [vmem:[#allocation2 + $0x8] sm:$0xff] %vm973, 0.0
        %6176 = vrot.lane.b32.xlu0 %v6170, 1
        %v6177 = vpop.permute.xlu0 %6176
        %6178 = vrot.lane.b32.xlu0 %v6171, 1
        %v6179 = vpop.permute.xlu0 %6178
        %6182 = vst.msk [vmem:[#allocation2] sm:$0xff] %vm1339, %v6177
        %6183 = vst.msk [vmem:[#allocation2 + $0x8] sm:$0xff] %vm1339, %v6179
        %6184 = vst.msk [vmem:[#allocation2 + $0x10] sm:$0xff] %vm1341, %v6170
        %6185 = vst.msk [vmem:[#allocation2 + $0x18] sm:$0xff] %vm1341, %v6171
        %6186 = vrot.lane.b32.xlu0 %v6170, 127
        %v6187 = vpop.permute.xlu0 %6186
        %6188 = vrot.lane.b32.xlu0 %v6171, 127
        %v6189 = vpop.permute.xlu0 %6188
        %6192 = vst.msk [vmem:[#allocation2 + $0x20] sm:$0xff] %vm1346, %v6187
        %6193 = vst.msk [vmem:[#allocation2 + $0x28] sm:$0xff] %vm1346, %v6189
        %6194 = vst.msk [vmem:[#allocation2 + $0x20] sm:$0xff] %vm1348, 0.0
        %6195 = vst.msk [vmem:[#allocation2 + $0x28] sm:$0xff] %vm1348, 0.0
        %v6196 = vld [vmem:[#allocation22] sm:$0xff]
        %v6197 = vld [vmem:[#allocation22 + $0x8] sm:$0xff]
        %v6198 = vld [vmem:[#allocation2] sm:$0xff]
        %v6199 = vld [vmem:[#allocation2 + $0x8] sm:$0xff]
        %v6200 = vld [vmem:[#allocation2 + $0x10] sm:$0xff]
        %v6201 = vld [vmem:[#allocation2 + $0x18] sm:$0xff]
        %v6202 = vld [vmem:[#allocation2 + $0x20] sm:$0xff]
        %v6203 = vld [vmem:[#allocation2 + $0x28] sm:$0xff]
        %v6204 = vld [vmem:[%s24] sm:$0xff]
        %v6205 = vld [vmem:[%s24 + $0x8] sm:$0xff]
        %6207 = vset.pattern.permute.xlu0 18
        %6208 = vperm.xlu0 %6207, %v6204
        %v6209 = vpop.permute.xlu0 %6208
        %6212 = vset.pattern.permute.xlu0 18
        %6213 = vperm.xlu0 %6212, %v6205
        %v6214 = vpop.permute.xlu0 %6213
        %v6217 = vsel %vm1494, %v6196, 0
        %v6220 = vsel %vm1494, %v6197, 0
        %6222 = vmatprep.subr.mxu0 0.0
        %6223 = vmatpush1.msra.mxu0 %v6198
        %6224 = vmatprep.subr.mxu0 0.0
        %6225 = vmatpush1.msra.mxu0 %v6199
        %6226 = vmatprep.subr.mxu0 0.0
        %6227 = vmatpush1.msra.mxu0 %v6200
        %6228 = vmatprep.subr.mxu0 0.0
        %6229 = vmatpush1.msra.mxu0 %v6201
        %6230 = vmatprep.subr.mxu0 0.0
        %6231 = vmatpush1.msra.mxu0 %v6202
        %6232 = vmatprep.subr.mxu0 0.0
        %6233 = vmatpush1.msra.mxu0 %v6203
        %6234 = vmatprep.subr.mxu0 0.0
        %6235 = vmatpush1.msra.mxu0 0.0
        %6236 = vmatprep.subr.mxu0 0.0
        %6237 = vmatpush1.msra.mxu0 0.0
        %6238 = vmatprep.subr.mxu0 0.0
        %6239 = vmatpush1.msra.mxu0 0.0
        %6240 = vmatprep.subr.mxu0 0.0
        %6241 = vmatpush1.msra.mxu0 0.0
        %6242 = vmatprep.subr.mxu0 0.0
        %6243 = vmatpush1.msra.mxu0 0.0
        %6244 = vmatprep.subr.mxu0 0.0
        %6245 = vmatpush1.msra.mxu0 0.0
        %6246 = vmatprep.subr.mxu0 0.0
        %6247 = vmatpush1.msra.mxu0 0.0
        %6248 = vmatprep.subr.mxu0 0.0
        %6249 = vmatpush1.msra.mxu0 0.0
        %6250 = vmatprep.subr.mxu0 0.0
        %6251 = vmatpush1.msra.mxu0 0.0
        %6252 = vmatprep.subr.mxu0 0.0
        %6253 = vmatpush1.msra.mxu0 0.0
        %6254 = vmatprep.subr.mxu0 0.0
        %6255 = vmatpush1.msra.mxu0 0.0
        %6256 = vmatprep.subr.mxu0 0.0
        %6257 = vmatpush1.msra.mxu0 0.0
        %6258 = vmatprep.subr.mxu0 0.0
        %6259 = vmatpush1.msra.mxu0 0.0
        %6260 = vmatprep.subr.mxu0 0.0
        %6261 = vmatpush1.msra.mxu0 0.0
        %6262 = vmatprep.subr.mxu0 0.0
        %6263 = vmatpush1.msra.mxu0 0.0
        %6264 = vmatprep.subr.mxu0 0.0
        %6265 = vmatpush1.msra.mxu0 0.0
        %6266 = vmatprep.subr.mxu0 0.0
        %6267 = vmatpush1.msra.mxu0 0.0
        %6268 = vmatprep.subr.mxu0 0.0
        %6269 = vmatpush1.msra.mxu0 0.0
        %6270 = vmatprep.subr.mxu0 0.0
        %6271 = vmatpush1.msra.mxu0 0.0
        %6272 = vmatprep.subr.mxu0 0.0
        %6273 = vmatpush1.msra.mxu0 0.0
        %6274 = vmatprep.subr.mxu0 0.0
        %6275 = vmatpush1.msra.mxu0 0.0
        %6276 = vmatprep.subr.mxu0 0.0
        %6277 = vmatpush1.msra.mxu0 0.0
        %6278 = vmatprep.subr.mxu0 0.0
        %6279 = vmatpush1.msra.mxu0 0.0
        %6280 = vmatprep.subr.mxu0 0.0
        %6281 = vmatpush1.msra.mxu0 0.0
        %6282 = vmatprep.subr.mxu0 0.0
        %6283 = vmatpush1.msra.mxu0 0.0
        %6284 = vmatprep.subr.mxu0 0.0
        %6285 = vmatpush1.msra.mxu0 0.0
        %6286 = vmatprep.mubr.f32.mxu0 0.0
        %6287 = vmatmul.mubr.f32.gmra.mrb[0].mxu0 %v6217
        %v6288 = vpop.f32.mrb[0].mxu0
        %v6289 = vadd.f32 %v6209, %v6288
        %v6290 = vpop.f32.mrb[0].mxu0
        %6291 = vmatprep.mubr.f32.mxu0 0.0
        %6292 = vmatmul.mubr.f32.gmra.mrb[0].mxu0 %v6220
        %v6293 = vpop.f32.mrb[0].mxu0
        %v6294 = vadd.f32 %v6214, %v6293
        %v6295 = vpop.f32.mrb[0].mxu0
        %6296 = vdwg.mxu0
        %v6297 = vtanh.pop %v6289
        %v6298 = vtanh.pop %v6294
        %v6299 = vld [vmem:[#allocation23] sm:$0xff]
        %v6300 = vld [vmem:[#allocation23 + $0x8] sm:$0xff]
        %v6302 = vsel %vm981, %v6299, 0
        %v6305 = vsel %vm981, %v6300, 0
        %6307 = vmatprep.subr.mxu0 0.0
        %6308 = vmatpush1.msra.mxu0 %v6297
        %6309 = vmatprep.subr.mxu0 0.0
        %6310 = vmatpush1.msra.mxu0 %v6298
        %6311 = vmatprep.subr.mxu0 0.0
        %6312 = vmatpush1.msra.mxu0 0.0
        %6313 = vmatprep.subr.mxu0 0.0
        %6314 = vmatpush1.msra.mxu0 0.0
        %6315 = vmatprep.subr.mxu0 0.0
        %6316 = vmatpush1.msra.mxu0 0.0
        %6317 = vmatprep.subr.mxu0 0.0
        %6318 = vmatpush1.msra.mxu0 0.0
        %6319 = vmatprep.subr.mxu0 0.0
        %6320 = vmatpush1.msra.mxu0 0.0
        %6321 = vmatprep.subr.mxu0 0.0
        %6322 = vmatpush1.msra.mxu0 0.0
        %6323 = vmatprep.subr.mxu0 0.0
        %6324 = vmatpush1.msra.mxu0 0.0
        %6325 = vmatprep.subr.mxu0 0.0
        %6326 = vmatpush1.msra.mxu0 0.0
        %6327 = vmatprep.subr.mxu0 0.0
        %6328 = vmatpush1.msra.mxu0 0.0
        %6329 = vmatprep.subr.mxu0 0.0
        %6330 = vmatpush1.msra.mxu0 0.0
        %6331 = vmatprep.subr.mxu0 0.0
        %6332 = vmatpush1.msra.mxu0 0.0
        %6333 = vmatprep.subr.mxu0 0.0
        %6334 = vmatpush1.msra.mxu0 0.0
        %6335 = vmatprep.subr.mxu0 0.0
        %6336 = vmatpush1.msra.mxu0 0.0
        %6337 = vmatprep.subr.mxu0 0.0
        %6338 = vmatpush1.msra.mxu0 0.0
        %6339 = vmatprep.subr.mxu0 0.0
        %6340 = vmatpush1.msra.mxu0 0.0
        %6341 = vmatprep.subr.mxu0 0.0
        %6342 = vmatpush1.msra.mxu0 0.0
        %6343 = vmatprep.subr.mxu0 0.0
        %6344 = vmatpush1.msra.mxu0 0.0
        %6345 = vmatprep.subr.mxu0 0.0
        %6346 = vmatpush1.msra.mxu0 0.0
        %6347 = vmatprep.subr.mxu0 0.0
        %6348 = vmatpush1.msra.mxu0 0.0
        %6349 = vmatprep.subr.mxu0 0.0
        %6350 = vmatpush1.msra.mxu0 0.0
        %6351 = vmatprep.subr.mxu0 0.0
        %6352 = vmatpush1.msra.mxu0 0.0
        %6353 = vmatprep.subr.mxu0 0.0
        %6354 = vmatpush1.msra.mxu0 0.0
        %6355 = vmatprep.subr.mxu0 0.0
        %6356 = vmatpush1.msra.mxu0 0.0
        %6357 = vmatprep.subr.mxu0 0.0
        %6358 = vmatpush1.msra.mxu0 0.0
        %6359 = vmatprep.subr.mxu0 0.0
        %6360 = vmatpush1.msra.mxu0 0.0
        %6361 = vmatprep.subr.mxu0 0.0
        %6362 = vmatpush1.msra.mxu0 0.0
        %6363 = vmatprep.subr.mxu0 0.0
        %6364 = vmatpush1.msra.mxu0 0.0
        %6365 = vmatprep.subr.mxu0 0.0
        %6366 = vmatpush1.msra.mxu0 0.0
        %6367 = vmatprep.subr.mxu0 0.0
        %6368 = vmatpush1.msra.mxu0 0.0
        %6369 = vmatprep.subr.mxu0 0.0
        %6370 = vmatpush1.msra.mxu0 0.0
        %6371 = vmatprep.mubr.f32.mxu0 0.0
        %6372 = vmatmul.mubr.f32.gmra.mrb[0].mxu0 %v6302
        %v6373 = vpop.f32.mrb[0].mxu0
        %v6374 = vadd.f32 0.0, %v6373
        %v6375 = vpop.f32.mrb[0].mxu0
        %6376 = vmatprep.mubr.f32.mxu0 0.0
        %6377 = vmatmul.mubr.f32.gmra.mrb[0].mxu0 %v6305
        %v6378 = vpop.f32.mrb[0].mxu0
        %v6379 = vadd.f32 0.0, %v6378
        %v6380 = vpop.f32.mrb[0].mxu0
        %6381 = vdwg.mxu0
        %v6382 = vld [vmem:[%s24] sm:$0xff]
        %v6384 = vsel %vm1341, %v6379, 0
        %6386 = vmatprep.subr.mxu0 0.0
        %6387 = vmatpush1.msra.mxu0 %v5071
        %6388 = vmatprep.subr.mxu0 0.0
        %6389 = vmatpush1.msra.mxu0 0.0
        %6390 = vmatprep.subr.mxu0 0.0
        %6391 = vmatpush1.msra.mxu0 0.0
        %6392 = vmatprep.subr.mxu0 0.0
        %6393 = vmatpush1.msra.mxu0 0.0
        %6394 = vmatprep.subr.mxu0 0.0
        %6395 = vmatpush1.msra.mxu0 0.0
        %6396 = vmatprep.subr.mxu0 0.0
        %6397 = vmatpush1.msra.mxu0 0.0
        %6398 = vmatprep.subr.mxu0 0.0
        %6399 = vmatpush1.msra.mxu0 0.0
        %6400 = vmatprep.subr.mxu0 0.0
        %6401 = vmatpush1.msra.mxu0 0.0
        %6402 = vmatprep.subr.mxu0 0.0
        %6403 = vmatpush1.msra.mxu0 0.0
        %6404 = vmatprep.subr.mxu0 0.0
        %6405 = vmatpush1.msra.mxu0 0.0
        %6406 = vmatprep.subr.mxu0 0.0
        %6407 = vmatpush1.msra.mxu0 0.0
        %6408 = vmatprep.subr.mxu0 0.0
        %6409 = vmatpush1.msra.mxu0 0.0
        %6410 = vmatprep.subr.mxu0 0.0
        %6411 = vmatpush1.msra.mxu0 0.0
        %6412 = vmatprep.subr.mxu0 0.0
        %6413 = vmatpush1.msra.mxu0 0.0
        %6414 = vmatprep.subr.mxu0 0.0
        %6415 = vmatpush1.msra.mxu0 0.0
        %6416 = vmatprep.subr.mxu0 0.0
        %6417 = vmatpush1.msra.mxu0 0.0
        %6418 = vmatprep.subr.mxu0 0.0
        %6419 = vmatpush1.msra.mxu0 0.0
        %6420 = vmatprep.subr.mxu0 0.0
        %6421 = vmatpush1.msra.mxu0 0.0
        %6422 = vmatprep.subr.mxu0 0.0
        %6423 = vmatpush1.msra.mxu0 0.0
        %6424 = vmatprep.subr.mxu0 0.0
        %6425 = vmatpush1.msra.mxu0 0.0
        %6426 = vmatprep.subr.mxu0 0.0
        %6427 = vmatpush1.msra.mxu0 0.0
        %6428 = vmatprep.subr.mxu0 0.0
        %6429 = vmatpush1.msra.mxu0 0.0
        %6430 = vmatprep.subr.mxu0 0.0
        %6431 = vmatpush1.msra.mxu0 0.0
        %6432 = vmatprep.subr.mxu0 0.0
        %6433 = vmatpush1.msra.mxu0 0.0
        %6434 = vmatprep.subr.mxu0 0.0
        %6435 = vmatpush1.msra.mxu0 0.0
        %6436 = vmatprep.subr.mxu0 0.0
        %6437 = vmatpush1.msra.mxu0 0.0
        %6438 = vmatprep.subr.mxu0 0.0
        %6439 = vmatpush1.msra.mxu0 0.0
        %6440 = vmatprep.subr.mxu0 0.0
        %6441 = vmatpush1.msra.mxu0 0.0
        %6442 = vmatprep.subr.mxu0 0.0
        %6443 = vmatpush1.msra.mxu0 0.0
        %6444 = vmatprep.subr.mxu0 0.0
        %6445 = vmatpush1.msra.mxu0 0.0
        %6446 = vmatprep.subr.mxu0 0.0
        %6447 = vmatpush1.msra.mxu0 0.0
        %6448 = vmatprep.subr.mxu0 0.0
        %6449 = vmatpush1.msra.mxu0 0.0
        %6450 = vmatprep.mubr.f32.mxu0 0.0
        %6451 = vmatmul.mubr.f32.gmra.mrb[0].mxu0 %v6384
        %v6452 = vpop.f32.mrb[0].mxu0
        %v6453 = vadd.f32 0.0, %v6452
        %v6454 = vpop.f32.mrb[0].mxu0
        %6455 = vdwg.mxu0
        %v6457 = vsel %vm1341, %v6374, 0
        %6459 = vmatprep.subr.mxu0 0.0
        %6460 = vmatpush1.msra.mxu0 %v5067
        %6461 = vmatprep.subr.mxu0 0.0
        %6462 = vmatpush1.msra.mxu0 0.0
        %6463 = vmatprep.subr.mxu0 0.0
        %6464 = vmatpush1.msra.mxu0 0.0
        %6465 = vmatprep.subr.mxu0 0.0
        %6466 = vmatpush1.msra.mxu0 0.0
        %6467 = vmatprep.subr.mxu0 0.0
        %6468 = vmatpush1.msra.mxu0 0.0
        %6469 = vmatprep.subr.mxu0 0.0
        %6470 = vmatpush1.msra.mxu0 0.0
        %6471 = vmatprep.subr.mxu0 0.0
        %6472 = vmatpush1.msra.mxu0 0.0
        %6473 = vmatprep.subr.mxu0 0.0
        %6474 = vmatpush1.msra.mxu0 0.0
        %6475 = vmatprep.subr.mxu0 0.0
        %6476 = vmatpush1.msra.mxu0 0.0
        %6477 = vmatprep.subr.mxu0 0.0
        %6478 = vmatpush1.msra.mxu0 0.0
        %6479 = vmatprep.subr.mxu0 0.0
        %6480 = vmatpush1.msra.mxu0 0.0
        %6481 = vmatprep.subr.mxu0 0.0
        %6482 = vmatpush1.msra.mxu0 0.0
        %6483 = vmatprep.subr.mxu0 0.0
        %6484 = vmatpush1.msra.mxu0 0.0
        %6485 = vmatprep.subr.mxu0 0.0
        %6486 = vmatpush1.msra.mxu0 0.0
        %6487 = vmatprep.subr.mxu0 0.0
        %6488 = vmatpush1.msra.mxu0 0.0
        %6489 = vmatprep.subr.mxu0 0.0
        %6490 = vmatpush1.msra.mxu0 0.0
        %6491 = vmatprep.subr.mxu0 0.0
        %6492 = vmatpush1.msra.mxu0 0.0
        %6493 = vmatprep.subr.mxu0 0.0
        %6494 = vmatpush1.msra.mxu0 0.0
        %6495 = vmatprep.subr.mxu0 0.0
        %6496 = vmatpush1.msra.mxu0 0.0
        %6497 = vmatprep.subr.mxu0 0.0
        %6498 = vmatpush1.msra.mxu0 0.0
        %6499 = vmatprep.subr.mxu0 0.0
        %6500 = vmatpush1.msra.mxu0 0.0
        %6501 = vmatprep.subr.mxu0 0.0
        %6502 = vmatpush1.msra.mxu0 0.0
        %6503 = vmatprep.subr.mxu0 0.0
        %6504 = vmatpush1.msra.mxu0 0.0
        %6505 = vmatprep.subr.mxu0 0.0
        %6506 = vmatpush1.msra.mxu0 0.0
        %6507 = vmatprep.subr.mxu0 0.0
        %6508 = vmatpush1.msra.mxu0 0.0
        %6509 = vmatprep.subr.mxu0 0.0
        %6510 = vmatpush1.msra.mxu0 0.0
        %6511 = vmatprep.subr.mxu0 0.0
        %6512 = vmatpush1.msra.mxu0 0.0
        %6513 = vmatprep.subr.mxu0 0.0
        %6514 = vmatpush1.msra.mxu0 0.0
        %6515 = vmatprep.subr.mxu0 0.0
        %6516 = vmatpush1.msra.mxu0 0.0
        %6517 = vmatprep.subr.mxu0 0.0
        %6518 = vmatpush1.msra.mxu0 0.0
        %6519 = vmatprep.subr.mxu0 0.0
        %6520 = vmatpush1.msra.mxu0 0.0
        %6521 = vmatprep.subr.mxu0 0.0
        %6522 = vmatpush1.msra.mxu0 0.0
        %6523 = vmatprep.mubr.f32.mxu0 0.0
        %6524 = vmatmul.mubr.f32.gmra.mrb[0].mxu0 %v6457
        %v6525 = vpop.f32.mrb[0].mxu0
        %v6526 = vadd.f32 %v6453, %v6525
        %v6527 = vpop.f32.mrb[0].mxu0
        %6528 = vdwg.mxu0
        %6530 = vset.pattern.permute.xlu0 19
        %6531 = vperm.xlu0 %6530, %v6382
        %v6532 = vpop.permute.xlu0 %6531
        %v6534 = vadd.f32 %v6526, %v6532
        %6535 = vst.msk [vmem:[#allocation2] sm:$0xff] %vm973, 0.0
        %6537 = vrot.lane.b32.xlu0 %v6534, 1
        %v6538 = vpop.permute.xlu0 %6537
        %6540 = vst.msk [vmem:[#allocation2] sm:$0xff] %vm979, %v6538
        %6541 = vst.msk [vmem:[#allocation2 + $0x10] sm:$0xff] %vm981, %v6534
        %6542 = vrot.lane.b32.xlu0 %v6534, 127
        %v6543 = vpop.permute.xlu0 %6542
        %6545 = vst.msk [vmem:[#allocation2 + $0x20] sm:$0xff] %vm986, %v6543
        %6546 = vst.msk [vmem:[#allocation2 + $0x20] sm:$0xff] %vm988, 0.0
        %6547 = vst.msk [vmem:[#allocation2 + $0x8] sm:$0xff] %vm973, 0.0
        %6548 = vrot.lane.b32.xlu0 %v1170, 1
        %v6549 = vpop.permute.xlu0 %6548
        %6551 = vst.msk [vmem:[#allocation2 + $0x8] sm:$0xff] %vm979, %v6549
        %6552 = vst.msk [vmem:[#allocation2 + $0x18] sm:$0xff] %vm981, %v1170
        %6553 = vrot.lane.b32.xlu0 %v1170, 127
        %v6554 = vpop.permute.xlu0 %6553
        %6556 = vst.msk [vmem:[#allocation2 + $0x28] sm:$0xff] %vm986, %v6554
        %6557 = vst.msk [vmem:[#allocation2 + $0x28] sm:$0xff] %vm988, 0.0
        %v6558 = vld [vmem:[%s21] sm:$0xff]
        %v6559 = vld [vmem:[#allocation2] sm:$0xff]
        %v6560 = vld [vmem:[#allocation2 + $0x8] sm:$0xff]
        %v6561 = vld [vmem:[#allocation2 + $0x10] sm:$0xff]
        %v6562 = vld [vmem:[#allocation2 + $0x18] sm:$0xff]
        %v6563 = vld [vmem:[#allocation2 + $0x20] sm:$0xff]
        %v6564 = vld [vmem:[#allocation2 + $0x28] sm:$0xff]
        %v6565 = vld [vmem:[%s24] sm:$0xff]
        %6567 = vset.pattern.permute.xlu0 20
        %6568 = vperm.xlu0 %6567, %v6565
        %v6569 = vpop.permute.xlu0 %6568
        %v6572 = vsel %vm1494, %v6558, 0
        %6574 = vmatprep.subr.mxu0 0.0
        %6575 = vmatpush1.msra.mxu0 %v6559
        %6576 = vmatprep.subr.mxu0 0.0
        %6577 = vmatpush1.msra.mxu0 %v6560
        %6578 = vmatprep.subr.mxu0 0.0
        %6579 = vmatpush1.msra.mxu0 %v6561
        %6580 = vmatprep.subr.mxu0 0.0
        %6581 = vmatpush1.msra.mxu0 %v6562
        %6582 = vmatprep.subr.mxu0 0.0
        %6583 = vmatpush1.msra.mxu0 %v6563
        %6584 = vmatprep.subr.mxu0 0.0
        %6585 = vmatpush1.msra.mxu0 %v6564
        %6586 = vmatprep.subr.mxu0 0.0
        %6587 = vmatpush1.msra.mxu0 0.0
        %6588 = vmatprep.subr.mxu0 0.0
        %6589 = vmatpush1.msra.mxu0 0.0
        %6590 = vmatprep.subr.mxu0 0.0
        %6591 = vmatpush1.msra.mxu0 0.0
        %6592 = vmatprep.subr.mxu0 0.0
        %6593 = vmatpush1.msra.mxu0 0.0
        %6594 = vmatprep.subr.mxu0 0.0
        %6595 = vmatpush1.msra.mxu0 0.0
        %6596 = vmatprep.subr.mxu0 0.0
        %6597 = vmatpush1.msra.mxu0 0.0
        %6598 = vmatprep.subr.mxu0 0.0
        %6599 = vmatpush1.msra.mxu0 0.0
        %6600 = vmatprep.subr.mxu0 0.0
        %6601 = vmatpush1.msra.mxu0 0.0
        %6602 = vmatprep.subr.mxu0 0.0
        %6603 = vmatpush1.msra.mxu0 0.0
        %6604 = vmatprep.subr.mxu0 0.0
        %6605 = vmatpush1.msra.mxu0 0.0
        %6606 = vmatprep.subr.mxu0 0.0
        %6607 = vmatpush1.msra.mxu0 0.0
        %6608 = vmatprep.subr.mxu0 0.0
        %6609 = vmatpush1.msra.mxu0 0.0
        %6610 = vmatprep.subr.mxu0 0.0
        %6611 = vmatpush1.msra.mxu0 0.0
        %6612 = vmatprep.subr.mxu0 0.0
        %6613 = vmatpush1.msra.mxu0 0.0
        %6614 = vmatprep.subr.mxu0 0.0
        %6615 = vmatpush1.msra.mxu0 0.0
        %6616 = vmatprep.subr.mxu0 0.0
        %6617 = vmatpush1.msra.mxu0 0.0
        %6618 = vmatprep.subr.mxu0 0.0
        %6619 = vmatpush1.msra.mxu0 0.0
        %6620 = vmatprep.subr.mxu0 0.0
        %6621 = vmatpush1.msra.mxu0 0.0
        %6622 = vmatprep.subr.mxu0 0.0
        %6623 = vmatpush1.msra.mxu0 0.0
        %6624 = vmatprep.subr.mxu0 0.0
        %6625 = vmatpush1.msra.mxu0 0.0
        %6626 = vmatprep.subr.mxu0 0.0
        %6627 = vmatpush1.msra.mxu0 0.0
        %6628 = vmatprep.subr.mxu0 0.0
        %6629 = vmatpush1.msra.mxu0 0.0
        %6630 = vmatprep.subr.mxu0 0.0
        %6631 = vmatpush1.msra.mxu0 0.0
        %6632 = vmatprep.subr.mxu0 0.0
        %6633 = vmatpush1.msra.mxu0 0.0
        %6634 = vmatprep.subr.mxu0 0.0
        %6635 = vmatpush1.msra.mxu0 0.0
        %6636 = vmatprep.subr.mxu0 0.0
        %6637 = vmatpush1.msra.mxu0 0.0
        %6638 = vmatprep.mubr.f32.mxu0 0.0
        %6639 = vmatmul.mubr.f32.gmra.mrb[0].mxu0 %v6572
        %v6640 = vpop.f32.mrb[0].mxu0
        %v6641 = vadd.f32 %v6569, %v6640
        %v6642 = vpop.f32.mrb[0].mxu0
        %6643 = vdwg.mxu0
        %v6644 = vtanh.pop %v6641
        %6645 = vst.msk [vmem:[#allocation2] sm:$0xff] %vm973, 0.0
        %6647 = vrot.lane.b32.xlu0 %v6644, 1
        %v6648 = vpop.permute.xlu0 %6647
        %6650 = vst.msk [vmem:[#allocation2] sm:$0xff] %vm979, %v6648
        %6651 = vst.msk [vmem:[#allocation2 + $0x8] sm:$0xff] %vm981, %v6644
        %6652 = vrot.lane.b32.xlu0 %v6644, 127
        %v6653 = vpop.permute.xlu0 %6652
        %6655 = vst.msk [vmem:[#allocation2 + $0x10] sm:$0xff] %vm986, %v6653
        %6656 = vst.msk [vmem:[#allocation2 + $0x10] sm:$0xff] %vm988, 0.0
        %v6657 = vld [vmem:[%s22] sm:$0xff]
        %v6658 = vld [vmem:[#allocation2] sm:$0xff]
        %v6659 = vld [vmem:[#allocation2 + $0x8] sm:$0xff]
        %v6660 = vld [vmem:[#allocation2 + $0x10] sm:$0xff]
        %v6661 = vld [vmem:[%s24] sm:$0xff]
        %6663 = vset.pattern.permute.xlu0 21
        %6664 = vperm.xlu0 %6663, %v6661
        %v6665 = vpop.permute.xlu0 %6664
        %v6668 = vsel %vm1000, %v6657, 0
        %6670 = vmatprep.subr.mxu0 0.0
        %6671 = vmatpush1.msra.mxu0 %v6658
        %6672 = vmatprep.subr.mxu0 0.0
        %6673 = vmatpush1.msra.mxu0 %v6659
        %6674 = vmatprep.subr.mxu0 0.0
        %6675 = vmatpush1.msra.mxu0 %v6660
        %6676 = vmatprep.subr.mxu0 0.0
        %6677 = vmatpush1.msra.mxu0 0.0
        %6678 = vmatprep.subr.mxu0 0.0
        %6679 = vmatpush1.msra.mxu0 0.0
        %6680 = vmatprep.subr.mxu0 0.0
        %6681 = vmatpush1.msra.mxu0 0.0
        %6682 = vmatprep.subr.mxu0 0.0
        %6683 = vmatpush1.msra.mxu0 0.0
        %6684 = vmatprep.subr.mxu0 0.0
        %6685 = vmatpush1.msra.mxu0 0.0
        %6686 = vmatprep.subr.mxu0 0.0
        %6687 = vmatpush1.msra.mxu0 0.0
        %6688 = vmatprep.subr.mxu0 0.0
        %6689 = vmatpush1.msra.mxu0 0.0
        %6690 = vmatprep.subr.mxu0 0.0
        %6691 = vmatpush1.msra.mxu0 0.0
        %6692 = vmatprep.subr.mxu0 0.0
        %6693 = vmatpush1.msra.mxu0 0.0
        %6694 = vmatprep.subr.mxu0 0.0
        %6695 = vmatpush1.msra.mxu0 0.0
        %6696 = vmatprep.subr.mxu0 0.0
        %6697 = vmatpush1.msra.mxu0 0.0
        %6698 = vmatprep.subr.mxu0 0.0
        %6699 = vmatpush1.msra.mxu0 0.0
        %6700 = vmatprep.subr.mxu0 0.0
        %6701 = vmatpush1.msra.mxu0 0.0
        %6702 = vmatprep.subr.mxu0 0.0
        %6703 = vmatpush1.msra.mxu0 0.0
        %6704 = vmatprep.subr.mxu0 0.0
        %6705 = vmatpush1.msra.mxu0 0.0
        %6706 = vmatprep.subr.mxu0 0.0
        %6707 = vmatpush1.msra.mxu0 0.0
        %6708 = vmatprep.subr.mxu0 0.0
        %6709 = vmatpush1.msra.mxu0 0.0
        %6710 = vmatprep.subr.mxu0 0.0
        %6711 = vmatpush1.msra.mxu0 0.0
        %6712 = vmatprep.subr.mxu0 0.0
        %6713 = vmatpush1.msra.mxu0 0.0
        %6714 = vmatprep.subr.mxu0 0.0
        %6715 = vmatpush1.msra.mxu0 0.0
        %6716 = vmatprep.subr.mxu0 0.0
        %6717 = vmatpush1.msra.mxu0 0.0
        %6718 = vmatprep.subr.mxu0 0.0
        %6719 = vmatpush1.msra.mxu0 0.0
        %6720 = vmatprep.subr.mxu0 0.0
        %6721 = vmatpush1.msra.mxu0 0.0
        %6722 = vmatprep.subr.mxu0 0.0
        %6723 = vmatpush1.msra.mxu0 0.0
        %6724 = vmatprep.subr.mxu0 0.0
        %6725 = vmatpush1.msra.mxu0 0.0
        %6726 = vmatprep.subr.mxu0 0.0
        %6727 = vmatpush1.msra.mxu0 0.0
        %6728 = vmatprep.subr.mxu0 0.0
        %6729 = vmatpush1.msra.mxu0 0.0
        %6730 = vmatprep.subr.mxu0 0.0
        %6731 = vmatpush1.msra.mxu0 0.0
        %6732 = vmatprep.subr.mxu0 0.0
        %6733 = vmatpush1.msra.mxu0 0.0
        %6734 = vmatprep.mubr.f32.mxu0 0.0
        %6735 = vmatmul.mubr.f32.gmra.mrb[0].mxu0 %v6668
        %v6736 = vpop.f32.mrb[0].mxu0
        %v6737 = vadd.f32 %v6665, %v6736
        %v6738 = vpop.f32.mrb[0].mxu0
        %6739 = vdwg.mxu0
        %v6740 = vtanh.pop %v6737
        %v6741 = vld [vmem:[#allocation25] sm:$0x7]
        %v6742 = vld [vmem:[%s24] sm:$0x7]
        %6744 = vset.pattern.permute.xlu0 22
        %6745 = vperm.xlu0 %6744, %v6742
        %v6746 = vpop.permute.xlu0 %6745
        %v6749 = vsel %vm1341, %v6741, 0
        %6751 = vmatprep.subr.mxu0 0.0
        %6752 = vmatpush1.msra.mxu0 %v6740
        %6753 = vmatprep.subr.mxu0 0.0
        %6754 = vmatpush1.msra.mxu0 0.0
        %6755 = vmatprep.subr.mxu0 0.0
        %6756 = vmatpush1.msra.mxu0 0.0
        %6757 = vmatprep.subr.mxu0 0.0
        %6758 = vmatpush1.msra.mxu0 0.0
        %6759 = vmatprep.subr.mxu0 0.0
        %6760 = vmatpush1.msra.mxu0 0.0
        %6761 = vmatprep.subr.mxu0 0.0
        %6762 = vmatpush1.msra.mxu0 0.0
        %6763 = vmatprep.subr.mxu0 0.0
        %6764 = vmatpush1.msra.mxu0 0.0
        %6765 = vmatprep.subr.mxu0 0.0
        %6766 = vmatpush1.msra.mxu0 0.0
        %6767 = vmatprep.subr.mxu0 0.0
        %6768 = vmatpush1.msra.mxu0 0.0
        %6769 = vmatprep.subr.mxu0 0.0
        %6770 = vmatpush1.msra.mxu0 0.0
        %6771 = vmatprep.subr.mxu0 0.0
        %6772 = vmatpush1.msra.mxu0 0.0
        %6773 = vmatprep.subr.mxu0 0.0
        %6774 = vmatpush1.msra.mxu0 0.0
        %6775 = vmatprep.subr.mxu0 0.0
        %6776 = vmatpush1.msra.mxu0 0.0
        %6777 = vmatprep.subr.mxu0 0.0
        %6778 = vmatpush1.msra.mxu0 0.0
        %6779 = vmatprep.subr.mxu0 0.0
        %6780 = vmatpush1.msra.mxu0 0.0
        %6781 = vmatprep.subr.mxu0 0.0
        %6782 = vmatpush1.msra.mxu0 0.0
        %6783 = vmatprep.subr.mxu0 0.0
        %6784 = vmatpush1.msra.mxu0 0.0
        %6785 = vmatprep.subr.mxu0 0.0
        %6786 = vmatpush1.msra.mxu0 0.0
        %6787 = vmatprep.subr.mxu0 0.0
        %6788 = vmatpush1.msra.mxu0 0.0
        %6789 = vmatprep.subr.mxu0 0.0
        %6790 = vmatpush1.msra.mxu0 0.0
        %6791 = vmatprep.subr.mxu0 0.0
        %6792 = vmatpush1.msra.mxu0 0.0
        %6793 = vmatprep.subr.mxu0 0.0
        %6794 = vmatpush1.msra.mxu0 0.0
        %6795 = vmatprep.subr.mxu0 0.0
        %6796 = vmatpush1.msra.mxu0 0.0
        %6797 = vmatprep.subr.mxu0 0.0
        %6798 = vmatpush1.msra.mxu0 0.0
        %6799 = vmatprep.subr.mxu0 0.0
        %6800 = vmatpush1.msra.mxu0 0.0
        %6801 = vmatprep.subr.mxu0 0.0
        %6802 = vmatpush1.msra.mxu0 0.0
        %6803 = vmatprep.subr.mxu0 0.0
        %6804 = vmatpush1.msra.mxu0 0.0
        %6805 = vmatprep.subr.mxu0 0.0
        %6806 = vmatpush1.msra.mxu0 0.0
        %6807 = vmatprep.subr.mxu0 0.0
        %6808 = vmatpush1.msra.mxu0 0.0
        %6809 = vmatprep.subr.mxu0 0.0
        %6810 = vmatpush1.msra.mxu0 0.0
        %6811 = vmatprep.subr.mxu0 0.0
        %6812 = vmatpush1.msra.mxu0 0.0
        %6813 = vmatprep.subr.mxu0 0.0
        %6814 = vmatpush1.msra.mxu0 0.0
        %6815 = vmatprep.mubr.f32.mxu0 0.0
        %6816 = vmatmul.mubr.f32.gmra.mrb[0].mxu0 %v6749
        %v6817 = vpop.f32.mrb[0].mxu0
        %v6818 = vadd.f32 %v6746, %v6817
        %v6819 = vpop.f32.mrb[0].mxu0
        %6820 = vdwg.mxu0
        %vm6821 = vcmask 124928
        %6822 = vst.msk [vmem:[%s971] sm:$0x7] %vm6821, %v6818
        %p6823 = scmp.lt.s32.totalorder %s44, 1
        %s6824 = scalar_select %p6823, %s44, 1
        %s6825 = smul.addr %s6824, 4
        %s6826 = scalar_lea.vmem %s25, %s6825
        // Predicated region
        $region181: #{unet1d_wrap_forward.1} parent=119 // pred_check
          %p6827 = pneg %p592
        $region182: #{unet1d_wrap_forward.1} parent=119 // pred_check_branch
          %6829 = sbr.rel (%p6827) target = $region184
        $region183: #{unet1d_wrap_forward.1} parent=119 // pred_region
          _
        $region184: #{unet1d_wrap_forward.1} parent=119 // pred_fallthru
          _
      $region120: #{unet1d_wrap_forward.1} parent=5 // pred_fallthru
        _
      %p6830 = scmp.le.s32.totalorder 2, %s39
      // Predicated region
      $region185: #{unet1d_wrap_forward.1} parent=5 // pred_check
        %p6831 = pneg %p6830
      $region186: #{unet1d_wrap_forward.1} parent=5 // pred_check_branch
        %6833 = sbr.rel (%p6831) target = $region188
      $region187: #{unet1d_wrap_forward.1} parent=5 // pred_region
        %s6834 = ssub.s32 %s39, 2
        // Predicated region
        $region189: #{unet1d_wrap_forward.1} parent=187 // pred_check
          %p6835 = pneg %p598
        $region190: #{unet1d_wrap_forward.1} parent=187 // pred_check_branch
          %6837 = sbr.rel (%p6835) target = $region192
        $region191: #{unet1d_wrap_forward.1} parent=187 // pred_region
          %p6838 = scmp.lt.s32.totalorder %s45, 1
          %s6839 = scalar_select %p6838, %s45, 1
          %s6840 = smul.addr %s6839, 4
          %s6841 = scalar_lea.vmem %s25, %s6840
        $region192: #{unet1d_wrap_forward.1} parent=187 // pred_fallthru
          _
      $region188: #{unet1d_wrap_forward.1} parent=5 // pred_fallthru
        _
    $region6: #{unet1d_wrap_forward.1} parent=1 // loop_footer
      %s43 = sadd.s32 1, %s39
    $region7: #{unet1d_wrap_forward.1} parent=1 // loop_footer_branch
      %38 = sbr.rel target = $region3
    $region8: #{unet1d_wrap_forward.1} parent=1 // loop_exit
      _
    %6842 = vsyncpa [#allocation4], 1
    %s6843 = scalar_lea.sflag [#allocation4], 1
    %6844 = vsyncpa %s6843, 1
    %6845 = vsyncpa [#allocation6], 1
    %6846 = vsyncpa [#allocation9], 1
    %6847 = vsyncpa [#allocation12], 1
    %6848 = vsyncpa [#allocation15], 1
    %6849 = vsyncpa [#allocation18], 1
    %6850 = vsyncpa [#allocation21], 1
    %6851 = vsyncpa [#allocation24], 1

</llo_original>
